<compile_context>
chip_gen: v5e
topology: v5e:2x2
jax: 0.10.0
libtpu: 0.0.40
codegen_flags: <defaults>
</compile_context>

<pallas_src>
import numpy as np
import jax
import jax.numpy as jnp
from jax.experimental import pallas as pl
from jax.experimental.pallas import tpu as pltpu

PREC = jax.lax.Precision.HIGHEST   # host-side precompute + f32 reference only


# ----------------------------------------------------------------------------
# shared math helper (kernel + reference): PyTorch LSTMCell gate nonlinearity
# ----------------------------------------------------------------------------
def _lstm_gates(gates, c_prev, Hd):
    """gates = x@W_ih^T + h@W_hh^T + b_ih + b_hh, PyTorch order (i, f, g, o)."""
    i = jax.nn.sigmoid(gates[:, 0 * Hd:1 * Hd])
    f = jax.nn.sigmoid(gates[:, 1 * Hd:2 * Hd])
    g = jnp.tanh(gates[:, 2 * Hd:3 * Hd])
    o = jax.nn.sigmoid(gates[:, 3 * Hd:4 * Hd])
    c_new = f * c_prev + i * g
    h_new = o * jnp.tanh(c_new)
    return h_new, c_new


# ----------------------------------------------------------------------------
# Pallas kernel (single invocation; fully unrolled in-kernel time loop)
# ----------------------------------------------------------------------------
def build_pallas_forward(cfg, B, T_enc, max_len):
    """B here is the (sublane-padded) batch the kernel actually runs at."""
    D = cfg["encoder_dim"]
    E = cfg["embedding_dim"]
    H = cfg["rnn_hidden_size"]
    H2 = cfg["second_rnn_hidden_size"]
    A = cfg["attention_dim"]
    L = cfg["label_dim"]
    K = cfg["attention_filter_len"]
    T = T_enc
    assert D == H, "module is only self-consistent when encoder_dim == rnn_hidden_size"

    BF = jnp.bfloat16
    F32 = jnp.float32

    def bdot(a, b):
        # bf16 operands, f32 accumulate: single MXU pass per dot.
        return jnp.dot(a.astype(BF), b, preferred_element_type=F32)

    def kernel(emb_ref, enc_ref, mem_ref,
               wih1x_ref, wih1c_ref, whha_ref, whhd_ref, b1_ref, b2_ref,
               wq_ref, s_ref, ma_ref, mc_ref, v_ref, wih2_ref, wproj_ref,
               out_ref, hall_ref):
        # -------- loop-invariant loads, hoisted once --------
        enc = enc_ref[...]          # (B, T, D)   bf16
        mem = mem_ref[...]          # (B, T, A)   f32 (processed memory)
        wih1x = wih1x_ref[...]      # (E, 4H)     bf16
        wih1c = wih1c_ref[...]      # (D, 4H)     bf16
        whha = whha_ref[...]        # (H, 4H)     bf16
        whhd = whhd_ref[...]        # (H2, 4H2)   bf16
        b1 = jnp.broadcast_to(b1_ref[...], (B, 4 * H))    # hoisted broadcast
        b2 = jnp.broadcast_to(b2_ref[...], (B, 4 * H2))   # hoisted broadcast
        wq = wq_ref[...]            # (H, A)      bf16
        S = s_ref[...]              # (T, K*T)    bf16 0/1 shift-selection
        Ma = ma_ref[...]            # (K, 1, 1, A) f32 fused conv+dense, ch 0
        Mc = mc_ref[...]            # (K, 1, 1, A) f32 fused conv+dense, ch 1
        v = v_ref[...]              # (1, 1, A)   f32
        wih2 = wih2_ref[...]        # (D, 4H2)    bf16
        wproj = wproj_ref[...]      # (H2, L)     bf16

        z = lambda s: jnp.zeros(s, F32)
        h_att, c_att = z((B, H)), z((B, H))
        h_dec, c_dec = z((B, H2)), z((B, H2))
        ctx = z((B, D))
        aw, awc = z((B, T)), z((B, T))

        # Fully unrolled time loop (small max_len): gives the scheduler
        # cross-step visibility and keeps all state in vregs.
        for t in range(max_len):
            x = emb_ref[t]                                  # (B, E) bf16

            # split recurrent matmuls: no concat, no block-diagonal zeros
            rec_a = bdot(h_att, whha)                       # (B, 4H)
            rec_d = bdot(h_dec, whhd)                       # (B, 4H2)

            # -------- attention_rnn: LSTMCell(cat(x, ctx)) without the cat
            g1 = bdot(x, wih1x) + bdot(ctx, wih1c) + rec_a + b1
            h_att, c_att = _lstm_gates(g1, c_att, H)

            # -------- location sensitive attention, O(T*A) per step --------
            pq = bdot(h_att, wq)                            # (B, A)
            sa = bdot(aw, S)                                # (B, K*T)  K taps of aw
            sc = bdot(awc, S)                               # (B, K*T)  K taps of awc
            acc = mem + pq[:, None, :]                      # (B, T, A)
            for k in range(K):                              # 2K VPU MACs
                acc = (acc
                       + sa[:, k * T:(k + 1) * T][:, :, None] * Ma[k]
                       + sc[:, k * T:(k + 1) * T][:, :, None] * Mc[k])
            e = jnp.tanh(acc)                               # (B, T, A)
            energies = jnp.sum(e * v, axis=-1)              # (B, T) lane reduce

            # softmax over encoder time (lane axis); EUP approx reciprocal
            m = jnp.max(energies, axis=-1, keepdims=True)
            ex = jnp.exp(energies - m)
            denom = jnp.sum(ex, axis=-1, keepdims=True)
            w = ex * pl.reciprocal(denom, approx=True)      # (B, T)

            # context: batched matvec on the MXU (no (B,T,D) VPU intermediate)
            ctx = jnp.einsum("bqt,btd->bqd", w[:, None, :].astype(BF), enc,
                             preferred_element_type=F32)[:, 0, :]   # (B, D)
            aw = w
            awc = awc + w

            # -------- decoder_rnn: LSTMCell(context) --------
            g2 = bdot(ctx, wih2) + rec_d + b2
            h_dec, c_dec = _lstm_gates(g2, c_dec, H2)

            # stash h_dec for the deferred projection (tile-aligned: B == 8)
            hall_ref[t * B:(t + 1) * B, :] = h_dec

        # deferred projection: ONE (max_len*B, H2) @ (H2, L) dot + bulk store
        out_ref[...] = bdot(hall_ref[...], wproj)           # (max_len*B, L)

    whole = lambda shape: pl.BlockSpec(shape, lambda i, _s=shape: (0,) * len(_s))

    def forward(emb_tmajor, enc_bf16, mem3, kw):
        ins = [emb_tmajor, enc_bf16, mem3,
               kw["wih1_x"], kw["wih1_c"], kw["whh_a"], kw["whh_d"],
               kw["b1"], kw["b2"], kw["wq"], kw["shift"], kw["ma"], kw["mc"],
               kw["vvec"], kw["wih2"], kw["wproj"]]
        out2d = pl.pallas_call(
            kernel,
            out_shape=jax.ShapeDtypeStruct((max_len * B, L), jnp.float32),
            grid_spec=pltpu.PrefetchScalarGridSpec(
                num_scalar_prefetch=0,
                grid=(1,),
                in_specs=[whole(tuple(a.shape)) for a in ins],
                out_specs=whole((max_len * B, L)),
                scratch_shapes=[pltpu.VMEM((max_len * B, H2), jnp.float32)],
            ),
            compiler_params=pltpu.CompilerParams(
                dimension_semantics=("arbitrary",),
                vmem_limit_bytes=32 * 1024 * 1024),
        )(*ins)
        # wrapper-side layout plumbing only
        return jnp.transpose(out2d.reshape(max_len, B, L), (1, 0, 2))

    return forward


# ----------------------------------------------------------------------------
# parameter init (PyTorch layout) and conversion to the kernel layout
# ----------------------------------------------------------------------------
def init_params(key, cfg):
    L, E, D = cfg["label_dim"], cfg["embedding_dim"], cfg["encoder_dim"]
    H, H2, A = cfg["rnn_hidden_size"], cfg["second_rnn_hidden_size"], cfg["attention_dim"]
    NF, K = cfg["attention_filter_n"], cfg["attention_filter_len"]
    ks = jax.random.split(key, 16)
    s = 0.1
    p = dict(
        embedding=jax.random.normal(ks[0], (L, E)) * s,
        att_wih=jax.random.normal(ks[1], (4 * H, E + H)) * s,
        att_whh=jax.random.normal(ks[2], (4 * H, H)) * s,
        att_bih=jax.random.normal(ks[3], (4 * H,)) * s,
        att_bhh=jax.random.normal(ks[4], (4 * H,)) * s,
        query_w=jax.random.normal(ks[5], (A, H)) * s,
        loc_conv=jax.random.normal(ks[6], (NF, 2, K)) * s,
        loc_dense=jax.random.normal(ks[7], (A, NF)) * s,
        v_w=jax.random.normal(ks[8], (1, A)) * s,
        dec_wih=jax.random.normal(ks[9], (4 * H2, H)) * s,
        dec_whh=jax.random.normal(ks[10], (4 * H2, H2)) * s,
        dec_bih=jax.random.normal(ks[11], (4 * H2,)) * s,
        dec_bhh=jax.random.normal(ks[12], (4 * H2,)) * s,
        mem_w=jax.random.normal(ks[13], (A, D)) * s,
        mem_b=jax.random.normal(ks[14], (A,)) * s,
        proj_w=jax.random.normal(ks[15], (L, H2)) * s,
    )
    return {k: v.astype(jnp.float32) for k, v in p.items()}


def to_kernel_weights(p, cfg, T_enc):
    """One-time host-side conversion to the split / bf16 kernel layouts."""
    E = cfg["embedding_dim"]
    H = cfg["rnn_hidden_size"]
    H2 = cfg["second_rnn_hidden_size"]
    A = cfg["attention_dim"]
    K = cfg["attention_filter_len"]
    assert K % 2 == 1, "location-conv 'same' padding only matches PyTorch for odd K"
    pad = (K - 1) // 2
    T = T_enc
    BF = jnp.bfloat16

    att_wih = np.asarray(p["att_wih"])                       # (4H, E+H)

    # shift-selection matrix S[tau, k*T + t] = 1 iff tau == t + k - pad
    # (one (B,T)@(T,K*T) dot produces all K shifted copies, zero-padded edges)
    S = np.zeros((T, K * T), np.float32)
    for k in range(K):
        for t in range(T):
            tau = t + k - pad
            if 0 <= tau < T:
                S[tau, k * T + t] = 1.0

    # fused location conv (2->NF) + dense (NF->A), split per channel/tap
    M = np.einsum("fck,af->cka", np.asarray(p["loc_conv"]),
                  np.asarray(p["loc_dense"]))                # (2, K, A)

    return dict(
        wih1_x=jnp.asarray(att_wih[:, :E].T, BF),            # (E, 4H)
        wih1_c=jnp.asarray(att_wih[:, E:].T, BF),             # (H, 4H)
        whh_a=jnp.asarray(np.asarray(p["att_whh"]).T, BF),    # (H, 4H)
        whh_d=jnp.asarray(np.asarray(p["dec_whh"]).T, BF),    # (H2, 4H2)
        b1=jnp.asarray((np.asarray(p["att_bih"]) +
                        np.asarray(p["att_bhh"])).reshape(1, 4 * H), jnp.float32),
        b2=jnp.asarray((np.asarray(p["dec_bih"]) +
                        np.asarray(p["dec_bhh"])).reshape(1, 4 * H2), jnp.float32),
        wq=jnp.asarray(np.asarray(p["query_w"]).T, BF),       # (H, A)
        shift=jnp.asarray(S, BF),                             # (T, K*T), exact in bf16
        ma=jnp.asarray(M[0].reshape(K, 1, 1, A), jnp.float32),
        mc=jnp.asarray(M[1].reshape(K, 1, 1, A), jnp.float32),
        vvec=jnp.asarray(np.asarray(p["v_w"]).reshape(1, 1, A), jnp.float32),
        wih2=jnp.asarray(np.asarray(p["dec_wih"]).T, BF),     # (H, 4H2)
        wproj=jnp.asarray(np.asarray(p["proj_w"]).T, BF),     # (H2, L)
    )


def processed_memory(p, enc, cfg):
    """memory_layer(encoder_inputs) -> (B, T, A); step-invariant, precomputed."""
    mem = jnp.einsum("btd,ad->bta", enc, p["mem_w"], precision=PREC) + p["mem_b"]
    return mem.astype(jnp.float32)


# ----------------------------------------------------------------------------
# pure-JAX reference (mirrors the PyTorch forward) for validation
# ----------------------------------------------------------------------------
def reference_forward(p, enc, dec_ids, cfg):
    B, T_enc, D = enc.shape
    _, max_len = dec_ids.shape
    H, H2, K = cfg["rnn_hidden_size"], cfg["second_rnn_hidden_size"], cfg["attention_filter_len"]
    pad = (K - 1) // 2
    ids = jnp.concatenate(
        [jnp.full((B, 1), cfg["sos_id"], jnp.int32), dec_ids], axis=1)
    emb = p["embedding"][ids]                                   # (B, max_len+1, E)
    mem = jnp.einsum("btd,ad->bta", enc, p["mem_w"], precision=PREC) + p["mem_b"]

    ah = jnp.zeros((B, H)); ac = jnp.zeros((B, H))
    dh = jnp.zeros((B, H2)); dc = jnp.zeros((B, H2))
    ctx = jnp.zeros((B, H))
    aw = jnp.zeros((B, T_enc)); awc = jnp.zeros((B, T_enc))
    outs = []
    for t in range(max_len):
        x = emb[:, t, :]
        cat_in = jnp.concatenate([x, ctx], axis=-1)
        g1 = (jnp.einsum("bi,gi->bg", cat_in, p["att_wih"], precision=PREC)
              + jnp.einsum("bh,gh->bg", ah, p["att_whh"], precision=PREC)
              + p["att_bih"] + p["att_bhh"])
        ah, ac = _lstm_gates(g1, ac, H)

        wcat = jnp.stack([aw, awc], axis=1)                     # (B, 2, T_enc)
        loc = jax.lax.conv_general_dilated(
            wcat, p["loc_conv"], (1,), [(pad, pad)],
            dimension_numbers=("NCH", "OIH", "NCH"), precision=PREC)   # (B, NF, T)
        ploc = jnp.einsum("bft,af->bta", loc, p["loc_dense"], precision=PREC)
        pq = jnp.einsum("bh,ah->ba", ah, p["query_w"], precision=PREC)
        e = jnp.tanh(pq[:, None, :] + ploc + mem)
        energies = jnp.einsum("bta,oa->bto", e, p["v_w"], precision=PREC)[:, :, 0]
        w = jax.nn.softmax(energies, axis=1)
        ctx = jnp.einsum("bt,btd->bd", w, enc, precision=PREC)
        aw = w
        awc = awc + w

        g2 = (jnp.einsum("bi,gi->bg", ctx, p["dec_wih"], precision=PREC)
              + jnp.einsum("bh,gh->bg", dh, p["dec_whh"], precision=PREC)
              + p["dec_bih"] + p["dec_bhh"])
        dh, dc = _lstm_gates(g2, dc, H2)
        outs.append(jnp.einsum("bh,lh->bl", dh, p["proj_w"], precision=PREC))
    return jnp.stack(outs, axis=1)                              # (B, max_len, L)


# ----------------------------------------------------------------------------
if __name__ == "__main__":
    cfg = dict(label_dim=16, embedding_dim=8, encoder_dim=32,
               rnn_hidden_size=32, second_rnn_hidden_size=32,
               attention_dim=16, attention_filter_n=4, attention_filter_len=3,
               sos_id=1, eos_id=2, pad_id=0)
    B, T_enc, max_len = 2, 8, 6
    Bp = 8   # pad batch to the f32 sublane height: padded rows are free on TPU

    key = jax.random.PRNGKey(0)
    k_p, k_enc, k_dec = jax.random.split(key, 3)
    params = init_params(k_p, cfg)
    encoder_inputs = jax.random.normal(
        k_enc, (B, T_enc, cfg["encoder_dim"]), jnp.float32)
    decoder_inputs = jax.random.randint(
        k_dec, (B, max_len), 3, cfg["label_dim"], jnp.int32)

    # glue (matches the PyTorch forward): sos prepend + embedding lookup,
    # time-major, drop the last teacher token.  Gather + batch padding stay
    # in XLA; the kernel runs at the padded batch Bp.
    ids = jnp.concatenate(
        [jnp.full((B, 1), cfg["sos_id"], jnp.int32), decoder_inputs], axis=1)
    ids_p = jnp.pad(ids, ((0, Bp - B), (0, 0)))                 # pad_id rows
    enc_p = jnp.pad(encoder_inputs, ((0, Bp - B), (0, 0), (0, 0)))
    emb_p = params["embedding"][ids_p]                          # (Bp, max_len+1, E)
    emb_tmajor = jnp.transpose(emb_p, (1, 0, 2))[:max_len].astype(jnp.bfloat16)

    fwd = build_pallas_forward(cfg, Bp, T_enc, max_len)
    kw = to_kernel_weights(params, cfg, T_enc)
    mem3 = processed_memory(params, enc_p, cfg)                 # (Bp, T, A) f32

    out_full = fwd(emb_tmajor, enc_p.astype(jnp.bfloat16), mem3, kw)
    out_full = jax.block_until_ready(out_full)                  # (Bp, max_len, L)
    out = out_full[:B]

    ref = reference_forward(params, encoder_inputs, decoder_inputs, cfg)
    ref = jax.block_until_ready(ref)

    assert out.shape == (B, max_len, cfg["label_dim"])
    # bf16 MXU operands + EUP approx reciprocal => relaxed tolerance vs the
    # f32/HIGHEST reference (keep an f32 debug path for bit-close checks).
    err = float(jnp.max(jnp.abs(out - ref)))
    assert err < 5e-2, f"max abs err {err}"
    print("KERNEL_OK")
</pallas_src>

<mosaic_0001>
module attributes {stable_mosaic.version = 11 : i64} {
  func.func @kernel(%arg0: i32, %arg1: memref<6x8x8xbf16, #tpu.memory_space<vmem>>, %arg2: memref<8x8x32xbf16, #tpu.memory_space<vmem>>, %arg3: memref<8x8x16xf32, #tpu.memory_space<vmem>>, %arg4: memref<8x128xbf16, #tpu.memory_space<vmem>>, %arg5: memref<32x128xbf16, #tpu.memory_space<vmem>>, %arg6: memref<32x128xbf16, #tpu.memory_space<vmem>>, %arg7: memref<32x128xbf16, #tpu.memory_space<vmem>>, %arg8: memref<1x128xf32, #tpu.memory_space<vmem>>, %arg9: memref<1x128xf32, #tpu.memory_space<vmem>>, %arg10: memref<32x16xbf16, #tpu.memory_space<vmem>>, %arg11: memref<8x24xbf16, #tpu.memory_space<vmem>>, %arg12: memref<3x1x1x16xf32, #tpu.memory_space<vmem>>, %arg13: memref<3x1x1x16xf32, #tpu.memory_space<vmem>>, %arg14: memref<1x1x16xf32, #tpu.memory_space<vmem>>, %arg15: memref<32x128xbf16, #tpu.memory_space<vmem>>, %arg16: memref<32x16xbf16, #tpu.memory_space<vmem>>, %arg17: memref<48x16xf32, #tpu.memory_space<vmem>>, %arg18: memref<48x32xf32, #tpu.memory_space<vmem>>) attributes {dimension_semantics = [#tpu.dimension_semantics<arbitrary>], iteration_bounds = array<i64: 1>, scalar_prefetch = 0 : i64, scratch_operands = 1 : i64, tpu.core_type = #tpu.core_type<tc>, window_params = [{pipeline_mode = #tpu.pipeline_mode<synchronous>, transform_indices = @transform_0, window_bounds = array<i64: 6, 8, 8>}, {pipeline_mode = #tpu.pipeline_mode<synchronous>, transform_indices = @transform_1, window_bounds = array<i64: 8, 8, 32>}, {pipeline_mode = #tpu.pipeline_mode<synchronous>, transform_indices = @transform_2, window_bounds = array<i64: 8, 8, 16>}, {pipeline_mode = #tpu.pipeline_mode<synchronous>, transform_indices = @transform_3, window_bounds = array<i64: 8, 128>}, {pipeline_mode = #tpu.pipeline_mode<synchronous>, transform_indices = @transform_4, window_bounds = array<i64: 32, 128>}, {pipeline_mode = #tpu.pipeline_mode<synchronous>, transform_indices = @transform_5, window_bounds = array<i64: 32, 128>}, {pipeline_mode = #tpu.pipeline_mode<synchronous>, transform_indices = @transform_6, window_bounds = array<i64: 32, 128>}, {pipeline_mode = #tpu.pipeline_mode<synchronous>, transform_indices = @transform_7, window_bounds = array<i64: 1, 128>}, {pipeline_mode = #tpu.pipeline_mode<synchronous>, transform_indices = @transform_8, window_bounds = array<i64: 1, 128>}, {pipeline_mode = #tpu.pipeline_mode<synchronous>, transform_indices = @transform_9, window_bounds = array<i64: 32, 16>}, {pipeline_mode = #tpu.pipeline_mode<synchronous>, transform_indices = @transform_10, window_bounds = array<i64: 8, 24>}, {pipeline_mode = #tpu.pipeline_mode<synchronous>, transform_indices = @transform_11, window_bounds = array<i64: 3, 1, 1, 16>}, {pipeline_mode = #tpu.pipeline_mode<synchronous>, transform_indices = @transform_12, window_bounds = array<i64: 3, 1, 1, 16>}, {pipeline_mode = #tpu.pipeline_mode<synchronous>, transform_indices = @transform_13, window_bounds = array<i64: 1, 1, 16>}, {pipeline_mode = #tpu.pipeline_mode<synchronous>, transform_indices = @transform_14, window_bounds = array<i64: 32, 128>}, {pipeline_mode = #tpu.pipeline_mode<synchronous>, transform_indices = @transform_15, window_bounds = array<i64: 32, 16>}, {pipeline_mode = #tpu.pipeline_mode<synchronous>, transform_indices = @transform_16, window_bounds = array<i64: 48, 16>}]} {
    %c0 = arith.constant 0 : index
    %c0_0 = arith.constant 0 : index
    %c0_1 = arith.constant 0 : index
    %0 = vector.load %arg2[%c0, %c0_0, %c0_1] : memref<8x8x32xbf16, #tpu.memory_space<vmem>>, vector<8x8x32xbf16>
    %c0_2 = arith.constant 0 : index
    %c0_3 = arith.constant 0 : index
    %c0_4 = arith.constant 0 : index
    %1 = vector.load %arg3[%c0_2, %c0_3, %c0_4] : memref<8x8x16xf32, #tpu.memory_space<vmem>>, vector<8x8x16xf32>
    %c0_5 = arith.constant 0 : index
    %c0_6 = arith.constant 0 : index
    %2 = vector.load %arg4[%c0_5, %c0_6] : memref<8x128xbf16, #tpu.memory_space<vmem>>, vector<8x128xbf16>
    %c0_7 = arith.constant 0 : index
    %c0_8 = arith.constant 0 : index
    %3 = vector.load %arg5[%c0_7, %c0_8] : memref<32x128xbf16, #tpu.memory_space<vmem>>, vector<32x128xbf16>
    %c0_9 = arith.constant 0 : index
    %c0_10 = arith.constant 0 : index
    %4 = vector.load %arg6[%c0_9, %c0_10] : memref<32x128xbf16, #tpu.memory_space<vmem>>, vector<32x128xbf16>
    %c0_11 = arith.constant 0 : index
    %c0_12 = arith.constant 0 : index
    %5 = vector.load %arg7[%c0_11, %c0_12] : memref<32x128xbf16, #tpu.memory_space<vmem>>, vector<32x128xbf16>
    %c0_13 = arith.constant 0 : index
    %c0_14 = arith.constant 0 : index
    %6 = vector.load %arg8[%c0_13, %c0_14] : memref<1x128xf32, #tpu.memory_space<vmem>>, vector<1x128xf32>
    %7 = vector.shape_cast %6 : vector<1x128xf32> to vector<1x128xf32>
    %8 = vector.broadcast %7 : vector<1x128xf32> to vector<8x128xf32>
    %c0_15 = arith.constant 0 : index
    %c0_16 = arith.constant 0 : index
    %9 = vector.load %arg9[%c0_15, %c0_16] : memref<1x128xf32, #tpu.memory_space<vmem>>, vector<1x128xf32>
    %10 = vector.shape_cast %9 : vector<1x128xf32> to vector<1x128xf32>
    %11 = vector.broadcast %10 : vector<1x128xf32> to vector<8x128xf32>
    %c0_17 = arith.constant 0 : index
    %c0_18 = arith.constant 0 : index
    %12 = vector.load %arg10[%c0_17, %c0_18] : memref<32x16xbf16, #tpu.memory_space<vmem>>, vector<32x16xbf16>
    %c0_19 = arith.constant 0 : index
    %c0_20 = arith.constant 0 : index
    %13 = vector.load %arg11[%c0_19, %c0_20] : memref<8x24xbf16, #tpu.memory_space<vmem>>, vector<8x24xbf16>
    %c0_21 = arith.constant 0 : index
    %c0_22 = arith.constant 0 : index
    %c0_23 = arith.constant 0 : index
    %c0_24 = arith.constant 0 : index
    %14 = vector.load %arg12[%c0_21, %c0_22, %c0_23, %c0_24] : memref<3x1x1x16xf32, #tpu.memory_space<vmem>>, vector<3x1x1x16xf32>
    %c0_25 = arith.constant 0 : index
    %c0_26 = arith.constant 0 : index
    %c0_27 = arith.constant 0 : index
    %c0_28 = arith.constant 0 : index
    %15 = vector.load %arg13[%c0_25, %c0_26, %c0_27, %c0_28] : memref<3x1x1x16xf32, #tpu.memory_space<vmem>>, vector<3x1x1x16xf32>
    %c0_29 = arith.constant 0 : index
    %c0_30 = arith.constant 0 : index
    %c0_31 = arith.constant 0 : index
    %16 = vector.load %arg14[%c0_29, %c0_30, %c0_31] : memref<1x1x16xf32, #tpu.memory_space<vmem>>, vector<1x1x16xf32>
    %c0_32 = arith.constant 0 : index
    %c0_33 = arith.constant 0 : index
    %17 = vector.load %arg15[%c0_32, %c0_33] : memref<32x128xbf16, #tpu.memory_space<vmem>>, vector<32x128xbf16>
    %c0_34 = arith.constant 0 : index
    %c0_35 = arith.constant 0 : index
    %18 = vector.load %arg16[%c0_34, %c0_35] : memref<32x16xbf16, #tpu.memory_space<vmem>>, vector<32x16xbf16>
    %cst = arith.constant 0.000000e+00 : f32
    %19 = vector.broadcast %cst : f32 to vector<8x32xf32>
    %cst_36 = arith.constant 0.000000e+00 : f32
    %20 = vector.broadcast %cst_36 : f32 to vector<8x32xf32>
    %cst_37 = arith.constant 0.000000e+00 : f32
    %21 = vector.broadcast %cst_37 : f32 to vector<8x32xf32>
    %cst_38 = arith.constant 0.000000e+00 : f32
    %22 = vector.broadcast %cst_38 : f32 to vector<8x32xf32>
    %cst_39 = arith.constant 0.000000e+00 : f32
    %23 = vector.broadcast %cst_39 : f32 to vector<8x32xf32>
    %cst_40 = arith.constant 0.000000e+00 : f32
    %24 = vector.broadcast %cst_40 : f32 to vector<8x8xf32>
    %cst_41 = arith.constant 0.000000e+00 : f32
    %25 = vector.broadcast %cst_41 : f32 to vector<8x8xf32>
    %c0_42 = arith.constant 0 : index
    %c0_43 = arith.constant 0 : index
    %c0_44 = arith.constant 0 : index
    %26 = vector.load %arg1[%c0_42, %c0_43, %c0_44] : memref<6x8x8xbf16, #tpu.memory_space<vmem>>, vector<1x8x8xbf16>
    %27 = vector.shape_cast %26 : vector<1x8x8xbf16> to vector<8x8xbf16>
    %28 = arith.truncf %19 : vector<8x32xf32> to vector<8x32xbf16>
    %cst_45 = arith.constant dense<0.000000e+00> : vector<8x128xf32>
    %29 = tpu.matmul %28, %4, %cst_45 {dimension_numbers = #tpu.dot_dimension_numbers<[1], [0], [0], [1], [0, 0, 1, 1], [], []>} : vector<8x32xbf16>, vector<32x128xbf16>, vector<8x128xf32> -> vector<8x128xf32>
    %30 = arith.truncf %21 : vector<8x32xf32> to vector<8x32xbf16>
    %cst_46 = arith.constant dense<0.000000e+00> : vector<8x128xf32>
    %31 = tpu.matmul %30, %5, %cst_46 {dimension_numbers = #tpu.dot_dimension_numbers<[1], [0], [0], [1], [0, 0, 1, 1], [], []>} : vector<8x32xbf16>, vector<32x128xbf16>, vector<8x128xf32> -> vector<8x128xf32>
    %cst_47 = arith.constant dense<0.000000e+00> : vector<8x128xf32>
    %32 = tpu.matmul %27, %2, %cst_47 {dimension_numbers = #tpu.dot_dimension_numbers<[1], [0], [0], [1], [0, 0, 1, 1], [], []>} : vector<8x8xbf16>, vector<8x128xbf16>, vector<8x128xf32> -> vector<8x128xf32>
    %33 = arith.truncf %23 : vector<8x32xf32> to vector<8x32xbf16>
    %cst_48 = arith.constant dense<0.000000e+00> : vector<8x128xf32>
    %34 = tpu.matmul %33, %3, %cst_48 {dimension_numbers = #tpu.dot_dimension_numbers<[1], [0], [0], [1], [0, 0, 1, 1], [], []>} : vector<8x32xbf16>, vector<32x128xbf16>, vector<8x128xf32> -> vector<8x128xf32>
    %35 = arith.addf %32, %34 : vector<8x128xf32>
    %36 = arith.addf %35, %29 : vector<8x128xf32>
    %37 = arith.addf %36, %8 : vector<8x128xf32>
    %38 = vector.extract_strided_slice %37 {offsets = [0, 0], sizes = [8, 32], strides = [1, 1]} : vector<8x128xf32> to vector<8x32xf32>
    %39 = arith.negf %38 : vector<8x32xf32>
    %40 = math.exp %39 : vector<8x32xf32>
    %cst_49 = arith.constant 1.000000e+00 : f32
    %41 = vector.broadcast %cst_49 : f32 to vector<8x32xf32>
    %42 = arith.addf %41, %40 : vector<8x32xf32>
    %43 = arith.divf %41, %42 : vector<8x32xf32>
    %44 = vector.extract_strided_slice %37 {offsets = [0, 32], sizes = [8, 32], strides = [1, 1]} : vector<8x128xf32> to vector<8x32xf32>
    %45 = arith.negf %44 : vector<8x32xf32>
    %46 = math.exp %45 : vector<8x32xf32>
    %cst_50 = arith.constant 1.000000e+00 : f32
    %47 = vector.broadcast %cst_50 : f32 to vector<8x32xf32>
    %48 = arith.addf %47, %46 : vector<8x32xf32>
    %49 = arith.divf %47, %48 : vector<8x32xf32>
    %50 = vector.extract_strided_slice %37 {offsets = [0, 64], sizes = [8, 32], strides = [1, 1]} : vector<8x128xf32> to vector<8x32xf32>
    %51 = math.tanh %50 : vector<8x32xf32>
    %52 = vector.extract_strided_slice %37 {offsets = [0, 96], sizes = [8, 32], strides = [1, 1]} : vector<8x128xf32> to vector<8x32xf32>
    %53 = arith.negf %52 : vector<8x32xf32>
    %54 = math.exp %53 : vector<8x32xf32>
    %cst_51 = arith.constant 1.000000e+00 : f32
    %55 = vector.broadcast %cst_51 : f32 to vector<8x32xf32>
    %56 = arith.addf %55, %54 : vector<8x32xf32>
    %57 = arith.divf %55, %56 : vector<8x32xf32>
    %58 = arith.mulf %49, %20 : vector<8x32xf32>
    %59 = arith.mulf %43, %51 : vector<8x32xf32>
    %60 = arith.addf %58, %59 : vector<8x32xf32>
    %61 = math.tanh %60 : vector<8x32xf32>
    %62 = arith.mulf %57, %61 : vector<8x32xf32>
    %63 = arith.truncf %62 : vector<8x32xf32> to vector<8x32xbf16>
    %cst_52 = arith.constant dense<0.000000e+00> : vector<8x16xf32>
    %64 = tpu.matmul %63, %12, %cst_52 {dimension_numbers = #tpu.dot_dimension_numbers<[1], [0], [0], [1], [0, 0, 1, 1], [], []>} : vector<8x32xbf16>, vector<32x16xbf16>, vector<8x16xf32> -> vector<8x16xf32>
    %65 = arith.truncf %24 : vector<8x8xf32> to vector<8x8xbf16>
    %cst_53 = arith.constant dense<0.000000e+00> : vector<8x24xf32>
    %66 = tpu.matmul %65, %13, %cst_53 {dimension_numbers = #tpu.dot_dimension_numbers<[1], [0], [0], [1], [0, 0, 1, 1], [], []>} : vector<8x8xbf16>, vector<8x24xbf16>, vector<8x24xf32> -> vector<8x24xf32>
    %67 = arith.truncf %25 : vector<8x8xf32> to vector<8x8xbf16>
    %cst_54 = arith.constant dense<0.000000e+00> : vector<8x24xf32>
    %68 = tpu.matmul %67, %13, %cst_54 {dimension_numbers = #tpu.dot_dimension_numbers<[1], [0], [0], [1], [0, 0, 1, 1], [], []>} : vector<8x8xbf16>, vector<8x24xbf16>, vector<8x24xf32> -> vector<8x24xf32>
    %69 = vector.shape_cast %64 : vector<8x16xf32> to vector<8x1x16xf32>
    %70 = vector.broadcast %69 : vector<8x1x16xf32> to vector<8x8x16xf32>
    %71 = arith.addf %1, %70 : vector<8x8x16xf32>
    %72 = vector.extract_strided_slice %66 {offsets = [0, 0], sizes = [8, 8], strides = [1, 1]} : vector<8x24xf32> to vector<8x8xf32>
    %73 = vector.shape_cast %72 : vector<8x8xf32> to vector<8x8x1xf32>
    %74 = vector.extract_strided_slice %14 {offsets = [0, 0, 0, 0], sizes = [1, 1, 1, 16], strides = [1, 1, 1, 1]} : vector<3x1x1x16xf32> to vector<1x1x1x16xf32>
    %75 = vector.shape_cast %74 : vector<1x1x1x16xf32> to vector<1x1x16xf32>
    %76 = vector.broadcast %73 : vector<8x8x1xf32> to vector<8x8x16xf32>
    %77 = vector.broadcast %75 : vector<1x1x16xf32> to vector<8x8x16xf32>
    %78 = arith.mulf %76, %77 : vector<8x8x16xf32>
    %79 = arith.addf %71, %78 : vector<8x8x16xf32>
    %80 = vector.extract_strided_slice %68 {offsets = [0, 0], sizes = [8, 8], strides = [1, 1]} : vector<8x24xf32> to vector<8x8xf32>
    %81 = vector.shape_cast %80 : vector<8x8xf32> to vector<8x8x1xf32>
    %82 = vector.extract_strided_slice %15 {offsets = [0, 0, 0, 0], sizes = [1, 1, 1, 16], strides = [1, 1, 1, 1]} : vector<3x1x1x16xf32> to vector<1x1x1x16xf32>
    %83 = vector.shape_cast %82 : vector<1x1x1x16xf32> to vector<1x1x16xf32>
    %84 = vector.broadcast %81 : vector<8x8x1xf32> to vector<8x8x16xf32>
    %85 = vector.broadcast %83 : vector<1x1x16xf32> to vector<8x8x16xf32>
    %86 = arith.mulf %84, %85 : vector<8x8x16xf32>
    %87 = arith.addf %79, %86 : vector<8x8x16xf32>
    %88 = vector.extract_strided_slice %66 {offsets = [0, 8], sizes = [8, 8], strides = [1, 1]} : vector<8x24xf32> to vector<8x8xf32>
    %89 = vector.shape_cast %88 : vector<8x8xf32> to vector<8x8x1xf32>
    %90 = vector.extract_strided_slice %14 {offsets = [1, 0, 0, 0], sizes = [1, 1, 1, 16], strides = [1, 1, 1, 1]} : vector<3x1x1x16xf32> to vector<1x1x1x16xf32>
    %91 = vector.shape_cast %90 : vector<1x1x1x16xf32> to vector<1x1x16xf32>
    %92 = vector.broadcast %89 : vector<8x8x1xf32> to vector<8x8x16xf32>
    %93 = vector.broadcast %91 : vector<1x1x16xf32> to vector<8x8x16xf32>
    %94 = arith.mulf %92, %93 : vector<8x8x16xf32>
    %95 = arith.addf %87, %94 : vector<8x8x16xf32>
    %96 = vector.extract_strided_slice %68 {offsets = [0, 8], sizes = [8, 8], strides = [1, 1]} : vector<8x24xf32> to vector<8x8xf32>
    %97 = vector.shape_cast %96 : vector<8x8xf32> to vector<8x8x1xf32>
    %98 = vector.extract_strided_slice %15 {offsets = [1, 0, 0, 0], sizes = [1, 1, 1, 16], strides = [1, 1, 1, 1]} : vector<3x1x1x16xf32> to vector<1x1x1x16xf32>
    %99 = vector.shape_cast %98 : vector<1x1x1x16xf32> to vector<1x1x16xf32>
    %100 = vector.broadcast %97 : vector<8x8x1xf32> to vector<8x8x16xf32>
    %101 = vector.broadcast %99 : vector<1x1x16xf32> to vector<8x8x16xf32>
    %102 = arith.mulf %100, %101 : vector<8x8x16xf32>
    %103 = arith.addf %95, %102 : vector<8x8x16xf32>
    %104 = vector.extract_strided_slice %66 {offsets = [0, 16], sizes = [8, 8], strides = [1, 1]} : vector<8x24xf32> to vector<8x8xf32>
    %105 = vector.shape_cast %104 : vector<8x8xf32> to vector<8x8x1xf32>
    %106 = vector.extract_strided_slice %14 {offsets = [2, 0, 0, 0], sizes = [1, 1, 1, 16], strides = [1, 1, 1, 1]} : vector<3x1x1x16xf32> to vector<1x1x1x16xf32>
    %107 = vector.shape_cast %106 : vector<1x1x1x16xf32> to vector<1x1x16xf32>
    %108 = vector.broadcast %105 : vector<8x8x1xf32> to vector<8x8x16xf32>
    %109 = vector.broadcast %107 : vector<1x1x16xf32> to vector<8x8x16xf32>
    %110 = arith.mulf %108, %109 : vector<8x8x16xf32>
    %111 = arith.addf %103, %110 : vector<8x8x16xf32>
    %112 = vector.extract_strided_slice %68 {offsets = [0, 16], sizes = [8, 8], strides = [1, 1]} : vector<8x24xf32> to vector<8x8xf32>
    %113 = vector.shape_cast %112 : vector<8x8xf32> to vector<8x8x1xf32>
    %114 = vector.extract_strided_slice %15 {offsets = [2, 0, 0, 0], sizes = [1, 1, 1, 16], strides = [1, 1, 1, 1]} : vector<3x1x1x16xf32> to vector<1x1x1x16xf32>
    %115 = vector.shape_cast %114 : vector<1x1x1x16xf32> to vector<1x1x16xf32>
    %116 = vector.broadcast %113 : vector<8x8x1xf32> to vector<8x8x16xf32>
    %117 = vector.broadcast %115 : vector<1x1x16xf32> to vector<8x8x16xf32>
    %118 = arith.mulf %116, %117 : vector<8x8x16xf32>
    %119 = arith.addf %111, %118 : vector<8x8x16xf32>
    %120 = math.tanh %119 : vector<8x8x16xf32>
    %121 = vector.broadcast %16 : vector<1x1x16xf32> to vector<8x8x16xf32>
    %122 = arith.mulf %120, %121 : vector<8x8x16xf32>
    %cst_55 = arith.constant dense<0.000000e+00> : vector<8x8xf32>
    %123 = vector.multi_reduction <add>, %122, %cst_55 [2] : vector<8x8x16xf32> to vector<8x8xf32>
    %cst_56 = arith.constant dense<0xFF800000> : vector<8xf32>
    %124 = vector.multi_reduction <maximumf>, %123, %cst_56 [1] : vector<8x8xf32> to vector<8xf32>
    %125 = vector.shape_cast %124 : vector<8xf32> to vector<8x1xf32>
    %126 = vector.broadcast %125 : vector<8x1xf32> to vector<8x8xf32>
    %127 = arith.subf %123, %126 : vector<8x8xf32>
    %128 = math.exp %127 : vector<8x8xf32>
    %cst_57 = arith.constant dense<0.000000e+00> : vector<8xf32>
    %129 = vector.multi_reduction <add>, %128, %cst_57 [1] : vector<8x8xf32> to vector<8xf32>
    %130 = vector.shape_cast %129 : vector<8xf32> to vector<8x1xf32>
    %131 = tpu.reciprocal %130 {approx = true} : vector<8x1xf32> -> vector<8x1xf32>
    %132 = vector.broadcast %131 : vector<8x1xf32> to vector<8x8xf32>
    %133 = arith.mulf %128, %132 : vector<8x8xf32>
    %134 = vector.shape_cast %133 : vector<8x8xf32> to vector<8x1x8xf32>
    %135 = arith.truncf %134 : vector<8x1x8xf32> to vector<8x1x8xbf16>
    "tpu.trace_start"() <{level = 10 : i32, message = "bqt,btd->bqd"}> : () -> ()
    %cst_58 = arith.constant dense<0.000000e+00> : vector<8x1x32xf32>
    %136 = tpu.matmul %135, %0, %cst_58 {dimension_numbers = #tpu.dot_dimension_numbers<[2], [1], [1], [2], [0, 0, 0, 1, 1, 2], [0], [0]>} : vector<8x1x8xbf16>, vector<8x8x32xbf16>, vector<8x1x32xf32> -> vector<8x1x32xf32>
    "tpu.trace_stop"() : () -> ()
    %137 = vector.shape_cast %136 : vector<8x1x32xf32> to vector<8x32xf32>
    %138 = arith.addf %25, %133 : vector<8x8xf32>
    %139 = arith.truncf %137 : vector<8x32xf32> to vector<8x32xbf16>
    %cst_59 = arith.constant dense<0.000000e+00> : vector<8x128xf32>
    %140 = tpu.matmul %139, %17, %cst_59 {dimension_numbers = #tpu.dot_dimension_numbers<[1], [0], [0], [1], [0, 0, 1, 1], [], []>} : vector<8x32xbf16>, vector<32x128xbf16>, vector<8x128xf32> -> vector<8x128xf32>
    %141 = arith.addf %140, %31 : vector<8x128xf32>
    %142 = arith.addf %141, %11 : vector<8x128xf32>
    %143 = vector.extract_strided_slice %142 {offsets = [0, 0], sizes = [8, 32], strides = [1, 1]} : vector<8x128xf32> to vector<8x32xf32>
    %144 = arith.negf %143 : vector<8x32xf32>
    %145 = math.exp %144 : vector<8x32xf32>
    %cst_60 = arith.constant 1.000000e+00 : f32
    %146 = vector.broadcast %cst_60 : f32 to vector<8x32xf32>
    %147 = arith.addf %146, %145 : vector<8x32xf32>
    %148 = arith.divf %146, %147 : vector<8x32xf32>
    %149 = vector.extract_strided_slice %142 {offsets = [0, 32], sizes = [8, 32], strides = [1, 1]} : vector<8x128xf32> to vector<8x32xf32>
    %150 = arith.negf %149 : vector<8x32xf32>
    %151 = math.exp %150 : vector<8x32xf32>
    %cst_61 = arith.constant 1.000000e+00 : f32
    %152 = vector.broadcast %cst_61 : f32 to vector<8x32xf32>
    %153 = arith.addf %152, %151 : vector<8x32xf32>
    %154 = arith.divf %152, %153 : vector<8x32xf32>
    %155 = vector.extract_strided_slice %142 {offsets = [0, 64], sizes = [8, 32], strides = [1, 1]} : vector<8x128xf32> to vector<8x32xf32>
    %156 = math.tanh %155 : vector<8x32xf32>
    %157 = vector.extract_strided_slice %142 {offsets = [0, 96], sizes = [8, 32], strides = [1, 1]} : vector<8x128xf32> to vector<8x32xf32>
    %158 = arith.negf %157 : vector<8x32xf32>
    %159 = math.exp %158 : vector<8x32xf32>
    %cst_62 = arith.constant 1.000000e+00 : f32
    %160 = vector.broadcast %cst_62 : f32 to vector<8x32xf32>
    %161 = arith.addf %160, %159 : vector<8x32xf32>
    %162 = arith.divf %160, %161 : vector<8x32xf32>
    %163 = arith.mulf %154, %22 : vector<8x32xf32>
    %164 = arith.mulf %148, %156 : vector<8x32xf32>
    %165 = arith.addf %163, %164 : vector<8x32xf32>
    %166 = math.tanh %165 : vector<8x32xf32>
    %167 = arith.mulf %162, %166 : vector<8x32xf32>
    %c0_63 = arith.constant 0 : index
    %c0_64 = arith.constant 0 : index
    %168 = vector.load %arg18[%c0_63, %c0_64] : memref<48x32xf32, #tpu.memory_space<vmem>>, vector<8x32xf32>
    tpu.vector_store %arg18[%c0_63, %c0_64], %167 {strides = array<i32>} : memref<48x32xf32, #tpu.memory_space<vmem>>, vector<8x32xf32>,
    %c1 = arith.constant 1 : index
    %c0_65 = arith.constant 0 : index
    %c0_66 = arith.constant 0 : index
    %169 = vector.load %arg1[%c1, %c0_65, %c0_66] : memref<6x8x8xbf16, #tpu.memory_space<vmem>>, vector<1x8x8xbf16>
    %170 = vector.shape_cast %169 : vector<1x8x8xbf16> to vector<8x8xbf16>
    %171 = arith.truncf %62 : vector<8x32xf32> to vector<8x32xbf16>
    %cst_67 = arith.constant dense<0.000000e+00> : vector<8x128xf32>
    %172 = tpu.matmul %171, %4, %cst_67 {dimension_numbers = #tpu.dot_dimension_numbers<[1], [0], [0], [1], [0, 0, 1, 1], [], []>} : vector<8x32xbf16>, vector<32x128xbf16>, vector<8x128xf32> -> vector<8x128xf32>
    %173 = arith.truncf %167 : vector<8x32xf32> to vector<8x32xbf16>
    %cst_68 = arith.constant dense<0.000000e+00> : vector<8x128xf32>
    %174 = tpu.matmul %173, %5, %cst_68 {dimension_numbers = #tpu.dot_dimension_numbers<[1], [0], [0], [1], [0, 0, 1, 1], [], []>} : vector<8x32xbf16>, vector<32x128xbf16>, vector<8x128xf32> -> vector<8x128xf32>
    %cst_69 = arith.constant dense<0.000000e+00> : vector<8x128xf32>
    %175 = tpu.matmul %170, %2, %cst_69 {dimension_numbers = #tpu.dot_dimension_numbers<[1], [0], [0], [1], [0, 0, 1, 1], [], []>} : vector<8x8xbf16>, vector<8x128xbf16>, vector<8x128xf32> -> vector<8x128xf32>
    %176 = arith.truncf %137 : vector<8x32xf32> to vector<8x32xbf16>
    %cst_70 = arith.constant dense<0.000000e+00> : vector<8x128xf32>
    %177 = tpu.matmul %176, %3, %cst_70 {dimension_numbers = #tpu.dot_dimension_numbers<[1], [0], [0], [1], [0, 0, 1, 1], [], []>} : vector<8x32xbf16>, vector<32x128xbf16>, vector<8x128xf32> -> vector<8x128xf32>
    %178 = arith.addf %175, %177 : vector<8x128xf32>
    %179 = arith.addf %178, %172 : vector<8x128xf32>
    %180 = arith.addf %179, %8 : vector<8x128xf32>
    %181 = vector.extract_strided_slice %180 {offsets = [0, 0], sizes = [8, 32], strides = [1, 1]} : vector<8x128xf32> to vector<8x32xf32>
    %182 = arith.negf %181 : vector<8x32xf32>
    %183 = math.exp %182 : vector<8x32xf32>
    %cst_71 = arith.constant 1.000000e+00 : f32
    %184 = vector.broadcast %cst_71 : f32 to vector<8x32xf32>
    %185 = arith.addf %184, %183 : vector<8x32xf32>
    %186 = arith.divf %184, %185 : vector<8x32xf32>
    %187 = vector.extract_strided_slice %180 {offsets = [0, 32], sizes = [8, 32], strides = [1, 1]} : vector<8x128xf32> to vector<8x32xf32>
    %188 = arith.negf %187 : vector<8x32xf32>
    %189 = math.exp %188 : vector<8x32xf32>
    %cst_72 = arith.constant 1.000000e+00 : f32
    %190 = vector.broadcast %cst_72 : f32 to vector<8x32xf32>
    %191 = arith.addf %190, %189 : vector<8x32xf32>
    %192 = arith.divf %190, %191 : vector<8x32xf32>
    %193 = vector.extract_strided_slice %180 {offsets = [0, 64], sizes = [8, 32], strides = [1, 1]} : vector<8x128xf32> to vector<8x32xf32>
    %194 = math.tanh %193 : vector<8x32xf32>
    %195 = vector.extract_strided_slice %180 {offsets = [0, 96], sizes = [8, 32], strides = [1, 1]} : vector<8x128xf32> to vector<8x32xf32>
    %196 = arith.negf %195 : vector<8x32xf32>
    %197 = math.exp %196 : vector<8x32xf32>
    %cst_73 = arith.constant 1.000000e+00 : f32
    %198 = vector.broadcast %cst_73 : f32 to vector<8x32xf32>
    %199 = arith.addf %198, %197 : vector<8x32xf32>
    %200 = arith.divf %198, %199 : vector<8x32xf32>
    %201 = arith.mulf %192, %60 : vector<8x32xf32>
    %202 = arith.mulf %186, %194 : vector<8x32xf32>
    %203 = arith.addf %201, %202 : vector<8x32xf32>
    %204 = math.tanh %203 : vector<8x32xf32>
    %205 = arith.mulf %200, %204 : vector<8x32xf32>
    %206 = arith.truncf %205 : vector<8x32xf32> to vector<8x32xbf16>
    %cst_74 = arith.constant dense<0.000000e+00> : vector<8x16xf32>
    %207 = tpu.matmul %206, %12, %cst_74 {dimension_numbers = #tpu.dot_dimension_numbers<[1], [0], [0], [1], [0, 0, 1, 1], [], []>} : vector<8x32xbf16>, vector<32x16xbf16>, vector<8x16xf32> -> vector<8x16xf32>
    %208 = arith.truncf %133 : vector<8x8xf32> to vector<8x8xbf16>
    %cst_75 = arith.constant dense<0.000000e+00> : vector<8x24xf32>
    %209 = tpu.matmul %208, %13, %cst_75 {dimension_numbers = #tpu.dot_dimension_numbers<[1], [0], [0], [1], [0, 0, 1, 1], [], []>} : vector<8x8xbf16>, vector<8x24xbf16>, vector<8x24xf32> -> vector<8x24xf32>
    %210 = arith.truncf %138 : vector<8x8xf32> to vector<8x8xbf16>
    %cst_76 = arith.constant dense<0.000000e+00> : vector<8x24xf32>
    %211 = tpu.matmul %210, %13, %cst_76 {dimension_numbers = #tpu.dot_dimension_numbers<[1], [0], [0], [1], [0, 0, 1, 1], [], []>} : vector<8x8xbf16>, vector<8x24xbf16>, vector<8x24xf32> -> vector<8x24xf32>
    %212 = vector.shape_cast %207 : vector<8x16xf32> to vector<8x1x16xf32>
    %213 = vector.broadcast %212 : vector<8x1x16xf32> to vector<8x8x16xf32>
    %214 = arith.addf %1, %213 : vector<8x8x16xf32>
    %215 = vector.extract_strided_slice %209 {offsets = [0, 0], sizes = [8, 8], strides = [1, 1]} : vector<8x24xf32> to vector<8x8xf32>
    %216 = vector.shape_cast %215 : vector<8x8xf32> to vector<8x8x1xf32>
    %217 = vector.extract_strided_slice %14 {offsets = [0, 0, 0, 0], sizes = [1, 1, 1, 16], strides = [1, 1, 1, 1]} : vector<3x1x1x16xf32> to vector<1x1x1x16xf32>
    %218 = vector.shape_cast %217 : vector<1x1x1x16xf32> to vector<1x1x16xf32>
    %219 = vector.broadcast %216 : vector<8x8x1xf32> to vector<8x8x16xf32>
    %220 = vector.broadcast %218 : vector<1x1x16xf32> to vector<8x8x16xf32>
    %221 = arith.mulf %219, %220 : vector<8x8x16xf32>
    %222 = arith.addf %214, %221 : vector<8x8x16xf32>
    %223 = vector.extract_strided_slice %211 {offsets = [0, 0], sizes = [8, 8], strides = [1, 1]} : vector<8x24xf32> to vector<8x8xf32>
    %224 = vector.shape_cast %223 : vector<8x8xf32> to vector<8x8x1xf32>
    %225 = vector.extract_strided_slice %15 {offsets = [0, 0, 0, 0], sizes = [1, 1, 1, 16], strides = [1, 1, 1, 1]} : vector<3x1x1x16xf32> to vector<1x1x1x16xf32>
    %226 = vector.shape_cast %225 : vector<1x1x1x16xf32> to vector<1x1x16xf32>
    %227 = vector.broadcast %224 : vector<8x8x1xf32> to vector<8x8x16xf32>
    %228 = vector.broadcast %226 : vector<1x1x16xf32> to vector<8x8x16xf32>
    %229 = arith.mulf %227, %228 : vector<8x8x16xf32>
    %230 = arith.addf %222, %229 : vector<8x8x16xf32>
    %231 = vector.extract_strided_slice %209 {offsets = [0, 8], sizes = [8, 8], strides = [1, 1]} : vector<8x24xf32> to vector<8x8xf32>
    %232 = vector.shape_cast %231 : vector<8x8xf32> to vector<8x8x1xf32>
    %233 = vector.extract_strided_slice %14 {offsets = [1, 0, 0, 0], sizes = [1, 1, 1, 16], strides = [1, 1, 1, 1]} : vector<3x1x1x16xf32> to vector<1x1x1x16xf32>
    %234 = vector.shape_cast %233 : vector<1x1x1x16xf32> to vector<1x1x16xf32>
    %235 = vector.broadcast %232 : vector<8x8x1xf32> to vector<8x8x16xf32>
    %236 = vector.broadcast %234 : vector<1x1x16xf32> to vector<8x8x16xf32>
    %237 = arith.mulf %235, %236 : vector<8x8x16xf32>
    %238 = arith.addf %230, %237 : vector<8x8x16xf32>
    %239 = vector.extract_strided_slice %211 {offsets = [0, 8], sizes = [8, 8], strides = [1, 1]} : vector<8x24xf32> to vector<8x8xf32>
    %240 = vector.shape_cast %239 : vector<8x8xf32> to vector<8x8x1xf32>
    %241 = vector.extract_strided_slice %15 {offsets = [1, 0, 0, 0], sizes = [1, 1, 1, 16], strides = [1, 1, 1, 1]} : vector<3x1x1x16xf32> to vector<1x1x1x16xf32>
    %242 = vector.shape_cast %241 : vector<1x1x1x16xf32> to vector<1x1x16xf32>
    %243 = vector.broadcast %240 : vector<8x8x1xf32> to vector<8x8x16xf32>
    %244 = vector.broadcast %242 : vector<1x1x16xf32> to vector<8x8x16xf32>
    %245 = arith.mulf %243, %244 : vector<8x8x16xf32>
    %246 = arith.addf %238, %245 : vector<8x8x16xf32>
    %247 = vector.extract_strided_slice %209 {offsets = [0, 16], sizes = [8, 8], strides = [1, 1]} : vector<8x24xf32> to vector<8x8xf32>
    %248 = vector.shape_cast %247 : vector<8x8xf32> to vector<8x8x1xf32>
    %249 = vector.extract_strided_slice %14 {offsets = [2, 0, 0, 0], sizes = [1, 1, 1, 16], strides = [1, 1, 1, 1]} : vector<3x1x1x16xf32> to vector<1x1x1x16xf32>
    %250 = vector.shape_cast %249 : vector<1x1x1x16xf32> to vector<1x1x16xf32>
    %251 = vector.broadcast %248 : vector<8x8x1xf32> to vector<8x8x16xf32>
    %252 = vector.broadcast %250 : vector<1x1x16xf32> to vector<8x8x16xf32>
    %253 = arith.mulf %251, %252 : vector<8x8x16xf32>
    %254 = arith.addf %246, %253 : vector<8x8x16xf32>
    %255 = vector.extract_strided_slice %211 {offsets = [0, 16], sizes = [8, 8], strides = [1, 1]} : vector<8x24xf32> to vector<8x8xf32>
    %256 = vector.shape_cast %255 : vector<8x8xf32> to vector<8x8x1xf32>
    %257 = vector.extract_strided_slice %15 {offsets = [2, 0, 0, 0], sizes = [1, 1, 1, 16], strides = [1, 1, 1, 1]} : vector<3x1x1x16xf32> to vector<1x1x1x16xf32>
    %258 = vector.shape_cast %257 : vector<1x1x1x16xf32> to vector<1x1x16xf32>
    %259 = vector.broadcast %256 : vector<8x8x1xf32> to vector<8x8x16xf32>
    %260 = vector.broadcast %258 : vector<1x1x16xf32> to vector<8x8x16xf32>
    %261 = arith.mulf %259, %260 : vector<8x8x16xf32>
    %262 = arith.addf %254, %261 : vector<8x8x16xf32>
    %263 = math.tanh %262 : vector<8x8x16xf32>
    %264 = vector.broadcast %16 : vector<1x1x16xf32> to vector<8x8x16xf32>
    %265 = arith.mulf %263, %264 : vector<8x8x16xf32>
    %cst_77 = arith.constant dense<0.000000e+00> : vector<8x8xf32>
    %266 = vector.multi_reduction <add>, %265, %cst_77 [2] : vector<8x8x16xf32> to vector<8x8xf32>
    %cst_78 = arith.constant dense<0xFF800000> : vector<8xf32>
    %267 = vector.multi_reduction <maximumf>, %266, %cst_78 [1] : vector<8x8xf32> to vector<8xf32>
    %268 = vector.shape_cast %267 : vector<8xf32> to vector<8x1xf32>
    %269 = vector.broadcast %268 : vector<8x1xf32> to vector<8x8xf32>
    %270 = arith.subf %266, %269 : vector<8x8xf32>
    %271 = math.exp %270 : vector<8x8xf32>
    %cst_79 = arith.constant dense<0.000000e+00> : vector<8xf32>
    %272 = vector.multi_reduction <add>, %271, %cst_79 [1] : vector<8x8xf32> to vector<8xf32>
    %273 = vector.shape_cast %272 : vector<8xf32> to vector<8x1xf32>
    %274 = tpu.reciprocal %273 {approx = true} : vector<8x1xf32> -> vector<8x1xf32>
    %275 = vector.broadcast %274 : vector<8x1xf32> to vector<8x8xf32>
    %276 = arith.mulf %271, %275 : vector<8x8xf32>
    %277 = vector.shape_cast %276 : vector<8x8xf32> to vector<8x1x8xf32>
    %278 = arith.truncf %277 : vector<8x1x8xf32> to vector<8x1x8xbf16>
    "tpu.trace_start"() <{level = 10 : i32, message = "bqt,btd->bqd"}> : () -> ()
    %cst_80 = arith.constant dense<0.000000e+00> : vector<8x1x32xf32>
    %279 = tpu.matmul %278, %0, %cst_80 {dimension_numbers = #tpu.dot_dimension_numbers<[2], [1], [1], [2], [0, 0, 0, 1, 1, 2], [0], [0]>} : vector<8x1x8xbf16>, vector<8x8x32xbf16>, vector<8x1x32xf32> -> vector<8x1x32xf32>
    "tpu.trace_stop"() : () -> ()
    %280 = vector.shape_cast %279 : vector<8x1x32xf32> to vector<8x32xf32>
    %281 = arith.addf %138, %276 : vector<8x8xf32>
    %282 = arith.truncf %280 : vector<8x32xf32> to vector<8x32xbf16>
    %cst_81 = arith.constant dense<0.000000e+00> : vector<8x128xf32>
    %283 = tpu.matmul %282, %17, %cst_81 {dimension_numbers = #tpu.dot_dimension_numbers<[1], [0], [0], [1], [0, 0, 1, 1], [], []>} : vector<8x32xbf16>, vector<32x128xbf16>, vector<8x128xf32> -> vector<8x128xf32>
    %284 = arith.addf %283, %174 : vector<8x128xf32>
    %285 = arith.addf %284, %11 : vector<8x128xf32>
    %286 = vector.extract_strided_slice %285 {offsets = [0, 0], sizes = [8, 32], strides = [1, 1]} : vector<8x128xf32> to vector<8x32xf32>
    %287 = arith.negf %286 : vector<8x32xf32>
    %288 = math.exp %287 : vector<8x32xf32>
    %cst_82 = arith.constant 1.000000e+00 : f32
    %289 = vector.broadcast %cst_82 : f32 to vector<8x32xf32>
    %290 = arith.addf %289, %288 : vector<8x32xf32>
    %291 = arith.divf %289, %290 : vector<8x32xf32>
    %292 = vector.extract_strided_slice %285 {offsets = [0, 32], sizes = [8, 32], strides = [1, 1]} : vector<8x128xf32> to vector<8x32xf32>
    %293 = arith.negf %292 : vector<8x32xf32>
    %294 = math.exp %293 : vector<8x32xf32>
    %cst_83 = arith.constant 1.000000e+00 : f32
    %295 = vector.broadcast %cst_83 : f32 to vector<8x32xf32>
    %296 = arith.addf %295, %294 : vector<8x32xf32>
    %297 = arith.divf %295, %296 : vector<8x32xf32>
    %298 = vector.extract_strided_slice %285 {offsets = [0, 64], sizes = [8, 32], strides = [1, 1]} : vector<8x128xf32> to vector<8x32xf32>
    %299 = math.tanh %298 : vector<8x32xf32>
    %300 = vector.extract_strided_slice %285 {offsets = [0, 96], sizes = [8, 32], strides = [1, 1]} : vector<8x128xf32> to vector<8x32xf32>
    %301 = arith.negf %300 : vector<8x32xf32>
    %302 = math.exp %301 : vector<8x32xf32>
    %cst_84 = arith.constant 1.000000e+00 : f32
    %303 = vector.broadcast %cst_84 : f32 to vector<8x32xf32>
    %304 = arith.addf %303, %302 : vector<8x32xf32>
    %305 = arith.divf %303, %304 : vector<8x32xf32>
    %306 = arith.mulf %297, %165 : vector<8x32xf32>
    %307 = arith.mulf %291, %299 : vector<8x32xf32>
    %308 = arith.addf %306, %307 : vector<8x32xf32>
    %309 = math.tanh %308 : vector<8x32xf32>
    %310 = arith.mulf %305, %309 : vector<8x32xf32>
    %c8 = arith.constant 8 : index
    %c0_85 = arith.constant 0 : index
    %311 = vector.load %arg18[%c8, %c0_85] : memref<48x32xf32, #tpu.memory_space<vmem>>, vector<8x32xf32>
    tpu.vector_store %arg18[%c8, %c0_85], %310 {strides = array<i32>} : memref<48x32xf32, #tpu.memory_space<vmem>>, vector<8x32xf32>,
    %c2 = arith.constant 2 : index
    %c0_86 = arith.constant 0 : index
    %c0_87 = arith.constant 0 : index
    %312 = vector.load %arg1[%c2, %c0_86, %c0_87] : memref<6x8x8xbf16, #tpu.memory_space<vmem>>, vector<1x8x8xbf16>
    %313 = vector.shape_cast %312 : vector<1x8x8xbf16> to vector<8x8xbf16>
    %314 = arith.truncf %205 : vector<8x32xf32> to vector<8x32xbf16>
    %cst_88 = arith.constant dense<0.000000e+00> : vector<8x128xf32>
    %315 = tpu.matmul %314, %4, %cst_88 {dimension_numbers = #tpu.dot_dimension_numbers<[1], [0], [0], [1], [0, 0, 1, 1], [], []>} : vector<8x32xbf16>, vector<32x128xbf16>, vector<8x128xf32> -> vector<8x128xf32>
    %316 = arith.truncf %310 : vector<8x32xf32> to vector<8x32xbf16>
    %cst_89 = arith.constant dense<0.000000e+00> : vector<8x128xf32>
    %317 = tpu.matmul %316, %5, %cst_89 {dimension_numbers = #tpu.dot_dimension_numbers<[1], [0], [0], [1], [0, 0, 1, 1], [], []>} : vector<8x32xbf16>, vector<32x128xbf16>, vector<8x128xf32> -> vector<8x128xf32>
    %cst_90 = arith.constant dense<0.000000e+00> : vector<8x128xf32>
    %318 = tpu.matmul %313, %2, %cst_90 {dimension_numbers = #tpu.dot_dimension_numbers<[1], [0], [0], [1], [0, 0, 1, 1], [], []>} : vector<8x8xbf16>, vector<8x128xbf16>, vector<8x128xf32> -> vector<8x128xf32>
    %319 = arith.truncf %280 : vector<8x32xf32> to vector<8x32xbf16>
    %cst_91 = arith.constant dense<0.000000e+00> : vector<8x128xf32>
    %320 = tpu.matmul %319, %3, %cst_91 {dimension_numbers = #tpu.dot_dimension_numbers<[1], [0], [0], [1], [0, 0, 1, 1], [], []>} : vector<8x32xbf16>, vector<32x128xbf16>, vector<8x128xf32> -> vector<8x128xf32>
    %321 = arith.addf %318, %320 : vector<8x128xf32>
    %322 = arith.addf %321, %315 : vector<8x128xf32>
    %323 = arith.addf %322, %8 : vector<8x128xf32>
    %324 = vector.extract_strided_slice %323 {offsets = [0, 0], sizes = [8, 32], strides = [1, 1]} : vector<8x128xf32> to vector<8x32xf32>
    %325 = arith.negf %324 : vector<8x32xf32>
    %326 = math.exp %325 : vector<8x32xf32>
    %cst_92 = arith.constant 1.000000e+00 : f32
    %327 = vector.broadcast %cst_92 : f32 to vector<8x32xf32>
    %328 = arith.addf %327, %326 : vector<8x32xf32>
    %329 = arith.divf %327, %328 : vector<8x32xf32>
    %330 = vector.extract_strided_slice %323 {offsets = [0, 32], sizes = [8, 32], strides = [1, 1]} : vector<8x128xf32> to vector<8x32xf32>
    %331 = arith.negf %330 : vector<8x32xf32>
    %332 = math.exp %331 : vector<8x32xf32>
    %cst_93 = arith.constant 1.000000e+00 : f32
    %333 = vector.broadcast %cst_93 : f32 to vector<8x32xf32>
    %334 = arith.addf %333, %332 : vector<8x32xf32>
    %335 = arith.divf %333, %334 : vector<8x32xf32>
    %336 = vector.extract_strided_slice %323 {offsets = [0, 64], sizes = [8, 32], strides = [1, 1]} : vector<8x128xf32> to vector<8x32xf32>
    %337 = math.tanh %336 : vector<8x32xf32>
    %338 = vector.extract_strided_slice %323 {offsets = [0, 96], sizes = [8, 32], strides = [1, 1]} : vector<8x128xf32> to vector<8x32xf32>
    %339 = arith.negf %338 : vector<8x32xf32>
    %340 = math.exp %339 : vector<8x32xf32>
    %cst_94 = arith.constant 1.000000e+00 : f32
    %341 = vector.broadcast %cst_94 : f32 to vector<8x32xf32>
    %342 = arith.addf %341, %340 : vector<8x32xf32>
    %343 = arith.divf %341, %342 : vector<8x32xf32>
    %344 = arith.mulf %335, %203 : vector<8x32xf32>
    %345 = arith.mulf %329, %337 : vector<8x32xf32>
    %346 = arith.addf %344, %345 : vector<8x32xf32>
    %347 = math.tanh %346 : vector<8x32xf32>
    %348 = arith.mulf %343, %347 : vector<8x32xf32>
    %349 = arith.truncf %348 : vector<8x32xf32> to vector<8x32xbf16>
    %cst_95 = arith.constant dense<0.000000e+00> : vector<8x16xf32>
    %350 = tpu.matmul %349, %12, %cst_95 {dimension_numbers = #tpu.dot_dimension_numbers<[1], [0], [0], [1], [0, 0, 1, 1], [], []>} : vector<8x32xbf16>, vector<32x16xbf16>, vector<8x16xf32> -> vector<8x16xf32>
    %351 = arith.truncf %276 : vector<8x8xf32> to vector<8x8xbf16>
    %cst_96 = arith.constant dense<0.000000e+00> : vector<8x24xf32>
    %352 = tpu.matmul %351, %13, %cst_96 {dimension_numbers = #tpu.dot_dimension_numbers<[1], [0], [0], [1], [0, 0, 1, 1], [], []>} : vector<8x8xbf16>, vector<8x24xbf16>, vector<8x24xf32> -> vector<8x24xf32>
    %353 = arith.truncf %281 : vector<8x8xf32> to vector<8x8xbf16>
    %cst_97 = arith.constant dense<0.000000e+00> : vector<8x24xf32>
    %354 = tpu.matmul %353, %13, %cst_97 {dimension_numbers = #tpu.dot_dimension_numbers<[1], [0], [0], [1], [0, 0, 1, 1], [], []>} : vector<8x8xbf16>, vector<8x24xbf16>, vector<8x24xf32> -> vector<8x24xf32>
    %355 = vector.shape_cast %350 : vector<8x16xf32> to vector<8x1x16xf32>
    %356 = vector.broadcast %355 : vector<8x1x16xf32> to vector<8x8x16xf32>
    %357 = arith.addf %1, %356 : vector<8x8x16xf32>
    %358 = vector.extract_strided_slice %352 {offsets = [0, 0], sizes = [8, 8], strides = [1, 1]} : vector<8x24xf32> to vector<8x8xf32>
    %359 = vector.shape_cast %358 : vector<8x8xf32> to vector<8x8x1xf32>
    %360 = vector.extract_strided_slice %14 {offsets = [0, 0, 0, 0], sizes = [1, 1, 1, 16], strides = [1, 1, 1, 1]} : vector<3x1x1x16xf32> to vector<1x1x1x16xf32>
    %361 = vector.shape_cast %360 : vector<1x1x1x16xf32> to vector<1x1x16xf32>
    %362 = vector.broadcast %359 : vector<8x8x1xf32> to vector<8x8x16xf32>
    %363 = vector.broadcast %361 : vector<1x1x16xf32> to vector<8x8x16xf32>
    %364 = arith.mulf %362, %363 : vector<8x8x16xf32>
    %365 = arith.addf %357, %364 : vector<8x8x16xf32>
    %366 = vector.extract_strided_slice %354 {offsets = [0, 0], sizes = [8, 8], strides = [1, 1]} : vector<8x24xf32> to vector<8x8xf32>
    %367 = vector.shape_cast %366 : vector<8x8xf32> to vector<8x8x1xf32>
    %368 = vector.extract_strided_slice %15 {offsets = [0, 0, 0, 0], sizes = [1, 1, 1, 16], strides = [1, 1, 1, 1]} : vector<3x1x1x16xf32> to vector<1x1x1x16xf32>
    %369 = vector.shape_cast %368 : vector<1x1x1x16xf32> to vector<1x1x16xf32>
    %370 = vector.broadcast %367 : vector<8x8x1xf32> to vector<8x8x16xf32>
    %371 = vector.broadcast %369 : vector<1x1x16xf32> to vector<8x8x16xf32>
    %372 = arith.mulf %370, %371 : vector<8x8x16xf32>
    %373 = arith.addf %365, %372 : vector<8x8x16xf32>
    %374 = vector.extract_strided_slice %352 {offsets = [0, 8], sizes = [8, 8], strides = [1, 1]} : vector<8x24xf32> to vector<8x8xf32>
    %375 = vector.shape_cast %374 : vector<8x8xf32> to vector<8x8x1xf32>
    %376 = vector.extract_strided_slice %14 {offsets = [1, 0, 0, 0], sizes = [1, 1, 1, 16], strides = [1, 1, 1, 1]} : vector<3x1x1x16xf32> to vector<1x1x1x16xf32>
    %377 = vector.shape_cast %376 : vector<1x1x1x16xf32> to vector<1x1x16xf32>
    %378 = vector.broadcast %375 : vector<8x8x1xf32> to vector<8x8x16xf32>
    %379 = vector.broadcast %377 : vector<1x1x16xf32> to vector<8x8x16xf32>
    %380 = arith.mulf %378, %379 : vector<8x8x16xf32>
    %381 = arith.addf %373, %380 : vector<8x8x16xf32>
    %382 = vector.extract_strided_slice %354 {offsets = [0, 8], sizes = [8, 8], strides = [1, 1]} : vector<8x24xf32> to vector<8x8xf32>
    %383 = vector.shape_cast %382 : vector<8x8xf32> to vector<8x8x1xf32>
    %384 = vector.extract_strided_slice %15 {offsets = [1, 0, 0, 0], sizes = [1, 1, 1, 16], strides = [1, 1, 1, 1]} : vector<3x1x1x16xf32> to vector<1x1x1x16xf32>
    %385 = vector.shape_cast %384 : vector<1x1x1x16xf32> to vector<1x1x16xf32>
    %386 = vector.broadcast %383 : vector<8x8x1xf32> to vector<8x8x16xf32>
    %387 = vector.broadcast %385 : vector<1x1x16xf32> to vector<8x8x16xf32>
    %388 = arith.mulf %386, %387 : vector<8x8x16xf32>
    %389 = arith.addf %381, %388 : vector<8x8x16xf32>
    %390 = vector.extract_strided_slice %352 {offsets = [0, 16], sizes = [8, 8], strides = [1, 1]} : vector<8x24xf32> to vector<8x8xf32>
    %391 = vector.shape_cast %390 : vector<8x8xf32> to vector<8x8x1xf32>
    %392 = vector.extract_strided_slice %14 {offsets = [2, 0, 0, 0], sizes = [1, 1, 1, 16], strides = [1, 1, 1, 1]} : vector<3x1x1x16xf32> to vector<1x1x1x16xf32>
    %393 = vector.shape_cast %392 : vector<1x1x1x16xf32> to vector<1x1x16xf32>
    %394 = vector.broadcast %391 : vector<8x8x1xf32> to vector<8x8x16xf32>
    %395 = vector.broadcast %393 : vector<1x1x16xf32> to vector<8x8x16xf32>
    %396 = arith.mulf %394, %395 : vector<8x8x16xf32>
    %397 = arith.addf %389, %396 : vector<8x8x16xf32>
    %398 = vector.extract_strided_slice %354 {offsets = [0, 16], sizes = [8, 8], strides = [1, 1]} : vector<8x24xf32> to vector<8x8xf32>
    %399 = vector.shape_cast %398 : vector<8x8xf32> to vector<8x8x1xf32>
    %400 = vector.extract_strided_slice %15 {offsets = [2, 0, 0, 0], sizes = [1, 1, 1, 16], strides = [1, 1, 1, 1]} : vector<3x1x1x16xf32> to vector<1x1x1x16xf32>
    %401 = vector.shape_cast %400 : vector<1x1x1x16xf32> to vector<1x1x16xf32>
    %402 = vector.broadcast %399 : vector<8x8x1xf32> to vector<8x8x16xf32>
    %403 = vector.broadcast %401 : vector<1x1x16xf32> to vector<8x8x16xf32>
    %404 = arith.mulf %402, %403 : vector<8x8x16xf32>
    %405 = arith.addf %397, %404 : vector<8x8x16xf32>
    %406 = math.tanh %405 : vector<8x8x16xf32>
    %407 = vector.broadcast %16 : vector<1x1x16xf32> to vector<8x8x16xf32>
    %408 = arith.mulf %406, %407 : vector<8x8x16xf32>
    %cst_98 = arith.constant dense<0.000000e+00> : vector<8x8xf32>
    %409 = vector.multi_reduction <add>, %408, %cst_98 [2] : vector<8x8x16xf32> to vector<8x8xf32>
    %cst_99 = arith.constant dense<0xFF800000> : vector<8xf32>
    %410 = vector.multi_reduction <maximumf>, %409, %cst_99 [1] : vector<8x8xf32> to vector<8xf32>
    %411 = vector.shape_cast %410 : vector<8xf32> to vector<8x1xf32>
    %412 = vector.broadcast %411 : vector<8x1xf32> to vector<8x8xf32>
    %413 = arith.subf %409, %412 : vector<8x8xf32>
    %414 = math.exp %413 : vector<8x8xf32>
    %cst_100 = arith.constant dense<0.000000e+00> : vector<8xf32>
    %415 = vector.multi_reduction <add>, %414, %cst_100 [1] : vector<8x8xf32> to vector<8xf32>
    %416 = vector.shape_cast %415 : vector<8xf32> to vector<8x1xf32>
    %417 = tpu.reciprocal %416 {approx = true} : vector<8x1xf32> -> vector<8x1xf32>
    %418 = vector.broadcast %417 : vector<8x1xf32> to vector<8x8xf32>
    %419 = arith.mulf %414, %418 : vector<8x8xf32>
    %420 = vector.shape_cast %419 : vector<8x8xf32> to vector<8x1x8xf32>
    %421 = arith.truncf %420 : vector<8x1x8xf32> to vector<8x1x8xbf16>
    "tpu.trace_start"() <{level = 10 : i32, message = "bqt,btd->bqd"}> : () -> ()
    %cst_101 = arith.constant dense<0.000000e+00> : vector<8x1x32xf32>
    %422 = tpu.matmul %421, %0, %cst_101 {dimension_numbers = #tpu.dot_dimension_numbers<[2], [1], [1], [2], [0, 0, 0, 1, 1, 2], [0], [0]>} : vector<8x1x8xbf16>, vector<8x8x32xbf16>, vector<8x1x32xf32> -> vector<8x1x32xf32>
    "tpu.trace_stop"() : () -> ()
    %423 = vector.shape_cast %422 : vector<8x1x32xf32> to vector<8x32xf32>
    %424 = arith.addf %281, %419 : vector<8x8xf32>
    %425 = arith.truncf %423 : vector<8x32xf32> to vector<8x32xbf16>
    %cst_102 = arith.constant dense<0.000000e+00> : vector<8x128xf32>
    %426 = tpu.matmul %425, %17, %cst_102 {dimension_numbers = #tpu.dot_dimension_numbers<[1], [0], [0], [1], [0, 0, 1, 1], [], []>} : vector<8x32xbf16>, vector<32x128xbf16>, vector<8x128xf32> -> vector<8x128xf32>
    %427 = arith.addf %426, %317 : vector<8x128xf32>
    %428 = arith.addf %427, %11 : vector<8x128xf32>
    %429 = vector.extract_strided_slice %428 {offsets = [0, 0], sizes = [8, 32], strides = [1, 1]} : vector<8x128xf32> to vector<8x32xf32>
    %430 = arith.negf %429 : vector<8x32xf32>
    %431 = math.exp %430 : vector<8x32xf32>
    %cst_103 = arith.constant 1.000000e+00 : f32
    %432 = vector.broadcast %cst_103 : f32 to vector<8x32xf32>
    %433 = arith.addf %432, %431 : vector<8x32xf32>
    %434 = arith.divf %432, %433 : vector<8x32xf32>
    %435 = vector.extract_strided_slice %428 {offsets = [0, 32], sizes = [8, 32], strides = [1, 1]} : vector<8x128xf32> to vector<8x32xf32>
    %436 = arith.negf %435 : vector<8x32xf32>
    %437 = math.exp %436 : vector<8x32xf32>
    %cst_104 = arith.constant 1.000000e+00 : f32
    %438 = vector.broadcast %cst_104 : f32 to vector<8x32xf32>
    %439 = arith.addf %438, %437 : vector<8x32xf32>
    %440 = arith.divf %438, %439 : vector<8x32xf32>
    %441 = vector.extract_strided_slice %428 {offsets = [0, 64], sizes = [8, 32], strides = [1, 1]} : vector<8x128xf32> to vector<8x32xf32>
    %442 = math.tanh %441 : vector<8x32xf32>
    %443 = vector.extract_strided_slice %428 {offsets = [0, 96], sizes = [8, 32], strides = [1, 1]} : vector<8x128xf32> to vector<8x32xf32>
    %444 = arith.negf %443 : vector<8x32xf32>
    %445 = math.exp %444 : vector<8x32xf32>
    %cst_105 = arith.constant 1.000000e+00 : f32
    %446 = vector.broadcast %cst_105 : f32 to vector<8x32xf32>
    %447 = arith.addf %446, %445 : vector<8x32xf32>
    %448 = arith.divf %446, %447 : vector<8x32xf32>
    %449 = arith.mulf %440, %308 : vector<8x32xf32>
    %450 = arith.mulf %434, %442 : vector<8x32xf32>
    %451 = arith.addf %449, %450 : vector<8x32xf32>
    %452 = math.tanh %451 : vector<8x32xf32>
    %453 = arith.mulf %448, %452 : vector<8x32xf32>
    %c16 = arith.constant 16 : index
    %c0_106 = arith.constant 0 : index
    %454 = vector.load %arg18[%c16, %c0_106] : memref<48x32xf32, #tpu.memory_space<vmem>>, vector<8x32xf32>
    tpu.vector_store %arg18[%c16, %c0_106], %453 {strides = array<i32>} : memref<48x32xf32, #tpu.memory_space<vmem>>, vector<8x32xf32>,
    %c3 = arith.constant 3 : index
    %c0_107 = arith.constant 0 : index
    %c0_108 = arith.constant 0 : index
    %455 = vector.load %arg1[%c3, %c0_107, %c0_108] : memref<6x8x8xbf16, #tpu.memory_space<vmem>>, vector<1x8x8xbf16>
    %456 = vector.shape_cast %455 : vector<1x8x8xbf16> to vector<8x8xbf16>
    %457 = arith.truncf %348 : vector<8x32xf32> to vector<8x32xbf16>
    %cst_109 = arith.constant dense<0.000000e+00> : vector<8x128xf32>
    %458 = tpu.matmul %457, %4, %cst_109 {dimension_numbers = #tpu.dot_dimension_numbers<[1], [0], [0], [1], [0, 0, 1, 1], [], []>} : vector<8x32xbf16>, vector<32x128xbf16>, vector<8x128xf32> -> vector<8x128xf32>
    %459 = arith.truncf %453 : vector<8x32xf32> to vector<8x32xbf16>
    %cst_110 = arith.constant dense<0.000000e+00> : vector<8x128xf32>
    %460 = tpu.matmul %459, %5, %cst_110 {dimension_numbers = #tpu.dot_dimension_numbers<[1], [0], [0], [1], [0, 0, 1, 1], [], []>} : vector<8x32xbf16>, vector<32x128xbf16>, vector<8x128xf32> -> vector<8x128xf32>
    %cst_111 = arith.constant dense<0.000000e+00> : vector<8x128xf32>
    %461 = tpu.matmul %456, %2, %cst_111 {dimension_numbers = #tpu.dot_dimension_numbers<[1], [0], [0], [1], [0, 0, 1, 1], [], []>} : vector<8x8xbf16>, vector<8x128xbf16>, vector<8x128xf32> -> vector<8x128xf32>
    %462 = arith.truncf %423 : vector<8x32xf32> to vector<8x32xbf16>
    %cst_112 = arith.constant dense<0.000000e+00> : vector<8x128xf32>
    %463 = tpu.matmul %462, %3, %cst_112 {dimension_numbers = #tpu.dot_dimension_numbers<[1], [0], [0], [1], [0, 0, 1, 1], [], []>} : vector<8x32xbf16>, vector<32x128xbf16>, vector<8x128xf32> -> vector<8x128xf32>
    %464 = arith.addf %461, %463 : vector<8x128xf32>
    %465 = arith.addf %464, %458 : vector<8x128xf32>
    %466 = arith.addf %465, %8 : vector<8x128xf32>
    %467 = vector.extract_strided_slice %466 {offsets = [0, 0], sizes = [8, 32], strides = [1, 1]} : vector<8x128xf32> to vector<8x32xf32>
    %468 = arith.negf %467 : vector<8x32xf32>
    %469 = math.exp %468 : vector<8x32xf32>
    %cst_113 = arith.constant 1.000000e+00 : f32
    %470 = vector.broadcast %cst_113 : f32 to vector<8x32xf32>
    %471 = arith.addf %470, %469 : vector<8x32xf32>
    %472 = arith.divf %470, %471 : vector<8x32xf32>
    %473 = vector.extract_strided_slice %466 {offsets = [0, 32], sizes = [8, 32], strides = [1, 1]} : vector<8x128xf32> to vector<8x32xf32>
    %474 = arith.negf %473 : vector<8x32xf32>
    %475 = math.exp %474 : vector<8x32xf32>
    %cst_114 = arith.constant 1.000000e+00 : f32
    %476 = vector.broadcast %cst_114 : f32 to vector<8x32xf32>
    %477 = arith.addf %476, %475 : vector<8x32xf32>
    %478 = arith.divf %476, %477 : vector<8x32xf32>
    %479 = vector.extract_strided_slice %466 {offsets = [0, 64], sizes = [8, 32], strides = [1, 1]} : vector<8x128xf32> to vector<8x32xf32>
    %480 = math.tanh %479 : vector<8x32xf32>
    %481 = vector.extract_strided_slice %466 {offsets = [0, 96], sizes = [8, 32], strides = [1, 1]} : vector<8x128xf32> to vector<8x32xf32>
    %482 = arith.negf %481 : vector<8x32xf32>
    %483 = math.exp %482 : vector<8x32xf32>
    %cst_115 = arith.constant 1.000000e+00 : f32
    %484 = vector.broadcast %cst_115 : f32 to vector<8x32xf32>
    %485 = arith.addf %484, %483 : vector<8x32xf32>
    %486 = arith.divf %484, %485 : vector<8x32xf32>
    %487 = arith.mulf %478, %346 : vector<8x32xf32>
    %488 = arith.mulf %472, %480 : vector<8x32xf32>
    %489 = arith.addf %487, %488 : vector<8x32xf32>
    %490 = math.tanh %489 : vector<8x32xf32>
    %491 = arith.mulf %486, %490 : vector<8x32xf32>
    %492 = arith.truncf %491 : vector<8x32xf32> to vector<8x32xbf16>
    %cst_116 = arith.constant dense<0.000000e+00> : vector<8x16xf32>
    %493 = tpu.matmul %492, %12, %cst_116 {dimension_numbers = #tpu.dot_dimension_numbers<[1], [0], [0], [1], [0, 0, 1, 1], [], []>} : vector<8x32xbf16>, vector<32x16xbf16>, vector<8x16xf32> -> vector<8x16xf32>
    %494 = arith.truncf %419 : vector<8x8xf32> to vector<8x8xbf16>
    %cst_117 = arith.constant dense<0.000000e+00> : vector<8x24xf32>
    %495 = tpu.matmul %494, %13, %cst_117 {dimension_numbers = #tpu.dot_dimension_numbers<[1], [0], [0], [1], [0, 0, 1, 1], [], []>} : vector<8x8xbf16>, vector<8x24xbf16>, vector<8x24xf32> -> vector<8x24xf32>
    %496 = arith.truncf %424 : vector<8x8xf32> to vector<8x8xbf16>
    %cst_118 = arith.constant dense<0.000000e+00> : vector<8x24xf32>
    %497 = tpu.matmul %496, %13, %cst_118 {dimension_numbers = #tpu.dot_dimension_numbers<[1], [0], [0], [1], [0, 0, 1, 1], [], []>} : vector<8x8xbf16>, vector<8x24xbf16>, vector<8x24xf32> -> vector<8x24xf32>
    %498 = vector.shape_cast %493 : vector<8x16xf32> to vector<8x1x16xf32>
    %499 = vector.broadcast %498 : vector<8x1x16xf32> to vector<8x8x16xf32>
    %500 = arith.addf %1, %499 : vector<8x8x16xf32>
    %501 = vector.extract_strided_slice %495 {offsets = [0, 0], sizes = [8, 8], strides = [1, 1]} : vector<8x24xf32> to vector<8x8xf32>
    %502 = vector.shape_cast %501 : vector<8x8xf32> to vector<8x8x1xf32>
    %503 = vector.extract_strided_slice %14 {offsets = [0, 0, 0, 0], sizes = [1, 1, 1, 16], strides = [1, 1, 1, 1]} : vector<3x1x1x16xf32> to vector<1x1x1x16xf32>
    %504 = vector.shape_cast %503 : vector<1x1x1x16xf32> to vector<1x1x16xf32>
    %505 = vector.broadcast %502 : vector<8x8x1xf32> to vector<8x8x16xf32>
    %506 = vector.broadcast %504 : vector<1x1x16xf32> to vector<8x8x16xf32>
    %507 = arith.mulf %505, %506 : vector<8x8x16xf32>
    %508 = arith.addf %500, %507 : vector<8x8x16xf32>
    %509 = vector.extract_strided_slice %497 {offsets = [0, 0], sizes = [8, 8], strides = [1, 1]} : vector<8x24xf32> to vector<8x8xf32>
    %510 = vector.shape_cast %509 : vector<8x8xf32> to vector<8x8x1xf32>
    %511 = vector.extract_strided_slice %15 {offsets = [0, 0, 0, 0], sizes = [1, 1, 1, 16], strides = [1, 1, 1, 1]} : vector<3x1x1x16xf32> to vector<1x1x1x16xf32>
    %512 = vector.shape_cast %511 : vector<1x1x1x16xf32> to vector<1x1x16xf32>
    %513 = vector.broadcast %510 : vector<8x8x1xf32> to vector<8x8x16xf32>
    %514 = vector.broadcast %512 : vector<1x1x16xf32> to vector<8x8x16xf32>
    %515 = arith.mulf %513, %514 : vector<8x8x16xf32>
    %516 = arith.addf %508, %515 : vector<8x8x16xf32>
    %517 = vector.extract_strided_slice %495 {offsets = [0, 8], sizes = [8, 8], strides = [1, 1]} : vector<8x24xf32> to vector<8x8xf32>
    %518 = vector.shape_cast %517 : vector<8x8xf32> to vector<8x8x1xf32>
    %519 = vector.extract_strided_slice %14 {offsets = [1, 0, 0, 0], sizes = [1, 1, 1, 16], strides = [1, 1, 1, 1]} : vector<3x1x1x16xf32> to vector<1x1x1x16xf32>
    %520 = vector.shape_cast %519 : vector<1x1x1x16xf32> to vector<1x1x16xf32>
    %521 = vector.broadcast %518 : vector<8x8x1xf32> to vector<8x8x16xf32>
    %522 = vector.broadcast %520 : vector<1x1x16xf32> to vector<8x8x16xf32>
    %523 = arith.mulf %521, %522 : vector<8x8x16xf32>
    %524 = arith.addf %516, %523 : vector<8x8x16xf32>
    %525 = vector.extract_strided_slice %497 {offsets = [0, 8], sizes = [8, 8], strides = [1, 1]} : vector<8x24xf32> to vector<8x8xf32>
    %526 = vector.shape_cast %525 : vector<8x8xf32> to vector<8x8x1xf32>
    %527 = vector.extract_strided_slice %15 {offsets = [1, 0, 0, 0], sizes = [1, 1, 1, 16], strides = [1, 1, 1, 1]} : vector<3x1x1x16xf32> to vector<1x1x1x16xf32>
    %528 = vector.shape_cast %527 : vector<1x1x1x16xf32> to vector<1x1x16xf32>
    %529 = vector.broadcast %526 : vector<8x8x1xf32> to vector<8x8x16xf32>
    %530 = vector.broadcast %528 : vector<1x1x16xf32> to vector<8x8x16xf32>
    %531 = arith.mulf %529, %530 : vector<8x8x16xf32>
    %532 = arith.addf %524, %531 : vector<8x8x16xf32>
    %533 = vector.extract_strided_slice %495 {offsets = [0, 16], sizes = [8, 8], strides = [1, 1]} : vector<8x24xf32> to vector<8x8xf32>
    %534 = vector.shape_cast %533 : vector<8x8xf32> to vector<8x8x1xf32>
    %535 = vector.extract_strided_slice %14 {offsets = [2, 0, 0, 0], sizes = [1, 1, 1, 16], strides = [1, 1, 1, 1]} : vector<3x1x1x16xf32> to vector<1x1x1x16xf32>
    %536 = vector.shape_cast %535 : vector<1x1x1x16xf32> to vector<1x1x16xf32>
    %537 = vector.broadcast %534 : vector<8x8x1xf32> to vector<8x8x16xf32>
    %538 = vector.broadcast %536 : vector<1x1x16xf32> to vector<8x8x16xf32>
    %539 = arith.mulf %537, %538 : vector<8x8x16xf32>
    %540 = arith.addf %532, %539 : vector<8x8x16xf32>
    %541 = vector.extract_strided_slice %497 {offsets = [0, 16], sizes = [8, 8], strides = [1, 1]} : vector<8x24xf32> to vector<8x8xf32>
    %542 = vector.shape_cast %541 : vector<8x8xf32> to vector<8x8x1xf32>
    %543 = vector.extract_strided_slice %15 {offsets = [2, 0, 0, 0], sizes = [1, 1, 1, 16], strides = [1, 1, 1, 1]} : vector<3x1x1x16xf32> to vector<1x1x1x16xf32>
    %544 = vector.shape_cast %543 : vector<1x1x1x16xf32> to vector<1x1x16xf32>
    %545 = vector.broadcast %542 : vector<8x8x1xf32> to vector<8x8x16xf32>
    %546 = vector.broadcast %544 : vector<1x1x16xf32> to vector<8x8x16xf32>
    %547 = arith.mulf %545, %546 : vector<8x8x16xf32>
    %548 = arith.addf %540, %547 : vector<8x8x16xf32>
    %549 = math.tanh %548 : vector<8x8x16xf32>
    %550 = vector.broadcast %16 : vector<1x1x16xf32> to vector<8x8x16xf32>
    %551 = arith.mulf %549, %550 : vector<8x8x16xf32>
    %cst_119 = arith.constant dense<0.000000e+00> : vector<8x8xf32>
    %552 = vector.multi_reduction <add>, %551, %cst_119 [2] : vector<8x8x16xf32> to vector<8x8xf32>
    %cst_120 = arith.constant dense<0xFF800000> : vector<8xf32>
    %553 = vector.multi_reduction <maximumf>, %552, %cst_120 [1] : vector<8x8xf32> to vector<8xf32>
    %554 = vector.shape_cast %553 : vector<8xf32> to vector<8x1xf32>
    %555 = vector.broadcast %554 : vector<8x1xf32> to vector<8x8xf32>
    %556 = arith.subf %552, %555 : vector<8x8xf32>
    %557 = math.exp %556 : vector<8x8xf32>
    %cst_121 = arith.constant dense<0.000000e+00> : vector<8xf32>
    %558 = vector.multi_reduction <add>, %557, %cst_121 [1] : vector<8x8xf32> to vector<8xf32>
    %559 = vector.shape_cast %558 : vector<8xf32> to vector<8x1xf32>
    %560 = tpu.reciprocal %559 {approx = true} : vector<8x1xf32> -> vector<8x1xf32>
    %561 = vector.broadcast %560 : vector<8x1xf32> to vector<8x8xf32>
    %562 = arith.mulf %557, %561 : vector<8x8xf32>
    %563 = vector.shape_cast %562 : vector<8x8xf32> to vector<8x1x8xf32>
    %564 = arith.truncf %563 : vector<8x1x8xf32> to vector<8x1x8xbf16>
    "tpu.trace_start"() <{level = 10 : i32, message = "bqt,btd->bqd"}> : () -> ()
    %cst_122 = arith.constant dense<0.000000e+00> : vector<8x1x32xf32>
    %565 = tpu.matmul %564, %0, %cst_122 {dimension_numbers = #tpu.dot_dimension_numbers<[2], [1], [1], [2], [0, 0, 0, 1, 1, 2], [0], [0]>} : vector<8x1x8xbf16>, vector<8x8x32xbf16>, vector<8x1x32xf32> -> vector<8x1x32xf32>
    "tpu.trace_stop"() : () -> ()
    %566 = vector.shape_cast %565 : vector<8x1x32xf32> to vector<8x32xf32>
    %567 = arith.addf %424, %562 : vector<8x8xf32>
    %568 = arith.truncf %566 : vector<8x32xf32> to vector<8x32xbf16>
    %cst_123 = arith.constant dense<0.000000e+00> : vector<8x128xf32>
    %569 = tpu.matmul %568, %17, %cst_123 {dimension_numbers = #tpu.dot_dimension_numbers<[1], [0], [0], [1], [0, 0, 1, 1], [], []>} : vector<8x32xbf16>, vector<32x128xbf16>, vector<8x128xf32> -> vector<8x128xf32>
    %570 = arith.addf %569, %460 : vector<8x128xf32>
    %571 = arith.addf %570, %11 : vector<8x128xf32>
    %572 = vector.extract_strided_slice %571 {offsets = [0, 0], sizes = [8, 32], strides = [1, 1]} : vector<8x128xf32> to vector<8x32xf32>
    %573 = arith.negf %572 : vector<8x32xf32>
    %574 = math.exp %573 : vector<8x32xf32>
    %cst_124 = arith.constant 1.000000e+00 : f32
    %575 = vector.broadcast %cst_124 : f32 to vector<8x32xf32>
    %576 = arith.addf %575, %574 : vector<8x32xf32>
    %577 = arith.divf %575, %576 : vector<8x32xf32>
    %578 = vector.extract_strided_slice %571 {offsets = [0, 32], sizes = [8, 32], strides = [1, 1]} : vector<8x128xf32> to vector<8x32xf32>
    %579 = arith.negf %578 : vector<8x32xf32>
    %580 = math.exp %579 : vector<8x32xf32>
    %cst_125 = arith.constant 1.000000e+00 : f32
    %581 = vector.broadcast %cst_125 : f32 to vector<8x32xf32>
    %582 = arith.addf %581, %580 : vector<8x32xf32>
    %583 = arith.divf %581, %582 : vector<8x32xf32>
    %584 = vector.extract_strided_slice %571 {offsets = [0, 64], sizes = [8, 32], strides = [1, 1]} : vector<8x128xf32> to vector<8x32xf32>
    %585 = math.tanh %584 : vector<8x32xf32>
    %586 = vector.extract_strided_slice %571 {offsets = [0, 96], sizes = [8, 32], strides = [1, 1]} : vector<8x128xf32> to vector<8x32xf32>
    %587 = arith.negf %586 : vector<8x32xf32>
    %588 = math.exp %587 : vector<8x32xf32>
    %cst_126 = arith.constant 1.000000e+00 : f32
    %589 = vector.broadcast %cst_126 : f32 to vector<8x32xf32>
    %590 = arith.addf %589, %588 : vector<8x32xf32>
    %591 = arith.divf %589, %590 : vector<8x32xf32>
    %592 = arith.mulf %583, %451 : vector<8x32xf32>
    %593 = arith.mulf %577, %585 : vector<8x32xf32>
    %594 = arith.addf %592, %593 : vector<8x32xf32>
    %595 = math.tanh %594 : vector<8x32xf32>
    %596 = arith.mulf %591, %595 : vector<8x32xf32>
    %c24 = arith.constant 24 : index
    %c0_127 = arith.constant 0 : index
    %597 = vector.load %arg18[%c24, %c0_127] : memref<48x32xf32, #tpu.memory_space<vmem>>, vector<8x32xf32>
    tpu.vector_store %arg18[%c24, %c0_127], %596 {strides = array<i32>} : memref<48x32xf32, #tpu.memory_space<vmem>>, vector<8x32xf32>,
    %c4 = arith.constant 4 : index
    %c0_128 = arith.constant 0 : index
    %c0_129 = arith.constant 0 : index
    %598 = vector.load %arg1[%c4, %c0_128, %c0_129] : memref<6x8x8xbf16, #tpu.memory_space<vmem>>, vector<1x8x8xbf16>
    %599 = vector.shape_cast %598 : vector<1x8x8xbf16> to vector<8x8xbf16>
    %600 = arith.truncf %491 : vector<8x32xf32> to vector<8x32xbf16>
    %cst_130 = arith.constant dense<0.000000e+00> : vector<8x128xf32>
    %601 = tpu.matmul %600, %4, %cst_130 {dimension_numbers = #tpu.dot_dimension_numbers<[1], [0], [0], [1], [0, 0, 1, 1], [], []>} : vector<8x32xbf16>, vector<32x128xbf16>, vector<8x128xf32> -> vector<8x128xf32>
    %602 = arith.truncf %596 : vector<8x32xf32> to vector<8x32xbf16>
    %cst_131 = arith.constant dense<0.000000e+00> : vector<8x128xf32>
    %603 = tpu.matmul %602, %5, %cst_131 {dimension_numbers = #tpu.dot_dimension_numbers<[1], [0], [0], [1], [0, 0, 1, 1], [], []>} : vector<8x32xbf16>, vector<32x128xbf16>, vector<8x128xf32> -> vector<8x128xf32>
    %cst_132 = arith.constant dense<0.000000e+00> : vector<8x128xf32>
    %604 = tpu.matmul %599, %2, %cst_132 {dimension_numbers = #tpu.dot_dimension_numbers<[1], [0], [0], [1], [0, 0, 1, 1], [], []>} : vector<8x8xbf16>, vector<8x128xbf16>, vector<8x128xf32> -> vector<8x128xf32>
    %605 = arith.truncf %566 : vector<8x32xf32> to vector<8x32xbf16>
    %cst_133 = arith.constant dense<0.000000e+00> : vector<8x128xf32>
    %606 = tpu.matmul %605, %3, %cst_133 {dimension_numbers = #tpu.dot_dimension_numbers<[1], [0], [0], [1], [0, 0, 1, 1], [], []>} : vector<8x32xbf16>, vector<32x128xbf16>, vector<8x128xf32> -> vector<8x128xf32>
    %607 = arith.addf %604, %606 : vector<8x128xf32>
    %608 = arith.addf %607, %601 : vector<8x128xf32>
    %609 = arith.addf %608, %8 : vector<8x128xf32>
    %610 = vector.extract_strided_slice %609 {offsets = [0, 0], sizes = [8, 32], strides = [1, 1]} : vector<8x128xf32> to vector<8x32xf32>
    %611 = arith.negf %610 : vector<8x32xf32>
    %612 = math.exp %611 : vector<8x32xf32>
    %cst_134 = arith.constant 1.000000e+00 : f32
    %613 = vector.broadcast %cst_134 : f32 to vector<8x32xf32>
    %614 = arith.addf %613, %612 : vector<8x32xf32>
    %615 = arith.divf %613, %614 : vector<8x32xf32>
    %616 = vector.extract_strided_slice %609 {offsets = [0, 32], sizes = [8, 32], strides = [1, 1]} : vector<8x128xf32> to vector<8x32xf32>
    %617 = arith.negf %616 : vector<8x32xf32>
    %618 = math.exp %617 : vector<8x32xf32>
    %cst_135 = arith.constant 1.000000e+00 : f32
    %619 = vector.broadcast %cst_135 : f32 to vector<8x32xf32>
    %620 = arith.addf %619, %618 : vector<8x32xf32>
    %621 = arith.divf %619, %620 : vector<8x32xf32>
    %622 = vector.extract_strided_slice %609 {offsets = [0, 64], sizes = [8, 32], strides = [1, 1]} : vector<8x128xf32> to vector<8x32xf32>
    %623 = math.tanh %622 : vector<8x32xf32>
    %624 = vector.extract_strided_slice %609 {offsets = [0, 96], sizes = [8, 32], strides = [1, 1]} : vector<8x128xf32> to vector<8x32xf32>
    %625 = arith.negf %624 : vector<8x32xf32>
    %626 = math.exp %625 : vector<8x32xf32>
    %cst_136 = arith.constant 1.000000e+00 : f32
    %627 = vector.broadcast %cst_136 : f32 to vector<8x32xf32>
    %628 = arith.addf %627, %626 : vector<8x32xf32>
    %629 = arith.divf %627, %628 : vector<8x32xf32>
    %630 = arith.mulf %621, %489 : vector<8x32xf32>
    %631 = arith.mulf %615, %623 : vector<8x32xf32>
    %632 = arith.addf %630, %631 : vector<8x32xf32>
    %633 = math.tanh %632 : vector<8x32xf32>
    %634 = arith.mulf %629, %633 : vector<8x32xf32>
    %635 = arith.truncf %634 : vector<8x32xf32> to vector<8x32xbf16>
    %cst_137 = arith.constant dense<0.000000e+00> : vector<8x16xf32>
    %636 = tpu.matmul %635, %12, %cst_137 {dimension_numbers = #tpu.dot_dimension_numbers<[1], [0], [0], [1], [0, 0, 1, 1], [], []>} : vector<8x32xbf16>, vector<32x16xbf16>, vector<8x16xf32> -> vector<8x16xf32>
    %637 = arith.truncf %562 : vector<8x8xf32> to vector<8x8xbf16>
    %cst_138 = arith.constant dense<0.000000e+00> : vector<8x24xf32>
    %638 = tpu.matmul %637, %13, %cst_138 {dimension_numbers = #tpu.dot_dimension_numbers<[1], [0], [0], [1], [0, 0, 1, 1], [], []>} : vector<8x8xbf16>, vector<8x24xbf16>, vector<8x24xf32> -> vector<8x24xf32>
    %639 = arith.truncf %567 : vector<8x8xf32> to vector<8x8xbf16>
    %cst_139 = arith.constant dense<0.000000e+00> : vector<8x24xf32>
    %640 = tpu.matmul %639, %13, %cst_139 {dimension_numbers = #tpu.dot_dimension_numbers<[1], [0], [0], [1], [0, 0, 1, 1], [], []>} : vector<8x8xbf16>, vector<8x24xbf16>, vector<8x24xf32> -> vector<8x24xf32>
    %641 = vector.shape_cast %636 : vector<8x16xf32> to vector<8x1x16xf32>
    %642 = vector.broadcast %641 : vector<8x1x16xf32> to vector<8x8x16xf32>
    %643 = arith.addf %1, %642 : vector<8x8x16xf32>
    %644 = vector.extract_strided_slice %638 {offsets = [0, 0], sizes = [8, 8], strides = [1, 1]} : vector<8x24xf32> to vector<8x8xf32>
    %645 = vector.shape_cast %644 : vector<8x8xf32> to vector<8x8x1xf32>
    %646 = vector.extract_strided_slice %14 {offsets = [0, 0, 0, 0], sizes = [1, 1, 1, 16], strides = [1, 1, 1, 1]} : vector<3x1x1x16xf32> to vector<1x1x1x16xf32>
    %647 = vector.shape_cast %646 : vector<1x1x1x16xf32> to vector<1x1x16xf32>
    %648 = vector.broadcast %645 : vector<8x8x1xf32> to vector<8x8x16xf32>
    %649 = vector.broadcast %647 : vector<1x1x16xf32> to vector<8x8x16xf32>
    %650 = arith.mulf %648, %649 : vector<8x8x16xf32>
    %651 = arith.addf %643, %650 : vector<8x8x16xf32>
    %652 = vector.extract_strided_slice %640 {offsets = [0, 0], sizes = [8, 8], strides = [1, 1]} : vector<8x24xf32> to vector<8x8xf32>
    %653 = vector.shape_cast %652 : vector<8x8xf32> to vector<8x8x1xf32>
    %654 = vector.extract_strided_slice %15 {offsets = [0, 0, 0, 0], sizes = [1, 1, 1, 16], strides = [1, 1, 1, 1]} : vector<3x1x1x16xf32> to vector<1x1x1x16xf32>
    %655 = vector.shape_cast %654 : vector<1x1x1x16xf32> to vector<1x1x16xf32>
    %656 = vector.broadcast %653 : vector<8x8x1xf32> to vector<8x8x16xf32>
    %657 = vector.broadcast %655 : vector<1x1x16xf32> to vector<8x8x16xf32>
    %658 = arith.mulf %656, %657 : vector<8x8x16xf32>
    %659 = arith.addf %651, %658 : vector<8x8x16xf32>
    %660 = vector.extract_strided_slice %638 {offsets = [0, 8], sizes = [8, 8], strides = [1, 1]} : vector<8x24xf32> to vector<8x8xf32>
    %661 = vector.shape_cast %660 : vector<8x8xf32> to vector<8x8x1xf32>
    %662 = vector.extract_strided_slice %14 {offsets = [1, 0, 0, 0], sizes = [1, 1, 1, 16], strides = [1, 1, 1, 1]} : vector<3x1x1x16xf32> to vector<1x1x1x16xf32>
    %663 = vector.shape_cast %662 : vector<1x1x1x16xf32> to vector<1x1x16xf32>
    %664 = vector.broadcast %661 : vector<8x8x1xf32> to vector<8x8x16xf32>
    %665 = vector.broadcast %663 : vector<1x1x16xf32> to vector<8x8x16xf32>
    %666 = arith.mulf %664, %665 : vector<8x8x16xf32>
    %667 = arith.addf %659, %666 : vector<8x8x16xf32>
    %668 = vector.extract_strided_slice %640 {offsets = [0, 8], sizes = [8, 8], strides = [1, 1]} : vector<8x24xf32> to vector<8x8xf32>
    %669 = vector.shape_cast %668 : vector<8x8xf32> to vector<8x8x1xf32>
    %670 = vector.extract_strided_slice %15 {offsets = [1, 0, 0, 0], sizes = [1, 1, 1, 16], strides = [1, 1, 1, 1]} : vector<3x1x1x16xf32> to vector<1x1x1x16xf32>
    %671 = vector.shape_cast %670 : vector<1x1x1x16xf32> to vector<1x1x16xf32>
    %672 = vector.broadcast %669 : vector<8x8x1xf32> to vector<8x8x16xf32>
    %673 = vector.broadcast %671 : vector<1x1x16xf32> to vector<8x8x16xf32>
    %674 = arith.mulf %672, %673 : vector<8x8x16xf32>
    %675 = arith.addf %667, %674 : vector<8x8x16xf32>
    %676 = vector.extract_strided_slice %638 {offsets = [0, 16], sizes = [8, 8], strides = [1, 1]} : vector<8x24xf32> to vector<8x8xf32>
    %677 = vector.shape_cast %676 : vector<8x8xf32> to vector<8x8x1xf32>
    %678 = vector.extract_strided_slice %14 {offsets = [2, 0, 0, 0], sizes = [1, 1, 1, 16], strides = [1, 1, 1, 1]} : vector<3x1x1x16xf32> to vector<1x1x1x16xf32>
    %679 = vector.shape_cast %678 : vector<1x1x1x16xf32> to vector<1x1x16xf32>
    %680 = vector.broadcast %677 : vector<8x8x1xf32> to vector<8x8x16xf32>
    %681 = vector.broadcast %679 : vector<1x1x16xf32> to vector<8x8x16xf32>
    %682 = arith.mulf %680, %681 : vector<8x8x16xf32>
    %683 = arith.addf %675, %682 : vector<8x8x16xf32>
    %684 = vector.extract_strided_slice %640 {offsets = [0, 16], sizes = [8, 8], strides = [1, 1]} : vector<8x24xf32> to vector<8x8xf32>
    %685 = vector.shape_cast %684 : vector<8x8xf32> to vector<8x8x1xf32>
    %686 = vector.extract_strided_slice %15 {offsets = [2, 0, 0, 0], sizes = [1, 1, 1, 16], strides = [1, 1, 1, 1]} : vector<3x1x1x16xf32> to vector<1x1x1x16xf32>
    %687 = vector.shape_cast %686 : vector<1x1x1x16xf32> to vector<1x1x16xf32>
    %688 = vector.broadcast %685 : vector<8x8x1xf32> to vector<8x8x16xf32>
    %689 = vector.broadcast %687 : vector<1x1x16xf32> to vector<8x8x16xf32>
    %690 = arith.mulf %688, %689 : vector<8x8x16xf32>
    %691 = arith.addf %683, %690 : vector<8x8x16xf32>
    %692 = math.tanh %691 : vector<8x8x16xf32>
    %693 = vector.broadcast %16 : vector<1x1x16xf32> to vector<8x8x16xf32>
    %694 = arith.mulf %692, %693 : vector<8x8x16xf32>
    %cst_140 = arith.constant dense<0.000000e+00> : vector<8x8xf32>
    %695 = vector.multi_reduction <add>, %694, %cst_140 [2] : vector<8x8x16xf32> to vector<8x8xf32>
    %cst_141 = arith.constant dense<0xFF800000> : vector<8xf32>
    %696 = vector.multi_reduction <maximumf>, %695, %cst_141 [1] : vector<8x8xf32> to vector<8xf32>
    %697 = vector.shape_cast %696 : vector<8xf32> to vector<8x1xf32>
    %698 = vector.broadcast %697 : vector<8x1xf32> to vector<8x8xf32>
    %699 = arith.subf %695, %698 : vector<8x8xf32>
    %700 = math.exp %699 : vector<8x8xf32>
    %cst_142 = arith.constant dense<0.000000e+00> : vector<8xf32>
    %701 = vector.multi_reduction <add>, %700, %cst_142 [1] : vector<8x8xf32> to vector<8xf32>
    %702 = vector.shape_cast %701 : vector<8xf32> to vector<8x1xf32>
    %703 = tpu.reciprocal %702 {approx = true} : vector<8x1xf32> -> vector<8x1xf32>
    %704 = vector.broadcast %703 : vector<8x1xf32> to vector<8x8xf32>
    %705 = arith.mulf %700, %704 : vector<8x8xf32>
    %706 = vector.shape_cast %705 : vector<8x8xf32> to vector<8x1x8xf32>
    %707 = arith.truncf %706 : vector<8x1x8xf32> to vector<8x1x8xbf16>
    "tpu.trace_start"() <{level = 10 : i32, message = "bqt,btd->bqd"}> : () -> ()
    %cst_143 = arith.constant dense<0.000000e+00> : vector<8x1x32xf32>
    %708 = tpu.matmul %707, %0, %cst_143 {dimension_numbers = #tpu.dot_dimension_numbers<[2], [1], [1], [2], [0, 0, 0, 1, 1, 2], [0], [0]>} : vector<8x1x8xbf16>, vector<8x8x32xbf16>, vector<8x1x32xf32> -> vector<8x1x32xf32>
    "tpu.trace_stop"() : () -> ()
    %709 = vector.shape_cast %708 : vector<8x1x32xf32> to vector<8x32xf32>
    %710 = arith.addf %567, %705 : vector<8x8xf32>
    %711 = arith.truncf %709 : vector<8x32xf32> to vector<8x32xbf16>
    %cst_144 = arith.constant dense<0.000000e+00> : vector<8x128xf32>
    %712 = tpu.matmul %711, %17, %cst_144 {dimension_numbers = #tpu.dot_dimension_numbers<[1], [0], [0], [1], [0, 0, 1, 1], [], []>} : vector<8x32xbf16>, vector<32x128xbf16>, vector<8x128xf32> -> vector<8x128xf32>
    %713 = arith.addf %712, %603 : vector<8x128xf32>
    %714 = arith.addf %713, %11 : vector<8x128xf32>
    %715 = vector.extract_strided_slice %714 {offsets = [0, 0], sizes = [8, 32], strides = [1, 1]} : vector<8x128xf32> to vector<8x32xf32>
    %716 = arith.negf %715 : vector<8x32xf32>
    %717 = math.exp %716 : vector<8x32xf32>
    %cst_145 = arith.constant 1.000000e+00 : f32
    %718 = vector.broadcast %cst_145 : f32 to vector<8x32xf32>
    %719 = arith.addf %718, %717 : vector<8x32xf32>
    %720 = arith.divf %718, %719 : vector<8x32xf32>
    %721 = vector.extract_strided_slice %714 {offsets = [0, 32], sizes = [8, 32], strides = [1, 1]} : vector<8x128xf32> to vector<8x32xf32>
    %722 = arith.negf %721 : vector<8x32xf32>
    %723 = math.exp %722 : vector<8x32xf32>
    %cst_146 = arith.constant 1.000000e+00 : f32
    %724 = vector.broadcast %cst_146 : f32 to vector<8x32xf32>
    %725 = arith.addf %724, %723 : vector<8x32xf32>
    %726 = arith.divf %724, %725 : vector<8x32xf32>
    %727 = vector.extract_strided_slice %714 {offsets = [0, 64], sizes = [8, 32], strides = [1, 1]} : vector<8x128xf32> to vector<8x32xf32>
    %728 = math.tanh %727 : vector<8x32xf32>
    %729 = vector.extract_strided_slice %714 {offsets = [0, 96], sizes = [8, 32], strides = [1, 1]} : vector<8x128xf32> to vector<8x32xf32>
    %730 = arith.negf %729 : vector<8x32xf32>
    %731 = math.exp %730 : vector<8x32xf32>
    %cst_147 = arith.constant 1.000000e+00 : f32
    %732 = vector.broadcast %cst_147 : f32 to vector<8x32xf32>
    %733 = arith.addf %732, %731 : vector<8x32xf32>
    %734 = arith.divf %732, %733 : vector<8x32xf32>
    %735 = arith.mulf %726, %594 : vector<8x32xf32>
    %736 = arith.mulf %720, %728 : vector<8x32xf32>
    %737 = arith.addf %735, %736 : vector<8x32xf32>
    %738 = math.tanh %737 : vector<8x32xf32>
    %739 = arith.mulf %734, %738 : vector<8x32xf32>
    %c32 = arith.constant 32 : index
    %c0_148 = arith.constant 0 : index
    %740 = vector.load %arg18[%c32, %c0_148] : memref<48x32xf32, #tpu.memory_space<vmem>>, vector<8x32xf32>
    tpu.vector_store %arg18[%c32, %c0_148], %739 {strides = array<i32>} : memref<48x32xf32, #tpu.memory_space<vmem>>, vector<8x32xf32>,
    %c5 = arith.constant 5 : index
    %c0_149 = arith.constant 0 : index
    %c0_150 = arith.constant 0 : index
    %741 = vector.load %arg1[%c5, %c0_149, %c0_150] : memref<6x8x8xbf16, #tpu.memory_space<vmem>>, vector<1x8x8xbf16>
    %742 = vector.shape_cast %741 : vector<1x8x8xbf16> to vector<8x8xbf16>
    %743 = arith.truncf %634 : vector<8x32xf32> to vector<8x32xbf16>
    %cst_151 = arith.constant dense<0.000000e+00> : vector<8x128xf32>
    %744 = tpu.matmul %743, %4, %cst_151 {dimension_numbers = #tpu.dot_dimension_numbers<[1], [0], [0], [1], [0, 0, 1, 1], [], []>} : vector<8x32xbf16>, vector<32x128xbf16>, vector<8x128xf32> -> vector<8x128xf32>
    %745 = arith.truncf %739 : vector<8x32xf32> to vector<8x32xbf16>
    %cst_152 = arith.constant dense<0.000000e+00> : vector<8x128xf32>
    %746 = tpu.matmul %745, %5, %cst_152 {dimension_numbers = #tpu.dot_dimension_numbers<[1], [0], [0], [1], [0, 0, 1, 1], [], []>} : vector<8x32xbf16>, vector<32x128xbf16>, vector<8x128xf32> -> vector<8x128xf32>
    %cst_153 = arith.constant dense<0.000000e+00> : vector<8x128xf32>
    %747 = tpu.matmul %742, %2, %cst_153 {dimension_numbers = #tpu.dot_dimension_numbers<[1], [0], [0], [1], [0, 0, 1, 1], [], []>} : vector<8x8xbf16>, vector<8x128xbf16>, vector<8x128xf32> -> vector<8x128xf32>
    %748 = arith.truncf %709 : vector<8x32xf32> to vector<8x32xbf16>
    %cst_154 = arith.constant dense<0.000000e+00> : vector<8x128xf32>
    %749 = tpu.matmul %748, %3, %cst_154 {dimension_numbers = #tpu.dot_dimension_numbers<[1], [0], [0], [1], [0, 0, 1, 1], [], []>} : vector<8x32xbf16>, vector<32x128xbf16>, vector<8x128xf32> -> vector<8x128xf32>
    %750 = arith.addf %747, %749 : vector<8x128xf32>
    %751 = arith.addf %750, %744 : vector<8x128xf32>
    %752 = arith.addf %751, %8 : vector<8x128xf32>
    %753 = vector.extract_strided_slice %752 {offsets = [0, 0], sizes = [8, 32], strides = [1, 1]} : vector<8x128xf32> to vector<8x32xf32>
    %754 = arith.negf %753 : vector<8x32xf32>
    %755 = math.exp %754 : vector<8x32xf32>
    %cst_155 = arith.constant 1.000000e+00 : f32
    %756 = vector.broadcast %cst_155 : f32 to vector<8x32xf32>
    %757 = arith.addf %756, %755 : vector<8x32xf32>
    %758 = arith.divf %756, %757 : vector<8x32xf32>
    %759 = vector.extract_strided_slice %752 {offsets = [0, 32], sizes = [8, 32], strides = [1, 1]} : vector<8x128xf32> to vector<8x32xf32>
    %760 = arith.negf %759 : vector<8x32xf32>
    %761 = math.exp %760 : vector<8x32xf32>
    %cst_156 = arith.constant 1.000000e+00 : f32
    %762 = vector.broadcast %cst_156 : f32 to vector<8x32xf32>
    %763 = arith.addf %762, %761 : vector<8x32xf32>
    %764 = arith.divf %762, %763 : vector<8x32xf32>
    %765 = vector.extract_strided_slice %752 {offsets = [0, 64], sizes = [8, 32], strides = [1, 1]} : vector<8x128xf32> to vector<8x32xf32>
    %766 = math.tanh %765 : vector<8x32xf32>
    %767 = vector.extract_strided_slice %752 {offsets = [0, 96], sizes = [8, 32], strides = [1, 1]} : vector<8x128xf32> to vector<8x32xf32>
    %768 = arith.negf %767 : vector<8x32xf32>
    %769 = math.exp %768 : vector<8x32xf32>
    %cst_157 = arith.constant 1.000000e+00 : f32
    %770 = vector.broadcast %cst_157 : f32 to vector<8x32xf32>
    %771 = arith.addf %770, %769 : vector<8x32xf32>
    %772 = arith.divf %770, %771 : vector<8x32xf32>
    %773 = arith.mulf %764, %632 : vector<8x32xf32>
    %774 = arith.mulf %758, %766 : vector<8x32xf32>
    %775 = arith.addf %773, %774 : vector<8x32xf32>
    %776 = math.tanh %775 : vector<8x32xf32>
    %777 = arith.mulf %772, %776 : vector<8x32xf32>
    %778 = arith.truncf %777 : vector<8x32xf32> to vector<8x32xbf16>
    %cst_158 = arith.constant dense<0.000000e+00> : vector<8x16xf32>
    %779 = tpu.matmul %778, %12, %cst_158 {dimension_numbers = #tpu.dot_dimension_numbers<[1], [0], [0], [1], [0, 0, 1, 1], [], []>} : vector<8x32xbf16>, vector<32x16xbf16>, vector<8x16xf32> -> vector<8x16xf32>
    %780 = arith.truncf %705 : vector<8x8xf32> to vector<8x8xbf16>
    %cst_159 = arith.constant dense<0.000000e+00> : vector<8x24xf32>
    %781 = tpu.matmul %780, %13, %cst_159 {dimension_numbers = #tpu.dot_dimension_numbers<[1], [0], [0], [1], [0, 0, 1, 1], [], []>} : vector<8x8xbf16>, vector<8x24xbf16>, vector<8x24xf32> -> vector<8x24xf32>
    %782 = arith.truncf %710 : vector<8x8xf32> to vector<8x8xbf16>
    %cst_160 = arith.constant dense<0.000000e+00> : vector<8x24xf32>
    %783 = tpu.matmul %782, %13, %cst_160 {dimension_numbers = #tpu.dot_dimension_numbers<[1], [0], [0], [1], [0, 0, 1, 1], [], []>} : vector<8x8xbf16>, vector<8x24xbf16>, vector<8x24xf32> -> vector<8x24xf32>
    %784 = vector.shape_cast %779 : vector<8x16xf32> to vector<8x1x16xf32>
    %785 = vector.broadcast %784 : vector<8x1x16xf32> to vector<8x8x16xf32>
    %786 = arith.addf %1, %785 : vector<8x8x16xf32>
    %787 = vector.extract_strided_slice %781 {offsets = [0, 0], sizes = [8, 8], strides = [1, 1]} : vector<8x24xf32> to vector<8x8xf32>
    %788 = vector.shape_cast %787 : vector<8x8xf32> to vector<8x8x1xf32>
    %789 = vector.extract_strided_slice %14 {offsets = [0, 0, 0, 0], sizes = [1, 1, 1, 16], strides = [1, 1, 1, 1]} : vector<3x1x1x16xf32> to vector<1x1x1x16xf32>
    %790 = vector.shape_cast %789 : vector<1x1x1x16xf32> to vector<1x1x16xf32>
    %791 = vector.broadcast %788 : vector<8x8x1xf32> to vector<8x8x16xf32>
    %792 = vector.broadcast %790 : vector<1x1x16xf32> to vector<8x8x16xf32>
    %793 = arith.mulf %791, %792 : vector<8x8x16xf32>
    %794 = arith.addf %786, %793 : vector<8x8x16xf32>
    %795 = vector.extract_strided_slice %783 {offsets = [0, 0], sizes = [8, 8], strides = [1, 1]} : vector<8x24xf32> to vector<8x8xf32>
    %796 = vector.shape_cast %795 : vector<8x8xf32> to vector<8x8x1xf32>
    %797 = vector.extract_strided_slice %15 {offsets = [0, 0, 0, 0], sizes = [1, 1, 1, 16], strides = [1, 1, 1, 1]} : vector<3x1x1x16xf32> to vector<1x1x1x16xf32>
    %798 = vector.shape_cast %797 : vector<1x1x1x16xf32> to vector<1x1x16xf32>
    %799 = vector.broadcast %796 : vector<8x8x1xf32> to vector<8x8x16xf32>
    %800 = vector.broadcast %798 : vector<1x1x16xf32> to vector<8x8x16xf32>
    %801 = arith.mulf %799, %800 : vector<8x8x16xf32>
    %802 = arith.addf %794, %801 : vector<8x8x16xf32>
    %803 = vector.extract_strided_slice %781 {offsets = [0, 8], sizes = [8, 8], strides = [1, 1]} : vector<8x24xf32> to vector<8x8xf32>
    %804 = vector.shape_cast %803 : vector<8x8xf32> to vector<8x8x1xf32>
    %805 = vector.extract_strided_slice %14 {offsets = [1, 0, 0, 0], sizes = [1, 1, 1, 16], strides = [1, 1, 1, 1]} : vector<3x1x1x16xf32> to vector<1x1x1x16xf32>
    %806 = vector.shape_cast %805 : vector<1x1x1x16xf32> to vector<1x1x16xf32>
    %807 = vector.broadcast %804 : vector<8x8x1xf32> to vector<8x8x16xf32>
    %808 = vector.broadcast %806 : vector<1x1x16xf32> to vector<8x8x16xf32>
    %809 = arith.mulf %807, %808 : vector<8x8x16xf32>
    %810 = arith.addf %802, %809 : vector<8x8x16xf32>
    %811 = vector.extract_strided_slice %783 {offsets = [0, 8], sizes = [8, 8], strides = [1, 1]} : vector<8x24xf32> to vector<8x8xf32>
    %812 = vector.shape_cast %811 : vector<8x8xf32> to vector<8x8x1xf32>
    %813 = vector.extract_strided_slice %15 {offsets = [1, 0, 0, 0], sizes = [1, 1, 1, 16], strides = [1, 1, 1, 1]} : vector<3x1x1x16xf32> to vector<1x1x1x16xf32>
    %814 = vector.shape_cast %813 : vector<1x1x1x16xf32> to vector<1x1x16xf32>
    %815 = vector.broadcast %812 : vector<8x8x1xf32> to vector<8x8x16xf32>
    %816 = vector.broadcast %814 : vector<1x1x16xf32> to vector<8x8x16xf32>
    %817 = arith.mulf %815, %816 : vector<8x8x16xf32>
    %818 = arith.addf %810, %817 : vector<8x8x16xf32>
    %819 = vector.extract_strided_slice %781 {offsets = [0, 16], sizes = [8, 8], strides = [1, 1]} : vector<8x24xf32> to vector<8x8xf32>
    %820 = vector.shape_cast %819 : vector<8x8xf32> to vector<8x8x1xf32>
    %821 = vector.extract_strided_slice %14 {offsets = [2, 0, 0, 0], sizes = [1, 1, 1, 16], strides = [1, 1, 1, 1]} : vector<3x1x1x16xf32> to vector<1x1x1x16xf32>
    %822 = vector.shape_cast %821 : vector<1x1x1x16xf32> to vector<1x1x16xf32>
    %823 = vector.broadcast %820 : vector<8x8x1xf32> to vector<8x8x16xf32>
    %824 = vector.broadcast %822 : vector<1x1x16xf32> to vector<8x8x16xf32>
    %825 = arith.mulf %823, %824 : vector<8x8x16xf32>
    %826 = arith.addf %818, %825 : vector<8x8x16xf32>
    %827 = vector.extract_strided_slice %783 {offsets = [0, 16], sizes = [8, 8], strides = [1, 1]} : vector<8x24xf32> to vector<8x8xf32>
    %828 = vector.shape_cast %827 : vector<8x8xf32> to vector<8x8x1xf32>
    %829 = vector.extract_strided_slice %15 {offsets = [2, 0, 0, 0], sizes = [1, 1, 1, 16], strides = [1, 1, 1, 1]} : vector<3x1x1x16xf32> to vector<1x1x1x16xf32>
    %830 = vector.shape_cast %829 : vector<1x1x1x16xf32> to vector<1x1x16xf32>
    %831 = vector.broadcast %828 : vector<8x8x1xf32> to vector<8x8x16xf32>
    %832 = vector.broadcast %830 : vector<1x1x16xf32> to vector<8x8x16xf32>
    %833 = arith.mulf %831, %832 : vector<8x8x16xf32>
    %834 = arith.addf %826, %833 : vector<8x8x16xf32>
    %835 = math.tanh %834 : vector<8x8x16xf32>
    %836 = vector.broadcast %16 : vector<1x1x16xf32> to vector<8x8x16xf32>
    %837 = arith.mulf %835, %836 : vector<8x8x16xf32>
    %cst_161 = arith.constant dense<0.000000e+00> : vector<8x8xf32>
    %838 = vector.multi_reduction <add>, %837, %cst_161 [2] : vector<8x8x16xf32> to vector<8x8xf32>
    %cst_162 = arith.constant dense<0xFF800000> : vector<8xf32>
    %839 = vector.multi_reduction <maximumf>, %838, %cst_162 [1] : vector<8x8xf32> to vector<8xf32>
    %840 = vector.shape_cast %839 : vector<8xf32> to vector<8x1xf32>
    %841 = vector.broadcast %840 : vector<8x1xf32> to vector<8x8xf32>
    %842 = arith.subf %838, %841 : vector<8x8xf32>
    %843 = math.exp %842 : vector<8x8xf32>
    %cst_163 = arith.constant dense<0.000000e+00> : vector<8xf32>
    %844 = vector.multi_reduction <add>, %843, %cst_163 [1] : vector<8x8xf32> to vector<8xf32>
    %845 = vector.shape_cast %844 : vector<8xf32> to vector<8x1xf32>
    %846 = tpu.reciprocal %845 {approx = true} : vector<8x1xf32> -> vector<8x1xf32>
    %847 = vector.broadcast %846 : vector<8x1xf32> to vector<8x8xf32>
    %848 = arith.mulf %843, %847 : vector<8x8xf32>
    %849 = vector.shape_cast %848 : vector<8x8xf32> to vector<8x1x8xf32>
    %850 = arith.truncf %849 : vector<8x1x8xf32> to vector<8x1x8xbf16>
    "tpu.trace_start"() <{level = 10 : i32, message = "bqt,btd->bqd"}> : () -> ()
    %cst_164 = arith.constant dense<0.000000e+00> : vector<8x1x32xf32>
    %851 = tpu.matmul %850, %0, %cst_164 {dimension_numbers = #tpu.dot_dimension_numbers<[2], [1], [1], [2], [0, 0, 0, 1, 1, 2], [0], [0]>} : vector<8x1x8xbf16>, vector<8x8x32xbf16>, vector<8x1x32xf32> -> vector<8x1x32xf32>
    "tpu.trace_stop"() : () -> ()
    %852 = vector.shape_cast %851 : vector<8x1x32xf32> to vector<8x32xf32>
    %853 = arith.truncf %852 : vector<8x32xf32> to vector<8x32xbf16>
    %cst_165 = arith.constant dense<0.000000e+00> : vector<8x128xf32>
    %854 = tpu.matmul %853, %17, %cst_165 {dimension_numbers = #tpu.dot_dimension_numbers<[1], [0], [0], [1], [0, 0, 1, 1], [], []>} : vector<8x32xbf16>, vector<32x128xbf16>, vector<8x128xf32> -> vector<8x128xf32>
    %855 = arith.addf %854, %746 : vector<8x128xf32>
    %856 = arith.addf %855, %11 : vector<8x128xf32>
    %857 = vector.extract_strided_slice %856 {offsets = [0, 0], sizes = [8, 32], strides = [1, 1]} : vector<8x128xf32> to vector<8x32xf32>
    %858 = arith.negf %857 : vector<8x32xf32>
    %859 = math.exp %858 : vector<8x32xf32>
    %cst_166 = arith.constant 1.000000e+00 : f32
    %860 = vector.broadcast %cst_166 : f32 to vector<8x32xf32>
    %861 = arith.addf %860, %859 : vector<8x32xf32>
    %862 = arith.divf %860, %861 : vector<8x32xf32>
    %863 = vector.extract_strided_slice %856 {offsets = [0, 32], sizes = [8, 32], strides = [1, 1]} : vector<8x128xf32> to vector<8x32xf32>
    %864 = arith.negf %863 : vector<8x32xf32>
    %865 = math.exp %864 : vector<8x32xf32>
    %cst_167 = arith.constant 1.000000e+00 : f32
    %866 = vector.broadcast %cst_167 : f32 to vector<8x32xf32>
    %867 = arith.addf %866, %865 : vector<8x32xf32>
    %868 = arith.divf %866, %867 : vector<8x32xf32>
    %869 = vector.extract_strided_slice %856 {offsets = [0, 64], sizes = [8, 32], strides = [1, 1]} : vector<8x128xf32> to vector<8x32xf32>
    %870 = math.tanh %869 : vector<8x32xf32>
    %871 = vector.extract_strided_slice %856 {offsets = [0, 96], sizes = [8, 32], strides = [1, 1]} : vector<8x128xf32> to vector<8x32xf32>
    %872 = arith.negf %871 : vector<8x32xf32>
    %873 = math.exp %872 : vector<8x32xf32>
    %cst_168 = arith.constant 1.000000e+00 : f32
    %874 = vector.broadcast %cst_168 : f32 to vector<8x32xf32>
    %875 = arith.addf %874, %873 : vector<8x32xf32>
    %876 = arith.divf %874, %875 : vector<8x32xf32>
    %877 = arith.mulf %868, %737 : vector<8x32xf32>
    %878 = arith.mulf %862, %870 : vector<8x32xf32>
    %879 = arith.addf %877, %878 : vector<8x32xf32>
    %880 = math.tanh %879 : vector<8x32xf32>
    %881 = arith.mulf %876, %880 : vector<8x32xf32>
    %c40 = arith.constant 40 : index
    %c0_169 = arith.constant 0 : index
    %882 = vector.load %arg18[%c40, %c0_169] : memref<48x32xf32, #tpu.memory_space<vmem>>, vector<8x32xf32>
    tpu.vector_store %arg18[%c40, %c0_169], %881 {strides = array<i32>} : memref<48x32xf32, #tpu.memory_space<vmem>>, vector<8x32xf32>,
    %c0_170 = arith.constant 0 : index
    %c0_171 = arith.constant 0 : index
    %883 = vector.load %arg18[%c0_170, %c0_171] : memref<48x32xf32, #tpu.memory_space<vmem>>, vector<48x32xf32>
    %884 = arith.truncf %883 : vector<48x32xf32> to vector<48x32xbf16>
    %cst_172 = arith.constant dense<0.000000e+00> : vector<48x16xf32>
    %885 = tpu.matmul %884, %18, %cst_172 {dimension_numbers = #tpu.dot_dimension_numbers<[1], [0], [0], [1], [0, 0, 1, 1], [], []>} : vector<48x32xbf16>, vector<32x16xbf16>, vector<48x16xf32> -> vector<48x16xf32>
    %c0_173 = arith.constant 0 : index
    %c0_174 = arith.constant 0 : index
    %886 = vector.load %arg17[%c0_173, %c0_174] : memref<48x16xf32, #tpu.memory_space<vmem>>, vector<48x16xf32>
    tpu.vector_store %arg17[%c0_173, %c0_174], %885 {strides = array<i32>} : memref<48x16xf32, #tpu.memory_space<vmem>>, vector<48x16xf32>,
    return
  }
  func.func @transform_0(%arg0: i32) -> (i32, i32, i32) {
    %c0_i32 = arith.constant 0 : i32
    %c0_i32_0 = arith.constant 0 : i32
    %c0_i32_1 = arith.constant 0 : i32
    %c0_i32_2 = arith.constant 0 : i32
    return %c0_i32, %c0_i32_0, %c0_i32_1 : i32, i32, i32
  }
  func.func @transform_1(%arg0: i32) -> (i32, i32, i32) {
    %c0_i32 = arith.constant 0 : i32
    %c0_i32_0 = arith.constant 0 : i32
    %c0_i32_1 = arith.constant 0 : i32
    %c0_i32_2 = arith.constant 0 : i32
    return %c0_i32, %c0_i32_0, %c0_i32_1 : i32, i32, i32
  }
  func.func @transform_2(%arg0: i32) -> (i32, i32, i32) {
    %c0_i32 = arith.constant 0 : i32
    %c0_i32_0 = arith.constant 0 : i32
    %c0_i32_1 = arith.constant 0 : i32
    %c0_i32_2 = arith.constant 0 : i32
    return %c0_i32, %c0_i32_0, %c0_i32_1 : i32, i32, i32
  }
  func.func @transform_3(%arg0: i32) -> (i32, i32) {
    %c0_i32 = arith.constant 0 : i32
    %c0_i32_0 = arith.constant 0 : i32
    %c0_i32_1 = arith.constant 0 : i32
    return %c0_i32, %c0_i32_0 : i32, i32
  }
  func.func @transform_4(%arg0: i32) -> (i32, i32) {
    %c0_i32 = arith.constant 0 : i32
    %c0_i32_0 = arith.constant 0 : i32
    %c0_i32_1 = arith.constant 0 : i32
    return %c0_i32, %c0_i32_0 : i32, i32
  }
  func.func @transform_5(%arg0: i32) -> (i32, i32) {
    %c0_i32 = arith.constant 0 : i32
    %c0_i32_0 = arith.constant 0 : i32
    %c0_i32_1 = arith.constant 0 : i32
    return %c0_i32, %c0_i32_0 : i32, i32
  }
  func.func @transform_6(%arg0: i32) -> (i32, i32) {
    %c0_i32 = arith.constant 0 : i32
    %c0_i32_0 = arith.constant 0 : i32
    %c0_i32_1 = arith.constant 0 : i32
    return %c0_i32, %c0_i32_0 : i32, i32
  }
  func.func @transform_7(%arg0: i32) -> (i32, i32) {
    %c0_i32 = arith.constant 0 : i32
    %c0_i32_0 = arith.constant 0 : i32
    %c0_i32_1 = arith.constant 0 : i32
    return %c0_i32, %c0_i32_0 : i32, i32
  }
  func.func @transform_8(%arg0: i32) -> (i32, i32) {
    %c0_i32 = arith.constant 0 : i32
    %c0_i32_0 = arith.constant 0 : i32
    %c0_i32_1 = arith.constant 0 : i32
    return %c0_i32, %c0_i32_0 : i32, i32
  }
  func.func @transform_9(%arg0: i32) -> (i32, i32) {
    %c0_i32 = arith.constant 0 : i32
    %c0_i32_0 = arith.constant 0 : i32
    %c0_i32_1 = arith.constant 0 : i32
    return %c0_i32, %c0_i32_0 : i32, i32
  }
  func.func @transform_10(%arg0: i32) -> (i32, i32) {
    %c0_i32 = arith.constant 0 : i32
    %c0_i32_0 = arith.constant 0 : i32
    %c0_i32_1 = arith.constant 0 : i32
    return %c0_i32, %c0_i32_0 : i32, i32
  }
  func.func @transform_11(%arg0: i32) -> (i32, i32, i32, i32) {
    %c0_i32 = arith.constant 0 : i32
    %c0_i32_0 = arith.constant 0 : i32
    %c0_i32_1 = arith.constant 0 : i32
    %c0_i32_2 = arith.constant 0 : i32
    %c0_i32_3 = arith.constant 0 : i32
    return %c0_i32, %c0_i32_0, %c0_i32_1, %c0_i32_2 : i32, i32, i32, i32
  }
  func.func @transform_12(%arg0: i32) -> (i32, i32, i32, i32) {
    %c0_i32 = arith.constant 0 : i32
    %c0_i32_0 = arith.constant 0 : i32
    %c0_i32_1 = arith.constant 0 : i32
    %c0_i32_2 = arith.constant 0 : i32
    %c0_i32_3 = arith.constant 0 : i32
    return %c0_i32, %c0_i32_0, %c0_i32_1, %c0_i32_2 : i32, i32, i32, i32
  }
  func.func @transform_13(%arg0: i32) -> (i32, i32, i32) {
    %c0_i32 = arith.constant 0 : i32
    %c0_i32_0 = arith.constant 0 : i32
    %c0_i32_1 = arith.constant 0 : i32
    %c0_i32_2 = arith.constant 0 : i32
    return %c0_i32, %c0_i32_0, %c0_i32_1 : i32, i32, i32
  }
  func.func @transform_14(%arg0: i32) -> (i32, i32) {
    %c0_i32 = arith.constant 0 : i32
    %c0_i32_0 = arith.constant 0 : i32
    %c0_i32_1 = arith.constant 0 : i32
    return %c0_i32, %c0_i32_0 : i32, i32
  }
  func.func @transform_15(%arg0: i32) -> (i32, i32) {
    %c0_i32 = arith.constant 0 : i32
    %c0_i32_0 = arith.constant 0 : i32
    %c0_i32_1 = arith.constant 0 : i32
    return %c0_i32, %c0_i32_0 : i32, i32
  }
  func.func @transform_16(%arg0: i32) -> (i32, i32) {
    %c0_i32 = arith.constant 0 : i32
    %c0_i32_0 = arith.constant 0 : i32
    %c0_i32_1 = arith.constant 0 : i32
    return %c0_i32, %c0_i32_0 : i32, i32
  }
}

</mosaic_0001>

<llo_original>
// kernel: tpu_custom_call.1
$region0: #{tpu_custom_call.1}
  #allocation0 [shape = 'u32[]', space=smem, size = 0x4, offset = 0x4, fixed_abs, tag = 'smem constant byte address 0x4 - core index']
  #allocation1 [shape = 'u32[72,128]{1,0:T(1,128)}', space=vmem, size = 0x9000, scoped, tag = 'internal scratch']
  #allocation2 [shape = 'f32[48,32]{1,0:T(8,128)}', space=vmem, size = 0x6000, scoped, tag = 'scratch operand']
  %s0 = inlined_call_operand.hbm [shape: bf16[6,8,8], index: 0, kind: input, shape index: {}]
  %s1 = inlined_call_operand.vmem [shape: bf16[8,8,32], index: 1, kind: input, shape index: {}]
  %s2 = inlined_call_operand.hbm [shape: f32[8,8,16], index: 2, kind: input, shape index: {}]
  %s3 = inlined_call_operand.vmem [shape: bf16[8,128], index: 3, kind: input, shape index: {}]
  %s4 = inlined_call_operand.hbm [shape: bf16[32,128], index: 4, kind: input, shape index: {}]
  %s5 = inlined_call_operand.hbm [shape: bf16[32,128], index: 5, kind: input, shape index: {}]
  %s6 = inlined_call_operand.hbm [shape: bf16[32,128], index: 6, kind: input, shape index: {}]
  %s7 = inlined_call_operand.hbm [shape: f32[1,128], index: 7, kind: input, shape index: {}]
  %s8 = inlined_call_operand.hbm [shape: f32[1,128], index: 8, kind: input, shape index: {}]
  %s9 = inlined_call_operand.vmem [shape: bf16[32,16], index: 9, kind: input, shape index: {}]
  %s10 = inlined_call_operand.vmem [shape: bf16[8,24], index: 10, kind: input, shape index: {}]
  %s11 = inlined_call_operand.hbm [shape: f32[3,1,1,16], index: 11, kind: input, shape index: {}]
  %s12 = inlined_call_operand.vmem [shape: f32[3,1,1,16], index: 12, kind: input, shape index: {}]
  %s13 = inlined_call_operand.vmem [shape: f32[1,1,16], index: 13, kind: input, shape index: {}]
  %s14 = inlined_call_operand.hbm [shape: bf16[32,128], index: 14, kind: input, shape index: {}]
  %s15 = inlined_call_operand.vmem [shape: bf16[32,16], index: 15, kind: input, shape index: {}]
  %s16 = inlined_call_operand.vmem [shape: f32[48,16], index: 16, kind: output, shape index: {}]
  %s17 = sld [smem:[#allocation0]]
  $region110: #{tpu_custom_call.1} parent=0
    _
  %s19 = ssub.s32 1, %s17
  %s20 = scalar_select 0, %s19, %s17
  $region1: #{tpu_custom_call.1} parent=0
    #allocation3 [shape = 'u8[12288]{0}', space=vmem, size = 0x3000, scoped, tag = 'input window, operand 0, single buffered']
    #allocation4 [shape = 's32[1]{0}', space=sflag, size = 0x4, scoped, tag = 'scoped memory for tpu_custom_call.1']
    #allocation5 [shape = 'u8[32768]{0}', space=vmem, size = 0x8000, scoped, tag = 'input window, operand 2, single buffered']
    #allocation6 [shape = 's32[1]{0}', space=sflag, size = 0x4, scoped, tag = 'scoped memory for tpu_custom_call.1']
    #allocation7 [shape = 'u8[8192]{0}', space=vmem, size = 0x2000, scoped, tag = 'input window, operand 4, single buffered']
    #allocation8 [shape = 'u8[8192]{0}', space=vmem, size = 0x2000, scoped, tag = 'input window, operand 5, single buffered']
    #allocation9 [shape = 's32[1]{0}', space=sflag, size = 0x4, scoped, tag = 'scoped memory for tpu_custom_call.1']
    #allocation10 [shape = 'u8[8192]{0}', space=vmem, size = 0x2000, scoped, tag = 'input window, operand 6, single buffered']
    #allocation11 [shape = 'u8[512]{0}', space=vmem, size = 0x400, scoped, tag = 'input window, operand 7, single buffered']
    #allocation12 [shape = 's32[1]{0}', space=sflag, size = 0x4, scoped, tag = 'scoped memory for tpu_custom_call.1']
    #allocation13 [shape = 'u8[512]{0}', space=vmem, size = 0x400, scoped, tag = 'input window, operand 8, single buffered']
    #allocation14 [shape = 'u8[1536]{0}', space=vmem, size = 0x800, scoped, tag = 'input window, operand 11, single buffered']
    #allocation15 [shape = 's32[1]{0}', space=sflag, size = 0x4, scoped, tag = 'scoped memory for tpu_custom_call.1']
    #allocation16 [shape = 'u8[8192]{0}', space=vmem, size = 0x2000, scoped, tag = 'input window, operand 14, single buffered']
    %21 = vsyncpa [#allocation4], 0
    %22 = vsyncpa [#allocation6], 0
    %23 = vsyncpa [#allocation9], 0
    %24 = vsyncpa [#allocation12], 0
    %25 = vsyncpa [#allocation15], 0
    // Predicated region
    $region2: #{tpu_custom_call.1} parent=1 // pred_check
      _
    $region3: #{tpu_custom_call.1} parent=1 // pred_check_branch
      %27 = sbr.rel (0) target = $region5
    $region4: #{tpu_custom_call.1} parent=1 // pred_region
      %29 = vsyncadd [#allocation4], 0
      %s30 = sshll.u32 %s0, 4
      %s31 = int_to_ptr.hbm [resolvable:$true] %s30
      %s32 = sshll.u32 [#allocation3], 4
      %s33 = int_to_ptr.vmem [resolvable:$true] %s32
      %38 = dma.hbm_to_vmem [thread:$0]  %s31, 384, %s33, [#allocation4], 64, 64, 4
    $region5: #{tpu_custom_call.1} parent=1 // pred_fallthru
      _
    // Predicated region
    $region6: #{tpu_custom_call.1} parent=1 // pred_check
      _
    $region7: #{tpu_custom_call.1} parent=1 // pred_check_branch
      %40 = sbr.rel (0) target = $region9
    $region8: #{tpu_custom_call.1} parent=1 // pred_region
      _
    $region9: #{tpu_custom_call.1} parent=1 // pred_fallthru
      _
    // Predicated region
    $region10: #{tpu_custom_call.1} parent=1 // pred_check
      _
    $region11: #{tpu_custom_call.1} parent=1 // pred_check_branch
      %42 = sbr.rel (0) target = $region13
    $region12: #{tpu_custom_call.1} parent=1 // pred_region
      %44 = vsyncadd [#allocation6], 0
      %s45 = sshll.u32 %s2, 4
      %s46 = int_to_ptr.hbm [resolvable:$true] %s45
      %s47 = sshll.u32 [#allocation5], 4
      %s48 = int_to_ptr.vmem [resolvable:$true] %s47
      %53 = dma.hbm_to_vmem [thread:$0]  %s46, 1024, %s48, [#allocation6], 128, 128, 8
    $region13: #{tpu_custom_call.1} parent=1 // pred_fallthru
      _
    // Predicated region
    $region14: #{tpu_custom_call.1} parent=1 // pred_check
      _
    $region15: #{tpu_custom_call.1} parent=1 // pred_check_branch
      %55 = sbr.rel (0) target = $region17
    $region16: #{tpu_custom_call.1} parent=1 // pred_region
      _
    $region17: #{tpu_custom_call.1} parent=1 // pred_fallthru
      _
    // Predicated region
    $region18: #{tpu_custom_call.1} parent=1 // pred_check
      _
    $region19: #{tpu_custom_call.1} parent=1 // pred_check_branch
      %57 = sbr.rel (0) target = $region21
    $region20: #{tpu_custom_call.1} parent=1 // pred_region
      %59 = vsyncadd [#allocation6], 0
      %s60 = sshll.u32 %s4, 4
      %s61 = int_to_ptr.hbm [resolvable:$true] %s60
      %s62 = sshll.u32 [#allocation7], 4
      %s63 = int_to_ptr.vmem [resolvable:$true] %s62
      %68 = dma.hbm_to_vmem [thread:$0]  %s61, 256, %s63, [#allocation6], 64, 64, 4
    $region21: #{tpu_custom_call.1} parent=1 // pred_fallthru
      _
    // Predicated region
    $region22: #{tpu_custom_call.1} parent=1 // pred_check
      _
    $region23: #{tpu_custom_call.1} parent=1 // pred_check_branch
      %70 = sbr.rel (0) target = $region25
    $region24: #{tpu_custom_call.1} parent=1 // pred_region
      %72 = vsyncadd [#allocation9], 0
      %s73 = sshll.u32 %s5, 4
      %s74 = int_to_ptr.hbm [resolvable:$true] %s73
      %s75 = sshll.u32 [#allocation8], 4
      %s76 = int_to_ptr.vmem [resolvable:$true] %s75
      %81 = dma.hbm_to_vmem [thread:$0]  %s74, 256, %s76, [#allocation9], 64, 64, 4
    $region25: #{tpu_custom_call.1} parent=1 // pred_fallthru
      _
    // Predicated region
    $region26: #{tpu_custom_call.1} parent=1 // pred_check
      _
    $region27: #{tpu_custom_call.1} parent=1 // pred_check_branch
      %83 = sbr.rel (0) target = $region29
    $region28: #{tpu_custom_call.1} parent=1 // pred_region
      %85 = vsyncadd [#allocation9], 0
      %s86 = sshll.u32 %s6, 4
      %s87 = int_to_ptr.hbm [resolvable:$true] %s86
      %s88 = sshll.u32 [#allocation10], 4
      %s89 = int_to_ptr.vmem [resolvable:$true] %s88
      %94 = dma.hbm_to_vmem [thread:$0]  %s87, 256, %s89, [#allocation9], 64, 64, 4
    $region29: #{tpu_custom_call.1} parent=1 // pred_fallthru
      _
    // Predicated region
    $region30: #{tpu_custom_call.1} parent=1 // pred_check
      _
    $region31: #{tpu_custom_call.1} parent=1 // pred_check_branch
      %96 = sbr.rel (0) target = $region33
    $region32: #{tpu_custom_call.1} parent=1 // pred_region
      %98 = vsyncadd [#allocation12], 0
      %s100 = sshll.u32 %s7, 4
      %s101 = int_to_ptr.hbm [resolvable:$true] %s100
      %s102 = sshll.u32 [#allocation11], 4
      %s103 = int_to_ptr.vmem [resolvable:$true] %s102
      %105 = dma.hbm_to_vmem [thread:$0]  %s101, 16, %s103, [#allocation12]
    $region33: #{tpu_custom_call.1} parent=1 // pred_fallthru
      _
    // Predicated region
    $region34: #{tpu_custom_call.1} parent=1 // pred_check
      _
    $region35: #{tpu_custom_call.1} parent=1 // pred_check_branch
      %107 = sbr.rel (0) target = $region37
    $region36: #{tpu_custom_call.1} parent=1 // pred_region
      %109 = vsyncadd [#allocation12], 0
      %s111 = sshll.u32 %s8, 4
      %s112 = int_to_ptr.hbm [resolvable:$true] %s111
      %s113 = sshll.u32 [#allocation13], 4
      %s114 = int_to_ptr.vmem [resolvable:$true] %s113
      %116 = dma.hbm_to_vmem [thread:$0]  %s112, 16, %s114, [#allocation12]
    $region37: #{tpu_custom_call.1} parent=1 // pred_fallthru
      _
    // Predicated region
    $region38: #{tpu_custom_call.1} parent=1 // pred_check
      _
    $region39: #{tpu_custom_call.1} parent=1 // pred_check_branch
      %118 = sbr.rel (0) target = $region41
    $region40: #{tpu_custom_call.1} parent=1 // pred_region
      _
    $region41: #{tpu_custom_call.1} parent=1 // pred_fallthru
      _
    // Predicated region
    $region42: #{tpu_custom_call.1} parent=1 // pred_check
      _
    $region43: #{tpu_custom_call.1} parent=1 // pred_check_branch
      %120 = sbr.rel (0) target = $region45
    $region44: #{tpu_custom_call.1} parent=1 // pred_region
      _
    $region45: #{tpu_custom_call.1} parent=1 // pred_fallthru
      _
    // Predicated region
    $region46: #{tpu_custom_call.1} parent=1 // pred_check
      _
    $region47: #{tpu_custom_call.1} parent=1 // pred_check_branch
      %122 = sbr.rel (0) target = $region49
    $region48: #{tpu_custom_call.1} parent=1 // pred_region
      %124 = vsyncadd [#allocation15], 0
      %s125 = sshll.u32 %s11, 4
      %s126 = int_to_ptr.hbm [resolvable:$true] %s125
      %s127 = sshll.u32 [#allocation14], 4
      %s128 = int_to_ptr.vmem [resolvable:$true] %s127
      %133 = dma.hbm_to_vmem [thread:$0]  %s126, 48, %s128, [#allocation15], 16, 16, 1
    $region49: #{tpu_custom_call.1} parent=1 // pred_fallthru
      _
    // Predicated region
    $region50: #{tpu_custom_call.1} parent=1 // pred_check
      _
    $region51: #{tpu_custom_call.1} parent=1 // pred_check_branch
      %135 = sbr.rel (0) target = $region53
    $region52: #{tpu_custom_call.1} parent=1 // pred_region
      _
    $region53: #{tpu_custom_call.1} parent=1 // pred_fallthru
      _
    // Predicated region
    $region54: #{tpu_custom_call.1} parent=1 // pred_check
      _
    $region55: #{tpu_custom_call.1} parent=1 // pred_check_branch
      %137 = sbr.rel (0) target = $region57
    $region56: #{tpu_custom_call.1} parent=1 // pred_region
      _
    $region57: #{tpu_custom_call.1} parent=1 // pred_fallthru
      _
    // Predicated region
    $region58: #{tpu_custom_call.1} parent=1 // pred_check
      _
    $region59: #{tpu_custom_call.1} parent=1 // pred_check_branch
      %139 = sbr.rel (0) target = $region61
    $region60: #{tpu_custom_call.1} parent=1 // pred_region
      %141 = vsyncadd [#allocation15], 0
      %s142 = sshll.u32 %s14, 4
      %s143 = int_to_ptr.hbm [resolvable:$true] %s142
      %s144 = sshll.u32 [#allocation16], 4
      %s145 = int_to_ptr.vmem [resolvable:$true] %s144
      %150 = dma.hbm_to_vmem [thread:$0]  %s143, 256, %s145, [#allocation15], 64, 64, 4
    $region61: #{tpu_custom_call.1} parent=1 // pred_fallthru
      _
    // Predicated region
    $region62: #{tpu_custom_call.1} parent=1 // pred_check
      _
    $region63: #{tpu_custom_call.1} parent=1 // pred_check_branch
      %152 = sbr.rel (0) target = $region65
    $region64: #{tpu_custom_call.1} parent=1 // pred_region
      _
    $region65: #{tpu_custom_call.1} parent=1 // pred_fallthru
      _
    // Predicated region
    $region66: #{tpu_custom_call.1} parent=1 // pred_check
      _
    $region67: #{tpu_custom_call.1} parent=1 // pred_check_branch
      %154 = sbr.rel (0) target = $region69
    $region68: #{tpu_custom_call.1} parent=1 // pred_region
      %156 = dma.done [#allocation4], 384
    $region69: #{tpu_custom_call.1} parent=1 // pred_fallthru
      _
    // Predicated region
    $region70: #{tpu_custom_call.1} parent=1 // pred_check
      _
    $region71: #{tpu_custom_call.1} parent=1 // pred_check_branch
      %158 = sbr.rel (0) target = $region73
    $region72: #{tpu_custom_call.1} parent=1 // pred_region
      %160 = dma.done [#allocation6], 1024
    $region73: #{tpu_custom_call.1} parent=1 // pred_fallthru
      _
    // Predicated region
    $region74: #{tpu_custom_call.1} parent=1 // pred_check
      _
    $region75: #{tpu_custom_call.1} parent=1 // pred_check_branch
      %162 = sbr.rel (0) target = $region77
    $region76: #{tpu_custom_call.1} parent=1 // pred_region
      %164 = dma.done [#allocation6], 256
    $region77: #{tpu_custom_call.1} parent=1 // pred_fallthru
      _
    // Predicated region
    $region78: #{tpu_custom_call.1} parent=1 // pred_check
      _
    $region79: #{tpu_custom_call.1} parent=1 // pred_check_branch
      %166 = sbr.rel (0) target = $region81
    $region80: #{tpu_custom_call.1} parent=1 // pred_region
      %168 = dma.done [#allocation9], 256
    $region81: #{tpu_custom_call.1} parent=1 // pred_fallthru
      _
    // Predicated region
    $region82: #{tpu_custom_call.1} parent=1 // pred_check
      _
    $region83: #{tpu_custom_call.1} parent=1 // pred_check_branch
      %170 = sbr.rel (0) target = $region85
    $region84: #{tpu_custom_call.1} parent=1 // pred_region
      %172 = dma.done [#allocation9], 256
    $region85: #{tpu_custom_call.1} parent=1 // pred_fallthru
      _
    // Predicated region
    $region86: #{tpu_custom_call.1} parent=1 // pred_check
      _
    $region87: #{tpu_custom_call.1} parent=1 // pred_check_branch
      %174 = sbr.rel (0) target = $region89
    $region88: #{tpu_custom_call.1} parent=1 // pred_region
      %176 = dma.done [#allocation12], 16
    $region89: #{tpu_custom_call.1} parent=1 // pred_fallthru
      _
    // Predicated region
    $region90: #{tpu_custom_call.1} parent=1 // pred_check
      _
    $region91: #{tpu_custom_call.1} parent=1 // pred_check_branch
      %178 = sbr.rel (0) target = $region93
    $region92: #{tpu_custom_call.1} parent=1 // pred_region
      %180 = dma.done [#allocation12], 16
    $region93: #{tpu_custom_call.1} parent=1 // pred_fallthru
      _
    // Predicated region
    $region94: #{tpu_custom_call.1} parent=1 // pred_check
      _
    $region95: #{tpu_custom_call.1} parent=1 // pred_check_branch
      %182 = sbr.rel (0) target = $region97
    $region96: #{tpu_custom_call.1} parent=1 // pred_region
      %184 = dma.done [#allocation15], 48
    $region97: #{tpu_custom_call.1} parent=1 // pred_fallthru
      _
    // Predicated region
    $region98: #{tpu_custom_call.1} parent=1 // pred_check
      _
    $region99: #{tpu_custom_call.1} parent=1 // pred_check_branch
      %186 = sbr.rel (0) target = $region101
    $region100: #{tpu_custom_call.1} parent=1 // pred_region
      %188 = dma.done [#allocation15], 256
    $region101: #{tpu_custom_call.1} parent=1 // pred_fallthru
      _
    %v190 = vld [vmem:[%s1] sm:$0xf]
    %v191 = vld [vmem:[%s1 + $0x4] sm:$0xf]
    %v192 = vld [vmem:[%s1 + $0x8] sm:$0xf]
    %v193 = vld [vmem:[%s1 + $0xc] sm:$0xf]
    %v194 = vld [vmem:[%s1 + $0x10] sm:$0xf]
    %v195 = vld [vmem:[%s1 + $0x14] sm:$0xf]
    %v196 = vld [vmem:[%s1 + $0x18] sm:$0xf]
    %v197 = vld [vmem:[%s1 + $0x1c] sm:$0xf]
    %v198 = vld [vmem:[#allocation5] sm:$0xff]
    %v199 = vld [vmem:[#allocation5 + $0x8] sm:$0xff]
    %v200 = vld [vmem:[#allocation5 + $0x10] sm:$0xff]
    %v201 = vld [vmem:[#allocation5 + $0x18] sm:$0xff]
    %v202 = vld [vmem:[#allocation5 + $0x20] sm:$0xff]
    %v203 = vld [vmem:[#allocation5 + $0x28] sm:$0xff]
    %v204 = vld [vmem:[#allocation5 + $0x30] sm:$0xff]
    %v205 = vld [vmem:[#allocation5 + $0x38] sm:$0xff]
    %v206 = vld [vmem:[%s3] sm:$0xf]
    %v207 = vld [vmem:[#allocation7] sm:$0xf]
    %v208 = vld [vmem:[#allocation7 + $0x4] sm:$0xf]
    %v209 = vld [vmem:[#allocation7 + $0x8] sm:$0xf]
    %v210 = vld [vmem:[#allocation7 + $0xc] sm:$0xf]
    %v211 = vld [vmem:[#allocation8] sm:$0xf]
    %v212 = vld [vmem:[#allocation8 + $0x4] sm:$0xf]
    %v213 = vld [vmem:[#allocation8 + $0x8] sm:$0xf]
    %v214 = vld [vmem:[#allocation8 + $0xc] sm:$0xf]
    %v215 = vld [vmem:[#allocation10] sm:$0xf]
    %v216 = vld [vmem:[#allocation10 + $0x4] sm:$0xf]
    %v217 = vld [vmem:[#allocation10 + $0x8] sm:$0xf]
    %v218 = vld [vmem:[#allocation10 + $0xc] sm:$0xf]
    %v219 = vld [vmem:[#allocation11] sm:$0x1]
    %v221 = vperm.slane %v219, 0
    %v223 = vld [vmem:[#allocation13] sm:$0x1]
    %v225 = vperm.slane %v223, 0
    %v227 = vld [vmem:[%s9] sm:$0xf]
    %v228 = vld [vmem:[%s9 + $0x4] sm:$0xf]
    %v229 = vld [vmem:[%s9 + $0x8] sm:$0xf]
    %v230 = vld [vmem:[%s9 + $0xc] sm:$0xf]
    %v231 = vld [vmem:[%s10] sm:$0xf]
    %v232 = vld [vmem:[#allocation14] sm:$0x1]
    %v233 = vld [vmem:[#allocation14 + $0x1] sm:$0x1]
    %v234 = vld [vmem:[#allocation14 + $0x2] sm:$0x1]
    %v235 = vld [vmem:[%s12] sm:$0x1]
    %v236 = vld [vmem:[%s12 + $0x1] sm:$0x1]
    %v237 = vld [vmem:[%s12 + $0x2] sm:$0x1]
    %v238 = vld [vmem:[%s13] sm:$0x1]
    %v239 = vld [vmem:[#allocation16] sm:$0xf]
    %v240 = vld [vmem:[#allocation16 + $0x4] sm:$0xf]
    %v241 = vld [vmem:[#allocation16 + $0x8] sm:$0xf]
    %v242 = vld [vmem:[#allocation16 + $0xc] sm:$0xf]
    %v243 = vld [vmem:[%s15] sm:$0xf]
    %v244 = vld [vmem:[%s15 + $0x4] sm:$0xf]
    %v245 = vld [vmem:[%s15 + $0x8] sm:$0xf]
    %v246 = vld [vmem:[%s15 + $0xc] sm:$0xf]
    %v247 = vld [vmem:[#allocation3] sm:$0xf]
    %v252 = vunpack.c.l.b16 %v211
    %v253 = vunpack.c.l.b16 %v212
    %v254 = vunpack.c.l.b16 %v213
    %v255 = vunpack.c.l.b16 %v214
    %v256 = vpack.c.b16 %v253, %v252
    %v257 = vpack.c.b16 %v255, %v254
    %vm260 = vcmask 261120
    %v262 = vsel %vm260, 0, 0
    %264 = vmatpush.bf16.msra.mxu0 0
    %265 = vmatpush.bf16.msra.mxu0 0
    %266 = vmatpush.bf16.msra.mxu0 0
    %267 = vmatpush.bf16.msra.mxu0 0
    %268 = vmatpush.bf16.msra.mxu0 0
    %269 = vmatpush.bf16.msra.mxu0 0
    %270 = vmatpush.bf16.msra.mxu0 %v257
    %271 = vmatpush.bf16.msra.mxu0 %v256
    %272 = vmatmul.bf16.gmra.mxu0 %v262
    %v273 = vpop.f32.mrf.mxu0
    %v274 = vadd.f32 0.0, %v273
    %v275 = vpop.f32.mrf.mxu0
    %276 = vdwg.mxu0
    %v281 = vunpack.c.l.b16 %v215
    %v282 = vunpack.c.l.b16 %v216
    %v283 = vunpack.c.l.b16 %v217
    %v284 = vunpack.c.l.b16 %v218
    %v285 = vpack.c.b16 %v282, %v281
    %v286 = vpack.c.b16 %v284, %v283
    %289 = vmatpush.bf16.msra.mxu0 0
    %290 = vmatpush.bf16.msra.mxu0 0
    %291 = vmatpush.bf16.msra.mxu0 0
    %292 = vmatpush.bf16.msra.mxu0 0
    %293 = vmatpush.bf16.msra.mxu0 0
    %294 = vmatpush.bf16.msra.mxu0 0
    %295 = vmatpush.bf16.msra.mxu0 %v286
    %296 = vmatpush.bf16.msra.mxu0 %v285
    %297 = vmatmul.bf16.gmra.mxu0 %v262
    %v298 = vpop.f32.mrf.mxu0
    %v299 = vadd.f32 0.0, %v298
    %v300 = vpop.f32.mrf.mxu0
    %301 = vdwg.mxu0
    %v306 = vunpack.c.l.b16 %v207
    %v307 = vunpack.c.l.b16 %v208
    %v308 = vunpack.c.l.b16 %v209
    %v309 = vunpack.c.l.b16 %v210
    %v310 = vpack.c.b16 %v307, %v306
    %v311 = vpack.c.b16 %v309, %v308
    %314 = vmatpush.bf16.msra.mxu0 0
    %315 = vmatpush.bf16.msra.mxu0 0
    %316 = vmatpush.bf16.msra.mxu0 0
    %317 = vmatpush.bf16.msra.mxu0 0
    %318 = vmatpush.bf16.msra.mxu0 0
    %319 = vmatpush.bf16.msra.mxu0 0
    %320 = vmatpush.bf16.msra.mxu0 %v311
    %321 = vmatpush.bf16.msra.mxu0 %v310
    %322 = vmatmul.bf16.gmra.mxu0 %v262
    %v323 = vpop.f32.mrf.mxu0
    %v324 = vadd.f32 0.0, %v323
    %v325 = vpop.f32.mrf.mxu0
    %326 = vdwg.mxu0
    %vm327 = vcmask 64512
    %v329 = vsel %vm327, %v247, 0
    %vm331 = vcmask 1043456
    %v333 = vsel %vm331, %v206, 0
    %335 = vmatpush.bf16.msra.mxu0 0
    %336 = vmatpush.bf16.msra.mxu0 0
    %337 = vmatpush.bf16.msra.mxu0 0
    %338 = vmatpush.bf16.msra.mxu0 0
    %339 = vmatpush.bf16.msra.mxu0 0
    %340 = vmatpush.bf16.msra.mxu0 0
    %341 = vmatpush.bf16.msra.mxu0 0
    %342 = vmatpush.bf16.msra.mxu0 %v333
    %343 = vmatmul.bf16.gmra.mxu0 %v329
    %v344 = vpop.f32.mrf.mxu0
    %v345 = vadd.f32 %v324, %v344
    %v346 = vpop.f32.mrf.mxu0
    %347 = vdwg.mxu0
    %v348 = vadd.f32 %v345, %v274
    %v349 = vadd.f32 %v348, %v221
    %v350 = vxor.u32 %v349, 2147483648
    %v351 = vmul.f32 %v350, 1.442695
    %v352 = vpow.pop %v351
    %v353 = vadd.f32 %v352, 1.0
    %v354 = vrcp.pop %v353
    %v355 = vmul.f32 %v353, %v354
    %v356 = vsub.f32 1.0, %v355
    %v357 = vmul.f32 %v354, %v356
    %v358 = vadd.f32 %v354, %v357
    %vm359 = vweird.f32 %v353
    %vm360 = vweird.f32 %v354
    %vm361 = vmor %vm359, %vm360
    %v362 = vsel %vm361, %v354, %v358
    %v363 = vand.u32 2147483647, %v353
    %vm364 = vcmp.eq.f32.partialorder %v363, 8.507059e+37
    %v365 = vand.u32 %v353, 2147483648
    %v366 = vor.u32 1.1754944e-38, %v365
    %v367 = vsel %vm364, %v366, %v362
    %v368 = vmul.f32 1.0, %v367
    %v369 = vtanh.pop %v349
    %v370 = vmul.f32 %v368, 0.0
    %372 = vrot.lane.b32.xlu0 %v369, 64
    %v373 = vpop.permute.xlu0 %372
    %v375 = vmul.f32 %v368, %v373
    %377 = vrot.lane.b32.xlu0 %v375, 32
    %v378 = vpop.permute.xlu0 %377
    %v380 = vadd.f32 %v370, %v378
    %v381 = vtanh.pop %v380
    %383 = vrot.lane.b32.xlu0 %v381, 64
    %v384 = vpop.permute.xlu0 %383
    %v386 = vmul.f32 %v368, %v384
    %v387 = vpack.c.bf16 %v386, %v386
    %389 = vrot.lane.b32.xlu0 %v387, 32
    %v390 = vpop.permute.xlu0 %389
    %v395 = vunpack.c.l.b16 %v227
    %v396 = vunpack.c.l.b16 %v228
    %v397 = vunpack.c.l.b16 %v229
    %v398 = vunpack.c.l.b16 %v230
    %v399 = vpack.c.b16 %v396, %v395
    %v400 = vpack.c.b16 %v398, %v397
    %v404 = vsel %vm260, %v390, 0
    %406 = vmatpush.bf16.msra.mxu0 0
    %407 = vmatpush.bf16.msra.mxu0 0
    %408 = vmatpush.bf16.msra.mxu0 0
    %409 = vmatpush.bf16.msra.mxu0 0
    %410 = vmatpush.bf16.msra.mxu0 0
    %411 = vmatpush.bf16.msra.mxu0 0
    %412 = vmatpush.bf16.msra.mxu0 %v400
    %413 = vmatpush.bf16.msra.mxu0 %v399
    %414 = vmatmul.bf16.gmra.mxu0 %v404
    %v415 = vpop.f32.mrf.mxu0
    %v416 = vadd.f32 0.0, %v415
    %v417 = vpop.f32.mrf.mxu0
    %418 = vdwg.mxu0
    %v419 = vsel %vm327, 0, 0
    %v422 = vsel %vm331, %v231, 0
    %424 = vmatpush.bf16.msra.mxu0 0
    %425 = vmatpush.bf16.msra.mxu0 0
    %426 = vmatpush.bf16.msra.mxu0 0
    %427 = vmatpush.bf16.msra.mxu0 0
    %428 = vmatpush.bf16.msra.mxu0 0
    %429 = vmatpush.bf16.msra.mxu0 0
    %430 = vmatpush.bf16.msra.mxu0 0
    %431 = vmatpush.bf16.msra.mxu0 %v422
    %432 = vmatmul.bf16.gmra.mxu0 %v419
    %v433 = vpop.f32.mrf.mxu0
    %v434 = vadd.f32 0.0, %v433
    %v435 = vpop.f32.mrf.mxu0
    %436 = vdwg.mxu0
    %v438 = vrot.slane %v416, 1
    %v439 = vrot.slane %v416, 2
    %v440 = vrot.slane %v416, 3
    %v441 = vrot.slane %v416, 4
    %v442 = vrot.slane %v416, 5
    %v443 = vrot.slane %v416, 6
    %v444 = vrot.slane %v416, 7
    %v445 = vperm.slane %v416, 0
    %v446 = vperm.slane %v438, 0
    %v447 = vperm.slane %v439, 0
    %v448 = vperm.slane %v440, 0
    %v449 = vperm.slane %v441, 0
    %v450 = vperm.slane %v442, 0
    %v451 = vperm.slane %v443, 0
    %v452 = vperm.slane %v444, 0
    %v461 = vadd.f32 %v198, %v445
    %v462 = vadd.f32 %v199, %v446
    %v463 = vadd.f32 %v200, %v447
    %v464 = vadd.f32 %v201, %v448
    %v465 = vadd.f32 %v202, %v449
    %v466 = vadd.f32 %v203, %v450
    %v467 = vadd.f32 %v204, %v451
    %v468 = vadd.f32 %v205, %v452
    %v469 = vperm.slane %v434, 0
    %v470 = vlaneseq
    %v471 = vshrl.u32 %v470, 7
    %473 = vset.pattern.permute.xlu0 %v471
    %474 = vperm.xlu0 %473, %v469
    %v475 = vpop.permute.xlu0 %474
    %v476 = vperm.slane %v434, 1
    %v477 = vlaneseq
    %v478 = vshrl.u32 %v477, 7
    %480 = vset.pattern.permute.xlu0 %v478
    %481 = vperm.xlu0 %480, %v476
    %v482 = vpop.permute.xlu0 %481
    %v483 = vperm.slane %v434, 2
    %v484 = vlaneseq
    %v485 = vshrl.u32 %v484, 7
    %487 = vset.pattern.permute.xlu0 %v485
    %488 = vperm.xlu0 %487, %v483
    %v489 = vpop.permute.xlu0 %488
    %v490 = vperm.slane %v434, 3
    %v491 = vlaneseq
    %v492 = vshrl.u32 %v491, 7
    %494 = vset.pattern.permute.xlu0 %v492
    %495 = vperm.xlu0 %494, %v490
    %v496 = vpop.permute.xlu0 %495
    %v497 = vperm.slane %v434, 4
    %v498 = vlaneseq
    %v499 = vshrl.u32 %v498, 7
    %501 = vset.pattern.permute.xlu0 %v499
    %502 = vperm.xlu0 %501, %v497
    %v503 = vpop.permute.xlu0 %502
    %v504 = vperm.slane %v434, 5
    %v505 = vlaneseq
    %v506 = vshrl.u32 %v505, 7
    %508 = vset.pattern.permute.xlu0 %v506
    %509 = vperm.xlu0 %508, %v504
    %v510 = vpop.permute.xlu0 %509
    %v511 = vperm.slane %v434, 6
    %v512 = vlaneseq
    %v513 = vshrl.u32 %v512, 7
    %515 = vset.pattern.permute.xlu0 %v513
    %516 = vperm.xlu0 %515, %v511
    %v517 = vpop.permute.xlu0 %516
    %v518 = vperm.slane %v434, 7
    %v519 = vlaneseq
    %v520 = vshrl.u32 %v519, 7
    %522 = vset.pattern.permute.xlu0 %v520
    %523 = vperm.xlu0 %522, %v518
    %v524 = vpop.permute.xlu0 %523
    %v526 = vperm.slane %v232, 0
    %v528 = vmul.f32 %v475, %v526
    %v529 = vmul.f32 %v482, %v526
    %v530 = vmul.f32 %v489, %v526
    %v531 = vmul.f32 %v496, %v526
    %v532 = vmul.f32 %v503, %v526
    %v533 = vmul.f32 %v510, %v526
    %v534 = vmul.f32 %v517, %v526
    %v535 = vmul.f32 %v524, %v526
    %v536 = vadd.f32 %v461, %v528
    %v537 = vadd.f32 %v462, %v529
    %v538 = vadd.f32 %v463, %v530
    %v539 = vadd.f32 %v464, %v531
    %v540 = vadd.f32 %v465, %v532
    %v541 = vadd.f32 %v466, %v533
    %v542 = vadd.f32 %v467, %v534
    %v543 = vadd.f32 %v468, %v535
    %v545 = vperm.slane %v235, 0
    %v547 = vmul.f32 %v475, %v545
    %v548 = vmul.f32 %v482, %v545
    %v549 = vmul.f32 %v489, %v545
    %v550 = vmul.f32 %v496, %v545
    %v551 = vmul.f32 %v503, %v545
    %v552 = vmul.f32 %v510, %v545
    %v553 = vmul.f32 %v517, %v545
    %v554 = vmul.f32 %v524, %v545
    %v555 = vadd.f32 %v536, %v547
    %v556 = vadd.f32 %v537, %v548
    %v557 = vadd.f32 %v538, %v549
    %v558 = vadd.f32 %v539, %v550
    %v559 = vadd.f32 %v540, %v551
    %v560 = vadd.f32 %v541, %v552
    %v561 = vadd.f32 %v542, %v553
    %v562 = vadd.f32 %v543, %v554
    %v563 = vlaneseq
    %v564 = vshrl.u32 %v563, 7
    %v565 = vadd.s32 %v564, 8
    %566 = vset.pattern.permute.xlu0 %v565
    %567 = vperm.xlu0 %566, %v469
    %v568 = vpop.permute.xlu0 %567
    %v569 = vlaneseq
    %v570 = vshrl.u32 %v569, 7
    %v571 = vadd.s32 %v570, 8
    %572 = vset.pattern.permute.xlu0 %v571
    %573 = vperm.xlu0 %572, %v476
    %v574 = vpop.permute.xlu0 %573
    %v575 = vlaneseq
    %v576 = vshrl.u32 %v575, 7
    %v577 = vadd.s32 %v576, 8
    %578 = vset.pattern.permute.xlu0 %v577
    %579 = vperm.xlu0 %578, %v483
    %v580 = vpop.permute.xlu0 %579
    %v581 = vlaneseq
    %v582 = vshrl.u32 %v581, 7
    %v583 = vadd.s32 %v582, 8
    %584 = vset.pattern.permute.xlu0 %v583
    %585 = vperm.xlu0 %584, %v490
    %v586 = vpop.permute.xlu0 %585
    %v587 = vlaneseq
    %v588 = vshrl.u32 %v587, 7
    %v589 = vadd.s32 %v588, 8
    %590 = vset.pattern.permute.xlu0 %v589
    %591 = vperm.xlu0 %590, %v497
    %v592 = vpop.permute.xlu0 %591
    %v593 = vlaneseq
    %v594 = vshrl.u32 %v593, 7
    %v595 = vadd.s32 %v594, 8
    %596 = vset.pattern.permute.xlu0 %v595
    %597 = vperm.xlu0 %596, %v504
    %v598 = vpop.permute.xlu0 %597
    %v599 = vlaneseq
    %v600 = vshrl.u32 %v599, 7
    %v601 = vadd.s32 %v600, 8
    %602 = vset.pattern.permute.xlu0 %v601
    %603 = vperm.xlu0 %602, %v511
    %v604 = vpop.permute.xlu0 %603
    %v605 = vlaneseq
    %v606 = vshrl.u32 %v605, 7
    %v607 = vadd.s32 %v606, 8
    %608 = vset.pattern.permute.xlu0 %v607
    %609 = vperm.xlu0 %608, %v518
    %v610 = vpop.permute.xlu0 %609
    %v612 = vperm.slane %v233, 0
    %v614 = vmul.f32 %v568, %v612
    %v615 = vmul.f32 %v574, %v612
    %v616 = vmul.f32 %v580, %v612
    %v617 = vmul.f32 %v586, %v612
    %v618 = vmul.f32 %v592, %v612
    %v619 = vmul.f32 %v598, %v612
    %v620 = vmul.f32 %v604, %v612
    %v621 = vmul.f32 %v610, %v612
    %v622 = vadd.f32 %v555, %v614
    %v623 = vadd.f32 %v556, %v615
    %v624 = vadd.f32 %v557, %v616
    %v625 = vadd.f32 %v558, %v617
    %v626 = vadd.f32 %v559, %v618
    %v627 = vadd.f32 %v560, %v619
    %v628 = vadd.f32 %v561, %v620
    %v629 = vadd.f32 %v562, %v621
    %v631 = vperm.slane %v236, 0
    %v633 = vmul.f32 %v568, %v631
    %v634 = vmul.f32 %v574, %v631
    %v635 = vmul.f32 %v580, %v631
    %v636 = vmul.f32 %v586, %v631
    %v637 = vmul.f32 %v592, %v631
    %v638 = vmul.f32 %v598, %v631
    %v639 = vmul.f32 %v604, %v631
    %v640 = vmul.f32 %v610, %v631
    %v641 = vadd.f32 %v622, %v633
    %v642 = vadd.f32 %v623, %v634
    %v643 = vadd.f32 %v624, %v635
    %v644 = vadd.f32 %v625, %v636
    %v645 = vadd.f32 %v626, %v637
    %v646 = vadd.f32 %v627, %v638
    %v647 = vadd.f32 %v628, %v639
    %v648 = vadd.f32 %v629, %v640
    %v649 = vlaneseq
    %v650 = vshrl.u32 %v649, 7
    %v651 = vadd.s32 %v650, 16
    %652 = vset.pattern.permute.xlu0 %v651
    %653 = vperm.xlu0 %652, %v469
    %v654 = vpop.permute.xlu0 %653
    %v655 = vlaneseq
    %v656 = vshrl.u32 %v655, 7
    %v657 = vadd.s32 %v656, 16
    %658 = vset.pattern.permute.xlu0 %v657
    %659 = vperm.xlu0 %658, %v476
    %v660 = vpop.permute.xlu0 %659
    %v661 = vlaneseq
    %v662 = vshrl.u32 %v661, 7
    %v663 = vadd.s32 %v662, 16
    %664 = vset.pattern.permute.xlu0 %v663
    %665 = vperm.xlu0 %664, %v483
    %v666 = vpop.permute.xlu0 %665
    %v667 = vlaneseq
    %v668 = vshrl.u32 %v667, 7
    %v669 = vadd.s32 %v668, 16
    %670 = vset.pattern.permute.xlu0 %v669
    %671 = vperm.xlu0 %670, %v490
    %v672 = vpop.permute.xlu0 %671
    %v673 = vlaneseq
    %v674 = vshrl.u32 %v673, 7
    %v675 = vadd.s32 %v674, 16
    %676 = vset.pattern.permute.xlu0 %v675
    %677 = vperm.xlu0 %676, %v497
    %v678 = vpop.permute.xlu0 %677
    %v679 = vlaneseq
    %v680 = vshrl.u32 %v679, 7
    %v681 = vadd.s32 %v680, 16
    %682 = vset.pattern.permute.xlu0 %v681
    %683 = vperm.xlu0 %682, %v504
    %v684 = vpop.permute.xlu0 %683
    %v685 = vlaneseq
    %v686 = vshrl.u32 %v685, 7
    %v687 = vadd.s32 %v686, 16
    %688 = vset.pattern.permute.xlu0 %v687
    %689 = vperm.xlu0 %688, %v511
    %v690 = vpop.permute.xlu0 %689
    %v691 = vlaneseq
    %v692 = vshrl.u32 %v691, 7
    %v693 = vadd.s32 %v692, 16
    %694 = vset.pattern.permute.xlu0 %v693
    %695 = vperm.xlu0 %694, %v518
    %v696 = vpop.permute.xlu0 %695
    %v698 = vperm.slane %v234, 0
    %v700 = vmul.f32 %v654, %v698
    %v701 = vmul.f32 %v660, %v698
    %v702 = vmul.f32 %v666, %v698
    %v703 = vmul.f32 %v672, %v698
    %v704 = vmul.f32 %v678, %v698
    %v705 = vmul.f32 %v684, %v698
    %v706 = vmul.f32 %v690, %v698
    %v707 = vmul.f32 %v696, %v698
    %v708 = vadd.f32 %v641, %v700
    %v709 = vadd.f32 %v642, %v701
    %v710 = vadd.f32 %v643, %v702
    %v711 = vadd.f32 %v644, %v703
    %v712 = vadd.f32 %v645, %v704
    %v713 = vadd.f32 %v646, %v705
    %v714 = vadd.f32 %v647, %v706
    %v715 = vadd.f32 %v648, %v707
    %v717 = vperm.slane %v237, 0
    %v719 = vmul.f32 %v654, %v717
    %v720 = vmul.f32 %v660, %v717
    %v721 = vmul.f32 %v666, %v717
    %v722 = vmul.f32 %v672, %v717
    %v723 = vmul.f32 %v678, %v717
    %v724 = vmul.f32 %v684, %v717
    %v725 = vmul.f32 %v690, %v717
    %v726 = vmul.f32 %v696, %v717
    %v727 = vadd.f32 %v708, %v719
    %v728 = vadd.f32 %v709, %v720
    %v729 = vadd.f32 %v710, %v721
    %v730 = vadd.f32 %v711, %v722
    %v731 = vadd.f32 %v712, %v723
    %v732 = vadd.f32 %v713, %v724
    %v733 = vadd.f32 %v714, %v725
    %v734 = vadd.f32 %v715, %v726
    %v735 = vtanh.pop %v727
    %v736 = vtanh.pop %v728
    %v737 = vtanh.pop %v729
    %v738 = vtanh.pop %v730
    %v739 = vtanh.pop %v731
    %v740 = vtanh.pop %v732
    %v741 = vtanh.pop %v733
    %v742 = vtanh.pop %v734
    %v744 = vperm.slane %v238, 0
    %v746 = vmul.f32 %v735, %v744
    %v747 = vmul.f32 %v736, %v744
    %v748 = vmul.f32 %v737, %v744
    %v749 = vmul.f32 %v738, %v744
    %v750 = vmul.f32 %v739, %v744
    %v751 = vmul.f32 %v740, %v744
    %v752 = vmul.f32 %v741, %v744
    %v753 = vmul.f32 %v742, %v744
    %vm754 = vcmask 130048
    %v755 = vsel %vm754, %v746, 0.0
    %756 = vadd.xlane.f32.xlu0 %v755
    %v757 = vpop.xlane.xlu0 %756
    %v758 = vsel %vm754, %v747, 0.0
    %759 = vadd.xlane.f32.xlu0 %v758
    %v760 = vpop.xlane.xlu0 %759
    %v761 = vsel %vm754, %v748, 0.0
    %762 = vadd.xlane.f32.xlu0 %v761
    %v763 = vpop.xlane.xlu0 %762
    %v764 = vsel %vm754, %v749, 0.0
    %765 = vadd.xlane.f32.xlu0 %v764
    %v766 = vpop.xlane.xlu0 %765
    %v767 = vsel %vm754, %v750, 0.0
    %768 = vadd.xlane.f32.xlu0 %v767
    %v769 = vpop.xlane.xlu0 %768
    %v770 = vsel %vm754, %v751, 0.0
    %771 = vadd.xlane.f32.xlu0 %v770
    %v772 = vpop.xlane.xlu0 %771
    %v773 = vsel %vm754, %v752, 0.0
    %774 = vadd.xlane.f32.xlu0 %v773
    %v775 = vpop.xlane.xlu0 %774
    %v776 = vsel %vm754, %v753, 0.0
    %777 = vadd.xlane.f32.xlu0 %v776
    %v778 = vpop.xlane.xlu0 %777
    %v787 = vlaneseq
    %v788 = vand.u32 %v787, 127
    %v789 = vperm.slane %v757, %v788
    %v790 = vperm.slane %v760, %v788
    %v791 = vperm.slane %v763, %v788
    %v792 = vperm.slane %v766, %v788
    %v793 = vperm.slane %v769, %v788
    %v794 = vperm.slane %v772, %v788
    %v795 = vperm.slane %v775, %v788
    %v796 = vperm.slane %v778, %v788
    %vm797 = vcmask 1041409
    %v798 = vsel %vm797, %v790, %v789
    %vm799 = vcmask 1042434
    %v800 = vsel %vm799, %v791, %v798
    %vm801 = vcmask 1043459
    %v802 = vsel %vm801, %v792, %v800
    %vm803 = vcmask 1044484
    %v804 = vsel %vm803, %v793, %v802
    %vm805 = vcmask 1045509
    %v806 = vsel %vm805, %v794, %v804
    %vm807 = vcmask 1046534
    %v808 = vsel %vm807, %v795, %v806
    %vm809 = vcmask 1047559
    %v810 = vsel %vm809, %v796, %v808
    %v812 = vsel %vm327, %v810, -inf
    %813 = vmax.xlane.f32.xlu0 %v812
    %v814 = vpop.xlane.xlu0 %813
    %v816 = vperm.slane %v814, 0
    %v817 = vperm.slane %v814, 1
    %v818 = vperm.slane %v814, 2
    %v819 = vperm.slane %v814, 3
    %v820 = vperm.slane %v814, 4
    %v821 = vperm.slane %v814, 5
    %v822 = vperm.slane %v814, 6
    %v823 = vperm.slane %v814, 7
    %v832 = vsub.f32 %v757, %v816
    %v833 = vsub.f32 %v760, %v817
    %v834 = vsub.f32 %v763, %v818
    %v835 = vsub.f32 %v766, %v819
    %v836 = vsub.f32 %v769, %v820
    %v837 = vsub.f32 %v772, %v821
    %v838 = vsub.f32 %v775, %v822
    %v839 = vsub.f32 %v778, %v823
    %v840 = vmul.f32 %v832, 1.442695
    %v841 = vpow.pop %v840
    %v842 = vmul.f32 %v833, 1.442695
    %v843 = vpow.pop %v842
    %v844 = vmul.f32 %v834, 1.442695
    %v845 = vpow.pop %v844
    %v846 = vmul.f32 %v835, 1.442695
    %v847 = vpow.pop %v846
    %v848 = vmul.f32 %v836, 1.442695
    %v849 = vpow.pop %v848
    %v850 = vmul.f32 %v837, 1.442695
    %v851 = vpow.pop %v850
    %v852 = vmul.f32 %v838, 1.442695
    %v853 = vpow.pop %v852
    %v854 = vmul.f32 %v839, 1.442695
    %v855 = vpow.pop %v854
    %864 = vset.pattern.permute.xlu0 0
    %865 = vperm.xlu0 %864, %v841
    %v866 = vpop.permute.xlu0 %865
    %867 = vset.pattern.permute.xlu0 0
    %868 = vperm.xlu0 %867, %v843
    %v869 = vpop.permute.xlu0 %868
    %870 = vset.pattern.permute.xlu0 0
    %871 = vperm.xlu0 %870, %v845
    %v872 = vpop.permute.xlu0 %871
    %873 = vset.pattern.permute.xlu0 0
    %874 = vperm.xlu0 %873, %v847
    %v875 = vpop.permute.xlu0 %874
    %876 = vset.pattern.permute.xlu0 0
    %877 = vperm.xlu0 %876, %v849
    %v878 = vpop.permute.xlu0 %877
    %879 = vset.pattern.permute.xlu0 0
    %880 = vperm.xlu0 %879, %v851
    %v881 = vpop.permute.xlu0 %880
    %882 = vset.pattern.permute.xlu0 0
    %883 = vperm.xlu0 %882, %v853
    %v884 = vpop.permute.xlu0 %883
    %885 = vset.pattern.permute.xlu0 0
    %886 = vperm.xlu0 %885, %v855
    %v887 = vpop.permute.xlu0 %886
    %v888 = vperm.slane %v866, %v788
    %v889 = vperm.slane %v869, %v788
    %v890 = vperm.slane %v872, %v788
    %v891 = vperm.slane %v875, %v788
    %v892 = vperm.slane %v878, %v788
    %v893 = vperm.slane %v881, %v788
    %v894 = vperm.slane %v884, %v788
    %v895 = vperm.slane %v887, %v788
    %v896 = vsel %vm797, %v889, %v888
    %v897 = vsel %vm799, %v890, %v896
    %v898 = vsel %vm801, %v891, %v897
    %v899 = vsel %vm803, %v892, %v898
    %v900 = vsel %vm805, %v893, %v899
    %v901 = vsel %vm807, %v894, %v900
    %v902 = vsel %vm809, %v895, %v901
    %v904 = vsel %vm327, %v902, 0.0
    %905 = vadd.xlane.f32.xlu0 %v904
    %v906 = vpop.xlane.xlu0 %905
    %v907 = vrcp.pop %v906
    %v909 = vperm.slane %v907, 0
    %v910 = vperm.slane %v907, 1
    %v911 = vperm.slane %v907, 2
    %v912 = vperm.slane %v907, 3
    %v913 = vperm.slane %v907, 4
    %v914 = vperm.slane %v907, 5
    %v915 = vperm.slane %v907, 6
    %v916 = vperm.slane %v907, 7
    %v925 = vmul.f32 %v841, %v909
    %v926 = vmul.f32 %v843, %v910
    %v927 = vmul.f32 %v845, %v911
    %v928 = vmul.f32 %v847, %v912
    %v929 = vmul.f32 %v849, %v913
    %v930 = vmul.f32 %v851, %v914
    %v931 = vmul.f32 %v853, %v915
    %v932 = vmul.f32 %v855, %v916
    %v933 = vpack.c.bf16 %v925, %v925
    %v934 = vpack.c.bf16 %v926, %v926
    %v935 = vpack.c.bf16 %v927, %v927
    %v936 = vpack.c.bf16 %v928, %v928
    %v937 = vpack.c.bf16 %v929, %v929
    %v938 = vpack.c.bf16 %v930, %v930
    %v939 = vpack.c.bf16 %v931, %v931
    %v940 = vpack.c.bf16 %v932, %v932
    %v942 = vunpack.c.l.b16 %v933
    %v943 = vpack.c.b16 %v942, %v942
    %v944 = vunpack.c.l.b16 %v943
    %945 = vset.pattern.permute.xlu0 0
    %946 = vperm.xlu0 %945, %v944
    %v947 = vpop.permute.xlu0 %946
    %v948 = vperm.slane %v947, %v788
    %v949 = vpack.c.b16 %v948, %v948
    %v951 = vsel %vm327, %v949, 0
    %v954 = vsel %vm331, %v190, 0
    %956 = vmatpush.bf16.msra.mxu0 0
    %957 = vmatpush.bf16.msra.mxu0 0
    %958 = vmatpush.bf16.msra.mxu0 0
    %959 = vmatpush.bf16.msra.mxu0 0
    %960 = vmatpush.bf16.msra.mxu0 0
    %961 = vmatpush.bf16.msra.mxu0 0
    %962 = vmatpush.bf16.msra.mxu0 0
    %963 = vmatpush.bf16.msra.mxu0 %v954
    %964 = vmatmul.bf16.gmra.mxu0 %v951
    %v965 = vpop.f32.mrf.mxu0
    %v966 = vadd.f32 0.0, %v965
    %v967 = vpop.f32.mrf.mxu0
    %968 = vdwg.mxu0
    %v970 = vunpack.c.l.b16 %v934
    %v971 = vpack.c.b16 %v970, %v970
    %v972 = vunpack.c.l.b16 %v971
    %973 = vset.pattern.permute.xlu0 0
    %974 = vperm.xlu0 %973, %v972
    %v975 = vpop.permute.xlu0 %974
    %v976 = vperm.slane %v975, %v788
    %v977 = vpack.c.b16 %v976, %v976
    %v979 = vsel %vm327, %v977, 0
    %v982 = vsel %vm331, %v191, 0
    %984 = vmatpush.bf16.msra.mxu0 0
    %985 = vmatpush.bf16.msra.mxu0 0
    %986 = vmatpush.bf16.msra.mxu0 0
    %987 = vmatpush.bf16.msra.mxu0 0
    %988 = vmatpush.bf16.msra.mxu0 0
    %989 = vmatpush.bf16.msra.mxu0 0
    %990 = vmatpush.bf16.msra.mxu0 0
    %991 = vmatpush.bf16.msra.mxu0 %v982
    %992 = vmatmul.bf16.gmra.mxu0 %v979
    %v993 = vpop.f32.mrf.mxu0
    %v994 = vadd.f32 0.0, %v993
    %v995 = vpop.f32.mrf.mxu0
    %996 = vdwg.mxu0
    %v998 = vunpack.c.l.b16 %v935
    %v999 = vpack.c.b16 %v998, %v998
    %v1000 = vunpack.c.l.b16 %v999
    %1001 = vset.pattern.permute.xlu0 0
    %1002 = vperm.xlu0 %1001, %v1000
    %v1003 = vpop.permute.xlu0 %1002
    %v1004 = vperm.slane %v1003, %v788
    %v1005 = vpack.c.b16 %v1004, %v1004
    %v1007 = vsel %vm327, %v1005, 0
    %v1010 = vsel %vm331, %v192, 0
    %1012 = vmatpush.bf16.msra.mxu0 0
    %1013 = vmatpush.bf16.msra.mxu0 0
    %1014 = vmatpush.bf16.msra.mxu0 0
    %1015 = vmatpush.bf16.msra.mxu0 0
    %1016 = vmatpush.bf16.msra.mxu0 0
    %1017 = vmatpush.bf16.msra.mxu0 0
    %1018 = vmatpush.bf16.msra.mxu0 0
    %1019 = vmatpush.bf16.msra.mxu0 %v1010
    %1020 = vmatmul.bf16.gmra.mxu0 %v1007
    %v1021 = vpop.f32.mrf.mxu0
    %v1022 = vadd.f32 0.0, %v1021
    %v1023 = vpop.f32.mrf.mxu0
    %1024 = vdwg.mxu0
    %v1026 = vunpack.c.l.b16 %v936
    %v1027 = vpack.c.b16 %v1026, %v1026
    %v1028 = vunpack.c.l.b16 %v1027
    %1029 = vset.pattern.permute.xlu0 0
    %1030 = vperm.xlu0 %1029, %v1028
    %v1031 = vpop.permute.xlu0 %1030
    %v1032 = vperm.slane %v1031, %v788
    %v1033 = vpack.c.b16 %v1032, %v1032
    %v1035 = vsel %vm327, %v1033, 0
    %v1038 = vsel %vm331, %v193, 0
    %1040 = vmatpush.bf16.msra.mxu0 0
    %1041 = vmatpush.bf16.msra.mxu0 0
    %1042 = vmatpush.bf16.msra.mxu0 0
    %1043 = vmatpush.bf16.msra.mxu0 0
    %1044 = vmatpush.bf16.msra.mxu0 0
    %1045 = vmatpush.bf16.msra.mxu0 0
    %1046 = vmatpush.bf16.msra.mxu0 0
    %1047 = vmatpush.bf16.msra.mxu0 %v1038
    %1048 = vmatmul.bf16.gmra.mxu0 %v1035
    %v1049 = vpop.f32.mrf.mxu0
    %v1050 = vadd.f32 0.0, %v1049
    %v1051 = vpop.f32.mrf.mxu0
    %1052 = vdwg.mxu0
    %v1054 = vunpack.c.l.b16 %v937
    %v1055 = vpack.c.b16 %v1054, %v1054
    %v1056 = vunpack.c.l.b16 %v1055
    %1057 = vset.pattern.permute.xlu0 0
    %1058 = vperm.xlu0 %1057, %v1056
    %v1059 = vpop.permute.xlu0 %1058
    %v1060 = vperm.slane %v1059, %v788
    %v1061 = vpack.c.b16 %v1060, %v1060
    %v1063 = vsel %vm327, %v1061, 0
    %v1066 = vsel %vm331, %v194, 0
    %1068 = vmatpush.bf16.msra.mxu0 0
    %1069 = vmatpush.bf16.msra.mxu0 0
    %1070 = vmatpush.bf16.msra.mxu0 0
    %1071 = vmatpush.bf16.msra.mxu0 0
    %1072 = vmatpush.bf16.msra.mxu0 0
    %1073 = vmatpush.bf16.msra.mxu0 0
    %1074 = vmatpush.bf16.msra.mxu0 0
    %1075 = vmatpush.bf16.msra.mxu0 %v1066
    %1076 = vmatmul.bf16.gmra.mxu0 %v1063
    %v1077 = vpop.f32.mrf.mxu0
    %v1078 = vadd.f32 0.0, %v1077
    %v1079 = vpop.f32.mrf.mxu0
    %1080 = vdwg.mxu0
    %v1082 = vunpack.c.l.b16 %v938
    %v1083 = vpack.c.b16 %v1082, %v1082
    %v1084 = vunpack.c.l.b16 %v1083
    %1085 = vset.pattern.permute.xlu0 0
    %1086 = vperm.xlu0 %1085, %v1084
    %v1087 = vpop.permute.xlu0 %1086
    %v1088 = vperm.slane %v1087, %v788
    %v1089 = vpack.c.b16 %v1088, %v1088
    %v1091 = vsel %vm327, %v1089, 0
    %v1094 = vsel %vm331, %v195, 0
    %1096 = vmatpush.bf16.msra.mxu0 0
    %1097 = vmatpush.bf16.msra.mxu0 0
    %1098 = vmatpush.bf16.msra.mxu0 0
    %1099 = vmatpush.bf16.msra.mxu0 0
    %1100 = vmatpush.bf16.msra.mxu0 0
    %1101 = vmatpush.bf16.msra.mxu0 0
    %1102 = vmatpush.bf16.msra.mxu0 0
    %1103 = vmatpush.bf16.msra.mxu0 %v1094
    %1104 = vmatmul.bf16.gmra.mxu0 %v1091
    %v1105 = vpop.f32.mrf.mxu0
    %v1106 = vadd.f32 0.0, %v1105
    %v1107 = vpop.f32.mrf.mxu0
    %1108 = vdwg.mxu0
    %v1110 = vunpack.c.l.b16 %v939
    %v1111 = vpack.c.b16 %v1110, %v1110
    %v1112 = vunpack.c.l.b16 %v1111
    %1113 = vset.pattern.permute.xlu0 0
    %1114 = vperm.xlu0 %1113, %v1112
    %v1115 = vpop.permute.xlu0 %1114
    %v1116 = vperm.slane %v1115, %v788
    %v1117 = vpack.c.b16 %v1116, %v1116
    %v1119 = vsel %vm327, %v1117, 0
    %v1122 = vsel %vm331, %v196, 0
    %1124 = vmatpush.bf16.msra.mxu0 0
    %1125 = vmatpush.bf16.msra.mxu0 0
    %1126 = vmatpush.bf16.msra.mxu0 0
    %1127 = vmatpush.bf16.msra.mxu0 0
    %1128 = vmatpush.bf16.msra.mxu0 0
    %1129 = vmatpush.bf16.msra.mxu0 0
    %1130 = vmatpush.bf16.msra.mxu0 0
    %1131 = vmatpush.bf16.msra.mxu0 %v1122
    %1132 = vmatmul.bf16.gmra.mxu0 %v1119
    %v1133 = vpop.f32.mrf.mxu0
    %v1134 = vadd.f32 0.0, %v1133
    %v1135 = vpop.f32.mrf.mxu0
    %1136 = vdwg.mxu0
    %v1138 = vunpack.c.l.b16 %v940
    %v1139 = vpack.c.b16 %v1138, %v1138
    %v1140 = vunpack.c.l.b16 %v1139
    %1141 = vset.pattern.permute.xlu0 0
    %1142 = vperm.xlu0 %1141, %v1140
    %v1143 = vpop.permute.xlu0 %1142
    %v1144 = vperm.slane %v1143, %v788
    %v1145 = vpack.c.b16 %v1144, %v1144
    %v1147 = vsel %vm327, %v1145, 0
    %v1150 = vsel %vm331, %v197, 0
    %1152 = vmatpush.bf16.msra.mxu0 0
    %1153 = vmatpush.bf16.msra.mxu0 0
    %1154 = vmatpush.bf16.msra.mxu0 0
    %1155 = vmatpush.bf16.msra.mxu0 0
    %1156 = vmatpush.bf16.msra.mxu0 0
    %1157 = vmatpush.bf16.msra.mxu0 0
    %1158 = vmatpush.bf16.msra.mxu0 0
    %1159 = vmatpush.bf16.msra.mxu0 %v1150
    %1160 = vmatmul.bf16.gmra.mxu0 %v1147
    %v1161 = vpop.f32.mrf.mxu0
    %v1162 = vadd.f32 0.0, %v1161
    %v1163 = vpop.f32.mrf.mxu0
    %1164 = vdwg.mxu0
    %v1165 = vadd.f32 %v925, 0.0
    %v1166 = vadd.f32 %v926, 0.0
    %v1167 = vadd.f32 %v927, 0.0
    %v1168 = vadd.f32 %v928, 0.0
    %v1169 = vadd.f32 %v929, 0.0
    %v1170 = vadd.f32 %v930, 0.0
    %v1171 = vadd.f32 %v931, 0.0
    %v1172 = vadd.f32 %v932, 0.0
    %v1173 = vpack.c.bf16 %v966, %v966
    %v1174 = vpack.c.bf16 %v994, %v994
    %v1175 = vpack.c.bf16 %v1022, %v1022
    %v1176 = vpack.c.bf16 %v1050, %v1050
    %v1177 = vpack.c.bf16 %v1078, %v1078
    %v1178 = vpack.c.bf16 %v1106, %v1106
    %v1179 = vpack.c.bf16 %v1134, %v1134
    %v1180 = vpack.c.bf16 %v1162, %v1162
    %v1189 = vunpack.c.l.b16 %v1173
    %v1190 = vunpack.c.l.b16 %v1174
    %v1191 = vunpack.c.l.b16 %v1175
    %v1192 = vunpack.c.l.b16 %v1176
    %v1193 = vunpack.c.l.b16 %v1177
    %v1194 = vunpack.c.l.b16 %v1178
    %v1195 = vunpack.c.l.b16 %v1179
    %v1196 = vunpack.c.l.b16 %v1180
    %v1197 = vrot.slane %v1190, 7
    %v1198 = vsel %vm797, %v1197, %v1189
    %v1199 = vrot.slane %v1191, 6
    %v1200 = vsel %vm799, %v1199, %v1198
    %v1201 = vrot.slane %v1192, 5
    %v1202 = vsel %vm801, %v1201, %v1200
    %v1203 = vrot.slane %v1193, 4
    %v1204 = vsel %vm803, %v1203, %v1202
    %v1205 = vrot.slane %v1194, 3
    %v1206 = vsel %vm805, %v1205, %v1204
    %v1207 = vrot.slane %v1195, 2
    %v1208 = vsel %vm807, %v1207, %v1206
    %v1209 = vrot.slane %v1196, 1
    %v1210 = vsel %vm809, %v1209, %v1208
    %v1211 = vpack.c.b16 %v1210, %v1210
    %v1216 = vunpack.c.l.b16 %v239
    %v1217 = vunpack.c.l.b16 %v240
    %v1218 = vunpack.c.l.b16 %v241
    %v1219 = vunpack.c.l.b16 %v242
    %v1220 = vpack.c.b16 %v1217, %v1216
    %v1221 = vpack.c.b16 %v1219, %v1218
    %v1225 = vsel %vm260, %v1211, 0
    %1227 = vmatpush.bf16.msra.mxu0 0
    %1228 = vmatpush.bf16.msra.mxu0 0
    %1229 = vmatpush.bf16.msra.mxu0 0
    %1230 = vmatpush.bf16.msra.mxu0 0
    %1231 = vmatpush.bf16.msra.mxu0 0
    %1232 = vmatpush.bf16.msra.mxu0 0
    %1233 = vmatpush.bf16.msra.mxu0 %v1221
    %1234 = vmatpush.bf16.msra.mxu0 %v1220
    %1235 = vmatmul.bf16.gmra.mxu0 %v1225
    %v1236 = vpop.f32.mrf.mxu0
    %v1237 = vadd.f32 %v299, %v1236
    %v1238 = vpop.f32.mrf.mxu0
    %1239 = vdwg.mxu0
    %v1240 = vadd.f32 %v1237, %v225
    %v1241 = vxor.u32 %v1240, 2147483648
    %v1242 = vmul.f32 %v1241, 1.442695
    %v1243 = vpow.pop %v1242
    %v1244 = vadd.f32 %v1243, 1.0
    %v1245 = vrcp.pop %v1244
    %v1246 = vmul.f32 %v1244, %v1245
    %v1247 = vsub.f32 1.0, %v1246
    %v1248 = vmul.f32 %v1245, %v1247
    %v1249 = vadd.f32 %v1245, %v1248
    %vm1250 = vweird.f32 %v1244
    %vm1251 = vweird.f32 %v1245
    %vm1252 = vmor %vm1250, %vm1251
    %v1253 = vsel %vm1252, %v1245, %v1249
    %v1254 = vand.u32 2147483647, %v1244
    %vm1255 = vcmp.eq.f32.partialorder %v1254, 8.507059e+37
    %v1256 = vand.u32 %v1244, 2147483648
    %v1257 = vor.u32 1.1754944e-38, %v1256
    %v1258 = vsel %vm1255, %v1257, %v1253
    %v1259 = vmul.f32 1.0, %v1258
    %v1260 = vtanh.pop %v1240
    %v1261 = vmul.f32 %v1259, 0.0
    %1263 = vrot.lane.b32.xlu0 %v1260, 64
    %v1264 = vpop.permute.xlu0 %1263
    %v1266 = vmul.f32 %v1259, %v1264
    %1268 = vrot.lane.b32.xlu0 %v1266, 32
    %v1269 = vpop.permute.xlu0 %1268
    %v1271 = vadd.f32 %v1261, %v1269
    %v1272 = vtanh.pop %v1271
    %1274 = vrot.lane.b32.xlu0 %v1272, 64
    %v1275 = vpop.permute.xlu0 %1274
    %v1277 = vmul.f32 %v1259, %v1275
    %1279 = vrot.lane.b32.xlu0 %v1277, 32
    %v1280 = vpop.permute.xlu0 %1279
    %1282 = vst.msk [vmem:[#allocation2] sm:$0xff] %vm260, %v1280
    %s1283 = scalar_lea.vmem [#allocation3], 4
    %v1284 = vld [vmem:[%s1283] sm:$0xf]
    %1285 = vmatpush.bf16.msra.mxu0 0
    %1286 = vmatpush.bf16.msra.mxu0 0
    %1287 = vmatpush.bf16.msra.mxu0 0
    %1288 = vmatpush.bf16.msra.mxu0 0
    %1289 = vmatpush.bf16.msra.mxu0 0
    %1290 = vmatpush.bf16.msra.mxu0 0
    %1291 = vmatpush.bf16.msra.mxu0 %v257
    %1292 = vmatpush.bf16.msra.mxu0 %v256
    %1293 = vmatmul.bf16.gmra.mxu0 %v404
    %v1294 = vpop.f32.mrf.mxu0
    %v1295 = vadd.f32 0.0, %v1294
    %v1296 = vpop.f32.mrf.mxu0
    %1297 = vdwg.mxu0
    %v1298 = vpack.c.bf16 %v1277, %v1277
    %1300 = vrot.lane.b32.xlu0 %v1298, 32
    %v1301 = vpop.permute.xlu0 %1300
    %v1303 = vsel %vm260, %v1301, 0
    %1305 = vmatpush.bf16.msra.mxu0 0
    %1306 = vmatpush.bf16.msra.mxu0 0
    %1307 = vmatpush.bf16.msra.mxu0 0
    %1308 = vmatpush.bf16.msra.mxu0 0
    %1309 = vmatpush.bf16.msra.mxu0 0
    %1310 = vmatpush.bf16.msra.mxu0 0
    %1311 = vmatpush.bf16.msra.mxu0 %v286
    %1312 = vmatpush.bf16.msra.mxu0 %v285
    %1313 = vmatmul.bf16.gmra.mxu0 %v1303
    %v1314 = vpop.f32.mrf.mxu0
    %v1315 = vadd.f32 0.0, %v1314
    %v1316 = vpop.f32.mrf.mxu0
    %1317 = vdwg.mxu0
    %1318 = vmatpush.bf16.msra.mxu0 0
    %1319 = vmatpush.bf16.msra.mxu0 0
    %1320 = vmatpush.bf16.msra.mxu0 0
    %1321 = vmatpush.bf16.msra.mxu0 0
    %1322 = vmatpush.bf16.msra.mxu0 0
    %1323 = vmatpush.bf16.msra.mxu0 0
    %1324 = vmatpush.bf16.msra.mxu0 %v311
    %1325 = vmatpush.bf16.msra.mxu0 %v310
    %1326 = vmatmul.bf16.gmra.mxu0 %v1225
    %v1327 = vpop.f32.mrf.mxu0
    %v1328 = vadd.f32 0.0, %v1327
    %v1329 = vpop.f32.mrf.mxu0
    %1330 = vdwg.mxu0
    %v1332 = vsel %vm327, %v1284, 0
    %1334 = vmatpush.bf16.msra.mxu0 0
    %1335 = vmatpush.bf16.msra.mxu0 0
    %1336 = vmatpush.bf16.msra.mxu0 0
    %1337 = vmatpush.bf16.msra.mxu0 0
    %1338 = vmatpush.bf16.msra.mxu0 0
    %1339 = vmatpush.bf16.msra.mxu0 0
    %1340 = vmatpush.bf16.msra.mxu0 0
    %1341 = vmatpush.bf16.msra.mxu0 %v333
    %1342 = vmatmul.bf16.gmra.mxu0 %v1332
    %v1343 = vpop.f32.mrf.mxu0
    %v1344 = vadd.f32 %v1328, %v1343
    %v1345 = vpop.f32.mrf.mxu0
    %1346 = vdwg.mxu0
    %v1347 = vadd.f32 %v1344, %v1295
    %v1348 = vadd.f32 %v1347, %v221
    %v1349 = vxor.u32 %v1348, 2147483648
    %v1350 = vmul.f32 %v1349, 1.442695
    %v1351 = vpow.pop %v1350
    %v1352 = vadd.f32 %v1351, 1.0
    %v1353 = vrcp.pop %v1352
    %v1354 = vmul.f32 %v1352, %v1353
    %v1355 = vsub.f32 1.0, %v1354
    %v1356 = vmul.f32 %v1353, %v1355
    %v1357 = vadd.f32 %v1353, %v1356
    %vm1358 = vweird.f32 %v1352
    %vm1359 = vweird.f32 %v1353
    %vm1360 = vmor %vm1358, %vm1359
    %v1361 = vsel %vm1360, %v1353, %v1357
    %v1362 = vand.u32 2147483647, %v1352
    %vm1363 = vcmp.eq.f32.partialorder %v1362, 8.507059e+37
    %v1364 = vand.u32 %v1352, 2147483648
    %v1365 = vor.u32 1.1754944e-38, %v1364
    %v1366 = vsel %vm1363, %v1365, %v1361
    %v1367 = vmul.f32 1.0, %v1366
    %v1368 = vtanh.pop %v1348
    %v1369 = vmul.f32 %v1367, %v380
    %1371 = vrot.lane.b32.xlu0 %v1368, 64
    %v1372 = vpop.permute.xlu0 %1371
    %v1374 = vmul.f32 %v1367, %v1372
    %1376 = vrot.lane.b32.xlu0 %v1374, 32
    %v1377 = vpop.permute.xlu0 %1376
    %v1379 = vadd.f32 %v1369, %v1377
    %v1380 = vtanh.pop %v1379
    %1382 = vrot.lane.b32.xlu0 %v1380, 64
    %v1383 = vpop.permute.xlu0 %1382
    %v1385 = vmul.f32 %v1367, %v1383
    %v1386 = vpack.c.bf16 %v1385, %v1385
    %1388 = vrot.lane.b32.xlu0 %v1386, 32
    %v1389 = vpop.permute.xlu0 %1388
    %v1391 = vsel %vm260, %v1389, 0
    %1393 = vmatpush.bf16.msra.mxu0 0
    %1394 = vmatpush.bf16.msra.mxu0 0
    %1395 = vmatpush.bf16.msra.mxu0 0
    %1396 = vmatpush.bf16.msra.mxu0 0
    %1397 = vmatpush.bf16.msra.mxu0 0
    %1398 = vmatpush.bf16.msra.mxu0 0
    %1399 = vmatpush.bf16.msra.mxu0 %v400
    %1400 = vmatpush.bf16.msra.mxu0 %v399
    %1401 = vmatmul.bf16.gmra.mxu0 %v1391
    %v1402 = vpop.f32.mrf.mxu0
    %v1403 = vadd.f32 0.0, %v1402
    %v1404 = vpop.f32.mrf.mxu0
    %1405 = vdwg.mxu0
    %1406 = vset.pattern.permute.xlu0 0
    %1407 = vperm.xlu0 %1406, %v942
    %v1408 = vpop.permute.xlu0 %1407
    %1409 = vset.pattern.permute.xlu0 0
    %1410 = vperm.xlu0 %1409, %v970
    %v1411 = vpop.permute.xlu0 %1410
    %1412 = vset.pattern.permute.xlu0 0
    %1413 = vperm.xlu0 %1412, %v998
    %v1414 = vpop.permute.xlu0 %1413
    %1415 = vset.pattern.permute.xlu0 0
    %1416 = vperm.xlu0 %1415, %v1026
    %v1417 = vpop.permute.xlu0 %1416
    %1418 = vset.pattern.permute.xlu0 0
    %1419 = vperm.xlu0 %1418, %v1054
    %v1420 = vpop.permute.xlu0 %1419
    %1421 = vset.pattern.permute.xlu0 0
    %1422 = vperm.xlu0 %1421, %v1082
    %v1423 = vpop.permute.xlu0 %1422
    %1424 = vset.pattern.permute.xlu0 0
    %1425 = vperm.xlu0 %1424, %v1110
    %v1426 = vpop.permute.xlu0 %1425
    %1427 = vset.pattern.permute.xlu0 0
    %1428 = vperm.xlu0 %1427, %v1138
    %v1429 = vpop.permute.xlu0 %1428
    %v1430 = vperm.slane %v1408, %v788
    %v1431 = vperm.slane %v1411, %v788
    %v1432 = vperm.slane %v1414, %v788
    %v1433 = vperm.slane %v1417, %v788
    %v1434 = vperm.slane %v1420, %v788
    %v1435 = vperm.slane %v1423, %v788
    %v1436 = vperm.slane %v1426, %v788
    %v1437 = vperm.slane %v1429, %v788
    %v1438 = vsel %vm797, %v1431, %v1430
    %v1439 = vsel %vm799, %v1432, %v1438
    %v1440 = vsel %vm801, %v1433, %v1439
    %v1441 = vsel %vm803, %v1434, %v1440
    %v1442 = vsel %vm805, %v1435, %v1441
    %v1443 = vsel %vm807, %v1436, %v1442
    %v1444 = vsel %vm809, %v1437, %v1443
    %v1445 = vpack.c.b16 %v1444, %v1444
    %v1447 = vsel %vm327, %v1445, 0
    %1449 = vmatpush.bf16.msra.mxu0 0
    %1450 = vmatpush.bf16.msra.mxu0 0
    %1451 = vmatpush.bf16.msra.mxu0 0
    %1452 = vmatpush.bf16.msra.mxu0 0
    %1453 = vmatpush.bf16.msra.mxu0 0
    %1454 = vmatpush.bf16.msra.mxu0 0
    %1455 = vmatpush.bf16.msra.mxu0 0
    %1456 = vmatpush.bf16.msra.mxu0 %v422
    %1457 = vmatmul.bf16.gmra.mxu0 %v1447
    %v1458 = vpop.f32.mrf.mxu0
    %v1459 = vadd.f32 0.0, %v1458
    %v1460 = vpop.f32.mrf.mxu0
    %1461 = vdwg.mxu0
    %v1462 = vpack.c.bf16 %v1165, %v1165
    %v1463 = vpack.c.bf16 %v1166, %v1166
    %v1464 = vpack.c.bf16 %v1167, %v1167
    %v1465 = vpack.c.bf16 %v1168, %v1168
    %v1466 = vpack.c.bf16 %v1169, %v1169
    %v1467 = vpack.c.bf16 %v1170, %v1170
    %v1468 = vpack.c.bf16 %v1171, %v1171
    %v1469 = vpack.c.bf16 %v1172, %v1172
    %v1478 = vunpack.c.l.b16 %v1462
    %v1479 = vunpack.c.l.b16 %v1463
    %v1480 = vunpack.c.l.b16 %v1464
    %v1481 = vunpack.c.l.b16 %v1465
    %v1482 = vunpack.c.l.b16 %v1466
    %v1483 = vunpack.c.l.b16 %v1467
    %v1484 = vunpack.c.l.b16 %v1468
    %v1485 = vunpack.c.l.b16 %v1469
    %1486 = vset.pattern.permute.xlu0 0
    %1487 = vperm.xlu0 %1486, %v1478
    %v1488 = vpop.permute.xlu0 %1487
    %1489 = vset.pattern.permute.xlu0 0
    %1490 = vperm.xlu0 %1489, %v1479
    %v1491 = vpop.permute.xlu0 %1490
    %1492 = vset.pattern.permute.xlu0 0
    %1493 = vperm.xlu0 %1492, %v1480
    %v1494 = vpop.permute.xlu0 %1493
    %1495 = vset.pattern.permute.xlu0 0
    %1496 = vperm.xlu0 %1495, %v1481
    %v1497 = vpop.permute.xlu0 %1496
    %1498 = vset.pattern.permute.xlu0 0
    %1499 = vperm.xlu0 %1498, %v1482
    %v1500 = vpop.permute.xlu0 %1499
    %1501 = vset.pattern.permute.xlu0 0
    %1502 = vperm.xlu0 %1501, %v1483
    %v1503 = vpop.permute.xlu0 %1502
    %1504 = vset.pattern.permute.xlu0 0
    %1505 = vperm.xlu0 %1504, %v1484
    %v1506 = vpop.permute.xlu0 %1505
    %1507 = vset.pattern.permute.xlu0 0
    %1508 = vperm.xlu0 %1507, %v1485
    %v1509 = vpop.permute.xlu0 %1508
    %v1510 = vperm.slane %v1488, %v788
    %v1511 = vperm.slane %v1491, %v788
    %v1512 = vperm.slane %v1494, %v788
    %v1513 = vperm.slane %v1497, %v788
    %v1514 = vperm.slane %v1500, %v788
    %v1515 = vperm.slane %v1503, %v788
    %v1516 = vperm.slane %v1506, %v788
    %v1517 = vperm.slane %v1509, %v788
    %v1518 = vsel %vm797, %v1511, %v1510
    %v1519 = vsel %vm799, %v1512, %v1518
    %v1520 = vsel %vm801, %v1513, %v1519
    %v1521 = vsel %vm803, %v1514, %v1520
    %v1522 = vsel %vm805, %v1515, %v1521
    %v1523 = vsel %vm807, %v1516, %v1522
    %v1524 = vsel %vm809, %v1517, %v1523
    %v1525 = vpack.c.b16 %v1524, %v1524
    %v1527 = vsel %vm327, %v1525, 0
    %1529 = vmatpush.bf16.msra.mxu0 0
    %1530 = vmatpush.bf16.msra.mxu0 0
    %1531 = vmatpush.bf16.msra.mxu0 0
    %1532 = vmatpush.bf16.msra.mxu0 0
    %1533 = vmatpush.bf16.msra.mxu0 0
    %1534 = vmatpush.bf16.msra.mxu0 0
    %1535 = vmatpush.bf16.msra.mxu0 0
    %1536 = vmatpush.bf16.msra.mxu0 %v422
    %1537 = vmatmul.bf16.gmra.mxu0 %v1527
    %v1538 = vpop.f32.mrf.mxu0
    %v1539 = vadd.f32 0.0, %v1538
    %v1540 = vpop.f32.mrf.mxu0
    %1541 = vdwg.mxu0
    %v1543 = vrot.slane %v1403, 1
    %v1544 = vrot.slane %v1403, 2
    %v1545 = vrot.slane %v1403, 3
    %v1546 = vrot.slane %v1403, 4
    %v1547 = vrot.slane %v1403, 5
    %v1548 = vrot.slane %v1403, 6
    %v1549 = vrot.slane %v1403, 7
    %v1550 = vperm.slane %v1403, 0
    %v1551 = vperm.slane %v1543, 0
    %v1552 = vperm.slane %v1544, 0
    %v1553 = vperm.slane %v1545, 0
    %v1554 = vperm.slane %v1546, 0
    %v1555 = vperm.slane %v1547, 0
    %v1556 = vperm.slane %v1548, 0
    %v1557 = vperm.slane %v1549, 0
    %v1566 = vadd.f32 %v198, %v1550
    %v1567 = vadd.f32 %v199, %v1551
    %v1568 = vadd.f32 %v200, %v1552
    %v1569 = vadd.f32 %v201, %v1553
    %v1570 = vadd.f32 %v202, %v1554
    %v1571 = vadd.f32 %v203, %v1555
    %v1572 = vadd.f32 %v204, %v1556
    %v1573 = vadd.f32 %v205, %v1557
    %v1574 = vperm.slane %v1459, 0
    %v1575 = vlaneseq
    %v1576 = vshrl.u32 %v1575, 7
    %1578 = vset.pattern.permute.xlu0 %v1576
    %1579 = vperm.xlu0 %1578, %v1574
    %v1580 = vpop.permute.xlu0 %1579
    %v1581 = vperm.slane %v1459, 1
    %v1582 = vlaneseq
    %v1583 = vshrl.u32 %v1582, 7
    %1585 = vset.pattern.permute.xlu0 %v1583
    %1586 = vperm.xlu0 %1585, %v1581
    %v1587 = vpop.permute.xlu0 %1586
    %v1588 = vperm.slane %v1459, 2
    %v1589 = vlaneseq
    %v1590 = vshrl.u32 %v1589, 7
    %1592 = vset.pattern.permute.xlu0 %v1590
    %1593 = vperm.xlu0 %1592, %v1588
    %v1594 = vpop.permute.xlu0 %1593
    %v1595 = vperm.slane %v1459, 3
    %v1596 = vlaneseq
    %v1597 = vshrl.u32 %v1596, 7
    %1599 = vset.pattern.permute.xlu0 %v1597
    %1600 = vperm.xlu0 %1599, %v1595
    %v1601 = vpop.permute.xlu0 %1600
    %v1602 = vperm.slane %v1459, 4
    %v1603 = vlaneseq
    %v1604 = vshrl.u32 %v1603, 7
    %1606 = vset.pattern.permute.xlu0 %v1604
    %1607 = vperm.xlu0 %1606, %v1602
    %v1608 = vpop.permute.xlu0 %1607
    %v1609 = vperm.slane %v1459, 5
    %v1610 = vlaneseq
    %v1611 = vshrl.u32 %v1610, 7
    %1613 = vset.pattern.permute.xlu0 %v1611
    %1614 = vperm.xlu0 %1613, %v1609
    %v1615 = vpop.permute.xlu0 %1614
    %v1616 = vperm.slane %v1459, 6
    %v1617 = vlaneseq
    %v1618 = vshrl.u32 %v1617, 7
    %1620 = vset.pattern.permute.xlu0 %v1618
    %1621 = vperm.xlu0 %1620, %v1616
    %v1622 = vpop.permute.xlu0 %1621
    %v1623 = vperm.slane %v1459, 7
    %v1624 = vlaneseq
    %v1625 = vshrl.u32 %v1624, 7
    %1627 = vset.pattern.permute.xlu0 %v1625
    %1628 = vperm.xlu0 %1627, %v1623
    %v1629 = vpop.permute.xlu0 %1628
    %v1630 = vmul.f32 %v1580, %v526
    %v1631 = vmul.f32 %v1587, %v526
    %v1632 = vmul.f32 %v1594, %v526
    %v1633 = vmul.f32 %v1601, %v526
    %v1634 = vmul.f32 %v1608, %v526
    %v1635 = vmul.f32 %v1615, %v526
    %v1636 = vmul.f32 %v1622, %v526
    %v1637 = vmul.f32 %v1629, %v526
    %v1638 = vadd.f32 %v1566, %v1630
    %v1639 = vadd.f32 %v1567, %v1631
    %v1640 = vadd.f32 %v1568, %v1632
    %v1641 = vadd.f32 %v1569, %v1633
    %v1642 = vadd.f32 %v1570, %v1634
    %v1643 = vadd.f32 %v1571, %v1635
    %v1644 = vadd.f32 %v1572, %v1636
    %v1645 = vadd.f32 %v1573, %v1637
    %v1646 = vperm.slane %v1539, 0
    %v1647 = vlaneseq
    %v1648 = vshrl.u32 %v1647, 7
    %1650 = vset.pattern.permute.xlu0 %v1648
    %1651 = vperm.xlu0 %1650, %v1646
    %v1652 = vpop.permute.xlu0 %1651
    %v1653 = vperm.slane %v1539, 1
    %v1654 = vlaneseq
    %v1655 = vshrl.u32 %v1654, 7
    %1657 = vset.pattern.permute.xlu0 %v1655
    %1658 = vperm.xlu0 %1657, %v1653
    %v1659 = vpop.permute.xlu0 %1658
    %v1660 = vperm.slane %v1539, 2
    %v1661 = vlaneseq
    %v1662 = vshrl.u32 %v1661, 7
    %1664 = vset.pattern.permute.xlu0 %v1662
    %1665 = vperm.xlu0 %1664, %v1660
    %v1666 = vpop.permute.xlu0 %1665
    %v1667 = vperm.slane %v1539, 3
    %v1668 = vlaneseq
    %v1669 = vshrl.u32 %v1668, 7
    %1671 = vset.pattern.permute.xlu0 %v1669
    %1672 = vperm.xlu0 %1671, %v1667
    %v1673 = vpop.permute.xlu0 %1672
    %v1674 = vperm.slane %v1539, 4
    %v1675 = vlaneseq
    %v1676 = vshrl.u32 %v1675, 7
    %1678 = vset.pattern.permute.xlu0 %v1676
    %1679 = vperm.xlu0 %1678, %v1674
    %v1680 = vpop.permute.xlu0 %1679
    %v1681 = vperm.slane %v1539, 5
    %v1682 = vlaneseq
    %v1683 = vshrl.u32 %v1682, 7
    %1685 = vset.pattern.permute.xlu0 %v1683
    %1686 = vperm.xlu0 %1685, %v1681
    %v1687 = vpop.permute.xlu0 %1686
    %v1688 = vperm.slane %v1539, 6
    %v1689 = vlaneseq
    %v1690 = vshrl.u32 %v1689, 7
    %1692 = vset.pattern.permute.xlu0 %v1690
    %1693 = vperm.xlu0 %1692, %v1688
    %v1694 = vpop.permute.xlu0 %1693
    %v1695 = vperm.slane %v1539, 7
    %v1696 = vlaneseq
    %v1697 = vshrl.u32 %v1696, 7
    %1699 = vset.pattern.permute.xlu0 %v1697
    %1700 = vperm.xlu0 %1699, %v1695
    %v1701 = vpop.permute.xlu0 %1700
    %v1702 = vmul.f32 %v1652, %v545
    %v1703 = vmul.f32 %v1659, %v545
    %v1704 = vmul.f32 %v1666, %v545
    %v1705 = vmul.f32 %v1673, %v545
    %v1706 = vmul.f32 %v1680, %v545
    %v1707 = vmul.f32 %v1687, %v545
    %v1708 = vmul.f32 %v1694, %v545
    %v1709 = vmul.f32 %v1701, %v545
    %v1710 = vadd.f32 %v1638, %v1702
    %v1711 = vadd.f32 %v1639, %v1703
    %v1712 = vadd.f32 %v1640, %v1704
    %v1713 = vadd.f32 %v1641, %v1705
    %v1714 = vadd.f32 %v1642, %v1706
    %v1715 = vadd.f32 %v1643, %v1707
    %v1716 = vadd.f32 %v1644, %v1708
    %v1717 = vadd.f32 %v1645, %v1709
    %v1718 = vlaneseq
    %v1719 = vshrl.u32 %v1718, 7
    %v1720 = vadd.s32 %v1719, 8
    %1721 = vset.pattern.permute.xlu0 %v1720
    %1722 = vperm.xlu0 %1721, %v1574
    %v1723 = vpop.permute.xlu0 %1722
    %v1724 = vlaneseq
    %v1725 = vshrl.u32 %v1724, 7
    %v1726 = vadd.s32 %v1725, 8
    %1727 = vset.pattern.permute.xlu0 %v1726
    %1728 = vperm.xlu0 %1727, %v1581
    %v1729 = vpop.permute.xlu0 %1728
    %v1730 = vlaneseq
    %v1731 = vshrl.u32 %v1730, 7
    %v1732 = vadd.s32 %v1731, 8
    %1733 = vset.pattern.permute.xlu0 %v1732
    %1734 = vperm.xlu0 %1733, %v1588
    %v1735 = vpop.permute.xlu0 %1734
    %v1736 = vlaneseq
    %v1737 = vshrl.u32 %v1736, 7
    %v1738 = vadd.s32 %v1737, 8
    %1739 = vset.pattern.permute.xlu0 %v1738
    %1740 = vperm.xlu0 %1739, %v1595
    %v1741 = vpop.permute.xlu0 %1740
    %v1742 = vlaneseq
    %v1743 = vshrl.u32 %v1742, 7
    %v1744 = vadd.s32 %v1743, 8
    %1745 = vset.pattern.permute.xlu0 %v1744
    %1746 = vperm.xlu0 %1745, %v1602
    %v1747 = vpop.permute.xlu0 %1746
    %v1748 = vlaneseq
    %v1749 = vshrl.u32 %v1748, 7
    %v1750 = vadd.s32 %v1749, 8
    %1751 = vset.pattern.permute.xlu0 %v1750
    %1752 = vperm.xlu0 %1751, %v1609
    %v1753 = vpop.permute.xlu0 %1752
    %v1754 = vlaneseq
    %v1755 = vshrl.u32 %v1754, 7
    %v1756 = vadd.s32 %v1755, 8
    %1757 = vset.pattern.permute.xlu0 %v1756
    %1758 = vperm.xlu0 %1757, %v1616
    %v1759 = vpop.permute.xlu0 %1758
    %v1760 = vlaneseq
    %v1761 = vshrl.u32 %v1760, 7
    %v1762 = vadd.s32 %v1761, 8
    %1763 = vset.pattern.permute.xlu0 %v1762
    %1764 = vperm.xlu0 %1763, %v1623
    %v1765 = vpop.permute.xlu0 %1764
    %v1766 = vmul.f32 %v1723, %v612
    %v1767 = vmul.f32 %v1729, %v612
    %v1768 = vmul.f32 %v1735, %v612
    %v1769 = vmul.f32 %v1741, %v612
    %v1770 = vmul.f32 %v1747, %v612
    %v1771 = vmul.f32 %v1753, %v612
    %v1772 = vmul.f32 %v1759, %v612
    %v1773 = vmul.f32 %v1765, %v612
    %v1774 = vadd.f32 %v1710, %v1766
    %v1775 = vadd.f32 %v1711, %v1767
    %v1776 = vadd.f32 %v1712, %v1768
    %v1777 = vadd.f32 %v1713, %v1769
    %v1778 = vadd.f32 %v1714, %v1770
    %v1779 = vadd.f32 %v1715, %v1771
    %v1780 = vadd.f32 %v1716, %v1772
    %v1781 = vadd.f32 %v1717, %v1773
    %v1782 = vlaneseq
    %v1783 = vshrl.u32 %v1782, 7
    %v1784 = vadd.s32 %v1783, 8
    %1785 = vset.pattern.permute.xlu0 %v1784
    %1786 = vperm.xlu0 %1785, %v1646
    %v1787 = vpop.permute.xlu0 %1786
    %v1788 = vlaneseq
    %v1789 = vshrl.u32 %v1788, 7
    %v1790 = vadd.s32 %v1789, 8
    %1791 = vset.pattern.permute.xlu0 %v1790
    %1792 = vperm.xlu0 %1791, %v1653
    %v1793 = vpop.permute.xlu0 %1792
    %v1794 = vlaneseq
    %v1795 = vshrl.u32 %v1794, 7
    %v1796 = vadd.s32 %v1795, 8
    %1797 = vset.pattern.permute.xlu0 %v1796
    %1798 = vperm.xlu0 %1797, %v1660
    %v1799 = vpop.permute.xlu0 %1798
    %v1800 = vlaneseq
    %v1801 = vshrl.u32 %v1800, 7
    %v1802 = vadd.s32 %v1801, 8
    %1803 = vset.pattern.permute.xlu0 %v1802
    %1804 = vperm.xlu0 %1803, %v1667
    %v1805 = vpop.permute.xlu0 %1804
    %v1806 = vlaneseq
    %v1807 = vshrl.u32 %v1806, 7
    %v1808 = vadd.s32 %v1807, 8
    %1809 = vset.pattern.permute.xlu0 %v1808
    %1810 = vperm.xlu0 %1809, %v1674
    %v1811 = vpop.permute.xlu0 %1810
    %v1812 = vlaneseq
    %v1813 = vshrl.u32 %v1812, 7
    %v1814 = vadd.s32 %v1813, 8
    %1815 = vset.pattern.permute.xlu0 %v1814
    %1816 = vperm.xlu0 %1815, %v1681
    %v1817 = vpop.permute.xlu0 %1816
    %v1818 = vlaneseq
    %v1819 = vshrl.u32 %v1818, 7
    %v1820 = vadd.s32 %v1819, 8
    %1821 = vset.pattern.permute.xlu0 %v1820
    %1822 = vperm.xlu0 %1821, %v1688
    %v1823 = vpop.permute.xlu0 %1822
    %v1824 = vlaneseq
    %v1825 = vshrl.u32 %v1824, 7
    %v1826 = vadd.s32 %v1825, 8
    %1827 = vset.pattern.permute.xlu0 %v1826
    %1828 = vperm.xlu0 %1827, %v1695
    %v1829 = vpop.permute.xlu0 %1828
    %v1830 = vmul.f32 %v1787, %v631
    %v1831 = vmul.f32 %v1793, %v631
    %v1832 = vmul.f32 %v1799, %v631
    %v1833 = vmul.f32 %v1805, %v631
    %v1834 = vmul.f32 %v1811, %v631
    %v1835 = vmul.f32 %v1817, %v631
    %v1836 = vmul.f32 %v1823, %v631
    %v1837 = vmul.f32 %v1829, %v631
    %v1838 = vadd.f32 %v1774, %v1830
    %v1839 = vadd.f32 %v1775, %v1831
    %v1840 = vadd.f32 %v1776, %v1832
    %v1841 = vadd.f32 %v1777, %v1833
    %v1842 = vadd.f32 %v1778, %v1834
    %v1843 = vadd.f32 %v1779, %v1835
    %v1844 = vadd.f32 %v1780, %v1836
    %v1845 = vadd.f32 %v1781, %v1837
    %v1846 = vlaneseq
    %v1847 = vshrl.u32 %v1846, 7
    %v1848 = vadd.s32 %v1847, 16
    %1849 = vset.pattern.permute.xlu0 %v1848
    %1850 = vperm.xlu0 %1849, %v1574
    %v1851 = vpop.permute.xlu0 %1850
    %v1852 = vlaneseq
    %v1853 = vshrl.u32 %v1852, 7
    %v1854 = vadd.s32 %v1853, 16
    %1855 = vset.pattern.permute.xlu0 %v1854
    %1856 = vperm.xlu0 %1855, %v1581
    %v1857 = vpop.permute.xlu0 %1856
    %v1858 = vlaneseq
    %v1859 = vshrl.u32 %v1858, 7
    %v1860 = vadd.s32 %v1859, 16
    %1861 = vset.pattern.permute.xlu0 %v1860
    %1862 = vperm.xlu0 %1861, %v1588
    %v1863 = vpop.permute.xlu0 %1862
    %v1864 = vlaneseq
    %v1865 = vshrl.u32 %v1864, 7
    %v1866 = vadd.s32 %v1865, 16
    %1867 = vset.pattern.permute.xlu0 %v1866
    %1868 = vperm.xlu0 %1867, %v1595
    %v1869 = vpop.permute.xlu0 %1868
    %v1870 = vlaneseq
    %v1871 = vshrl.u32 %v1870, 7
    %v1872 = vadd.s32 %v1871, 16
    %1873 = vset.pattern.permute.xlu0 %v1872
    %1874 = vperm.xlu0 %1873, %v1602
    %v1875 = vpop.permute.xlu0 %1874
    %v1876 = vlaneseq
    %v1877 = vshrl.u32 %v1876, 7
    %v1878 = vadd.s32 %v1877, 16
    %1879 = vset.pattern.permute.xlu0 %v1878
    %1880 = vperm.xlu0 %1879, %v1609
    %v1881 = vpop.permute.xlu0 %1880
    %v1882 = vlaneseq
    %v1883 = vshrl.u32 %v1882, 7
    %v1884 = vadd.s32 %v1883, 16
    %1885 = vset.pattern.permute.xlu0 %v1884
    %1886 = vperm.xlu0 %1885, %v1616
    %v1887 = vpop.permute.xlu0 %1886
    %v1888 = vlaneseq
    %v1889 = vshrl.u32 %v1888, 7
    %v1890 = vadd.s32 %v1889, 16
    %1891 = vset.pattern.permute.xlu0 %v1890
    %1892 = vperm.xlu0 %1891, %v1623
    %v1893 = vpop.permute.xlu0 %1892
    %v1894 = vmul.f32 %v1851, %v698
    %v1895 = vmul.f32 %v1857, %v698
    %v1896 = vmul.f32 %v1863, %v698
    %v1897 = vmul.f32 %v1869, %v698
    %v1898 = vmul.f32 %v1875, %v698
    %v1899 = vmul.f32 %v1881, %v698
    %v1900 = vmul.f32 %v1887, %v698
    %v1901 = vmul.f32 %v1893, %v698
    %v1902 = vadd.f32 %v1838, %v1894
    %v1903 = vadd.f32 %v1839, %v1895
    %v1904 = vadd.f32 %v1840, %v1896
    %v1905 = vadd.f32 %v1841, %v1897
    %v1906 = vadd.f32 %v1842, %v1898
    %v1907 = vadd.f32 %v1843, %v1899
    %v1908 = vadd.f32 %v1844, %v1900
    %v1909 = vadd.f32 %v1845, %v1901
    %v1910 = vlaneseq
    %v1911 = vshrl.u32 %v1910, 7
    %v1912 = vadd.s32 %v1911, 16
    %1913 = vset.pattern.permute.xlu0 %v1912
    %1914 = vperm.xlu0 %1913, %v1646
    %v1915 = vpop.permute.xlu0 %1914
    %v1916 = vlaneseq
    %v1917 = vshrl.u32 %v1916, 7
    %v1918 = vadd.s32 %v1917, 16
    %1919 = vset.pattern.permute.xlu0 %v1918
    %1920 = vperm.xlu0 %1919, %v1653
    %v1921 = vpop.permute.xlu0 %1920
    %v1922 = vlaneseq
    %v1923 = vshrl.u32 %v1922, 7
    %v1924 = vadd.s32 %v1923, 16
    %1925 = vset.pattern.permute.xlu0 %v1924
    %1926 = vperm.xlu0 %1925, %v1660
    %v1927 = vpop.permute.xlu0 %1926
    %v1928 = vlaneseq
    %v1929 = vshrl.u32 %v1928, 7
    %v1930 = vadd.s32 %v1929, 16
    %1931 = vset.pattern.permute.xlu0 %v1930
    %1932 = vperm.xlu0 %1931, %v1667
    %v1933 = vpop.permute.xlu0 %1932
    %v1934 = vlaneseq
    %v1935 = vshrl.u32 %v1934, 7
    %v1936 = vadd.s32 %v1935, 16
    %1937 = vset.pattern.permute.xlu0 %v1936
    %1938 = vperm.xlu0 %1937, %v1674
    %v1939 = vpop.permute.xlu0 %1938
    %v1940 = vlaneseq
    %v1941 = vshrl.u32 %v1940, 7
    %v1942 = vadd.s32 %v1941, 16
    %1943 = vset.pattern.permute.xlu0 %v1942
    %1944 = vperm.xlu0 %1943, %v1681
    %v1945 = vpop.permute.xlu0 %1944
    %v1946 = vlaneseq
    %v1947 = vshrl.u32 %v1946, 7
    %v1948 = vadd.s32 %v1947, 16
    %1949 = vset.pattern.permute.xlu0 %v1948
    %1950 = vperm.xlu0 %1949, %v1688
    %v1951 = vpop.permute.xlu0 %1950
    %v1952 = vlaneseq
    %v1953 = vshrl.u32 %v1952, 7
    %v1954 = vadd.s32 %v1953, 16
    %1955 = vset.pattern.permute.xlu0 %v1954
    %1956 = vperm.xlu0 %1955, %v1695
    %v1957 = vpop.permute.xlu0 %1956
    %v1958 = vmul.f32 %v1915, %v717
    %v1959 = vmul.f32 %v1921, %v717
    %v1960 = vmul.f32 %v1927, %v717
    %v1961 = vmul.f32 %v1933, %v717
    %v1962 = vmul.f32 %v1939, %v717
    %v1963 = vmul.f32 %v1945, %v717
    %v1964 = vmul.f32 %v1951, %v717
    %v1965 = vmul.f32 %v1957, %v717
    %v1966 = vadd.f32 %v1902, %v1958
    %v1967 = vadd.f32 %v1903, %v1959
    %v1968 = vadd.f32 %v1904, %v1960
    %v1969 = vadd.f32 %v1905, %v1961
    %v1970 = vadd.f32 %v1906, %v1962
    %v1971 = vadd.f32 %v1907, %v1963
    %v1972 = vadd.f32 %v1908, %v1964
    %v1973 = vadd.f32 %v1909, %v1965
    %v1974 = vtanh.pop %v1966
    %v1975 = vtanh.pop %v1967
    %v1976 = vtanh.pop %v1968
    %v1977 = vtanh.pop %v1969
    %v1978 = vtanh.pop %v1970
    %v1979 = vtanh.pop %v1971
    %v1980 = vtanh.pop %v1972
    %v1981 = vtanh.pop %v1973
    %v1982 = vmul.f32 %v1974, %v744
    %v1983 = vmul.f32 %v1975, %v744
    %v1984 = vmul.f32 %v1976, %v744
    %v1985 = vmul.f32 %v1977, %v744
    %v1986 = vmul.f32 %v1978, %v744
    %v1987 = vmul.f32 %v1979, %v744
    %v1988 = vmul.f32 %v1980, %v744
    %v1989 = vmul.f32 %v1981, %v744
    %v1990 = vsel %vm754, %v1982, 0.0
    %1991 = vadd.xlane.f32.xlu0 %v1990
    %v1992 = vpop.xlane.xlu0 %1991
    %v1993 = vsel %vm754, %v1983, 0.0
    %1994 = vadd.xlane.f32.xlu0 %v1993
    %v1995 = vpop.xlane.xlu0 %1994
    %v1996 = vsel %vm754, %v1984, 0.0
    %1997 = vadd.xlane.f32.xlu0 %v1996
    %v1998 = vpop.xlane.xlu0 %1997
    %v1999 = vsel %vm754, %v1985, 0.0
    %2000 = vadd.xlane.f32.xlu0 %v1999
    %v2001 = vpop.xlane.xlu0 %2000
    %v2002 = vsel %vm754, %v1986, 0.0
    %2003 = vadd.xlane.f32.xlu0 %v2002
    %v2004 = vpop.xlane.xlu0 %2003
    %v2005 = vsel %vm754, %v1987, 0.0
    %2006 = vadd.xlane.f32.xlu0 %v2005
    %v2007 = vpop.xlane.xlu0 %2006
    %v2008 = vsel %vm754, %v1988, 0.0
    %2009 = vadd.xlane.f32.xlu0 %v2008
    %v2010 = vpop.xlane.xlu0 %2009
    %v2011 = vsel %vm754, %v1989, 0.0
    %2012 = vadd.xlane.f32.xlu0 %v2011
    %v2013 = vpop.xlane.xlu0 %2012
    %v2022 = vperm.slane %v1992, %v788
    %v2023 = vperm.slane %v1995, %v788
    %v2024 = vperm.slane %v1998, %v788
    %v2025 = vperm.slane %v2001, %v788
    %v2026 = vperm.slane %v2004, %v788
    %v2027 = vperm.slane %v2007, %v788
    %v2028 = vperm.slane %v2010, %v788
    %v2029 = vperm.slane %v2013, %v788
    %v2030 = vsel %vm797, %v2023, %v2022
    %v2031 = vsel %vm799, %v2024, %v2030
    %v2032 = vsel %vm801, %v2025, %v2031
    %v2033 = vsel %vm803, %v2026, %v2032
    %v2034 = vsel %vm805, %v2027, %v2033
    %v2035 = vsel %vm807, %v2028, %v2034
    %v2036 = vsel %vm809, %v2029, %v2035
    %v2038 = vsel %vm327, %v2036, -inf
    %2039 = vmax.xlane.f32.xlu0 %v2038
    %v2040 = vpop.xlane.xlu0 %2039
    %v2042 = vperm.slane %v2040, 0
    %v2043 = vperm.slane %v2040, 1
    %v2044 = vperm.slane %v2040, 2
    %v2045 = vperm.slane %v2040, 3
    %v2046 = vperm.slane %v2040, 4
    %v2047 = vperm.slane %v2040, 5
    %v2048 = vperm.slane %v2040, 6
    %v2049 = vperm.slane %v2040, 7
    %v2058 = vsub.f32 %v1992, %v2042
    %v2059 = vsub.f32 %v1995, %v2043
    %v2060 = vsub.f32 %v1998, %v2044
    %v2061 = vsub.f32 %v2001, %v2045
    %v2062 = vsub.f32 %v2004, %v2046
    %v2063 = vsub.f32 %v2007, %v2047
    %v2064 = vsub.f32 %v2010, %v2048
    %v2065 = vsub.f32 %v2013, %v2049
    %v2066 = vmul.f32 %v2058, 1.442695
    %v2067 = vpow.pop %v2066
    %v2068 = vmul.f32 %v2059, 1.442695
    %v2069 = vpow.pop %v2068
    %v2070 = vmul.f32 %v2060, 1.442695
    %v2071 = vpow.pop %v2070
    %v2072 = vmul.f32 %v2061, 1.442695
    %v2073 = vpow.pop %v2072
    %v2074 = vmul.f32 %v2062, 1.442695
    %v2075 = vpow.pop %v2074
    %v2076 = vmul.f32 %v2063, 1.442695
    %v2077 = vpow.pop %v2076
    %v2078 = vmul.f32 %v2064, 1.442695
    %v2079 = vpow.pop %v2078
    %v2080 = vmul.f32 %v2065, 1.442695
    %v2081 = vpow.pop %v2080
    %2090 = vset.pattern.permute.xlu0 0
    %2091 = vperm.xlu0 %2090, %v2067
    %v2092 = vpop.permute.xlu0 %2091
    %2093 = vset.pattern.permute.xlu0 0
    %2094 = vperm.xlu0 %2093, %v2069
    %v2095 = vpop.permute.xlu0 %2094
    %2096 = vset.pattern.permute.xlu0 0
    %2097 = vperm.xlu0 %2096, %v2071
    %v2098 = vpop.permute.xlu0 %2097
    %2099 = vset.pattern.permute.xlu0 0
    %2100 = vperm.xlu0 %2099, %v2073
    %v2101 = vpop.permute.xlu0 %2100
    %2102 = vset.pattern.permute.xlu0 0
    %2103 = vperm.xlu0 %2102, %v2075
    %v2104 = vpop.permute.xlu0 %2103
    %2105 = vset.pattern.permute.xlu0 0
    %2106 = vperm.xlu0 %2105, %v2077
    %v2107 = vpop.permute.xlu0 %2106
    %2108 = vset.pattern.permute.xlu0 0
    %2109 = vperm.xlu0 %2108, %v2079
    %v2110 = vpop.permute.xlu0 %2109
    %2111 = vset.pattern.permute.xlu0 0
    %2112 = vperm.xlu0 %2111, %v2081
    %v2113 = vpop.permute.xlu0 %2112
    %v2114 = vperm.slane %v2092, %v788
    %v2115 = vperm.slane %v2095, %v788
    %v2116 = vperm.slane %v2098, %v788
    %v2117 = vperm.slane %v2101, %v788
    %v2118 = vperm.slane %v2104, %v788
    %v2119 = vperm.slane %v2107, %v788
    %v2120 = vperm.slane %v2110, %v788
    %v2121 = vperm.slane %v2113, %v788
    %v2122 = vsel %vm797, %v2115, %v2114
    %v2123 = vsel %vm799, %v2116, %v2122
    %v2124 = vsel %vm801, %v2117, %v2123
    %v2125 = vsel %vm803, %v2118, %v2124
    %v2126 = vsel %vm805, %v2119, %v2125
    %v2127 = vsel %vm807, %v2120, %v2126
    %v2128 = vsel %vm809, %v2121, %v2127
    %v2130 = vsel %vm327, %v2128, 0.0
    %2131 = vadd.xlane.f32.xlu0 %v2130
    %v2132 = vpop.xlane.xlu0 %2131
    %v2133 = vrcp.pop %v2132
    %v2135 = vperm.slane %v2133, 0
    %v2136 = vperm.slane %v2133, 1
    %v2137 = vperm.slane %v2133, 2
    %v2138 = vperm.slane %v2133, 3
    %v2139 = vperm.slane %v2133, 4
    %v2140 = vperm.slane %v2133, 5
    %v2141 = vperm.slane %v2133, 6
    %v2142 = vperm.slane %v2133, 7
    %v2151 = vmul.f32 %v2067, %v2135
    %v2152 = vmul.f32 %v2069, %v2136
    %v2153 = vmul.f32 %v2071, %v2137
    %v2154 = vmul.f32 %v2073, %v2138
    %v2155 = vmul.f32 %v2075, %v2139
    %v2156 = vmul.f32 %v2077, %v2140
    %v2157 = vmul.f32 %v2079, %v2141
    %v2158 = vmul.f32 %v2081, %v2142
    %v2159 = vpack.c.bf16 %v2151, %v2151
    %v2160 = vpack.c.bf16 %v2152, %v2152
    %v2161 = vpack.c.bf16 %v2153, %v2153
    %v2162 = vpack.c.bf16 %v2154, %v2154
    %v2163 = vpack.c.bf16 %v2155, %v2155
    %v2164 = vpack.c.bf16 %v2156, %v2156
    %v2165 = vpack.c.bf16 %v2157, %v2157
    %v2166 = vpack.c.bf16 %v2158, %v2158
    %v2168 = vunpack.c.l.b16 %v2159
    %v2169 = vpack.c.b16 %v2168, %v2168
    %v2170 = vunpack.c.l.b16 %v2169
    %2171 = vset.pattern.permute.xlu0 0
    %2172 = vperm.xlu0 %2171, %v2170
    %v2173 = vpop.permute.xlu0 %2172
    %v2174 = vperm.slane %v2173, %v788
    %v2175 = vpack.c.b16 %v2174, %v2174
    %v2177 = vsel %vm327, %v2175, 0
    %2179 = vmatpush.bf16.msra.mxu0 0
    %2180 = vmatpush.bf16.msra.mxu0 0
    %2181 = vmatpush.bf16.msra.mxu0 0
    %2182 = vmatpush.bf16.msra.mxu0 0
    %2183 = vmatpush.bf16.msra.mxu0 0
    %2184 = vmatpush.bf16.msra.mxu0 0
    %2185 = vmatpush.bf16.msra.mxu0 0
    %2186 = vmatpush.bf16.msra.mxu0 %v954
    %2187 = vmatmul.bf16.gmra.mxu0 %v2177
    %v2188 = vpop.f32.mrf.mxu0
    %v2189 = vadd.f32 0.0, %v2188
    %v2190 = vpop.f32.mrf.mxu0
    %2191 = vdwg.mxu0
    %v2193 = vunpack.c.l.b16 %v2160
    %v2194 = vpack.c.b16 %v2193, %v2193
    %v2195 = vunpack.c.l.b16 %v2194
    %2196 = vset.pattern.permute.xlu0 0
    %2197 = vperm.xlu0 %2196, %v2195
    %v2198 = vpop.permute.xlu0 %2197
    %v2199 = vperm.slane %v2198, %v788
    %v2200 = vpack.c.b16 %v2199, %v2199
    %v2202 = vsel %vm327, %v2200, 0
    %2204 = vmatpush.bf16.msra.mxu0 0
    %2205 = vmatpush.bf16.msra.mxu0 0
    %2206 = vmatpush.bf16.msra.mxu0 0
    %2207 = vmatpush.bf16.msra.mxu0 0
    %2208 = vmatpush.bf16.msra.mxu0 0
    %2209 = vmatpush.bf16.msra.mxu0 0
    %2210 = vmatpush.bf16.msra.mxu0 0
    %2211 = vmatpush.bf16.msra.mxu0 %v982
    %2212 = vmatmul.bf16.gmra.mxu0 %v2202
    %v2213 = vpop.f32.mrf.mxu0
    %v2214 = vadd.f32 0.0, %v2213
    %v2215 = vpop.f32.mrf.mxu0
    %2216 = vdwg.mxu0
    %v2218 = vunpack.c.l.b16 %v2161
    %v2219 = vpack.c.b16 %v2218, %v2218
    %v2220 = vunpack.c.l.b16 %v2219
    %2221 = vset.pattern.permute.xlu0 0
    %2222 = vperm.xlu0 %2221, %v2220
    %v2223 = vpop.permute.xlu0 %2222
    %v2224 = vperm.slane %v2223, %v788
    %v2225 = vpack.c.b16 %v2224, %v2224
    %v2227 = vsel %vm327, %v2225, 0
    %2229 = vmatpush.bf16.msra.mxu0 0
    %2230 = vmatpush.bf16.msra.mxu0 0
    %2231 = vmatpush.bf16.msra.mxu0 0
    %2232 = vmatpush.bf16.msra.mxu0 0
    %2233 = vmatpush.bf16.msra.mxu0 0
    %2234 = vmatpush.bf16.msra.mxu0 0
    %2235 = vmatpush.bf16.msra.mxu0 0
    %2236 = vmatpush.bf16.msra.mxu0 %v1010
    %2237 = vmatmul.bf16.gmra.mxu0 %v2227
    %v2238 = vpop.f32.mrf.mxu0
    %v2239 = vadd.f32 0.0, %v2238
    %v2240 = vpop.f32.mrf.mxu0
    %2241 = vdwg.mxu0
    %v2243 = vunpack.c.l.b16 %v2162
    %v2244 = vpack.c.b16 %v2243, %v2243
    %v2245 = vunpack.c.l.b16 %v2244
    %2246 = vset.pattern.permute.xlu0 0
    %2247 = vperm.xlu0 %2246, %v2245
    %v2248 = vpop.permute.xlu0 %2247
    %v2249 = vperm.slane %v2248, %v788
    %v2250 = vpack.c.b16 %v2249, %v2249
    %v2252 = vsel %vm327, %v2250, 0
    %2254 = vmatpush.bf16.msra.mxu0 0
    %2255 = vmatpush.bf16.msra.mxu0 0
    %2256 = vmatpush.bf16.msra.mxu0 0
    %2257 = vmatpush.bf16.msra.mxu0 0
    %2258 = vmatpush.bf16.msra.mxu0 0
    %2259 = vmatpush.bf16.msra.mxu0 0
    %2260 = vmatpush.bf16.msra.mxu0 0
    %2261 = vmatpush.bf16.msra.mxu0 %v1038
    %2262 = vmatmul.bf16.gmra.mxu0 %v2252
    %v2263 = vpop.f32.mrf.mxu0
    %v2264 = vadd.f32 0.0, %v2263
    %v2265 = vpop.f32.mrf.mxu0
    %2266 = vdwg.mxu0
    %v2268 = vunpack.c.l.b16 %v2163
    %v2269 = vpack.c.b16 %v2268, %v2268
    %v2270 = vunpack.c.l.b16 %v2269
    %2271 = vset.pattern.permute.xlu0 0
    %2272 = vperm.xlu0 %2271, %v2270
    %v2273 = vpop.permute.xlu0 %2272
    %v2274 = vperm.slane %v2273, %v788
    %v2275 = vpack.c.b16 %v2274, %v2274
    %v2277 = vsel %vm327, %v2275, 0
    %2279 = vmatpush.bf16.msra.mxu0 0
    %2280 = vmatpush.bf16.msra.mxu0 0
    %2281 = vmatpush.bf16.msra.mxu0 0
    %2282 = vmatpush.bf16.msra.mxu0 0
    %2283 = vmatpush.bf16.msra.mxu0 0
    %2284 = vmatpush.bf16.msra.mxu0 0
    %2285 = vmatpush.bf16.msra.mxu0 0
    %2286 = vmatpush.bf16.msra.mxu0 %v1066
    %2287 = vmatmul.bf16.gmra.mxu0 %v2277
    %v2288 = vpop.f32.mrf.mxu0
    %v2289 = vadd.f32 0.0, %v2288
    %v2290 = vpop.f32.mrf.mxu0
    %2291 = vdwg.mxu0
    %v2293 = vunpack.c.l.b16 %v2164
    %v2294 = vpack.c.b16 %v2293, %v2293
    %v2295 = vunpack.c.l.b16 %v2294
    %2296 = vset.pattern.permute.xlu0 0
    %2297 = vperm.xlu0 %2296, %v2295
    %v2298 = vpop.permute.xlu0 %2297
    %v2299 = vperm.slane %v2298, %v788
    %v2300 = vpack.c.b16 %v2299, %v2299
    %v2302 = vsel %vm327, %v2300, 0
    %2304 = vmatpush.bf16.msra.mxu0 0
    %2305 = vmatpush.bf16.msra.mxu0 0
    %2306 = vmatpush.bf16.msra.mxu0 0
    %2307 = vmatpush.bf16.msra.mxu0 0
    %2308 = vmatpush.bf16.msra.mxu0 0
    %2309 = vmatpush.bf16.msra.mxu0 0
    %2310 = vmatpush.bf16.msra.mxu0 0
    %2311 = vmatpush.bf16.msra.mxu0 %v1094
    %2312 = vmatmul.bf16.gmra.mxu0 %v2302
    %v2313 = vpop.f32.mrf.mxu0
    %v2314 = vadd.f32 0.0, %v2313
    %v2315 = vpop.f32.mrf.mxu0
    %2316 = vdwg.mxu0
    %v2318 = vunpack.c.l.b16 %v2165
    %v2319 = vpack.c.b16 %v2318, %v2318
    %v2320 = vunpack.c.l.b16 %v2319
    %2321 = vset.pattern.permute.xlu0 0
    %2322 = vperm.xlu0 %2321, %v2320
    %v2323 = vpop.permute.xlu0 %2322
    %v2324 = vperm.slane %v2323, %v788
    %v2325 = vpack.c.b16 %v2324, %v2324
    %v2327 = vsel %vm327, %v2325, 0
    %2329 = vmatpush.bf16.msra.mxu0 0
    %2330 = vmatpush.bf16.msra.mxu0 0
    %2331 = vmatpush.bf16.msra.mxu0 0
    %2332 = vmatpush.bf16.msra.mxu0 0
    %2333 = vmatpush.bf16.msra.mxu0 0
    %2334 = vmatpush.bf16.msra.mxu0 0
    %2335 = vmatpush.bf16.msra.mxu0 0
    %2336 = vmatpush.bf16.msra.mxu0 %v1122
    %2337 = vmatmul.bf16.gmra.mxu0 %v2327
    %v2338 = vpop.f32.mrf.mxu0
    %v2339 = vadd.f32 0.0, %v2338
    %v2340 = vpop.f32.mrf.mxu0
    %2341 = vdwg.mxu0
    %v2343 = vunpack.c.l.b16 %v2166
    %v2344 = vpack.c.b16 %v2343, %v2343
    %v2345 = vunpack.c.l.b16 %v2344
    %2346 = vset.pattern.permute.xlu0 0
    %2347 = vperm.xlu0 %2346, %v2345
    %v2348 = vpop.permute.xlu0 %2347
    %v2349 = vperm.slane %v2348, %v788
    %v2350 = vpack.c.b16 %v2349, %v2349
    %v2352 = vsel %vm327, %v2350, 0
    %2354 = vmatpush.bf16.msra.mxu0 0
    %2355 = vmatpush.bf16.msra.mxu0 0
    %2356 = vmatpush.bf16.msra.mxu0 0
    %2357 = vmatpush.bf16.msra.mxu0 0
    %2358 = vmatpush.bf16.msra.mxu0 0
    %2359 = vmatpush.bf16.msra.mxu0 0
    %2360 = vmatpush.bf16.msra.mxu0 0
    %2361 = vmatpush.bf16.msra.mxu0 %v1150
    %2362 = vmatmul.bf16.gmra.mxu0 %v2352
    %v2363 = vpop.f32.mrf.mxu0
    %v2364 = vadd.f32 0.0, %v2363
    %v2365 = vpop.f32.mrf.mxu0
    %2366 = vdwg.mxu0
    %v2367 = vadd.f32 %v1165, %v2151
    %v2368 = vadd.f32 %v1166, %v2152
    %v2369 = vadd.f32 %v1167, %v2153
    %v2370 = vadd.f32 %v1168, %v2154
    %v2371 = vadd.f32 %v1169, %v2155
    %v2372 = vadd.f32 %v1170, %v2156
    %v2373 = vadd.f32 %v1171, %v2157
    %v2374 = vadd.f32 %v1172, %v2158
    %v2375 = vpack.c.bf16 %v2189, %v2189
    %v2376 = vpack.c.bf16 %v2214, %v2214
    %v2377 = vpack.c.bf16 %v2239, %v2239
    %v2378 = vpack.c.bf16 %v2264, %v2264
    %v2379 = vpack.c.bf16 %v2289, %v2289
    %v2380 = vpack.c.bf16 %v2314, %v2314
    %v2381 = vpack.c.bf16 %v2339, %v2339
    %v2382 = vpack.c.bf16 %v2364, %v2364
    %v2391 = vunpack.c.l.b16 %v2375
    %v2392 = vunpack.c.l.b16 %v2376
    %v2393 = vunpack.c.l.b16 %v2377
    %v2394 = vunpack.c.l.b16 %v2378
    %v2395 = vunpack.c.l.b16 %v2379
    %v2396 = vunpack.c.l.b16 %v2380
    %v2397 = vunpack.c.l.b16 %v2381
    %v2398 = vunpack.c.l.b16 %v2382
    %v2399 = vrot.slane %v2392, 7
    %v2400 = vsel %vm797, %v2399, %v2391
    %v2401 = vrot.slane %v2393, 6
    %v2402 = vsel %vm799, %v2401, %v2400
    %v2403 = vrot.slane %v2394, 5
    %v2404 = vsel %vm801, %v2403, %v2402
    %v2405 = vrot.slane %v2395, 4
    %v2406 = vsel %vm803, %v2405, %v2404
    %v2407 = vrot.slane %v2396, 3
    %v2408 = vsel %vm805, %v2407, %v2406
    %v2409 = vrot.slane %v2397, 2
    %v2410 = vsel %vm807, %v2409, %v2408
    %v2411 = vrot.slane %v2398, 1
    %v2412 = vsel %vm809, %v2411, %v2410
    %v2413 = vpack.c.b16 %v2412, %v2412
    %v2415 = vsel %vm260, %v2413, 0
    %2417 = vmatpush.bf16.msra.mxu0 0
    %2418 = vmatpush.bf16.msra.mxu0 0
    %2419 = vmatpush.bf16.msra.mxu0 0
    %2420 = vmatpush.bf16.msra.mxu0 0
    %2421 = vmatpush.bf16.msra.mxu0 0
    %2422 = vmatpush.bf16.msra.mxu0 0
    %2423 = vmatpush.bf16.msra.mxu0 %v1221
    %2424 = vmatpush.bf16.msra.mxu0 %v1220
    %2425 = vmatmul.bf16.gmra.mxu0 %v2415
    %v2426 = vpop.f32.mrf.mxu0
    %v2427 = vadd.f32 %v1315, %v2426
    %v2428 = vpop.f32.mrf.mxu0
    %2429 = vdwg.mxu0
    %v2430 = vadd.f32 %v2427, %v225
    %v2431 = vxor.u32 %v2430, 2147483648
    %v2432 = vmul.f32 %v2431, 1.442695
    %v2433 = vpow.pop %v2432
    %v2434 = vadd.f32 %v2433, 1.0
    %v2435 = vrcp.pop %v2434
    %v2436 = vmul.f32 %v2434, %v2435
    %v2437 = vsub.f32 1.0, %v2436
    %v2438 = vmul.f32 %v2435, %v2437
    %v2439 = vadd.f32 %v2435, %v2438
    %vm2440 = vweird.f32 %v2434
    %vm2441 = vweird.f32 %v2435
    %vm2442 = vmor %vm2440, %vm2441
    %v2443 = vsel %vm2442, %v2435, %v2439
    %v2444 = vand.u32 2147483647, %v2434
    %vm2445 = vcmp.eq.f32.partialorder %v2444, 8.507059e+37
    %v2446 = vand.u32 %v2434, 2147483648
    %v2447 = vor.u32 1.1754944e-38, %v2446
    %v2448 = vsel %vm2445, %v2447, %v2443
    %v2449 = vmul.f32 1.0, %v2448
    %v2450 = vtanh.pop %v2430
    %v2451 = vmul.f32 %v2449, %v1271
    %2453 = vrot.lane.b32.xlu0 %v2450, 64
    %v2454 = vpop.permute.xlu0 %2453
    %v2456 = vmul.f32 %v2449, %v2454
    %2458 = vrot.lane.b32.xlu0 %v2456, 32
    %v2459 = vpop.permute.xlu0 %2458
    %v2461 = vadd.f32 %v2451, %v2459
    %v2462 = vtanh.pop %v2461
    %2464 = vrot.lane.b32.xlu0 %v2462, 64
    %v2465 = vpop.permute.xlu0 %2464
    %v2467 = vmul.f32 %v2449, %v2465
    %2469 = vrot.lane.b32.xlu0 %v2467, 32
    %v2470 = vpop.permute.xlu0 %2469
    %2472 = vst.msk [vmem:[#allocation2 + $0x8] sm:$0xff] %vm260, %v2470
    %s2473 = scalar_lea.vmem [#allocation3], 8
    %v2474 = vld [vmem:[%s2473] sm:$0xf]
    %2475 = vmatpush.bf16.msra.mxu0 0
    %2476 = vmatpush.bf16.msra.mxu0 0
    %2477 = vmatpush.bf16.msra.mxu0 0
    %2478 = vmatpush.bf16.msra.mxu0 0
    %2479 = vmatpush.bf16.msra.mxu0 0
    %2480 = vmatpush.bf16.msra.mxu0 0
    %2481 = vmatpush.bf16.msra.mxu0 %v257
    %2482 = vmatpush.bf16.msra.mxu0 %v256
    %2483 = vmatmul.bf16.gmra.mxu0 %v1391
    %v2484 = vpop.f32.mrf.mxu0
    %v2485 = vadd.f32 0.0, %v2484
    %v2486 = vpop.f32.mrf.mxu0
    %2487 = vdwg.mxu0
    %v2488 = vpack.c.bf16 %v2467, %v2467
    %2490 = vrot.lane.b32.xlu0 %v2488, 32
    %v2491 = vpop.permute.xlu0 %2490
    %v2493 = vsel %vm260, %v2491, 0
    %2495 = vmatpush.bf16.msra.mxu0 0
    %2496 = vmatpush.bf16.msra.mxu0 0
    %2497 = vmatpush.bf16.msra.mxu0 0
    %2498 = vmatpush.bf16.msra.mxu0 0
    %2499 = vmatpush.bf16.msra.mxu0 0
    %2500 = vmatpush.bf16.msra.mxu0 0
    %2501 = vmatpush.bf16.msra.mxu0 %v286
    %2502 = vmatpush.bf16.msra.mxu0 %v285
    %2503 = vmatmul.bf16.gmra.mxu0 %v2493
    %v2504 = vpop.f32.mrf.mxu0
    %v2505 = vadd.f32 0.0, %v2504
    %v2506 = vpop.f32.mrf.mxu0
    %2507 = vdwg.mxu0
    %2508 = vmatpush.bf16.msra.mxu0 0
    %2509 = vmatpush.bf16.msra.mxu0 0
    %2510 = vmatpush.bf16.msra.mxu0 0
    %2511 = vmatpush.bf16.msra.mxu0 0
    %2512 = vmatpush.bf16.msra.mxu0 0
    %2513 = vmatpush.bf16.msra.mxu0 0
    %2514 = vmatpush.bf16.msra.mxu0 %v311
    %2515 = vmatpush.bf16.msra.mxu0 %v310
    %2516 = vmatmul.bf16.gmra.mxu0 %v2415
    %v2517 = vpop.f32.mrf.mxu0
    %v2518 = vadd.f32 0.0, %v2517
    %v2519 = vpop.f32.mrf.mxu0
    %2520 = vdwg.mxu0
    %v2522 = vsel %vm327, %v2474, 0
    %2524 = vmatpush.bf16.msra.mxu0 0
    %2525 = vmatpush.bf16.msra.mxu0 0
    %2526 = vmatpush.bf16.msra.mxu0 0
    %2527 = vmatpush.bf16.msra.mxu0 0
    %2528 = vmatpush.bf16.msra.mxu0 0
    %2529 = vmatpush.bf16.msra.mxu0 0
    %2530 = vmatpush.bf16.msra.mxu0 0
    %2531 = vmatpush.bf16.msra.mxu0 %v333
    %2532 = vmatmul.bf16.gmra.mxu0 %v2522
    %v2533 = vpop.f32.mrf.mxu0
    %v2534 = vadd.f32 %v2518, %v2533
    %v2535 = vpop.f32.mrf.mxu0
    %2536 = vdwg.mxu0
    %v2537 = vadd.f32 %v2534, %v2485
    %v2538 = vadd.f32 %v2537, %v221
    %v2539 = vxor.u32 %v2538, 2147483648
    %v2540 = vmul.f32 %v2539, 1.442695
    %v2541 = vpow.pop %v2540
    %v2542 = vadd.f32 %v2541, 1.0
    %v2543 = vrcp.pop %v2542
    %v2544 = vmul.f32 %v2542, %v2543
    %v2545 = vsub.f32 1.0, %v2544
    %v2546 = vmul.f32 %v2543, %v2545
    %v2547 = vadd.f32 %v2543, %v2546
    %vm2548 = vweird.f32 %v2542
    %vm2549 = vweird.f32 %v2543
    %vm2550 = vmor %vm2548, %vm2549
    %v2551 = vsel %vm2550, %v2543, %v2547
    %v2552 = vand.u32 2147483647, %v2542
    %vm2553 = vcmp.eq.f32.partialorder %v2552, 8.507059e+37
    %v2554 = vand.u32 %v2542, 2147483648
    %v2555 = vor.u32 1.1754944e-38, %v2554
    %v2556 = vsel %vm2553, %v2555, %v2551
    %v2557 = vmul.f32 1.0, %v2556
    %v2558 = vtanh.pop %v2538
    %v2559 = vmul.f32 %v2557, %v1379
    %2561 = vrot.lane.b32.xlu0 %v2558, 64
    %v2562 = vpop.permute.xlu0 %2561
    %v2564 = vmul.f32 %v2557, %v2562
    %2566 = vrot.lane.b32.xlu0 %v2564, 32
    %v2567 = vpop.permute.xlu0 %2566
    %v2569 = vadd.f32 %v2559, %v2567
    %v2570 = vtanh.pop %v2569
    %2572 = vrot.lane.b32.xlu0 %v2570, 64
    %v2573 = vpop.permute.xlu0 %2572
    %v2575 = vmul.f32 %v2557, %v2573
    %v2576 = vpack.c.bf16 %v2575, %v2575
    %2578 = vrot.lane.b32.xlu0 %v2576, 32
    %v2579 = vpop.permute.xlu0 %2578
    %v2581 = vsel %vm260, %v2579, 0
    %2583 = vmatpush.bf16.msra.mxu0 0
    %2584 = vmatpush.bf16.msra.mxu0 0
    %2585 = vmatpush.bf16.msra.mxu0 0
    %2586 = vmatpush.bf16.msra.mxu0 0
    %2587 = vmatpush.bf16.msra.mxu0 0
    %2588 = vmatpush.bf16.msra.mxu0 0
    %2589 = vmatpush.bf16.msra.mxu0 %v400
    %2590 = vmatpush.bf16.msra.mxu0 %v399
    %2591 = vmatmul.bf16.gmra.mxu0 %v2581
    %v2592 = vpop.f32.mrf.mxu0
    %v2593 = vadd.f32 0.0, %v2592
    %v2594 = vpop.f32.mrf.mxu0
    %2595 = vdwg.mxu0
    %2596 = vset.pattern.permute.xlu0 0
    %2597 = vperm.xlu0 %2596, %v2168
    %v2598 = vpop.permute.xlu0 %2597
    %2599 = vset.pattern.permute.xlu0 0
    %2600 = vperm.xlu0 %2599, %v2193
    %v2601 = vpop.permute.xlu0 %2600
    %2602 = vset.pattern.permute.xlu0 0
    %2603 = vperm.xlu0 %2602, %v2218
    %v2604 = vpop.permute.xlu0 %2603
    %2605 = vset.pattern.permute.xlu0 0
    %2606 = vperm.xlu0 %2605, %v2243
    %v2607 = vpop.permute.xlu0 %2606
    %2608 = vset.pattern.permute.xlu0 0
    %2609 = vperm.xlu0 %2608, %v2268
    %v2610 = vpop.permute.xlu0 %2609
    %2611 = vset.pattern.permute.xlu0 0
    %2612 = vperm.xlu0 %2611, %v2293
    %v2613 = vpop.permute.xlu0 %2612
    %2614 = vset.pattern.permute.xlu0 0
    %2615 = vperm.xlu0 %2614, %v2318
    %v2616 = vpop.permute.xlu0 %2615
    %2617 = vset.pattern.permute.xlu0 0
    %2618 = vperm.xlu0 %2617, %v2343
    %v2619 = vpop.permute.xlu0 %2618
    %v2620 = vperm.slane %v2598, %v788
    %v2621 = vperm.slane %v2601, %v788
    %v2622 = vperm.slane %v2604, %v788
    %v2623 = vperm.slane %v2607, %v788
    %v2624 = vperm.slane %v2610, %v788
    %v2625 = vperm.slane %v2613, %v788
    %v2626 = vperm.slane %v2616, %v788
    %v2627 = vperm.slane %v2619, %v788
    %v2628 = vsel %vm797, %v2621, %v2620
    %v2629 = vsel %vm799, %v2622, %v2628
    %v2630 = vsel %vm801, %v2623, %v2629
    %v2631 = vsel %vm803, %v2624, %v2630
    %v2632 = vsel %vm805, %v2625, %v2631
    %v2633 = vsel %vm807, %v2626, %v2632
    %v2634 = vsel %vm809, %v2627, %v2633
    %v2635 = vpack.c.b16 %v2634, %v2634
    %v2637 = vsel %vm327, %v2635, 0
    %2639 = vmatpush.bf16.msra.mxu0 0
    %2640 = vmatpush.bf16.msra.mxu0 0
    %2641 = vmatpush.bf16.msra.mxu0 0
    %2642 = vmatpush.bf16.msra.mxu0 0
    %2643 = vmatpush.bf16.msra.mxu0 0
    %2644 = vmatpush.bf16.msra.mxu0 0
    %2645 = vmatpush.bf16.msra.mxu0 0
    %2646 = vmatpush.bf16.msra.mxu0 %v422
    %2647 = vmatmul.bf16.gmra.mxu0 %v2637
    %v2648 = vpop.f32.mrf.mxu0
    %v2649 = vadd.f32 0.0, %v2648
    %v2650 = vpop.f32.mrf.mxu0
    %2651 = vdwg.mxu0
    %v2652 = vpack.c.bf16 %v2367, %v2367
    %v2653 = vpack.c.bf16 %v2368, %v2368
    %v2654 = vpack.c.bf16 %v2369, %v2369
    %v2655 = vpack.c.bf16 %v2370, %v2370
    %v2656 = vpack.c.bf16 %v2371, %v2371
    %v2657 = vpack.c.bf16 %v2372, %v2372
    %v2658 = vpack.c.bf16 %v2373, %v2373
    %v2659 = vpack.c.bf16 %v2374, %v2374
    %v2668 = vunpack.c.l.b16 %v2652
    %v2669 = vunpack.c.l.b16 %v2653
    %v2670 = vunpack.c.l.b16 %v2654
    %v2671 = vunpack.c.l.b16 %v2655
    %v2672 = vunpack.c.l.b16 %v2656
    %v2673 = vunpack.c.l.b16 %v2657
    %v2674 = vunpack.c.l.b16 %v2658
    %v2675 = vunpack.c.l.b16 %v2659
    %2676 = vset.pattern.permute.xlu0 0
    %2677 = vperm.xlu0 %2676, %v2668
    %v2678 = vpop.permute.xlu0 %2677
    %2679 = vset.pattern.permute.xlu0 0
    %2680 = vperm.xlu0 %2679, %v2669
    %v2681 = vpop.permute.xlu0 %2680
    %2682 = vset.pattern.permute.xlu0 0
    %2683 = vperm.xlu0 %2682, %v2670
    %v2684 = vpop.permute.xlu0 %2683
    %2685 = vset.pattern.permute.xlu0 0
    %2686 = vperm.xlu0 %2685, %v2671
    %v2687 = vpop.permute.xlu0 %2686
    %2688 = vset.pattern.permute.xlu0 0
    %2689 = vperm.xlu0 %2688, %v2672
    %v2690 = vpop.permute.xlu0 %2689
    %2691 = vset.pattern.permute.xlu0 0
    %2692 = vperm.xlu0 %2691, %v2673
    %v2693 = vpop.permute.xlu0 %2692
    %2694 = vset.pattern.permute.xlu0 0
    %2695 = vperm.xlu0 %2694, %v2674
    %v2696 = vpop.permute.xlu0 %2695
    %2697 = vset.pattern.permute.xlu0 0
    %2698 = vperm.xlu0 %2697, %v2675
    %v2699 = vpop.permute.xlu0 %2698
    %v2700 = vperm.slane %v2678, %v788
    %v2701 = vperm.slane %v2681, %v788
    %v2702 = vperm.slane %v2684, %v788
    %v2703 = vperm.slane %v2687, %v788
    %v2704 = vperm.slane %v2690, %v788
    %v2705 = vperm.slane %v2693, %v788
    %v2706 = vperm.slane %v2696, %v788
    %v2707 = vperm.slane %v2699, %v788
    %v2708 = vsel %vm797, %v2701, %v2700
    %v2709 = vsel %vm799, %v2702, %v2708
    %v2710 = vsel %vm801, %v2703, %v2709
    %v2711 = vsel %vm803, %v2704, %v2710
    %v2712 = vsel %vm805, %v2705, %v2711
    %v2713 = vsel %vm807, %v2706, %v2712
    %v2714 = vsel %vm809, %v2707, %v2713
    %v2715 = vpack.c.b16 %v2714, %v2714
    %v2717 = vsel %vm327, %v2715, 0
    %2719 = vmatpush.bf16.msra.mxu0 0
    %2720 = vmatpush.bf16.msra.mxu0 0
    %2721 = vmatpush.bf16.msra.mxu0 0
    %2722 = vmatpush.bf16.msra.mxu0 0
    %2723 = vmatpush.bf16.msra.mxu0 0
    %2724 = vmatpush.bf16.msra.mxu0 0
    %2725 = vmatpush.bf16.msra.mxu0 0
    %2726 = vmatpush.bf16.msra.mxu0 %v422
    %2727 = vmatmul.bf16.gmra.mxu0 %v2717
    %v2728 = vpop.f32.mrf.mxu0
    %v2729 = vadd.f32 0.0, %v2728
    %v2730 = vpop.f32.mrf.mxu0
    %2731 = vdwg.mxu0
    %v2733 = vrot.slane %v2593, 1
    %v2734 = vrot.slane %v2593, 2
    %v2735 = vrot.slane %v2593, 3
    %v2736 = vrot.slane %v2593, 4
    %v2737 = vrot.slane %v2593, 5
    %v2738 = vrot.slane %v2593, 6
    %v2739 = vrot.slane %v2593, 7
    %v2740 = vperm.slane %v2593, 0
    %v2741 = vperm.slane %v2733, 0
    %v2742 = vperm.slane %v2734, 0
    %v2743 = vperm.slane %v2735, 0
    %v2744 = vperm.slane %v2736, 0
    %v2745 = vperm.slane %v2737, 0
    %v2746 = vperm.slane %v2738, 0
    %v2747 = vperm.slane %v2739, 0
    %v2756 = vadd.f32 %v198, %v2740
    %v2757 = vadd.f32 %v199, %v2741
    %v2758 = vadd.f32 %v200, %v2742
    %v2759 = vadd.f32 %v201, %v2743
    %v2760 = vadd.f32 %v202, %v2744
    %v2761 = vadd.f32 %v203, %v2745
    %v2762 = vadd.f32 %v204, %v2746
    %v2763 = vadd.f32 %v205, %v2747
    %v2764 = vperm.slane %v2649, 0
    %v2765 = vlaneseq
    %v2766 = vshrl.u32 %v2765, 7
    %2768 = vset.pattern.permute.xlu0 %v2766
    %2769 = vperm.xlu0 %2768, %v2764
    %v2770 = vpop.permute.xlu0 %2769
    %v2771 = vperm.slane %v2649, 1
    %v2772 = vlaneseq
    %v2773 = vshrl.u32 %v2772, 7
    %2775 = vset.pattern.permute.xlu0 %v2773
    %2776 = vperm.xlu0 %2775, %v2771
    %v2777 = vpop.permute.xlu0 %2776
    %v2778 = vperm.slane %v2649, 2
    %v2779 = vlaneseq
    %v2780 = vshrl.u32 %v2779, 7
    %2782 = vset.pattern.permute.xlu0 %v2780
    %2783 = vperm.xlu0 %2782, %v2778
    %v2784 = vpop.permute.xlu0 %2783
    %v2785 = vperm.slane %v2649, 3
    %v2786 = vlaneseq
    %v2787 = vshrl.u32 %v2786, 7
    %2789 = vset.pattern.permute.xlu0 %v2787
    %2790 = vperm.xlu0 %2789, %v2785
    %v2791 = vpop.permute.xlu0 %2790
    %v2792 = vperm.slane %v2649, 4
    %v2793 = vlaneseq
    %v2794 = vshrl.u32 %v2793, 7
    %2796 = vset.pattern.permute.xlu0 %v2794
    %2797 = vperm.xlu0 %2796, %v2792
    %v2798 = vpop.permute.xlu0 %2797
    %v2799 = vperm.slane %v2649, 5
    %v2800 = vlaneseq
    %v2801 = vshrl.u32 %v2800, 7
    %2803 = vset.pattern.permute.xlu0 %v2801
    %2804 = vperm.xlu0 %2803, %v2799
    %v2805 = vpop.permute.xlu0 %2804
    %v2806 = vperm.slane %v2649, 6
    %v2807 = vlaneseq
    %v2808 = vshrl.u32 %v2807, 7
    %2810 = vset.pattern.permute.xlu0 %v2808
    %2811 = vperm.xlu0 %2810, %v2806
    %v2812 = vpop.permute.xlu0 %2811
    %v2813 = vperm.slane %v2649, 7
    %v2814 = vlaneseq
    %v2815 = vshrl.u32 %v2814, 7
    %2817 = vset.pattern.permute.xlu0 %v2815
    %2818 = vperm.xlu0 %2817, %v2813
    %v2819 = vpop.permute.xlu0 %2818
    %v2820 = vmul.f32 %v2770, %v526
    %v2821 = vmul.f32 %v2777, %v526
    %v2822 = vmul.f32 %v2784, %v526
    %v2823 = vmul.f32 %v2791, %v526
    %v2824 = vmul.f32 %v2798, %v526
    %v2825 = vmul.f32 %v2805, %v526
    %v2826 = vmul.f32 %v2812, %v526
    %v2827 = vmul.f32 %v2819, %v526
    %v2828 = vadd.f32 %v2756, %v2820
    %v2829 = vadd.f32 %v2757, %v2821
    %v2830 = vadd.f32 %v2758, %v2822
    %v2831 = vadd.f32 %v2759, %v2823
    %v2832 = vadd.f32 %v2760, %v2824
    %v2833 = vadd.f32 %v2761, %v2825
    %v2834 = vadd.f32 %v2762, %v2826
    %v2835 = vadd.f32 %v2763, %v2827
    %v2836 = vperm.slane %v2729, 0
    %v2837 = vlaneseq
    %v2838 = vshrl.u32 %v2837, 7
    %2840 = vset.pattern.permute.xlu0 %v2838
    %2841 = vperm.xlu0 %2840, %v2836
    %v2842 = vpop.permute.xlu0 %2841
    %v2843 = vperm.slane %v2729, 1
    %v2844 = vlaneseq
    %v2845 = vshrl.u32 %v2844, 7
    %2847 = vset.pattern.permute.xlu0 %v2845
    %2848 = vperm.xlu0 %2847, %v2843
    %v2849 = vpop.permute.xlu0 %2848
    %v2850 = vperm.slane %v2729, 2
    %v2851 = vlaneseq
    %v2852 = vshrl.u32 %v2851, 7
    %2854 = vset.pattern.permute.xlu0 %v2852
    %2855 = vperm.xlu0 %2854, %v2850
    %v2856 = vpop.permute.xlu0 %2855
    %v2857 = vperm.slane %v2729, 3
    %v2858 = vlaneseq
    %v2859 = vshrl.u32 %v2858, 7
    %2861 = vset.pattern.permute.xlu0 %v2859
    %2862 = vperm.xlu0 %2861, %v2857
    %v2863 = vpop.permute.xlu0 %2862
    %v2864 = vperm.slane %v2729, 4
    %v2865 = vlaneseq
    %v2866 = vshrl.u32 %v2865, 7
    %2868 = vset.pattern.permute.xlu0 %v2866
    %2869 = vperm.xlu0 %2868, %v2864
    %v2870 = vpop.permute.xlu0 %2869
    %v2871 = vperm.slane %v2729, 5
    %v2872 = vlaneseq
    %v2873 = vshrl.u32 %v2872, 7
    %2875 = vset.pattern.permute.xlu0 %v2873
    %2876 = vperm.xlu0 %2875, %v2871
    %v2877 = vpop.permute.xlu0 %2876
    %v2878 = vperm.slane %v2729, 6
    %v2879 = vlaneseq
    %v2880 = vshrl.u32 %v2879, 7
    %2882 = vset.pattern.permute.xlu0 %v2880
    %2883 = vperm.xlu0 %2882, %v2878
    %v2884 = vpop.permute.xlu0 %2883
    %v2885 = vperm.slane %v2729, 7
    %v2886 = vlaneseq
    %v2887 = vshrl.u32 %v2886, 7
    %2889 = vset.pattern.permute.xlu0 %v2887
    %2890 = vperm.xlu0 %2889, %v2885
    %v2891 = vpop.permute.xlu0 %2890
    %v2892 = vmul.f32 %v2842, %v545
    %v2893 = vmul.f32 %v2849, %v545
    %v2894 = vmul.f32 %v2856, %v545
    %v2895 = vmul.f32 %v2863, %v545
    %v2896 = vmul.f32 %v2870, %v545
    %v2897 = vmul.f32 %v2877, %v545
    %v2898 = vmul.f32 %v2884, %v545
    %v2899 = vmul.f32 %v2891, %v545
    %v2900 = vadd.f32 %v2828, %v2892
    %v2901 = vadd.f32 %v2829, %v2893
    %v2902 = vadd.f32 %v2830, %v2894
    %v2903 = vadd.f32 %v2831, %v2895
    %v2904 = vadd.f32 %v2832, %v2896
    %v2905 = vadd.f32 %v2833, %v2897
    %v2906 = vadd.f32 %v2834, %v2898
    %v2907 = vadd.f32 %v2835, %v2899
    %v2908 = vlaneseq
    %v2909 = vshrl.u32 %v2908, 7
    %v2910 = vadd.s32 %v2909, 8
    %2911 = vset.pattern.permute.xlu0 %v2910
    %2912 = vperm.xlu0 %2911, %v2764
    %v2913 = vpop.permute.xlu0 %2912
    %v2914 = vlaneseq
    %v2915 = vshrl.u32 %v2914, 7
    %v2916 = vadd.s32 %v2915, 8
    %2917 = vset.pattern.permute.xlu0 %v2916
    %2918 = vperm.xlu0 %2917, %v2771
    %v2919 = vpop.permute.xlu0 %2918
    %v2920 = vlaneseq
    %v2921 = vshrl.u32 %v2920, 7
    %v2922 = vadd.s32 %v2921, 8
    %2923 = vset.pattern.permute.xlu0 %v2922
    %2924 = vperm.xlu0 %2923, %v2778
    %v2925 = vpop.permute.xlu0 %2924
    %v2926 = vlaneseq
    %v2927 = vshrl.u32 %v2926, 7
    %v2928 = vadd.s32 %v2927, 8
    %2929 = vset.pattern.permute.xlu0 %v2928
    %2930 = vperm.xlu0 %2929, %v2785
    %v2931 = vpop.permute.xlu0 %2930
    %v2932 = vlaneseq
    %v2933 = vshrl.u32 %v2932, 7
    %v2934 = vadd.s32 %v2933, 8
    %2935 = vset.pattern.permute.xlu0 %v2934
    %2936 = vperm.xlu0 %2935, %v2792
    %v2937 = vpop.permute.xlu0 %2936
    %v2938 = vlaneseq
    %v2939 = vshrl.u32 %v2938, 7
    %v2940 = vadd.s32 %v2939, 8
    %2941 = vset.pattern.permute.xlu0 %v2940
    %2942 = vperm.xlu0 %2941, %v2799
    %v2943 = vpop.permute.xlu0 %2942
    %v2944 = vlaneseq
    %v2945 = vshrl.u32 %v2944, 7
    %v2946 = vadd.s32 %v2945, 8
    %2947 = vset.pattern.permute.xlu0 %v2946
    %2948 = vperm.xlu0 %2947, %v2806
    %v2949 = vpop.permute.xlu0 %2948
    %v2950 = vlaneseq
    %v2951 = vshrl.u32 %v2950, 7
    %v2952 = vadd.s32 %v2951, 8
    %2953 = vset.pattern.permute.xlu0 %v2952
    %2954 = vperm.xlu0 %2953, %v2813
    %v2955 = vpop.permute.xlu0 %2954
    %v2956 = vmul.f32 %v2913, %v612
    %v2957 = vmul.f32 %v2919, %v612
    %v2958 = vmul.f32 %v2925, %v612
    %v2959 = vmul.f32 %v2931, %v612
    %v2960 = vmul.f32 %v2937, %v612
    %v2961 = vmul.f32 %v2943, %v612
    %v2962 = vmul.f32 %v2949, %v612
    %v2963 = vmul.f32 %v2955, %v612
    %v2964 = vadd.f32 %v2900, %v2956
    %v2965 = vadd.f32 %v2901, %v2957
    %v2966 = vadd.f32 %v2902, %v2958
    %v2967 = vadd.f32 %v2903, %v2959
    %v2968 = vadd.f32 %v2904, %v2960
    %v2969 = vadd.f32 %v2905, %v2961
    %v2970 = vadd.f32 %v2906, %v2962
    %v2971 = vadd.f32 %v2907, %v2963
    %v2972 = vlaneseq
    %v2973 = vshrl.u32 %v2972, 7
    %v2974 = vadd.s32 %v2973, 8
    %2975 = vset.pattern.permute.xlu0 %v2974
    %2976 = vperm.xlu0 %2975, %v2836
    %v2977 = vpop.permute.xlu0 %2976
    %v2978 = vlaneseq
    %v2979 = vshrl.u32 %v2978, 7
    %v2980 = vadd.s32 %v2979, 8
    %2981 = vset.pattern.permute.xlu0 %v2980
    %2982 = vperm.xlu0 %2981, %v2843
    %v2983 = vpop.permute.xlu0 %2982
    %v2984 = vlaneseq
    %v2985 = vshrl.u32 %v2984, 7
    %v2986 = vadd.s32 %v2985, 8
    %2987 = vset.pattern.permute.xlu0 %v2986
    %2988 = vperm.xlu0 %2987, %v2850
    %v2989 = vpop.permute.xlu0 %2988
    %v2990 = vlaneseq
    %v2991 = vshrl.u32 %v2990, 7
    %v2992 = vadd.s32 %v2991, 8
    %2993 = vset.pattern.permute.xlu0 %v2992
    %2994 = vperm.xlu0 %2993, %v2857
    %v2995 = vpop.permute.xlu0 %2994
    %v2996 = vlaneseq
    %v2997 = vshrl.u32 %v2996, 7
    %v2998 = vadd.s32 %v2997, 8
    %2999 = vset.pattern.permute.xlu0 %v2998
    %3000 = vperm.xlu0 %2999, %v2864
    %v3001 = vpop.permute.xlu0 %3000
    %v3002 = vlaneseq
    %v3003 = vshrl.u32 %v3002, 7
    %v3004 = vadd.s32 %v3003, 8
    %3005 = vset.pattern.permute.xlu0 %v3004
    %3006 = vperm.xlu0 %3005, %v2871
    %v3007 = vpop.permute.xlu0 %3006
    %v3008 = vlaneseq
    %v3009 = vshrl.u32 %v3008, 7
    %v3010 = vadd.s32 %v3009, 8
    %3011 = vset.pattern.permute.xlu0 %v3010
    %3012 = vperm.xlu0 %3011, %v2878
    %v3013 = vpop.permute.xlu0 %3012
    %v3014 = vlaneseq
    %v3015 = vshrl.u32 %v3014, 7
    %v3016 = vadd.s32 %v3015, 8
    %3017 = vset.pattern.permute.xlu0 %v3016
    %3018 = vperm.xlu0 %3017, %v2885
    %v3019 = vpop.permute.xlu0 %3018
    %v3020 = vmul.f32 %v2977, %v631
    %v3021 = vmul.f32 %v2983, %v631
    %v3022 = vmul.f32 %v2989, %v631
    %v3023 = vmul.f32 %v2995, %v631
    %v3024 = vmul.f32 %v3001, %v631
    %v3025 = vmul.f32 %v3007, %v631
    %v3026 = vmul.f32 %v3013, %v631
    %v3027 = vmul.f32 %v3019, %v631
    %v3028 = vadd.f32 %v2964, %v3020
    %v3029 = vadd.f32 %v2965, %v3021
    %v3030 = vadd.f32 %v2966, %v3022
    %v3031 = vadd.f32 %v2967, %v3023
    %v3032 = vadd.f32 %v2968, %v3024
    %v3033 = vadd.f32 %v2969, %v3025
    %v3034 = vadd.f32 %v2970, %v3026
    %v3035 = vadd.f32 %v2971, %v3027
    %v3036 = vlaneseq
    %v3037 = vshrl.u32 %v3036, 7
    %v3038 = vadd.s32 %v3037, 16
    %3039 = vset.pattern.permute.xlu0 %v3038
    %3040 = vperm.xlu0 %3039, %v2764
    %v3041 = vpop.permute.xlu0 %3040
    %v3042 = vlaneseq
    %v3043 = vshrl.u32 %v3042, 7
    %v3044 = vadd.s32 %v3043, 16
    %3045 = vset.pattern.permute.xlu0 %v3044
    %3046 = vperm.xlu0 %3045, %v2771
    %v3047 = vpop.permute.xlu0 %3046
    %v3048 = vlaneseq
    %v3049 = vshrl.u32 %v3048, 7
    %v3050 = vadd.s32 %v3049, 16
    %3051 = vset.pattern.permute.xlu0 %v3050
    %3052 = vperm.xlu0 %3051, %v2778
    %v3053 = vpop.permute.xlu0 %3052
    %v3054 = vlaneseq
    %v3055 = vshrl.u32 %v3054, 7
    %v3056 = vadd.s32 %v3055, 16
    %3057 = vset.pattern.permute.xlu0 %v3056
    %3058 = vperm.xlu0 %3057, %v2785
    %v3059 = vpop.permute.xlu0 %3058
    %v3060 = vlaneseq
    %v3061 = vshrl.u32 %v3060, 7
    %v3062 = vadd.s32 %v3061, 16
    %3063 = vset.pattern.permute.xlu0 %v3062
    %3064 = vperm.xlu0 %3063, %v2792
    %v3065 = vpop.permute.xlu0 %3064
    %v3066 = vlaneseq
    %v3067 = vshrl.u32 %v3066, 7
    %v3068 = vadd.s32 %v3067, 16
    %3069 = vset.pattern.permute.xlu0 %v3068
    %3070 = vperm.xlu0 %3069, %v2799
    %v3071 = vpop.permute.xlu0 %3070
    %v3072 = vlaneseq
    %v3073 = vshrl.u32 %v3072, 7
    %v3074 = vadd.s32 %v3073, 16
    %3075 = vset.pattern.permute.xlu0 %v3074
    %3076 = vperm.xlu0 %3075, %v2806
    %v3077 = vpop.permute.xlu0 %3076
    %v3078 = vlaneseq
    %v3079 = vshrl.u32 %v3078, 7
    %v3080 = vadd.s32 %v3079, 16
    %3081 = vset.pattern.permute.xlu0 %v3080
    %3082 = vperm.xlu0 %3081, %v2813
    %v3083 = vpop.permute.xlu0 %3082
    %v3084 = vmul.f32 %v3041, %v698
    %v3085 = vmul.f32 %v3047, %v698
    %v3086 = vmul.f32 %v3053, %v698
    %v3087 = vmul.f32 %v3059, %v698
    %v3088 = vmul.f32 %v3065, %v698
    %v3089 = vmul.f32 %v3071, %v698
    %v3090 = vmul.f32 %v3077, %v698
    %v3091 = vmul.f32 %v3083, %v698
    %v3092 = vadd.f32 %v3028, %v3084
    %v3093 = vadd.f32 %v3029, %v3085
    %v3094 = vadd.f32 %v3030, %v3086
    %v3095 = vadd.f32 %v3031, %v3087
    %v3096 = vadd.f32 %v3032, %v3088
    %v3097 = vadd.f32 %v3033, %v3089
    %v3098 = vadd.f32 %v3034, %v3090
    %v3099 = vadd.f32 %v3035, %v3091
    %v3100 = vlaneseq
    %v3101 = vshrl.u32 %v3100, 7
    %v3102 = vadd.s32 %v3101, 16
    %3103 = vset.pattern.permute.xlu0 %v3102
    %3104 = vperm.xlu0 %3103, %v2836
    %v3105 = vpop.permute.xlu0 %3104
    %v3106 = vlaneseq
    %v3107 = vshrl.u32 %v3106, 7
    %v3108 = vadd.s32 %v3107, 16
    %3109 = vset.pattern.permute.xlu0 %v3108
    %3110 = vperm.xlu0 %3109, %v2843
    %v3111 = vpop.permute.xlu0 %3110
    %v3112 = vlaneseq
    %v3113 = vshrl.u32 %v3112, 7
    %v3114 = vadd.s32 %v3113, 16
    %3115 = vset.pattern.permute.xlu0 %v3114
    %3116 = vperm.xlu0 %3115, %v2850
    %v3117 = vpop.permute.xlu0 %3116
    %v3118 = vlaneseq
    %v3119 = vshrl.u32 %v3118, 7
    %v3120 = vadd.s32 %v3119, 16
    %3121 = vset.pattern.permute.xlu0 %v3120
    %3122 = vperm.xlu0 %3121, %v2857
    %v3123 = vpop.permute.xlu0 %3122
    %v3124 = vlaneseq
    %v3125 = vshrl.u32 %v3124, 7
    %v3126 = vadd.s32 %v3125, 16
    %3127 = vset.pattern.permute.xlu0 %v3126
    %3128 = vperm.xlu0 %3127, %v2864
    %v3129 = vpop.permute.xlu0 %3128
    %v3130 = vlaneseq
    %v3131 = vshrl.u32 %v3130, 7
    %v3132 = vadd.s32 %v3131, 16
    %3133 = vset.pattern.permute.xlu0 %v3132
    %3134 = vperm.xlu0 %3133, %v2871
    %v3135 = vpop.permute.xlu0 %3134
    %v3136 = vlaneseq
    %v3137 = vshrl.u32 %v3136, 7
    %v3138 = vadd.s32 %v3137, 16
    %3139 = vset.pattern.permute.xlu0 %v3138
    %3140 = vperm.xlu0 %3139, %v2878
    %v3141 = vpop.permute.xlu0 %3140
    %v3142 = vlaneseq
    %v3143 = vshrl.u32 %v3142, 7
    %v3144 = vadd.s32 %v3143, 16
    %3145 = vset.pattern.permute.xlu0 %v3144
    %3146 = vperm.xlu0 %3145, %v2885
    %v3147 = vpop.permute.xlu0 %3146
    %v3148 = vmul.f32 %v3105, %v717
    %v3149 = vmul.f32 %v3111, %v717
    %v3150 = vmul.f32 %v3117, %v717
    %v3151 = vmul.f32 %v3123, %v717
    %v3152 = vmul.f32 %v3129, %v717
    %v3153 = vmul.f32 %v3135, %v717
    %v3154 = vmul.f32 %v3141, %v717
    %v3155 = vmul.f32 %v3147, %v717
    %v3156 = vadd.f32 %v3092, %v3148
    %v3157 = vadd.f32 %v3093, %v3149
    %v3158 = vadd.f32 %v3094, %v3150
    %v3159 = vadd.f32 %v3095, %v3151
    %v3160 = vadd.f32 %v3096, %v3152
    %v3161 = vadd.f32 %v3097, %v3153
    %v3162 = vadd.f32 %v3098, %v3154
    %v3163 = vadd.f32 %v3099, %v3155
    %v3164 = vtanh.pop %v3156
    %v3165 = vtanh.pop %v3157
    %v3166 = vtanh.pop %v3158
    %v3167 = vtanh.pop %v3159
    %v3168 = vtanh.pop %v3160
    %v3169 = vtanh.pop %v3161
    %v3170 = vtanh.pop %v3162
    %v3171 = vtanh.pop %v3163
    %v3172 = vmul.f32 %v3164, %v744
    %v3173 = vmul.f32 %v3165, %v744
    %v3174 = vmul.f32 %v3166, %v744
    %v3175 = vmul.f32 %v3167, %v744
    %v3176 = vmul.f32 %v3168, %v744
    %v3177 = vmul.f32 %v3169, %v744
    %v3178 = vmul.f32 %v3170, %v744
    %v3179 = vmul.f32 %v3171, %v744
    %v3180 = vsel %vm754, %v3172, 0.0
    %3181 = vadd.xlane.f32.xlu0 %v3180
    %v3182 = vpop.xlane.xlu0 %3181
    %v3183 = vsel %vm754, %v3173, 0.0
    %3184 = vadd.xlane.f32.xlu0 %v3183
    %v3185 = vpop.xlane.xlu0 %3184
    %v3186 = vsel %vm754, %v3174, 0.0
    %3187 = vadd.xlane.f32.xlu0 %v3186
    %v3188 = vpop.xlane.xlu0 %3187
    %v3189 = vsel %vm754, %v3175, 0.0
    %3190 = vadd.xlane.f32.xlu0 %v3189
    %v3191 = vpop.xlane.xlu0 %3190
    %v3192 = vsel %vm754, %v3176, 0.0
    %3193 = vadd.xlane.f32.xlu0 %v3192
    %v3194 = vpop.xlane.xlu0 %3193
    %v3195 = vsel %vm754, %v3177, 0.0
    %3196 = vadd.xlane.f32.xlu0 %v3195
    %v3197 = vpop.xlane.xlu0 %3196
    %v3198 = vsel %vm754, %v3178, 0.0
    %3199 = vadd.xlane.f32.xlu0 %v3198
    %v3200 = vpop.xlane.xlu0 %3199
    %v3201 = vsel %vm754, %v3179, 0.0
    %3202 = vadd.xlane.f32.xlu0 %v3201
    %v3203 = vpop.xlane.xlu0 %3202
    %v3212 = vperm.slane %v3182, %v788
    %v3213 = vperm.slane %v3185, %v788
    %v3214 = vperm.slane %v3188, %v788
    %v3215 = vperm.slane %v3191, %v788
    %v3216 = vperm.slane %v3194, %v788
    %v3217 = vperm.slane %v3197, %v788
    %v3218 = vperm.slane %v3200, %v788
    %v3219 = vperm.slane %v3203, %v788
    %v3220 = vsel %vm797, %v3213, %v3212
    %v3221 = vsel %vm799, %v3214, %v3220
    %v3222 = vsel %vm801, %v3215, %v3221
    %v3223 = vsel %vm803, %v3216, %v3222
    %v3224 = vsel %vm805, %v3217, %v3223
    %v3225 = vsel %vm807, %v3218, %v3224
    %v3226 = vsel %vm809, %v3219, %v3225
    %v3228 = vsel %vm327, %v3226, -inf
    %3229 = vmax.xlane.f32.xlu0 %v3228
    %v3230 = vpop.xlane.xlu0 %3229
    %v3232 = vperm.slane %v3230, 0
    %v3233 = vperm.slane %v3230, 1
    %v3234 = vperm.slane %v3230, 2
    %v3235 = vperm.slane %v3230, 3
    %v3236 = vperm.slane %v3230, 4
    %v3237 = vperm.slane %v3230, 5
    %v3238 = vperm.slane %v3230, 6
    %v3239 = vperm.slane %v3230, 7
    %v3248 = vsub.f32 %v3182, %v3232
    %v3249 = vsub.f32 %v3185, %v3233
    %v3250 = vsub.f32 %v3188, %v3234
    %v3251 = vsub.f32 %v3191, %v3235
    %v3252 = vsub.f32 %v3194, %v3236
    %v3253 = vsub.f32 %v3197, %v3237
    %v3254 = vsub.f32 %v3200, %v3238
    %v3255 = vsub.f32 %v3203, %v3239
    %v3256 = vmul.f32 %v3248, 1.442695
    %v3257 = vpow.pop %v3256
    %v3258 = vmul.f32 %v3249, 1.442695
    %v3259 = vpow.pop %v3258
    %v3260 = vmul.f32 %v3250, 1.442695
    %v3261 = vpow.pop %v3260
    %v3262 = vmul.f32 %v3251, 1.442695
    %v3263 = vpow.pop %v3262
    %v3264 = vmul.f32 %v3252, 1.442695
    %v3265 = vpow.pop %v3264
    %v3266 = vmul.f32 %v3253, 1.442695
    %v3267 = vpow.pop %v3266
    %v3268 = vmul.f32 %v3254, 1.442695
    %v3269 = vpow.pop %v3268
    %v3270 = vmul.f32 %v3255, 1.442695
    %v3271 = vpow.pop %v3270
    %3280 = vset.pattern.permute.xlu0 0
    %3281 = vperm.xlu0 %3280, %v3257
    %v3282 = vpop.permute.xlu0 %3281
    %3283 = vset.pattern.permute.xlu0 0
    %3284 = vperm.xlu0 %3283, %v3259
    %v3285 = vpop.permute.xlu0 %3284
    %3286 = vset.pattern.permute.xlu0 0
    %3287 = vperm.xlu0 %3286, %v3261
    %v3288 = vpop.permute.xlu0 %3287
    %3289 = vset.pattern.permute.xlu0 0
    %3290 = vperm.xlu0 %3289, %v3263
    %v3291 = vpop.permute.xlu0 %3290
    %3292 = vset.pattern.permute.xlu0 0
    %3293 = vperm.xlu0 %3292, %v3265
    %v3294 = vpop.permute.xlu0 %3293
    %3295 = vset.pattern.permute.xlu0 0
    %3296 = vperm.xlu0 %3295, %v3267
    %v3297 = vpop.permute.xlu0 %3296
    %3298 = vset.pattern.permute.xlu0 0
    %3299 = vperm.xlu0 %3298, %v3269
    %v3300 = vpop.permute.xlu0 %3299
    %3301 = vset.pattern.permute.xlu0 0
    %3302 = vperm.xlu0 %3301, %v3271
    %v3303 = vpop.permute.xlu0 %3302
    %v3304 = vperm.slane %v3282, %v788
    %v3305 = vperm.slane %v3285, %v788
    %v3306 = vperm.slane %v3288, %v788
    %v3307 = vperm.slane %v3291, %v788
    %v3308 = vperm.slane %v3294, %v788
    %v3309 = vperm.slane %v3297, %v788
    %v3310 = vperm.slane %v3300, %v788
    %v3311 = vperm.slane %v3303, %v788
    %v3312 = vsel %vm797, %v3305, %v3304
    %v3313 = vsel %vm799, %v3306, %v3312
    %v3314 = vsel %vm801, %v3307, %v3313
    %v3315 = vsel %vm803, %v3308, %v3314
    %v3316 = vsel %vm805, %v3309, %v3315
    %v3317 = vsel %vm807, %v3310, %v3316
    %v3318 = vsel %vm809, %v3311, %v3317
    %v3320 = vsel %vm327, %v3318, 0.0
    %3321 = vadd.xlane.f32.xlu0 %v3320
    %v3322 = vpop.xlane.xlu0 %3321
    %v3323 = vrcp.pop %v3322
    %v3325 = vperm.slane %v3323, 0
    %v3326 = vperm.slane %v3323, 1
    %v3327 = vperm.slane %v3323, 2
    %v3328 = vperm.slane %v3323, 3
    %v3329 = vperm.slane %v3323, 4
    %v3330 = vperm.slane %v3323, 5
    %v3331 = vperm.slane %v3323, 6
    %v3332 = vperm.slane %v3323, 7
    %v3341 = vmul.f32 %v3257, %v3325
    %v3342 = vmul.f32 %v3259, %v3326
    %v3343 = vmul.f32 %v3261, %v3327
    %v3344 = vmul.f32 %v3263, %v3328
    %v3345 = vmul.f32 %v3265, %v3329
    %v3346 = vmul.f32 %v3267, %v3330
    %v3347 = vmul.f32 %v3269, %v3331
    %v3348 = vmul.f32 %v3271, %v3332
    %v3349 = vpack.c.bf16 %v3341, %v3341
    %v3350 = vpack.c.bf16 %v3342, %v3342
    %v3351 = vpack.c.bf16 %v3343, %v3343
    %v3352 = vpack.c.bf16 %v3344, %v3344
    %v3353 = vpack.c.bf16 %v3345, %v3345
    %v3354 = vpack.c.bf16 %v3346, %v3346
    %v3355 = vpack.c.bf16 %v3347, %v3347
    %v3356 = vpack.c.bf16 %v3348, %v3348
    %v3358 = vunpack.c.l.b16 %v3349
    %v3359 = vpack.c.b16 %v3358, %v3358
    %v3360 = vunpack.c.l.b16 %v3359
    %3361 = vset.pattern.permute.xlu0 0
    %3362 = vperm.xlu0 %3361, %v3360
    %v3363 = vpop.permute.xlu0 %3362
    %v3364 = vperm.slane %v3363, %v788
    %v3365 = vpack.c.b16 %v3364, %v3364
    %v3367 = vsel %vm327, %v3365, 0
    %3369 = vmatpush.bf16.msra.mxu0 0
    %3370 = vmatpush.bf16.msra.mxu0 0
    %3371 = vmatpush.bf16.msra.mxu0 0
    %3372 = vmatpush.bf16.msra.mxu0 0
    %3373 = vmatpush.bf16.msra.mxu0 0
    %3374 = vmatpush.bf16.msra.mxu0 0
    %3375 = vmatpush.bf16.msra.mxu0 0
    %3376 = vmatpush.bf16.msra.mxu0 %v954
    %3377 = vmatmul.bf16.gmra.mxu0 %v3367
    %v3378 = vpop.f32.mrf.mxu0
    %v3379 = vadd.f32 0.0, %v3378
    %v3380 = vpop.f32.mrf.mxu0
    %3381 = vdwg.mxu0
    %v3383 = vunpack.c.l.b16 %v3350
    %v3384 = vpack.c.b16 %v3383, %v3383
    %v3385 = vunpack.c.l.b16 %v3384
    %3386 = vset.pattern.permute.xlu0 0
    %3387 = vperm.xlu0 %3386, %v3385
    %v3388 = vpop.permute.xlu0 %3387
    %v3389 = vperm.slane %v3388, %v788
    %v3390 = vpack.c.b16 %v3389, %v3389
    %v3392 = vsel %vm327, %v3390, 0
    %3394 = vmatpush.bf16.msra.mxu0 0
    %3395 = vmatpush.bf16.msra.mxu0 0
    %3396 = vmatpush.bf16.msra.mxu0 0
    %3397 = vmatpush.bf16.msra.mxu0 0
    %3398 = vmatpush.bf16.msra.mxu0 0
    %3399 = vmatpush.bf16.msra.mxu0 0
    %3400 = vmatpush.bf16.msra.mxu0 0
    %3401 = vmatpush.bf16.msra.mxu0 %v982
    %3402 = vmatmul.bf16.gmra.mxu0 %v3392
    %v3403 = vpop.f32.mrf.mxu0
    %v3404 = vadd.f32 0.0, %v3403
    %v3405 = vpop.f32.mrf.mxu0
    %3406 = vdwg.mxu0
    %v3408 = vunpack.c.l.b16 %v3351
    %v3409 = vpack.c.b16 %v3408, %v3408
    %v3410 = vunpack.c.l.b16 %v3409
    %3411 = vset.pattern.permute.xlu0 0
    %3412 = vperm.xlu0 %3411, %v3410
    %v3413 = vpop.permute.xlu0 %3412
    %v3414 = vperm.slane %v3413, %v788
    %v3415 = vpack.c.b16 %v3414, %v3414
    %v3417 = vsel %vm327, %v3415, 0
    %3419 = vmatpush.bf16.msra.mxu0 0
    %3420 = vmatpush.bf16.msra.mxu0 0
    %3421 = vmatpush.bf16.msra.mxu0 0
    %3422 = vmatpush.bf16.msra.mxu0 0
    %3423 = vmatpush.bf16.msra.mxu0 0
    %3424 = vmatpush.bf16.msra.mxu0 0
    %3425 = vmatpush.bf16.msra.mxu0 0
    %3426 = vmatpush.bf16.msra.mxu0 %v1010
    %3427 = vmatmul.bf16.gmra.mxu0 %v3417
    %v3428 = vpop.f32.mrf.mxu0
    %v3429 = vadd.f32 0.0, %v3428
    %v3430 = vpop.f32.mrf.mxu0
    %3431 = vdwg.mxu0
    %v3433 = vunpack.c.l.b16 %v3352
    %v3434 = vpack.c.b16 %v3433, %v3433
    %v3435 = vunpack.c.l.b16 %v3434
    %3436 = vset.pattern.permute.xlu0 0
    %3437 = vperm.xlu0 %3436, %v3435
    %v3438 = vpop.permute.xlu0 %3437
    %v3439 = vperm.slane %v3438, %v788
    %v3440 = vpack.c.b16 %v3439, %v3439
    %v3442 = vsel %vm327, %v3440, 0
    %3444 = vmatpush.bf16.msra.mxu0 0
    %3445 = vmatpush.bf16.msra.mxu0 0
    %3446 = vmatpush.bf16.msra.mxu0 0
    %3447 = vmatpush.bf16.msra.mxu0 0
    %3448 = vmatpush.bf16.msra.mxu0 0
    %3449 = vmatpush.bf16.msra.mxu0 0
    %3450 = vmatpush.bf16.msra.mxu0 0
    %3451 = vmatpush.bf16.msra.mxu0 %v1038
    %3452 = vmatmul.bf16.gmra.mxu0 %v3442
    %v3453 = vpop.f32.mrf.mxu0
    %v3454 = vadd.f32 0.0, %v3453
    %v3455 = vpop.f32.mrf.mxu0
    %3456 = vdwg.mxu0
    %v3458 = vunpack.c.l.b16 %v3353
    %v3459 = vpack.c.b16 %v3458, %v3458
    %v3460 = vunpack.c.l.b16 %v3459
    %3461 = vset.pattern.permute.xlu0 0
    %3462 = vperm.xlu0 %3461, %v3460
    %v3463 = vpop.permute.xlu0 %3462
    %v3464 = vperm.slane %v3463, %v788
    %v3465 = vpack.c.b16 %v3464, %v3464
    %v3467 = vsel %vm327, %v3465, 0
    %3469 = vmatpush.bf16.msra.mxu0 0
    %3470 = vmatpush.bf16.msra.mxu0 0
    %3471 = vmatpush.bf16.msra.mxu0 0
    %3472 = vmatpush.bf16.msra.mxu0 0
    %3473 = vmatpush.bf16.msra.mxu0 0
    %3474 = vmatpush.bf16.msra.mxu0 0
    %3475 = vmatpush.bf16.msra.mxu0 0
    %3476 = vmatpush.bf16.msra.mxu0 %v1066
    %3477 = vmatmul.bf16.gmra.mxu0 %v3467
    %v3478 = vpop.f32.mrf.mxu0
    %v3479 = vadd.f32 0.0, %v3478
    %v3480 = vpop.f32.mrf.mxu0
    %3481 = vdwg.mxu0
    %v3483 = vunpack.c.l.b16 %v3354
    %v3484 = vpack.c.b16 %v3483, %v3483
    %v3485 = vunpack.c.l.b16 %v3484
    %3486 = vset.pattern.permute.xlu0 0
    %3487 = vperm.xlu0 %3486, %v3485
    %v3488 = vpop.permute.xlu0 %3487
    %v3489 = vperm.slane %v3488, %v788
    %v3490 = vpack.c.b16 %v3489, %v3489
    %v3492 = vsel %vm327, %v3490, 0
    %3494 = vmatpush.bf16.msra.mxu0 0
    %3495 = vmatpush.bf16.msra.mxu0 0
    %3496 = vmatpush.bf16.msra.mxu0 0
    %3497 = vmatpush.bf16.msra.mxu0 0
    %3498 = vmatpush.bf16.msra.mxu0 0
    %3499 = vmatpush.bf16.msra.mxu0 0
    %3500 = vmatpush.bf16.msra.mxu0 0
    %3501 = vmatpush.bf16.msra.mxu0 %v1094
    %3502 = vmatmul.bf16.gmra.mxu0 %v3492
    %v3503 = vpop.f32.mrf.mxu0
    %v3504 = vadd.f32 0.0, %v3503
    %v3505 = vpop.f32.mrf.mxu0
    %3506 = vdwg.mxu0
    %v3508 = vunpack.c.l.b16 %v3355
    %v3509 = vpack.c.b16 %v3508, %v3508
    %v3510 = vunpack.c.l.b16 %v3509
    %3511 = vset.pattern.permute.xlu0 0
    %3512 = vperm.xlu0 %3511, %v3510
    %v3513 = vpop.permute.xlu0 %3512
    %v3514 = vperm.slane %v3513, %v788
    %v3515 = vpack.c.b16 %v3514, %v3514
    %v3517 = vsel %vm327, %v3515, 0
    %3519 = vmatpush.bf16.msra.mxu0 0
    %3520 = vmatpush.bf16.msra.mxu0 0
    %3521 = vmatpush.bf16.msra.mxu0 0
    %3522 = vmatpush.bf16.msra.mxu0 0
    %3523 = vmatpush.bf16.msra.mxu0 0
    %3524 = vmatpush.bf16.msra.mxu0 0
    %3525 = vmatpush.bf16.msra.mxu0 0
    %3526 = vmatpush.bf16.msra.mxu0 %v1122
    %3527 = vmatmul.bf16.gmra.mxu0 %v3517
    %v3528 = vpop.f32.mrf.mxu0
    %v3529 = vadd.f32 0.0, %v3528
    %v3530 = vpop.f32.mrf.mxu0
    %3531 = vdwg.mxu0
    %v3533 = vunpack.c.l.b16 %v3356
    %v3534 = vpack.c.b16 %v3533, %v3533
    %v3535 = vunpack.c.l.b16 %v3534
    %3536 = vset.pattern.permute.xlu0 0
    %3537 = vperm.xlu0 %3536, %v3535
    %v3538 = vpop.permute.xlu0 %3537
    %v3539 = vperm.slane %v3538, %v788
    %v3540 = vpack.c.b16 %v3539, %v3539
    %v3542 = vsel %vm327, %v3540, 0
    %3544 = vmatpush.bf16.msra.mxu0 0
    %3545 = vmatpush.bf16.msra.mxu0 0
    %3546 = vmatpush.bf16.msra.mxu0 0
    %3547 = vmatpush.bf16.msra.mxu0 0
    %3548 = vmatpush.bf16.msra.mxu0 0
    %3549 = vmatpush.bf16.msra.mxu0 0
    %3550 = vmatpush.bf16.msra.mxu0 0
    %3551 = vmatpush.bf16.msra.mxu0 %v1150
    %3552 = vmatmul.bf16.gmra.mxu0 %v3542
    %v3553 = vpop.f32.mrf.mxu0
    %v3554 = vadd.f32 0.0, %v3553
    %v3555 = vpop.f32.mrf.mxu0
    %3556 = vdwg.mxu0
    %v3557 = vadd.f32 %v2367, %v3341
    %v3558 = vadd.f32 %v2368, %v3342
    %v3559 = vadd.f32 %v2369, %v3343
    %v3560 = vadd.f32 %v2370, %v3344
    %v3561 = vadd.f32 %v2371, %v3345
    %v3562 = vadd.f32 %v2372, %v3346
    %v3563 = vadd.f32 %v2373, %v3347
    %v3564 = vadd.f32 %v2374, %v3348
    %v3565 = vpack.c.bf16 %v3379, %v3379
    %v3566 = vpack.c.bf16 %v3404, %v3404
    %v3567 = vpack.c.bf16 %v3429, %v3429
    %v3568 = vpack.c.bf16 %v3454, %v3454
    %v3569 = vpack.c.bf16 %v3479, %v3479
    %v3570 = vpack.c.bf16 %v3504, %v3504
    %v3571 = vpack.c.bf16 %v3529, %v3529
    %v3572 = vpack.c.bf16 %v3554, %v3554
    %v3581 = vunpack.c.l.b16 %v3565
    %v3582 = vunpack.c.l.b16 %v3566
    %v3583 = vunpack.c.l.b16 %v3567
    %v3584 = vunpack.c.l.b16 %v3568
    %v3585 = vunpack.c.l.b16 %v3569
    %v3586 = vunpack.c.l.b16 %v3570
    %v3587 = vunpack.c.l.b16 %v3571
    %v3588 = vunpack.c.l.b16 %v3572
    %v3589 = vrot.slane %v3582, 7
    %v3590 = vsel %vm797, %v3589, %v3581
    %v3591 = vrot.slane %v3583, 6
    %v3592 = vsel %vm799, %v3591, %v3590
    %v3593 = vrot.slane %v3584, 5
    %v3594 = vsel %vm801, %v3593, %v3592
    %v3595 = vrot.slane %v3585, 4
    %v3596 = vsel %vm803, %v3595, %v3594
    %v3597 = vrot.slane %v3586, 3
    %v3598 = vsel %vm805, %v3597, %v3596
    %v3599 = vrot.slane %v3587, 2
    %v3600 = vsel %vm807, %v3599, %v3598
    %v3601 = vrot.slane %v3588, 1
    %v3602 = vsel %vm809, %v3601, %v3600
    %v3603 = vpack.c.b16 %v3602, %v3602
    %v3605 = vsel %vm260, %v3603, 0
    %3607 = vmatpush.bf16.msra.mxu0 0
    %3608 = vmatpush.bf16.msra.mxu0 0
    %3609 = vmatpush.bf16.msra.mxu0 0
    %3610 = vmatpush.bf16.msra.mxu0 0
    %3611 = vmatpush.bf16.msra.mxu0 0
    %3612 = vmatpush.bf16.msra.mxu0 0
    %3613 = vmatpush.bf16.msra.mxu0 %v1221
    %3614 = vmatpush.bf16.msra.mxu0 %v1220
    %3615 = vmatmul.bf16.gmra.mxu0 %v3605
    %v3616 = vpop.f32.mrf.mxu0
    %v3617 = vadd.f32 %v2505, %v3616
    %v3618 = vpop.f32.mrf.mxu0
    %3619 = vdwg.mxu0
    %v3620 = vadd.f32 %v3617, %v225
    %v3621 = vxor.u32 %v3620, 2147483648
    %v3622 = vmul.f32 %v3621, 1.442695
    %v3623 = vpow.pop %v3622
    %v3624 = vadd.f32 %v3623, 1.0
    %v3625 = vrcp.pop %v3624
    %v3626 = vmul.f32 %v3624, %v3625
    %v3627 = vsub.f32 1.0, %v3626
    %v3628 = vmul.f32 %v3625, %v3627
    %v3629 = vadd.f32 %v3625, %v3628
    %vm3630 = vweird.f32 %v3624
    %vm3631 = vweird.f32 %v3625
    %vm3632 = vmor %vm3630, %vm3631
    %v3633 = vsel %vm3632, %v3625, %v3629
    %v3634 = vand.u32 2147483647, %v3624
    %vm3635 = vcmp.eq.f32.partialorder %v3634, 8.507059e+37
    %v3636 = vand.u32 %v3624, 2147483648
    %v3637 = vor.u32 1.1754944e-38, %v3636
    %v3638 = vsel %vm3635, %v3637, %v3633
    %v3639 = vmul.f32 1.0, %v3638
    %v3640 = vtanh.pop %v3620
    %v3641 = vmul.f32 %v3639, %v2461
    %3643 = vrot.lane.b32.xlu0 %v3640, 64
    %v3644 = vpop.permute.xlu0 %3643
    %v3646 = vmul.f32 %v3639, %v3644
    %3648 = vrot.lane.b32.xlu0 %v3646, 32
    %v3649 = vpop.permute.xlu0 %3648
    %v3651 = vadd.f32 %v3641, %v3649
    %v3652 = vtanh.pop %v3651
    %3654 = vrot.lane.b32.xlu0 %v3652, 64
    %v3655 = vpop.permute.xlu0 %3654
    %v3657 = vmul.f32 %v3639, %v3655
    %3659 = vrot.lane.b32.xlu0 %v3657, 32
    %v3660 = vpop.permute.xlu0 %3659
    %3662 = vst.msk [vmem:[#allocation2 + $0x10] sm:$0xff] %vm260, %v3660
    %s3663 = scalar_lea.vmem [#allocation3], 12
    %v3664 = vld [vmem:[%s3663] sm:$0xf]
    %3665 = vmatpush.bf16.msra.mxu0 0
    %3666 = vmatpush.bf16.msra.mxu0 0
    %3667 = vmatpush.bf16.msra.mxu0 0
    %3668 = vmatpush.bf16.msra.mxu0 0
    %3669 = vmatpush.bf16.msra.mxu0 0
    %3670 = vmatpush.bf16.msra.mxu0 0
    %3671 = vmatpush.bf16.msra.mxu0 %v257
    %3672 = vmatpush.bf16.msra.mxu0 %v256
    %3673 = vmatmul.bf16.gmra.mxu0 %v2581
    %v3674 = vpop.f32.mrf.mxu0
    %v3675 = vadd.f32 0.0, %v3674
    %v3676 = vpop.f32.mrf.mxu0
    %3677 = vdwg.mxu0
    %v3678 = vpack.c.bf16 %v3657, %v3657
    %3680 = vrot.lane.b32.xlu0 %v3678, 32
    %v3681 = vpop.permute.xlu0 %3680
    %v3683 = vsel %vm260, %v3681, 0
    %3685 = vmatpush.bf16.msra.mxu0 0
    %3686 = vmatpush.bf16.msra.mxu0 0
    %3687 = vmatpush.bf16.msra.mxu0 0
    %3688 = vmatpush.bf16.msra.mxu0 0
    %3689 = vmatpush.bf16.msra.mxu0 0
    %3690 = vmatpush.bf16.msra.mxu0 0
    %3691 = vmatpush.bf16.msra.mxu0 %v286
    %3692 = vmatpush.bf16.msra.mxu0 %v285
    %3693 = vmatmul.bf16.gmra.mxu0 %v3683
    %v3694 = vpop.f32.mrf.mxu0
    %v3695 = vadd.f32 0.0, %v3694
    %v3696 = vpop.f32.mrf.mxu0
    %3697 = vdwg.mxu0
    %3698 = vmatpush.bf16.msra.mxu0 0
    %3699 = vmatpush.bf16.msra.mxu0 0
    %3700 = vmatpush.bf16.msra.mxu0 0
    %3701 = vmatpush.bf16.msra.mxu0 0
    %3702 = vmatpush.bf16.msra.mxu0 0
    %3703 = vmatpush.bf16.msra.mxu0 0
    %3704 = vmatpush.bf16.msra.mxu0 %v311
    %3705 = vmatpush.bf16.msra.mxu0 %v310
    %3706 = vmatmul.bf16.gmra.mxu0 %v3605
    %v3707 = vpop.f32.mrf.mxu0
    %v3708 = vadd.f32 0.0, %v3707
    %v3709 = vpop.f32.mrf.mxu0
    %3710 = vdwg.mxu0
    %v3712 = vsel %vm327, %v3664, 0
    %3714 = vmatpush.bf16.msra.mxu0 0
    %3715 = vmatpush.bf16.msra.mxu0 0
    %3716 = vmatpush.bf16.msra.mxu0 0
    %3717 = vmatpush.bf16.msra.mxu0 0
    %3718 = vmatpush.bf16.msra.mxu0 0
    %3719 = vmatpush.bf16.msra.mxu0 0
    %3720 = vmatpush.bf16.msra.mxu0 0
    %3721 = vmatpush.bf16.msra.mxu0 %v333
    %3722 = vmatmul.bf16.gmra.mxu0 %v3712
    %v3723 = vpop.f32.mrf.mxu0
    %v3724 = vadd.f32 %v3708, %v3723
    %v3725 = vpop.f32.mrf.mxu0
    %3726 = vdwg.mxu0
    %v3727 = vadd.f32 %v3724, %v3675
    %v3728 = vadd.f32 %v3727, %v221
    %v3729 = vxor.u32 %v3728, 2147483648
    %v3730 = vmul.f32 %v3729, 1.442695
    %v3731 = vpow.pop %v3730
    %v3732 = vadd.f32 %v3731, 1.0
    %v3733 = vrcp.pop %v3732
    %v3734 = vmul.f32 %v3732, %v3733
    %v3735 = vsub.f32 1.0, %v3734
    %v3736 = vmul.f32 %v3733, %v3735
    %v3737 = vadd.f32 %v3733, %v3736
    %vm3738 = vweird.f32 %v3732
    %vm3739 = vweird.f32 %v3733
    %vm3740 = vmor %vm3738, %vm3739
    %v3741 = vsel %vm3740, %v3733, %v3737
    %v3742 = vand.u32 2147483647, %v3732
    %vm3743 = vcmp.eq.f32.partialorder %v3742, 8.507059e+37
    %v3744 = vand.u32 %v3732, 2147483648
    %v3745 = vor.u32 1.1754944e-38, %v3744
    %v3746 = vsel %vm3743, %v3745, %v3741
    %v3747 = vmul.f32 1.0, %v3746
    %v3748 = vtanh.pop %v3728
    %v3749 = vmul.f32 %v3747, %v2569
    %3751 = vrot.lane.b32.xlu0 %v3748, 64
    %v3752 = vpop.permute.xlu0 %3751
    %v3754 = vmul.f32 %v3747, %v3752
    %3756 = vrot.lane.b32.xlu0 %v3754, 32
    %v3757 = vpop.permute.xlu0 %3756
    %v3759 = vadd.f32 %v3749, %v3757
    %v3760 = vtanh.pop %v3759
    %3762 = vrot.lane.b32.xlu0 %v3760, 64
    %v3763 = vpop.permute.xlu0 %3762
    %v3765 = vmul.f32 %v3747, %v3763
    %v3766 = vpack.c.bf16 %v3765, %v3765
    %3768 = vrot.lane.b32.xlu0 %v3766, 32
    %v3769 = vpop.permute.xlu0 %3768
    %v3771 = vsel %vm260, %v3769, 0
    %3773 = vmatpush.bf16.msra.mxu0 0
    %3774 = vmatpush.bf16.msra.mxu0 0
    %3775 = vmatpush.bf16.msra.mxu0 0
    %3776 = vmatpush.bf16.msra.mxu0 0
    %3777 = vmatpush.bf16.msra.mxu0 0
    %3778 = vmatpush.bf16.msra.mxu0 0
    %3779 = vmatpush.bf16.msra.mxu0 %v400
    %3780 = vmatpush.bf16.msra.mxu0 %v399
    %3781 = vmatmul.bf16.gmra.mxu0 %v3771
    %v3782 = vpop.f32.mrf.mxu0
    %v3783 = vadd.f32 0.0, %v3782
    %v3784 = vpop.f32.mrf.mxu0
    %3785 = vdwg.mxu0
    %3786 = vset.pattern.permute.xlu0 0
    %3787 = vperm.xlu0 %3786, %v3358
    %v3788 = vpop.permute.xlu0 %3787
    %3789 = vset.pattern.permute.xlu0 0
    %3790 = vperm.xlu0 %3789, %v3383
    %v3791 = vpop.permute.xlu0 %3790
    %3792 = vset.pattern.permute.xlu0 0
    %3793 = vperm.xlu0 %3792, %v3408
    %v3794 = vpop.permute.xlu0 %3793
    %3795 = vset.pattern.permute.xlu0 0
    %3796 = vperm.xlu0 %3795, %v3433
    %v3797 = vpop.permute.xlu0 %3796
    %3798 = vset.pattern.permute.xlu0 0
    %3799 = vperm.xlu0 %3798, %v3458
    %v3800 = vpop.permute.xlu0 %3799
    %3801 = vset.pattern.permute.xlu0 0
    %3802 = vperm.xlu0 %3801, %v3483
    %v3803 = vpop.permute.xlu0 %3802
    %3804 = vset.pattern.permute.xlu0 0
    %3805 = vperm.xlu0 %3804, %v3508
    %v3806 = vpop.permute.xlu0 %3805
    %3807 = vset.pattern.permute.xlu0 0
    %3808 = vperm.xlu0 %3807, %v3533
    %v3809 = vpop.permute.xlu0 %3808
    %v3810 = vperm.slane %v3788, %v788
    %v3811 = vperm.slane %v3791, %v788
    %v3812 = vperm.slane %v3794, %v788
    %v3813 = vperm.slane %v3797, %v788
    %v3814 = vperm.slane %v3800, %v788
    %v3815 = vperm.slane %v3803, %v788
    %v3816 = vperm.slane %v3806, %v788
    %v3817 = vperm.slane %v3809, %v788
    %v3818 = vsel %vm797, %v3811, %v3810
    %v3819 = vsel %vm799, %v3812, %v3818
    %v3820 = vsel %vm801, %v3813, %v3819
    %v3821 = vsel %vm803, %v3814, %v3820
    %v3822 = vsel %vm805, %v3815, %v3821
    %v3823 = vsel %vm807, %v3816, %v3822
    %v3824 = vsel %vm809, %v3817, %v3823
    %v3825 = vpack.c.b16 %v3824, %v3824
    %v3827 = vsel %vm327, %v3825, 0
    %3829 = vmatpush.bf16.msra.mxu0 0
    %3830 = vmatpush.bf16.msra.mxu0 0
    %3831 = vmatpush.bf16.msra.mxu0 0
    %3832 = vmatpush.bf16.msra.mxu0 0
    %3833 = vmatpush.bf16.msra.mxu0 0
    %3834 = vmatpush.bf16.msra.mxu0 0
    %3835 = vmatpush.bf16.msra.mxu0 0
    %3836 = vmatpush.bf16.msra.mxu0 %v422
    %3837 = vmatmul.bf16.gmra.mxu0 %v3827
    %v3838 = vpop.f32.mrf.mxu0
    %v3839 = vadd.f32 0.0, %v3838
    %v3840 = vpop.f32.mrf.mxu0
    %3841 = vdwg.mxu0
    %v3842 = vpack.c.bf16 %v3557, %v3557
    %v3843 = vpack.c.bf16 %v3558, %v3558
    %v3844 = vpack.c.bf16 %v3559, %v3559
    %v3845 = vpack.c.bf16 %v3560, %v3560
    %v3846 = vpack.c.bf16 %v3561, %v3561
    %v3847 = vpack.c.bf16 %v3562, %v3562
    %v3848 = vpack.c.bf16 %v3563, %v3563
    %v3849 = vpack.c.bf16 %v3564, %v3564
    %v3858 = vunpack.c.l.b16 %v3842
    %v3859 = vunpack.c.l.b16 %v3843
    %v3860 = vunpack.c.l.b16 %v3844
    %v3861 = vunpack.c.l.b16 %v3845
    %v3862 = vunpack.c.l.b16 %v3846
    %v3863 = vunpack.c.l.b16 %v3847
    %v3864 = vunpack.c.l.b16 %v3848
    %v3865 = vunpack.c.l.b16 %v3849
    %3866 = vset.pattern.permute.xlu0 0
    %3867 = vperm.xlu0 %3866, %v3858
    %v3868 = vpop.permute.xlu0 %3867
    %3869 = vset.pattern.permute.xlu0 0
    %3870 = vperm.xlu0 %3869, %v3859
    %v3871 = vpop.permute.xlu0 %3870
    %3872 = vset.pattern.permute.xlu0 0
    %3873 = vperm.xlu0 %3872, %v3860
    %v3874 = vpop.permute.xlu0 %3873
    %3875 = vset.pattern.permute.xlu0 0
    %3876 = vperm.xlu0 %3875, %v3861
    %v3877 = vpop.permute.xlu0 %3876
    %3878 = vset.pattern.permute.xlu0 0
    %3879 = vperm.xlu0 %3878, %v3862
    %v3880 = vpop.permute.xlu0 %3879
    %3881 = vset.pattern.permute.xlu0 0
    %3882 = vperm.xlu0 %3881, %v3863
    %v3883 = vpop.permute.xlu0 %3882
    %3884 = vset.pattern.permute.xlu0 0
    %3885 = vperm.xlu0 %3884, %v3864
    %v3886 = vpop.permute.xlu0 %3885
    %3887 = vset.pattern.permute.xlu0 0
    %3888 = vperm.xlu0 %3887, %v3865
    %v3889 = vpop.permute.xlu0 %3888
    %v3890 = vperm.slane %v3868, %v788
    %v3891 = vperm.slane %v3871, %v788
    %v3892 = vperm.slane %v3874, %v788
    %v3893 = vperm.slane %v3877, %v788
    %v3894 = vperm.slane %v3880, %v788
    %v3895 = vperm.slane %v3883, %v788
    %v3896 = vperm.slane %v3886, %v788
    %v3897 = vperm.slane %v3889, %v788
    %v3898 = vsel %vm797, %v3891, %v3890
    %v3899 = vsel %vm799, %v3892, %v3898
    %v3900 = vsel %vm801, %v3893, %v3899
    %v3901 = vsel %vm803, %v3894, %v3900
    %v3902 = vsel %vm805, %v3895, %v3901
    %v3903 = vsel %vm807, %v3896, %v3902
    %v3904 = vsel %vm809, %v3897, %v3903
    %v3905 = vpack.c.b16 %v3904, %v3904
    %v3907 = vsel %vm327, %v3905, 0
    %3909 = vmatpush.bf16.msra.mxu0 0
    %3910 = vmatpush.bf16.msra.mxu0 0
    %3911 = vmatpush.bf16.msra.mxu0 0
    %3912 = vmatpush.bf16.msra.mxu0 0
    %3913 = vmatpush.bf16.msra.mxu0 0
    %3914 = vmatpush.bf16.msra.mxu0 0
    %3915 = vmatpush.bf16.msra.mxu0 0
    %3916 = vmatpush.bf16.msra.mxu0 %v422
    %3917 = vmatmul.bf16.gmra.mxu0 %v3907
    %v3918 = vpop.f32.mrf.mxu0
    %v3919 = vadd.f32 0.0, %v3918
    %v3920 = vpop.f32.mrf.mxu0
    %3921 = vdwg.mxu0
    %v3923 = vrot.slane %v3783, 1
    %v3924 = vrot.slane %v3783, 2
    %v3925 = vrot.slane %v3783, 3
    %v3926 = vrot.slane %v3783, 4
    %v3927 = vrot.slane %v3783, 5
    %v3928 = vrot.slane %v3783, 6
    %v3929 = vrot.slane %v3783, 7
    %v3930 = vperm.slane %v3783, 0
    %v3931 = vperm.slane %v3923, 0
    %v3932 = vperm.slane %v3924, 0
    %v3933 = vperm.slane %v3925, 0
    %v3934 = vperm.slane %v3926, 0
    %v3935 = vperm.slane %v3927, 0
    %v3936 = vperm.slane %v3928, 0
    %v3937 = vperm.slane %v3929, 0
    %v3946 = vadd.f32 %v198, %v3930
    %v3947 = vadd.f32 %v199, %v3931
    %v3948 = vadd.f32 %v200, %v3932
    %v3949 = vadd.f32 %v201, %v3933
    %v3950 = vadd.f32 %v202, %v3934
    %v3951 = vadd.f32 %v203, %v3935
    %v3952 = vadd.f32 %v204, %v3936
    %v3953 = vadd.f32 %v205, %v3937
    %v3954 = vperm.slane %v3839, 0
    %v3955 = vlaneseq
    %v3956 = vshrl.u32 %v3955, 7
    %3958 = vset.pattern.permute.xlu0 %v3956
    %3959 = vperm.xlu0 %3958, %v3954
    %v3960 = vpop.permute.xlu0 %3959
    %v3961 = vperm.slane %v3839, 1
    %v3962 = vlaneseq
    %v3963 = vshrl.u32 %v3962, 7
    %3965 = vset.pattern.permute.xlu0 %v3963
    %3966 = vperm.xlu0 %3965, %v3961
    %v3967 = vpop.permute.xlu0 %3966
    %v3968 = vperm.slane %v3839, 2
    %v3969 = vlaneseq
    %v3970 = vshrl.u32 %v3969, 7
    %3972 = vset.pattern.permute.xlu0 %v3970
    %3973 = vperm.xlu0 %3972, %v3968
    %v3974 = vpop.permute.xlu0 %3973
    %v3975 = vperm.slane %v3839, 3
    %v3976 = vlaneseq
    %v3977 = vshrl.u32 %v3976, 7
    %3979 = vset.pattern.permute.xlu0 %v3977
    %3980 = vperm.xlu0 %3979, %v3975
    %v3981 = vpop.permute.xlu0 %3980
    %v3982 = vperm.slane %v3839, 4
    %v3983 = vlaneseq
    %v3984 = vshrl.u32 %v3983, 7
    %3986 = vset.pattern.permute.xlu0 %v3984
    %3987 = vperm.xlu0 %3986, %v3982
    %v3988 = vpop.permute.xlu0 %3987
    %v3989 = vperm.slane %v3839, 5
    %v3990 = vlaneseq
    %v3991 = vshrl.u32 %v3990, 7
    %3993 = vset.pattern.permute.xlu0 %v3991
    %3994 = vperm.xlu0 %3993, %v3989
    %v3995 = vpop.permute.xlu0 %3994
    %v3996 = vperm.slane %v3839, 6
    %v3997 = vlaneseq
    %v3998 = vshrl.u32 %v3997, 7
    %4000 = vset.pattern.permute.xlu0 %v3998
    %4001 = vperm.xlu0 %4000, %v3996
    %v4002 = vpop.permute.xlu0 %4001
    %v4003 = vperm.slane %v3839, 7
    %v4004 = vlaneseq
    %v4005 = vshrl.u32 %v4004, 7
    %4007 = vset.pattern.permute.xlu0 %v4005
    %4008 = vperm.xlu0 %4007, %v4003
    %v4009 = vpop.permute.xlu0 %4008
    %v4010 = vmul.f32 %v3960, %v526
    %v4011 = vmul.f32 %v3967, %v526
    %v4012 = vmul.f32 %v3974, %v526
    %v4013 = vmul.f32 %v3981, %v526
    %v4014 = vmul.f32 %v3988, %v526
    %v4015 = vmul.f32 %v3995, %v526
    %v4016 = vmul.f32 %v4002, %v526
    %v4017 = vmul.f32 %v4009, %v526
    %v4018 = vadd.f32 %v3946, %v4010
    %v4019 = vadd.f32 %v3947, %v4011
    %v4020 = vadd.f32 %v3948, %v4012
    %v4021 = vadd.f32 %v3949, %v4013
    %v4022 = vadd.f32 %v3950, %v4014
    %v4023 = vadd.f32 %v3951, %v4015
    %v4024 = vadd.f32 %v3952, %v4016
    %v4025 = vadd.f32 %v3953, %v4017
    %v4026 = vperm.slane %v3919, 0
    %v4027 = vlaneseq
    %v4028 = vshrl.u32 %v4027, 7
    %4030 = vset.pattern.permute.xlu0 %v4028
    %4031 = vperm.xlu0 %4030, %v4026
    %v4032 = vpop.permute.xlu0 %4031
    %v4033 = vperm.slane %v3919, 1
    %v4034 = vlaneseq
    %v4035 = vshrl.u32 %v4034, 7
    %4037 = vset.pattern.permute.xlu0 %v4035
    %4038 = vperm.xlu0 %4037, %v4033
    %v4039 = vpop.permute.xlu0 %4038
    %v4040 = vperm.slane %v3919, 2
    %v4041 = vlaneseq
    %v4042 = vshrl.u32 %v4041, 7
    %4044 = vset.pattern.permute.xlu0 %v4042
    %4045 = vperm.xlu0 %4044, %v4040
    %v4046 = vpop.permute.xlu0 %4045
    %v4047 = vperm.slane %v3919, 3
    %v4048 = vlaneseq
    %v4049 = vshrl.u32 %v4048, 7
    %4051 = vset.pattern.permute.xlu0 %v4049
    %4052 = vperm.xlu0 %4051, %v4047
    %v4053 = vpop.permute.xlu0 %4052
    %v4054 = vperm.slane %v3919, 4
    %v4055 = vlaneseq
    %v4056 = vshrl.u32 %v4055, 7
    %4058 = vset.pattern.permute.xlu0 %v4056
    %4059 = vperm.xlu0 %4058, %v4054
    %v4060 = vpop.permute.xlu0 %4059
    %v4061 = vperm.slane %v3919, 5
    %v4062 = vlaneseq
    %v4063 = vshrl.u32 %v4062, 7
    %4065 = vset.pattern.permute.xlu0 %v4063
    %4066 = vperm.xlu0 %4065, %v4061
    %v4067 = vpop.permute.xlu0 %4066
    %v4068 = vperm.slane %v3919, 6
    %v4069 = vlaneseq
    %v4070 = vshrl.u32 %v4069, 7
    %4072 = vset.pattern.permute.xlu0 %v4070
    %4073 = vperm.xlu0 %4072, %v4068
    %v4074 = vpop.permute.xlu0 %4073
    %v4075 = vperm.slane %v3919, 7
    %v4076 = vlaneseq
    %v4077 = vshrl.u32 %v4076, 7
    %4079 = vset.pattern.permute.xlu0 %v4077
    %4080 = vperm.xlu0 %4079, %v4075
    %v4081 = vpop.permute.xlu0 %4080
    %v4082 = vmul.f32 %v4032, %v545
    %v4083 = vmul.f32 %v4039, %v545
    %v4084 = vmul.f32 %v4046, %v545
    %v4085 = vmul.f32 %v4053, %v545
    %v4086 = vmul.f32 %v4060, %v545
    %v4087 = vmul.f32 %v4067, %v545
    %v4088 = vmul.f32 %v4074, %v545
    %v4089 = vmul.f32 %v4081, %v545
    %v4090 = vadd.f32 %v4018, %v4082
    %v4091 = vadd.f32 %v4019, %v4083
    %v4092 = vadd.f32 %v4020, %v4084
    %v4093 = vadd.f32 %v4021, %v4085
    %v4094 = vadd.f32 %v4022, %v4086
    %v4095 = vadd.f32 %v4023, %v4087
    %v4096 = vadd.f32 %v4024, %v4088
    %v4097 = vadd.f32 %v4025, %v4089
    %v4098 = vlaneseq
    %v4099 = vshrl.u32 %v4098, 7
    %v4100 = vadd.s32 %v4099, 8
    %4101 = vset.pattern.permute.xlu0 %v4100
    %4102 = vperm.xlu0 %4101, %v3954
    %v4103 = vpop.permute.xlu0 %4102
    %v4104 = vlaneseq
    %v4105 = vshrl.u32 %v4104, 7
    %v4106 = vadd.s32 %v4105, 8
    %4107 = vset.pattern.permute.xlu0 %v4106
    %4108 = vperm.xlu0 %4107, %v3961
    %v4109 = vpop.permute.xlu0 %4108
    %v4110 = vlaneseq
    %v4111 = vshrl.u32 %v4110, 7
    %v4112 = vadd.s32 %v4111, 8
    %4113 = vset.pattern.permute.xlu0 %v4112
    %4114 = vperm.xlu0 %4113, %v3968
    %v4115 = vpop.permute.xlu0 %4114
    %v4116 = vlaneseq
    %v4117 = vshrl.u32 %v4116, 7
    %v4118 = vadd.s32 %v4117, 8
    %4119 = vset.pattern.permute.xlu0 %v4118
    %4120 = vperm.xlu0 %4119, %v3975
    %v4121 = vpop.permute.xlu0 %4120
    %v4122 = vlaneseq
    %v4123 = vshrl.u32 %v4122, 7
    %v4124 = vadd.s32 %v4123, 8
    %4125 = vset.pattern.permute.xlu0 %v4124
    %4126 = vperm.xlu0 %4125, %v3982
    %v4127 = vpop.permute.xlu0 %4126
    %v4128 = vlaneseq
    %v4129 = vshrl.u32 %v4128, 7
    %v4130 = vadd.s32 %v4129, 8
    %4131 = vset.pattern.permute.xlu0 %v4130
    %4132 = vperm.xlu0 %4131, %v3989
    %v4133 = vpop.permute.xlu0 %4132
    %v4134 = vlaneseq
    %v4135 = vshrl.u32 %v4134, 7
    %v4136 = vadd.s32 %v4135, 8
    %4137 = vset.pattern.permute.xlu0 %v4136
    %4138 = vperm.xlu0 %4137, %v3996
    %v4139 = vpop.permute.xlu0 %4138
    %v4140 = vlaneseq
    %v4141 = vshrl.u32 %v4140, 7
    %v4142 = vadd.s32 %v4141, 8
    %4143 = vset.pattern.permute.xlu0 %v4142
    %4144 = vperm.xlu0 %4143, %v4003
    %v4145 = vpop.permute.xlu0 %4144
    %v4146 = vmul.f32 %v4103, %v612
    %v4147 = vmul.f32 %v4109, %v612
    %v4148 = vmul.f32 %v4115, %v612
    %v4149 = vmul.f32 %v4121, %v612
    %v4150 = vmul.f32 %v4127, %v612
    %v4151 = vmul.f32 %v4133, %v612
    %v4152 = vmul.f32 %v4139, %v612
    %v4153 = vmul.f32 %v4145, %v612
    %v4154 = vadd.f32 %v4090, %v4146
    %v4155 = vadd.f32 %v4091, %v4147
    %v4156 = vadd.f32 %v4092, %v4148
    %v4157 = vadd.f32 %v4093, %v4149
    %v4158 = vadd.f32 %v4094, %v4150
    %v4159 = vadd.f32 %v4095, %v4151
    %v4160 = vadd.f32 %v4096, %v4152
    %v4161 = vadd.f32 %v4097, %v4153
    %v4162 = vlaneseq
    %v4163 = vshrl.u32 %v4162, 7
    %v4164 = vadd.s32 %v4163, 8
    %4165 = vset.pattern.permute.xlu0 %v4164
    %4166 = vperm.xlu0 %4165, %v4026
    %v4167 = vpop.permute.xlu0 %4166
    %v4168 = vlaneseq
    %v4169 = vshrl.u32 %v4168, 7
    %v4170 = vadd.s32 %v4169, 8
    %4171 = vset.pattern.permute.xlu0 %v4170
    %4172 = vperm.xlu0 %4171, %v4033
    %v4173 = vpop.permute.xlu0 %4172
    %v4174 = vlaneseq
    %v4175 = vshrl.u32 %v4174, 7
    %v4176 = vadd.s32 %v4175, 8
    %4177 = vset.pattern.permute.xlu0 %v4176
    %4178 = vperm.xlu0 %4177, %v4040
    %v4179 = vpop.permute.xlu0 %4178
    %v4180 = vlaneseq
    %v4181 = vshrl.u32 %v4180, 7
    %v4182 = vadd.s32 %v4181, 8
    %4183 = vset.pattern.permute.xlu0 %v4182
    %4184 = vperm.xlu0 %4183, %v4047
    %v4185 = vpop.permute.xlu0 %4184
    %v4186 = vlaneseq
    %v4187 = vshrl.u32 %v4186, 7
    %v4188 = vadd.s32 %v4187, 8
    %4189 = vset.pattern.permute.xlu0 %v4188
    %4190 = vperm.xlu0 %4189, %v4054
    %v4191 = vpop.permute.xlu0 %4190
    %v4192 = vlaneseq
    %v4193 = vshrl.u32 %v4192, 7
    %v4194 = vadd.s32 %v4193, 8
    %4195 = vset.pattern.permute.xlu0 %v4194
    %4196 = vperm.xlu0 %4195, %v4061
    %v4197 = vpop.permute.xlu0 %4196
    %v4198 = vlaneseq
    %v4199 = vshrl.u32 %v4198, 7
    %v4200 = vadd.s32 %v4199, 8
    %4201 = vset.pattern.permute.xlu0 %v4200
    %4202 = vperm.xlu0 %4201, %v4068
    %v4203 = vpop.permute.xlu0 %4202
    %v4204 = vlaneseq
    %v4205 = vshrl.u32 %v4204, 7
    %v4206 = vadd.s32 %v4205, 8
    %4207 = vset.pattern.permute.xlu0 %v4206
    %4208 = vperm.xlu0 %4207, %v4075
    %v4209 = vpop.permute.xlu0 %4208
    %v4210 = vmul.f32 %v4167, %v631
    %v4211 = vmul.f32 %v4173, %v631
    %v4212 = vmul.f32 %v4179, %v631
    %v4213 = vmul.f32 %v4185, %v631
    %v4214 = vmul.f32 %v4191, %v631
    %v4215 = vmul.f32 %v4197, %v631
    %v4216 = vmul.f32 %v4203, %v631
    %v4217 = vmul.f32 %v4209, %v631
    %v4218 = vadd.f32 %v4154, %v4210
    %v4219 = vadd.f32 %v4155, %v4211
    %v4220 = vadd.f32 %v4156, %v4212
    %v4221 = vadd.f32 %v4157, %v4213
    %v4222 = vadd.f32 %v4158, %v4214
    %v4223 = vadd.f32 %v4159, %v4215
    %v4224 = vadd.f32 %v4160, %v4216
    %v4225 = vadd.f32 %v4161, %v4217
    %v4226 = vlaneseq
    %v4227 = vshrl.u32 %v4226, 7
    %v4228 = vadd.s32 %v4227, 16
    %4229 = vset.pattern.permute.xlu0 %v4228
    %4230 = vperm.xlu0 %4229, %v3954
    %v4231 = vpop.permute.xlu0 %4230
    %v4232 = vlaneseq
    %v4233 = vshrl.u32 %v4232, 7
    %v4234 = vadd.s32 %v4233, 16
    %4235 = vset.pattern.permute.xlu0 %v4234
    %4236 = vperm.xlu0 %4235, %v3961
    %v4237 = vpop.permute.xlu0 %4236
    %v4238 = vlaneseq
    %v4239 = vshrl.u32 %v4238, 7
    %v4240 = vadd.s32 %v4239, 16
    %4241 = vset.pattern.permute.xlu0 %v4240
    %4242 = vperm.xlu0 %4241, %v3968
    %v4243 = vpop.permute.xlu0 %4242
    %v4244 = vlaneseq
    %v4245 = vshrl.u32 %v4244, 7
    %v4246 = vadd.s32 %v4245, 16
    %4247 = vset.pattern.permute.xlu0 %v4246
    %4248 = vperm.xlu0 %4247, %v3975
    %v4249 = vpop.permute.xlu0 %4248
    %v4250 = vlaneseq
    %v4251 = vshrl.u32 %v4250, 7
    %v4252 = vadd.s32 %v4251, 16
    %4253 = vset.pattern.permute.xlu0 %v4252
    %4254 = vperm.xlu0 %4253, %v3982
    %v4255 = vpop.permute.xlu0 %4254
    %v4256 = vlaneseq
    %v4257 = vshrl.u32 %v4256, 7
    %v4258 = vadd.s32 %v4257, 16
    %4259 = vset.pattern.permute.xlu0 %v4258
    %4260 = vperm.xlu0 %4259, %v3989
    %v4261 = vpop.permute.xlu0 %4260
    %v4262 = vlaneseq
    %v4263 = vshrl.u32 %v4262, 7
    %v4264 = vadd.s32 %v4263, 16
    %4265 = vset.pattern.permute.xlu0 %v4264
    %4266 = vperm.xlu0 %4265, %v3996
    %v4267 = vpop.permute.xlu0 %4266
    %v4268 = vlaneseq
    %v4269 = vshrl.u32 %v4268, 7
    %v4270 = vadd.s32 %v4269, 16
    %4271 = vset.pattern.permute.xlu0 %v4270
    %4272 = vperm.xlu0 %4271, %v4003
    %v4273 = vpop.permute.xlu0 %4272
    %v4274 = vmul.f32 %v4231, %v698
    %v4275 = vmul.f32 %v4237, %v698
    %v4276 = vmul.f32 %v4243, %v698
    %v4277 = vmul.f32 %v4249, %v698
    %v4278 = vmul.f32 %v4255, %v698
    %v4279 = vmul.f32 %v4261, %v698
    %v4280 = vmul.f32 %v4267, %v698
    %v4281 = vmul.f32 %v4273, %v698
    %v4282 = vadd.f32 %v4218, %v4274
    %v4283 = vadd.f32 %v4219, %v4275
    %v4284 = vadd.f32 %v4220, %v4276
    %v4285 = vadd.f32 %v4221, %v4277
    %v4286 = vadd.f32 %v4222, %v4278
    %v4287 = vadd.f32 %v4223, %v4279
    %v4288 = vadd.f32 %v4224, %v4280
    %v4289 = vadd.f32 %v4225, %v4281
    %v4290 = vlaneseq
    %v4291 = vshrl.u32 %v4290, 7
    %v4292 = vadd.s32 %v4291, 16
    %4293 = vset.pattern.permute.xlu0 %v4292
    %4294 = vperm.xlu0 %4293, %v4026
    %v4295 = vpop.permute.xlu0 %4294
    %v4296 = vlaneseq
    %v4297 = vshrl.u32 %v4296, 7
    %v4298 = vadd.s32 %v4297, 16
    %4299 = vset.pattern.permute.xlu0 %v4298
    %4300 = vperm.xlu0 %4299, %v4033
    %v4301 = vpop.permute.xlu0 %4300
    %v4302 = vlaneseq
    %v4303 = vshrl.u32 %v4302, 7
    %v4304 = vadd.s32 %v4303, 16
    %4305 = vset.pattern.permute.xlu0 %v4304
    %4306 = vperm.xlu0 %4305, %v4040
    %v4307 = vpop.permute.xlu0 %4306
    %v4308 = vlaneseq
    %v4309 = vshrl.u32 %v4308, 7
    %v4310 = vadd.s32 %v4309, 16
    %4311 = vset.pattern.permute.xlu0 %v4310
    %4312 = vperm.xlu0 %4311, %v4047
    %v4313 = vpop.permute.xlu0 %4312
    %v4314 = vlaneseq
    %v4315 = vshrl.u32 %v4314, 7
    %v4316 = vadd.s32 %v4315, 16
    %4317 = vset.pattern.permute.xlu0 %v4316
    %4318 = vperm.xlu0 %4317, %v4054
    %v4319 = vpop.permute.xlu0 %4318
    %v4320 = vlaneseq
    %v4321 = vshrl.u32 %v4320, 7
    %v4322 = vadd.s32 %v4321, 16
    %4323 = vset.pattern.permute.xlu0 %v4322
    %4324 = vperm.xlu0 %4323, %v4061
    %v4325 = vpop.permute.xlu0 %4324
    %v4326 = vlaneseq
    %v4327 = vshrl.u32 %v4326, 7
    %v4328 = vadd.s32 %v4327, 16
    %4329 = vset.pattern.permute.xlu0 %v4328
    %4330 = vperm.xlu0 %4329, %v4068
    %v4331 = vpop.permute.xlu0 %4330
    %v4332 = vlaneseq
    %v4333 = vshrl.u32 %v4332, 7
    %v4334 = vadd.s32 %v4333, 16
    %4335 = vset.pattern.permute.xlu0 %v4334
    %4336 = vperm.xlu0 %4335, %v4075
    %v4337 = vpop.permute.xlu0 %4336
    %v4338 = vmul.f32 %v4295, %v717
    %v4339 = vmul.f32 %v4301, %v717
    %v4340 = vmul.f32 %v4307, %v717
    %v4341 = vmul.f32 %v4313, %v717
    %v4342 = vmul.f32 %v4319, %v717
    %v4343 = vmul.f32 %v4325, %v717
    %v4344 = vmul.f32 %v4331, %v717
    %v4345 = vmul.f32 %v4337, %v717
    %v4346 = vadd.f32 %v4282, %v4338
    %v4347 = vadd.f32 %v4283, %v4339
    %v4348 = vadd.f32 %v4284, %v4340
    %v4349 = vadd.f32 %v4285, %v4341
    %v4350 = vadd.f32 %v4286, %v4342
    %v4351 = vadd.f32 %v4287, %v4343
    %v4352 = vadd.f32 %v4288, %v4344
    %v4353 = vadd.f32 %v4289, %v4345
    %v4354 = vtanh.pop %v4346
    %v4355 = vtanh.pop %v4347
    %v4356 = vtanh.pop %v4348
    %v4357 = vtanh.pop %v4349
    %v4358 = vtanh.pop %v4350
    %v4359 = vtanh.pop %v4351
    %v4360 = vtanh.pop %v4352
    %v4361 = vtanh.pop %v4353
    %v4362 = vmul.f32 %v4354, %v744
    %v4363 = vmul.f32 %v4355, %v744
    %v4364 = vmul.f32 %v4356, %v744
    %v4365 = vmul.f32 %v4357, %v744
    %v4366 = vmul.f32 %v4358, %v744
    %v4367 = vmul.f32 %v4359, %v744
    %v4368 = vmul.f32 %v4360, %v744
    %v4369 = vmul.f32 %v4361, %v744
    %v4370 = vsel %vm754, %v4362, 0.0
    %4371 = vadd.xlane.f32.xlu0 %v4370
    %v4372 = vpop.xlane.xlu0 %4371
    %v4373 = vsel %vm754, %v4363, 0.0
    %4374 = vadd.xlane.f32.xlu0 %v4373
    %v4375 = vpop.xlane.xlu0 %4374
    %v4376 = vsel %vm754, %v4364, 0.0
    %4377 = vadd.xlane.f32.xlu0 %v4376
    %v4378 = vpop.xlane.xlu0 %4377
    %v4379 = vsel %vm754, %v4365, 0.0
    %4380 = vadd.xlane.f32.xlu0 %v4379
    %v4381 = vpop.xlane.xlu0 %4380
    %v4382 = vsel %vm754, %v4366, 0.0
    %4383 = vadd.xlane.f32.xlu0 %v4382
    %v4384 = vpop.xlane.xlu0 %4383
    %v4385 = vsel %vm754, %v4367, 0.0
    %4386 = vadd.xlane.f32.xlu0 %v4385
    %v4387 = vpop.xlane.xlu0 %4386
    %v4388 = vsel %vm754, %v4368, 0.0
    %4389 = vadd.xlane.f32.xlu0 %v4388
    %v4390 = vpop.xlane.xlu0 %4389
    %v4391 = vsel %vm754, %v4369, 0.0
    %4392 = vadd.xlane.f32.xlu0 %v4391
    %v4393 = vpop.xlane.xlu0 %4392
    %v4402 = vperm.slane %v4372, %v788
    %v4403 = vperm.slane %v4375, %v788
    %v4404 = vperm.slane %v4378, %v788
    %v4405 = vperm.slane %v4381, %v788
    %v4406 = vperm.slane %v4384, %v788
    %v4407 = vperm.slane %v4387, %v788
    %v4408 = vperm.slane %v4390, %v788
    %v4409 = vperm.slane %v4393, %v788
    %v4410 = vsel %vm797, %v4403, %v4402
    %v4411 = vsel %vm799, %v4404, %v4410
    %v4412 = vsel %vm801, %v4405, %v4411
    %v4413 = vsel %vm803, %v4406, %v4412
    %v4414 = vsel %vm805, %v4407, %v4413
    %v4415 = vsel %vm807, %v4408, %v4414
    %v4416 = vsel %vm809, %v4409, %v4415
    %v4418 = vsel %vm327, %v4416, -inf
    %4419 = vmax.xlane.f32.xlu0 %v4418
    %v4420 = vpop.xlane.xlu0 %4419
    %v4422 = vperm.slane %v4420, 0
    %v4423 = vperm.slane %v4420, 1
    %v4424 = vperm.slane %v4420, 2
    %v4425 = vperm.slane %v4420, 3
    %v4426 = vperm.slane %v4420, 4
    %v4427 = vperm.slane %v4420, 5
    %v4428 = vperm.slane %v4420, 6
    %v4429 = vperm.slane %v4420, 7
    %v4438 = vsub.f32 %v4372, %v4422
    %v4439 = vsub.f32 %v4375, %v4423
    %v4440 = vsub.f32 %v4378, %v4424
    %v4441 = vsub.f32 %v4381, %v4425
    %v4442 = vsub.f32 %v4384, %v4426
    %v4443 = vsub.f32 %v4387, %v4427
    %v4444 = vsub.f32 %v4390, %v4428
    %v4445 = vsub.f32 %v4393, %v4429
    %v4446 = vmul.f32 %v4438, 1.442695
    %v4447 = vpow.pop %v4446
    %v4448 = vmul.f32 %v4439, 1.442695
    %v4449 = vpow.pop %v4448
    %v4450 = vmul.f32 %v4440, 1.442695
    %v4451 = vpow.pop %v4450
    %v4452 = vmul.f32 %v4441, 1.442695
    %v4453 = vpow.pop %v4452
    %v4454 = vmul.f32 %v4442, 1.442695
    %v4455 = vpow.pop %v4454
    %v4456 = vmul.f32 %v4443, 1.442695
    %v4457 = vpow.pop %v4456
    %v4458 = vmul.f32 %v4444, 1.442695
    %v4459 = vpow.pop %v4458
    %v4460 = vmul.f32 %v4445, 1.442695
    %v4461 = vpow.pop %v4460
    %4470 = vset.pattern.permute.xlu0 0
    %4471 = vperm.xlu0 %4470, %v4447
    %v4472 = vpop.permute.xlu0 %4471
    %4473 = vset.pattern.permute.xlu0 0
    %4474 = vperm.xlu0 %4473, %v4449
    %v4475 = vpop.permute.xlu0 %4474
    %4476 = vset.pattern.permute.xlu0 0
    %4477 = vperm.xlu0 %4476, %v4451
    %v4478 = vpop.permute.xlu0 %4477
    %4479 = vset.pattern.permute.xlu0 0
    %4480 = vperm.xlu0 %4479, %v4453
    %v4481 = vpop.permute.xlu0 %4480
    %4482 = vset.pattern.permute.xlu0 0
    %4483 = vperm.xlu0 %4482, %v4455
    %v4484 = vpop.permute.xlu0 %4483
    %4485 = vset.pattern.permute.xlu0 0
    %4486 = vperm.xlu0 %4485, %v4457
    %v4487 = vpop.permute.xlu0 %4486
    %4488 = vset.pattern.permute.xlu0 0
    %4489 = vperm.xlu0 %4488, %v4459
    %v4490 = vpop.permute.xlu0 %4489
    %4491 = vset.pattern.permute.xlu0 0
    %4492 = vperm.xlu0 %4491, %v4461
    %v4493 = vpop.permute.xlu0 %4492
    %v4494 = vperm.slane %v4472, %v788
    %v4495 = vperm.slane %v4475, %v788
    %v4496 = vperm.slane %v4478, %v788
    %v4497 = vperm.slane %v4481, %v788
    %v4498 = vperm.slane %v4484, %v788
    %v4499 = vperm.slane %v4487, %v788
    %v4500 = vperm.slane %v4490, %v788
    %v4501 = vperm.slane %v4493, %v788
    %v4502 = vsel %vm797, %v4495, %v4494
    %v4503 = vsel %vm799, %v4496, %v4502
    %v4504 = vsel %vm801, %v4497, %v4503
    %v4505 = vsel %vm803, %v4498, %v4504
    %v4506 = vsel %vm805, %v4499, %v4505
    %v4507 = vsel %vm807, %v4500, %v4506
    %v4508 = vsel %vm809, %v4501, %v4507
    %v4510 = vsel %vm327, %v4508, 0.0
    %4511 = vadd.xlane.f32.xlu0 %v4510
    %v4512 = vpop.xlane.xlu0 %4511
    %v4513 = vrcp.pop %v4512
    %v4515 = vperm.slane %v4513, 0
    %v4516 = vperm.slane %v4513, 1
    %v4517 = vperm.slane %v4513, 2
    %v4518 = vperm.slane %v4513, 3
    %v4519 = vperm.slane %v4513, 4
    %v4520 = vperm.slane %v4513, 5
    %v4521 = vperm.slane %v4513, 6
    %v4522 = vperm.slane %v4513, 7
    %v4531 = vmul.f32 %v4447, %v4515
    %v4532 = vmul.f32 %v4449, %v4516
    %v4533 = vmul.f32 %v4451, %v4517
    %v4534 = vmul.f32 %v4453, %v4518
    %v4535 = vmul.f32 %v4455, %v4519
    %v4536 = vmul.f32 %v4457, %v4520
    %v4537 = vmul.f32 %v4459, %v4521
    %v4538 = vmul.f32 %v4461, %v4522
    %v4539 = vpack.c.bf16 %v4531, %v4531
    %v4540 = vpack.c.bf16 %v4532, %v4532
    %v4541 = vpack.c.bf16 %v4533, %v4533
    %v4542 = vpack.c.bf16 %v4534, %v4534
    %v4543 = vpack.c.bf16 %v4535, %v4535
    %v4544 = vpack.c.bf16 %v4536, %v4536
    %v4545 = vpack.c.bf16 %v4537, %v4537
    %v4546 = vpack.c.bf16 %v4538, %v4538
    %v4548 = vunpack.c.l.b16 %v4539
    %v4549 = vpack.c.b16 %v4548, %v4548
    %v4550 = vunpack.c.l.b16 %v4549
    %4551 = vset.pattern.permute.xlu0 0
    %4552 = vperm.xlu0 %4551, %v4550
    %v4553 = vpop.permute.xlu0 %4552
    %v4554 = vperm.slane %v4553, %v788
    %v4555 = vpack.c.b16 %v4554, %v4554
    %v4557 = vsel %vm327, %v4555, 0
    %4559 = vmatpush.bf16.msra.mxu0 0
    %4560 = vmatpush.bf16.msra.mxu0 0
    %4561 = vmatpush.bf16.msra.mxu0 0
    %4562 = vmatpush.bf16.msra.mxu0 0
    %4563 = vmatpush.bf16.msra.mxu0 0
    %4564 = vmatpush.bf16.msra.mxu0 0
    %4565 = vmatpush.bf16.msra.mxu0 0
    %4566 = vmatpush.bf16.msra.mxu0 %v954
    %4567 = vmatmul.bf16.gmra.mxu0 %v4557
    %v4568 = vpop.f32.mrf.mxu0
    %v4569 = vadd.f32 0.0, %v4568
    %v4570 = vpop.f32.mrf.mxu0
    %4571 = vdwg.mxu0
    %v4573 = vunpack.c.l.b16 %v4540
    %v4574 = vpack.c.b16 %v4573, %v4573
    %v4575 = vunpack.c.l.b16 %v4574
    %4576 = vset.pattern.permute.xlu0 0
    %4577 = vperm.xlu0 %4576, %v4575
    %v4578 = vpop.permute.xlu0 %4577
    %v4579 = vperm.slane %v4578, %v788
    %v4580 = vpack.c.b16 %v4579, %v4579
    %v4582 = vsel %vm327, %v4580, 0
    %4584 = vmatpush.bf16.msra.mxu0 0
    %4585 = vmatpush.bf16.msra.mxu0 0
    %4586 = vmatpush.bf16.msra.mxu0 0
    %4587 = vmatpush.bf16.msra.mxu0 0
    %4588 = vmatpush.bf16.msra.mxu0 0
    %4589 = vmatpush.bf16.msra.mxu0 0
    %4590 = vmatpush.bf16.msra.mxu0 0
    %4591 = vmatpush.bf16.msra.mxu0 %v982
    %4592 = vmatmul.bf16.gmra.mxu0 %v4582
    %v4593 = vpop.f32.mrf.mxu0
    %v4594 = vadd.f32 0.0, %v4593
    %v4595 = vpop.f32.mrf.mxu0
    %4596 = vdwg.mxu0
    %v4598 = vunpack.c.l.b16 %v4541
    %v4599 = vpack.c.b16 %v4598, %v4598
    %v4600 = vunpack.c.l.b16 %v4599
    %4601 = vset.pattern.permute.xlu0 0
    %4602 = vperm.xlu0 %4601, %v4600
    %v4603 = vpop.permute.xlu0 %4602
    %v4604 = vperm.slane %v4603, %v788
    %v4605 = vpack.c.b16 %v4604, %v4604
    %v4607 = vsel %vm327, %v4605, 0
    %4609 = vmatpush.bf16.msra.mxu0 0
    %4610 = vmatpush.bf16.msra.mxu0 0
    %4611 = vmatpush.bf16.msra.mxu0 0
    %4612 = vmatpush.bf16.msra.mxu0 0
    %4613 = vmatpush.bf16.msra.mxu0 0
    %4614 = vmatpush.bf16.msra.mxu0 0
    %4615 = vmatpush.bf16.msra.mxu0 0
    %4616 = vmatpush.bf16.msra.mxu0 %v1010
    %4617 = vmatmul.bf16.gmra.mxu0 %v4607
    %v4618 = vpop.f32.mrf.mxu0
    %v4619 = vadd.f32 0.0, %v4618
    %v4620 = vpop.f32.mrf.mxu0
    %4621 = vdwg.mxu0
    %v4623 = vunpack.c.l.b16 %v4542
    %v4624 = vpack.c.b16 %v4623, %v4623
    %v4625 = vunpack.c.l.b16 %v4624
    %4626 = vset.pattern.permute.xlu0 0
    %4627 = vperm.xlu0 %4626, %v4625
    %v4628 = vpop.permute.xlu0 %4627
    %v4629 = vperm.slane %v4628, %v788
    %v4630 = vpack.c.b16 %v4629, %v4629
    %v4632 = vsel %vm327, %v4630, 0
    %4634 = vmatpush.bf16.msra.mxu0 0
    %4635 = vmatpush.bf16.msra.mxu0 0
    %4636 = vmatpush.bf16.msra.mxu0 0
    %4637 = vmatpush.bf16.msra.mxu0 0
    %4638 = vmatpush.bf16.msra.mxu0 0
    %4639 = vmatpush.bf16.msra.mxu0 0
    %4640 = vmatpush.bf16.msra.mxu0 0
    %4641 = vmatpush.bf16.msra.mxu0 %v1038
    %4642 = vmatmul.bf16.gmra.mxu0 %v4632
    %v4643 = vpop.f32.mrf.mxu0
    %v4644 = vadd.f32 0.0, %v4643
    %v4645 = vpop.f32.mrf.mxu0
    %4646 = vdwg.mxu0
    %v4648 = vunpack.c.l.b16 %v4543
    %v4649 = vpack.c.b16 %v4648, %v4648
    %v4650 = vunpack.c.l.b16 %v4649
    %4651 = vset.pattern.permute.xlu0 0
    %4652 = vperm.xlu0 %4651, %v4650
    %v4653 = vpop.permute.xlu0 %4652
    %v4654 = vperm.slane %v4653, %v788
    %v4655 = vpack.c.b16 %v4654, %v4654
    %v4657 = vsel %vm327, %v4655, 0
    %4659 = vmatpush.bf16.msra.mxu0 0
    %4660 = vmatpush.bf16.msra.mxu0 0
    %4661 = vmatpush.bf16.msra.mxu0 0
    %4662 = vmatpush.bf16.msra.mxu0 0
    %4663 = vmatpush.bf16.msra.mxu0 0
    %4664 = vmatpush.bf16.msra.mxu0 0
    %4665 = vmatpush.bf16.msra.mxu0 0
    %4666 = vmatpush.bf16.msra.mxu0 %v1066
    %4667 = vmatmul.bf16.gmra.mxu0 %v4657
    %v4668 = vpop.f32.mrf.mxu0
    %v4669 = vadd.f32 0.0, %v4668
    %v4670 = vpop.f32.mrf.mxu0
    %4671 = vdwg.mxu0
    %v4673 = vunpack.c.l.b16 %v4544
    %v4674 = vpack.c.b16 %v4673, %v4673
    %v4675 = vunpack.c.l.b16 %v4674
    %4676 = vset.pattern.permute.xlu0 0
    %4677 = vperm.xlu0 %4676, %v4675
    %v4678 = vpop.permute.xlu0 %4677
    %v4679 = vperm.slane %v4678, %v788
    %v4680 = vpack.c.b16 %v4679, %v4679
    %v4682 = vsel %vm327, %v4680, 0
    %4684 = vmatpush.bf16.msra.mxu0 0
    %4685 = vmatpush.bf16.msra.mxu0 0
    %4686 = vmatpush.bf16.msra.mxu0 0
    %4687 = vmatpush.bf16.msra.mxu0 0
    %4688 = vmatpush.bf16.msra.mxu0 0
    %4689 = vmatpush.bf16.msra.mxu0 0
    %4690 = vmatpush.bf16.msra.mxu0 0
    %4691 = vmatpush.bf16.msra.mxu0 %v1094
    %4692 = vmatmul.bf16.gmra.mxu0 %v4682
    %v4693 = vpop.f32.mrf.mxu0
    %v4694 = vadd.f32 0.0, %v4693
    %v4695 = vpop.f32.mrf.mxu0
    %4696 = vdwg.mxu0
    %v4698 = vunpack.c.l.b16 %v4545
    %v4699 = vpack.c.b16 %v4698, %v4698
    %v4700 = vunpack.c.l.b16 %v4699
    %4701 = vset.pattern.permute.xlu0 0
    %4702 = vperm.xlu0 %4701, %v4700
    %v4703 = vpop.permute.xlu0 %4702
    %v4704 = vperm.slane %v4703, %v788
    %v4705 = vpack.c.b16 %v4704, %v4704
    %v4707 = vsel %vm327, %v4705, 0
    %4709 = vmatpush.bf16.msra.mxu0 0
    %4710 = vmatpush.bf16.msra.mxu0 0
    %4711 = vmatpush.bf16.msra.mxu0 0
    %4712 = vmatpush.bf16.msra.mxu0 0
    %4713 = vmatpush.bf16.msra.mxu0 0
    %4714 = vmatpush.bf16.msra.mxu0 0
    %4715 = vmatpush.bf16.msra.mxu0 0
    %4716 = vmatpush.bf16.msra.mxu0 %v1122
    %4717 = vmatmul.bf16.gmra.mxu0 %v4707
    %v4718 = vpop.f32.mrf.mxu0
    %v4719 = vadd.f32 0.0, %v4718
    %v4720 = vpop.f32.mrf.mxu0
    %4721 = vdwg.mxu0
    %v4723 = vunpack.c.l.b16 %v4546
    %v4724 = vpack.c.b16 %v4723, %v4723
    %v4725 = vunpack.c.l.b16 %v4724
    %4726 = vset.pattern.permute.xlu0 0
    %4727 = vperm.xlu0 %4726, %v4725
    %v4728 = vpop.permute.xlu0 %4727
    %v4729 = vperm.slane %v4728, %v788
    %v4730 = vpack.c.b16 %v4729, %v4729
    %v4732 = vsel %vm327, %v4730, 0
    %4734 = vmatpush.bf16.msra.mxu0 0
    %4735 = vmatpush.bf16.msra.mxu0 0
    %4736 = vmatpush.bf16.msra.mxu0 0
    %4737 = vmatpush.bf16.msra.mxu0 0
    %4738 = vmatpush.bf16.msra.mxu0 0
    %4739 = vmatpush.bf16.msra.mxu0 0
    %4740 = vmatpush.bf16.msra.mxu0 0
    %4741 = vmatpush.bf16.msra.mxu0 %v1150
    %4742 = vmatmul.bf16.gmra.mxu0 %v4732
    %v4743 = vpop.f32.mrf.mxu0
    %v4744 = vadd.f32 0.0, %v4743
    %v4745 = vpop.f32.mrf.mxu0
    %4746 = vdwg.mxu0
    %v4747 = vadd.f32 %v3557, %v4531
    %v4748 = vadd.f32 %v3558, %v4532
    %v4749 = vadd.f32 %v3559, %v4533
    %v4750 = vadd.f32 %v3560, %v4534
    %v4751 = vadd.f32 %v3561, %v4535
    %v4752 = vadd.f32 %v3562, %v4536
    %v4753 = vadd.f32 %v3563, %v4537
    %v4754 = vadd.f32 %v3564, %v4538
    %v4755 = vpack.c.bf16 %v4569, %v4569
    %v4756 = vpack.c.bf16 %v4594, %v4594
    %v4757 = vpack.c.bf16 %v4619, %v4619
    %v4758 = vpack.c.bf16 %v4644, %v4644
    %v4759 = vpack.c.bf16 %v4669, %v4669
    %v4760 = vpack.c.bf16 %v4694, %v4694
    %v4761 = vpack.c.bf16 %v4719, %v4719
    %v4762 = vpack.c.bf16 %v4744, %v4744
    %v4771 = vunpack.c.l.b16 %v4755
    %v4772 = vunpack.c.l.b16 %v4756
    %v4773 = vunpack.c.l.b16 %v4757
    %v4774 = vunpack.c.l.b16 %v4758
    %v4775 = vunpack.c.l.b16 %v4759
    %v4776 = vunpack.c.l.b16 %v4760
    %v4777 = vunpack.c.l.b16 %v4761
    %v4778 = vunpack.c.l.b16 %v4762
    %v4779 = vrot.slane %v4772, 7
    %v4780 = vsel %vm797, %v4779, %v4771
    %v4781 = vrot.slane %v4773, 6
    %v4782 = vsel %vm799, %v4781, %v4780
    %v4783 = vrot.slane %v4774, 5
    %v4784 = vsel %vm801, %v4783, %v4782
    %v4785 = vrot.slane %v4775, 4
    %v4786 = vsel %vm803, %v4785, %v4784
    %v4787 = vrot.slane %v4776, 3
    %v4788 = vsel %vm805, %v4787, %v4786
    %v4789 = vrot.slane %v4777, 2
    %v4790 = vsel %vm807, %v4789, %v4788
    %v4791 = vrot.slane %v4778, 1
    %v4792 = vsel %vm809, %v4791, %v4790
    %v4793 = vpack.c.b16 %v4792, %v4792
    %v4795 = vsel %vm260, %v4793, 0
    %4797 = vmatpush.bf16.msra.mxu0 0
    %4798 = vmatpush.bf16.msra.mxu0 0
    %4799 = vmatpush.bf16.msra.mxu0 0
    %4800 = vmatpush.bf16.msra.mxu0 0
    %4801 = vmatpush.bf16.msra.mxu0 0
    %4802 = vmatpush.bf16.msra.mxu0 0
    %4803 = vmatpush.bf16.msra.mxu0 %v1221
    %4804 = vmatpush.bf16.msra.mxu0 %v1220
    %4805 = vmatmul.bf16.gmra.mxu0 %v4795
    %v4806 = vpop.f32.mrf.mxu0
    %v4807 = vadd.f32 %v3695, %v4806
    %v4808 = vpop.f32.mrf.mxu0
    %4809 = vdwg.mxu0
    %v4810 = vadd.f32 %v4807, %v225
    %v4811 = vxor.u32 %v4810, 2147483648
    %v4812 = vmul.f32 %v4811, 1.442695
    %v4813 = vpow.pop %v4812
    %v4814 = vadd.f32 %v4813, 1.0
    %v4815 = vrcp.pop %v4814
    %v4816 = vmul.f32 %v4814, %v4815
    %v4817 = vsub.f32 1.0, %v4816
    %v4818 = vmul.f32 %v4815, %v4817
    %v4819 = vadd.f32 %v4815, %v4818
    %vm4820 = vweird.f32 %v4814
    %vm4821 = vweird.f32 %v4815
    %vm4822 = vmor %vm4820, %vm4821
    %v4823 = vsel %vm4822, %v4815, %v4819
    %v4824 = vand.u32 2147483647, %v4814
    %vm4825 = vcmp.eq.f32.partialorder %v4824, 8.507059e+37
    %v4826 = vand.u32 %v4814, 2147483648
    %v4827 = vor.u32 1.1754944e-38, %v4826
    %v4828 = vsel %vm4825, %v4827, %v4823
    %v4829 = vmul.f32 1.0, %v4828
    %v4830 = vtanh.pop %v4810
    %v4831 = vmul.f32 %v4829, %v3651
    %4833 = vrot.lane.b32.xlu0 %v4830, 64
    %v4834 = vpop.permute.xlu0 %4833
    %v4836 = vmul.f32 %v4829, %v4834
    %4838 = vrot.lane.b32.xlu0 %v4836, 32
    %v4839 = vpop.permute.xlu0 %4838
    %v4841 = vadd.f32 %v4831, %v4839
    %v4842 = vtanh.pop %v4841
    %4844 = vrot.lane.b32.xlu0 %v4842, 64
    %v4845 = vpop.permute.xlu0 %4844
    %v4847 = vmul.f32 %v4829, %v4845
    %4849 = vrot.lane.b32.xlu0 %v4847, 32
    %v4850 = vpop.permute.xlu0 %4849
    %4852 = vst.msk [vmem:[#allocation2 + $0x18] sm:$0xff] %vm260, %v4850
    %s4853 = scalar_lea.vmem [#allocation3], 16
    %v4854 = vld [vmem:[%s4853] sm:$0xf]
    %4855 = vmatpush.bf16.msra.mxu0 0
    %4856 = vmatpush.bf16.msra.mxu0 0
    %4857 = vmatpush.bf16.msra.mxu0 0
    %4858 = vmatpush.bf16.msra.mxu0 0
    %4859 = vmatpush.bf16.msra.mxu0 0
    %4860 = vmatpush.bf16.msra.mxu0 0
    %4861 = vmatpush.bf16.msra.mxu0 %v257
    %4862 = vmatpush.bf16.msra.mxu0 %v256
    %4863 = vmatmul.bf16.gmra.mxu0 %v3771
    %v4864 = vpop.f32.mrf.mxu0
    %v4865 = vadd.f32 0.0, %v4864
    %v4866 = vpop.f32.mrf.mxu0
    %4867 = vdwg.mxu0
    %v4868 = vpack.c.bf16 %v4847, %v4847
    %4870 = vrot.lane.b32.xlu0 %v4868, 32
    %v4871 = vpop.permute.xlu0 %4870
    %v4873 = vsel %vm260, %v4871, 0
    %4875 = vmatpush.bf16.msra.mxu0 0
    %4876 = vmatpush.bf16.msra.mxu0 0
    %4877 = vmatpush.bf16.msra.mxu0 0
    %4878 = vmatpush.bf16.msra.mxu0 0
    %4879 = vmatpush.bf16.msra.mxu0 0
    %4880 = vmatpush.bf16.msra.mxu0 0
    %4881 = vmatpush.bf16.msra.mxu0 %v286
    %4882 = vmatpush.bf16.msra.mxu0 %v285
    %4883 = vmatmul.bf16.gmra.mxu0 %v4873
    %v4884 = vpop.f32.mrf.mxu0
    %v4885 = vadd.f32 0.0, %v4884
    %v4886 = vpop.f32.mrf.mxu0
    %4887 = vdwg.mxu0
    %4888 = vmatpush.bf16.msra.mxu0 0
    %4889 = vmatpush.bf16.msra.mxu0 0
    %4890 = vmatpush.bf16.msra.mxu0 0
    %4891 = vmatpush.bf16.msra.mxu0 0
    %4892 = vmatpush.bf16.msra.mxu0 0
    %4893 = vmatpush.bf16.msra.mxu0 0
    %4894 = vmatpush.bf16.msra.mxu0 %v311
    %4895 = vmatpush.bf16.msra.mxu0 %v310
    %4896 = vmatmul.bf16.gmra.mxu0 %v4795
    %v4897 = vpop.f32.mrf.mxu0
    %v4898 = vadd.f32 0.0, %v4897
    %v4899 = vpop.f32.mrf.mxu0
    %4900 = vdwg.mxu0
    %v4902 = vsel %vm327, %v4854, 0
    %4904 = vmatpush.bf16.msra.mxu0 0
    %4905 = vmatpush.bf16.msra.mxu0 0
    %4906 = vmatpush.bf16.msra.mxu0 0
    %4907 = vmatpush.bf16.msra.mxu0 0
    %4908 = vmatpush.bf16.msra.mxu0 0
    %4909 = vmatpush.bf16.msra.mxu0 0
    %4910 = vmatpush.bf16.msra.mxu0 0
    %4911 = vmatpush.bf16.msra.mxu0 %v333
    %4912 = vmatmul.bf16.gmra.mxu0 %v4902
    %v4913 = vpop.f32.mrf.mxu0
    %v4914 = vadd.f32 %v4898, %v4913
    %v4915 = vpop.f32.mrf.mxu0
    %4916 = vdwg.mxu0
    %v4917 = vadd.f32 %v4914, %v4865
    %v4918 = vadd.f32 %v4917, %v221
    %v4919 = vxor.u32 %v4918, 2147483648
    %v4920 = vmul.f32 %v4919, 1.442695
    %v4921 = vpow.pop %v4920
    %v4922 = vadd.f32 %v4921, 1.0
    %v4923 = vrcp.pop %v4922
    %v4924 = vmul.f32 %v4922, %v4923
    %v4925 = vsub.f32 1.0, %v4924
    %v4926 = vmul.f32 %v4923, %v4925
    %v4927 = vadd.f32 %v4923, %v4926
    %vm4928 = vweird.f32 %v4922
    %vm4929 = vweird.f32 %v4923
    %vm4930 = vmor %vm4928, %vm4929
    %v4931 = vsel %vm4930, %v4923, %v4927
    %v4932 = vand.u32 2147483647, %v4922
    %vm4933 = vcmp.eq.f32.partialorder %v4932, 8.507059e+37
    %v4934 = vand.u32 %v4922, 2147483648
    %v4935 = vor.u32 1.1754944e-38, %v4934
    %v4936 = vsel %vm4933, %v4935, %v4931
    %v4937 = vmul.f32 1.0, %v4936
    %v4938 = vtanh.pop %v4918
    %v4939 = vmul.f32 %v4937, %v3759
    %4941 = vrot.lane.b32.xlu0 %v4938, 64
    %v4942 = vpop.permute.xlu0 %4941
    %v4944 = vmul.f32 %v4937, %v4942
    %4946 = vrot.lane.b32.xlu0 %v4944, 32
    %v4947 = vpop.permute.xlu0 %4946
    %v4949 = vadd.f32 %v4939, %v4947
    %v4950 = vtanh.pop %v4949
    %4952 = vrot.lane.b32.xlu0 %v4950, 64
    %v4953 = vpop.permute.xlu0 %4952
    %v4955 = vmul.f32 %v4937, %v4953
    %v4956 = vpack.c.bf16 %v4955, %v4955
    %4958 = vrot.lane.b32.xlu0 %v4956, 32
    %v4959 = vpop.permute.xlu0 %4958
    %v4961 = vsel %vm260, %v4959, 0
    %4963 = vmatpush.bf16.msra.mxu0 0
    %4964 = vmatpush.bf16.msra.mxu0 0
    %4965 = vmatpush.bf16.msra.mxu0 0
    %4966 = vmatpush.bf16.msra.mxu0 0
    %4967 = vmatpush.bf16.msra.mxu0 0
    %4968 = vmatpush.bf16.msra.mxu0 0
    %4969 = vmatpush.bf16.msra.mxu0 %v400
    %4970 = vmatpush.bf16.msra.mxu0 %v399
    %4971 = vmatmul.bf16.gmra.mxu0 %v4961
    %v4972 = vpop.f32.mrf.mxu0
    %v4973 = vadd.f32 0.0, %v4972
    %v4974 = vpop.f32.mrf.mxu0
    %4975 = vdwg.mxu0
    %4976 = vset.pattern.permute.xlu0 0
    %4977 = vperm.xlu0 %4976, %v4548
    %v4978 = vpop.permute.xlu0 %4977
    %4979 = vset.pattern.permute.xlu0 0
    %4980 = vperm.xlu0 %4979, %v4573
    %v4981 = vpop.permute.xlu0 %4980
    %4982 = vset.pattern.permute.xlu0 0
    %4983 = vperm.xlu0 %4982, %v4598
    %v4984 = vpop.permute.xlu0 %4983
    %4985 = vset.pattern.permute.xlu0 0
    %4986 = vperm.xlu0 %4985, %v4623
    %v4987 = vpop.permute.xlu0 %4986
    %4988 = vset.pattern.permute.xlu0 0
    %4989 = vperm.xlu0 %4988, %v4648
    %v4990 = vpop.permute.xlu0 %4989
    %4991 = vset.pattern.permute.xlu0 0
    %4992 = vperm.xlu0 %4991, %v4673
    %v4993 = vpop.permute.xlu0 %4992
    %4994 = vset.pattern.permute.xlu0 0
    %4995 = vperm.xlu0 %4994, %v4698
    %v4996 = vpop.permute.xlu0 %4995
    %4997 = vset.pattern.permute.xlu0 0
    %4998 = vperm.xlu0 %4997, %v4723
    %v4999 = vpop.permute.xlu0 %4998
    %v5000 = vperm.slane %v4978, %v788
    %v5001 = vperm.slane %v4981, %v788
    %v5002 = vperm.slane %v4984, %v788
    %v5003 = vperm.slane %v4987, %v788
    %v5004 = vperm.slane %v4990, %v788
    %v5005 = vperm.slane %v4993, %v788
    %v5006 = vperm.slane %v4996, %v788
    %v5007 = vperm.slane %v4999, %v788
    %v5008 = vsel %vm797, %v5001, %v5000
    %v5009 = vsel %vm799, %v5002, %v5008
    %v5010 = vsel %vm801, %v5003, %v5009
    %v5011 = vsel %vm803, %v5004, %v5010
    %v5012 = vsel %vm805, %v5005, %v5011
    %v5013 = vsel %vm807, %v5006, %v5012
    %v5014 = vsel %vm809, %v5007, %v5013
    %v5015 = vpack.c.b16 %v5014, %v5014
    %v5017 = vsel %vm327, %v5015, 0
    %5019 = vmatpush.bf16.msra.mxu0 0
    %5020 = vmatpush.bf16.msra.mxu0 0
    %5021 = vmatpush.bf16.msra.mxu0 0
    %5022 = vmatpush.bf16.msra.mxu0 0
    %5023 = vmatpush.bf16.msra.mxu0 0
    %5024 = vmatpush.bf16.msra.mxu0 0
    %5025 = vmatpush.bf16.msra.mxu0 0
    %5026 = vmatpush.bf16.msra.mxu0 %v422
    %5027 = vmatmul.bf16.gmra.mxu0 %v5017
    %v5028 = vpop.f32.mrf.mxu0
    %v5029 = vadd.f32 0.0, %v5028
    %v5030 = vpop.f32.mrf.mxu0
    %5031 = vdwg.mxu0
    %v5032 = vpack.c.bf16 %v4747, %v4747
    %v5033 = vpack.c.bf16 %v4748, %v4748
    %v5034 = vpack.c.bf16 %v4749, %v4749
    %v5035 = vpack.c.bf16 %v4750, %v4750
    %v5036 = vpack.c.bf16 %v4751, %v4751
    %v5037 = vpack.c.bf16 %v4752, %v4752
    %v5038 = vpack.c.bf16 %v4753, %v4753
    %v5039 = vpack.c.bf16 %v4754, %v4754
    %v5048 = vunpack.c.l.b16 %v5032
    %v5049 = vunpack.c.l.b16 %v5033
    %v5050 = vunpack.c.l.b16 %v5034
    %v5051 = vunpack.c.l.b16 %v5035
    %v5052 = vunpack.c.l.b16 %v5036
    %v5053 = vunpack.c.l.b16 %v5037
    %v5054 = vunpack.c.l.b16 %v5038
    %v5055 = vunpack.c.l.b16 %v5039
    %5056 = vset.pattern.permute.xlu0 0
    %5057 = vperm.xlu0 %5056, %v5048
    %v5058 = vpop.permute.xlu0 %5057
    %5059 = vset.pattern.permute.xlu0 0
    %5060 = vperm.xlu0 %5059, %v5049
    %v5061 = vpop.permute.xlu0 %5060
    %5062 = vset.pattern.permute.xlu0 0
    %5063 = vperm.xlu0 %5062, %v5050
    %v5064 = vpop.permute.xlu0 %5063
    %5065 = vset.pattern.permute.xlu0 0
    %5066 = vperm.xlu0 %5065, %v5051
    %v5067 = vpop.permute.xlu0 %5066
    %5068 = vset.pattern.permute.xlu0 0
    %5069 = vperm.xlu0 %5068, %v5052
    %v5070 = vpop.permute.xlu0 %5069
    %5071 = vset.pattern.permute.xlu0 0
    %5072 = vperm.xlu0 %5071, %v5053
    %v5073 = vpop.permute.xlu0 %5072
    %5074 = vset.pattern.permute.xlu0 0
    %5075 = vperm.xlu0 %5074, %v5054
    %v5076 = vpop.permute.xlu0 %5075
    %5077 = vset.pattern.permute.xlu0 0
    %5078 = vperm.xlu0 %5077, %v5055
    %v5079 = vpop.permute.xlu0 %5078
    %v5080 = vperm.slane %v5058, %v788
    %v5081 = vperm.slane %v5061, %v788
    %v5082 = vperm.slane %v5064, %v788
    %v5083 = vperm.slane %v5067, %v788
    %v5084 = vperm.slane %v5070, %v788
    %v5085 = vperm.slane %v5073, %v788
    %v5086 = vperm.slane %v5076, %v788
    %v5087 = vperm.slane %v5079, %v788
    %v5088 = vsel %vm797, %v5081, %v5080
    %v5089 = vsel %vm799, %v5082, %v5088
    %v5090 = vsel %vm801, %v5083, %v5089
    %v5091 = vsel %vm803, %v5084, %v5090
    %v5092 = vsel %vm805, %v5085, %v5091
    %v5093 = vsel %vm807, %v5086, %v5092
    %v5094 = vsel %vm809, %v5087, %v5093
    %v5095 = vpack.c.b16 %v5094, %v5094
    %v5097 = vsel %vm327, %v5095, 0
    %5099 = vmatpush.bf16.msra.mxu0 0
    %5100 = vmatpush.bf16.msra.mxu0 0
    %5101 = vmatpush.bf16.msra.mxu0 0
    %5102 = vmatpush.bf16.msra.mxu0 0
    %5103 = vmatpush.bf16.msra.mxu0 0
    %5104 = vmatpush.bf16.msra.mxu0 0
    %5105 = vmatpush.bf16.msra.mxu0 0
    %5106 = vmatpush.bf16.msra.mxu0 %v422
    %5107 = vmatmul.bf16.gmra.mxu0 %v5097
    %v5108 = vpop.f32.mrf.mxu0
    %v5109 = vadd.f32 0.0, %v5108
    %v5110 = vpop.f32.mrf.mxu0
    %5111 = vdwg.mxu0
    %v5113 = vrot.slane %v4973, 1
    %v5114 = vrot.slane %v4973, 2
    %v5115 = vrot.slane %v4973, 3
    %v5116 = vrot.slane %v4973, 4
    %v5117 = vrot.slane %v4973, 5
    %v5118 = vrot.slane %v4973, 6
    %v5119 = vrot.slane %v4973, 7
    %v5120 = vperm.slane %v4973, 0
    %v5121 = vperm.slane %v5113, 0
    %v5122 = vperm.slane %v5114, 0
    %v5123 = vperm.slane %v5115, 0
    %v5124 = vperm.slane %v5116, 0
    %v5125 = vperm.slane %v5117, 0
    %v5126 = vperm.slane %v5118, 0
    %v5127 = vperm.slane %v5119, 0
    %v5136 = vadd.f32 %v198, %v5120
    %v5137 = vadd.f32 %v199, %v5121
    %v5138 = vadd.f32 %v200, %v5122
    %v5139 = vadd.f32 %v201, %v5123
    %v5140 = vadd.f32 %v202, %v5124
    %v5141 = vadd.f32 %v203, %v5125
    %v5142 = vadd.f32 %v204, %v5126
    %v5143 = vadd.f32 %v205, %v5127
    %v5144 = vperm.slane %v5029, 0
    %v5145 = vlaneseq
    %v5146 = vshrl.u32 %v5145, 7
    %5148 = vset.pattern.permute.xlu0 %v5146
    %5149 = vperm.xlu0 %5148, %v5144
    %v5150 = vpop.permute.xlu0 %5149
    %v5151 = vperm.slane %v5029, 1
    %v5152 = vlaneseq
    %v5153 = vshrl.u32 %v5152, 7
    %5155 = vset.pattern.permute.xlu0 %v5153
    %5156 = vperm.xlu0 %5155, %v5151
    %v5157 = vpop.permute.xlu0 %5156
    %v5158 = vperm.slane %v5029, 2
    %v5159 = vlaneseq
    %v5160 = vshrl.u32 %v5159, 7
    %5162 = vset.pattern.permute.xlu0 %v5160
    %5163 = vperm.xlu0 %5162, %v5158
    %v5164 = vpop.permute.xlu0 %5163
    %v5165 = vperm.slane %v5029, 3
    %v5166 = vlaneseq
    %v5167 = vshrl.u32 %v5166, 7
    %5169 = vset.pattern.permute.xlu0 %v5167
    %5170 = vperm.xlu0 %5169, %v5165
    %v5171 = vpop.permute.xlu0 %5170
    %v5172 = vperm.slane %v5029, 4
    %v5173 = vlaneseq
    %v5174 = vshrl.u32 %v5173, 7
    %5176 = vset.pattern.permute.xlu0 %v5174
    %5177 = vperm.xlu0 %5176, %v5172
    %v5178 = vpop.permute.xlu0 %5177
    %v5179 = vperm.slane %v5029, 5
    %v5180 = vlaneseq
    %v5181 = vshrl.u32 %v5180, 7
    %5183 = vset.pattern.permute.xlu0 %v5181
    %5184 = vperm.xlu0 %5183, %v5179
    %v5185 = vpop.permute.xlu0 %5184
    %v5186 = vperm.slane %v5029, 6
    %v5187 = vlaneseq
    %v5188 = vshrl.u32 %v5187, 7
    %5190 = vset.pattern.permute.xlu0 %v5188
    %5191 = vperm.xlu0 %5190, %v5186
    %v5192 = vpop.permute.xlu0 %5191
    %v5193 = vperm.slane %v5029, 7
    %v5194 = vlaneseq
    %v5195 = vshrl.u32 %v5194, 7
    %5197 = vset.pattern.permute.xlu0 %v5195
    %5198 = vperm.xlu0 %5197, %v5193
    %v5199 = vpop.permute.xlu0 %5198
    %v5200 = vmul.f32 %v5150, %v526
    %v5201 = vmul.f32 %v5157, %v526
    %v5202 = vmul.f32 %v5164, %v526
    %v5203 = vmul.f32 %v5171, %v526
    %v5204 = vmul.f32 %v5178, %v526
    %v5205 = vmul.f32 %v5185, %v526
    %v5206 = vmul.f32 %v5192, %v526
    %v5207 = vmul.f32 %v5199, %v526
    %v5208 = vadd.f32 %v5136, %v5200
    %v5209 = vadd.f32 %v5137, %v5201
    %v5210 = vadd.f32 %v5138, %v5202
    %v5211 = vadd.f32 %v5139, %v5203
    %v5212 = vadd.f32 %v5140, %v5204
    %v5213 = vadd.f32 %v5141, %v5205
    %v5214 = vadd.f32 %v5142, %v5206
    %v5215 = vadd.f32 %v5143, %v5207
    %v5216 = vperm.slane %v5109, 0
    %v5217 = vlaneseq
    %v5218 = vshrl.u32 %v5217, 7
    %5220 = vset.pattern.permute.xlu0 %v5218
    %5221 = vperm.xlu0 %5220, %v5216
    %v5222 = vpop.permute.xlu0 %5221
    %v5223 = vperm.slane %v5109, 1
    %v5224 = vlaneseq
    %v5225 = vshrl.u32 %v5224, 7
    %5227 = vset.pattern.permute.xlu0 %v5225
    %5228 = vperm.xlu0 %5227, %v5223
    %v5229 = vpop.permute.xlu0 %5228
    %v5230 = vperm.slane %v5109, 2
    %v5231 = vlaneseq
    %v5232 = vshrl.u32 %v5231, 7
    %5234 = vset.pattern.permute.xlu0 %v5232
    %5235 = vperm.xlu0 %5234, %v5230
    %v5236 = vpop.permute.xlu0 %5235
    %v5237 = vperm.slane %v5109, 3
    %v5238 = vlaneseq
    %v5239 = vshrl.u32 %v5238, 7
    %5241 = vset.pattern.permute.xlu0 %v5239
    %5242 = vperm.xlu0 %5241, %v5237
    %v5243 = vpop.permute.xlu0 %5242
    %v5244 = vperm.slane %v5109, 4
    %v5245 = vlaneseq
    %v5246 = vshrl.u32 %v5245, 7
    %5248 = vset.pattern.permute.xlu0 %v5246
    %5249 = vperm.xlu0 %5248, %v5244
    %v5250 = vpop.permute.xlu0 %5249
    %v5251 = vperm.slane %v5109, 5
    %v5252 = vlaneseq
    %v5253 = vshrl.u32 %v5252, 7
    %5255 = vset.pattern.permute.xlu0 %v5253
    %5256 = vperm.xlu0 %5255, %v5251
    %v5257 = vpop.permute.xlu0 %5256
    %v5258 = vperm.slane %v5109, 6
    %v5259 = vlaneseq
    %v5260 = vshrl.u32 %v5259, 7
    %5262 = vset.pattern.permute.xlu0 %v5260
    %5263 = vperm.xlu0 %5262, %v5258
    %v5264 = vpop.permute.xlu0 %5263
    %v5265 = vperm.slane %v5109, 7
    %v5266 = vlaneseq
    %v5267 = vshrl.u32 %v5266, 7
    %5269 = vset.pattern.permute.xlu0 %v5267
    %5270 = vperm.xlu0 %5269, %v5265
    %v5271 = vpop.permute.xlu0 %5270
    %v5272 = vmul.f32 %v5222, %v545
    %v5273 = vmul.f32 %v5229, %v545
    %v5274 = vmul.f32 %v5236, %v545
    %v5275 = vmul.f32 %v5243, %v545
    %v5276 = vmul.f32 %v5250, %v545
    %v5277 = vmul.f32 %v5257, %v545
    %v5278 = vmul.f32 %v5264, %v545
    %v5279 = vmul.f32 %v5271, %v545
    %v5280 = vadd.f32 %v5208, %v5272
    %v5281 = vadd.f32 %v5209, %v5273
    %v5282 = vadd.f32 %v5210, %v5274
    %v5283 = vadd.f32 %v5211, %v5275
    %v5284 = vadd.f32 %v5212, %v5276
    %v5285 = vadd.f32 %v5213, %v5277
    %v5286 = vadd.f32 %v5214, %v5278
    %v5287 = vadd.f32 %v5215, %v5279
    %v5288 = vlaneseq
    %v5289 = vshrl.u32 %v5288, 7
    %v5290 = vadd.s32 %v5289, 8
    %5291 = vset.pattern.permute.xlu0 %v5290
    %5292 = vperm.xlu0 %5291, %v5144
    %v5293 = vpop.permute.xlu0 %5292
    %v5294 = vlaneseq
    %v5295 = vshrl.u32 %v5294, 7
    %v5296 = vadd.s32 %v5295, 8
    %5297 = vset.pattern.permute.xlu0 %v5296
    %5298 = vperm.xlu0 %5297, %v5151
    %v5299 = vpop.permute.xlu0 %5298
    %v5300 = vlaneseq
    %v5301 = vshrl.u32 %v5300, 7
    %v5302 = vadd.s32 %v5301, 8
    %5303 = vset.pattern.permute.xlu0 %v5302
    %5304 = vperm.xlu0 %5303, %v5158
    %v5305 = vpop.permute.xlu0 %5304
    %v5306 = vlaneseq
    %v5307 = vshrl.u32 %v5306, 7
    %v5308 = vadd.s32 %v5307, 8
    %5309 = vset.pattern.permute.xlu0 %v5308
    %5310 = vperm.xlu0 %5309, %v5165
    %v5311 = vpop.permute.xlu0 %5310
    %v5312 = vlaneseq
    %v5313 = vshrl.u32 %v5312, 7
    %v5314 = vadd.s32 %v5313, 8
    %5315 = vset.pattern.permute.xlu0 %v5314
    %5316 = vperm.xlu0 %5315, %v5172
    %v5317 = vpop.permute.xlu0 %5316
    %v5318 = vlaneseq
    %v5319 = vshrl.u32 %v5318, 7
    %v5320 = vadd.s32 %v5319, 8
    %5321 = vset.pattern.permute.xlu0 %v5320
    %5322 = vperm.xlu0 %5321, %v5179
    %v5323 = vpop.permute.xlu0 %5322
    %v5324 = vlaneseq
    %v5325 = vshrl.u32 %v5324, 7
    %v5326 = vadd.s32 %v5325, 8
    %5327 = vset.pattern.permute.xlu0 %v5326
    %5328 = vperm.xlu0 %5327, %v5186
    %v5329 = vpop.permute.xlu0 %5328
    %v5330 = vlaneseq
    %v5331 = vshrl.u32 %v5330, 7
    %v5332 = vadd.s32 %v5331, 8
    %5333 = vset.pattern.permute.xlu0 %v5332
    %5334 = vperm.xlu0 %5333, %v5193
    %v5335 = vpop.permute.xlu0 %5334
    %v5336 = vmul.f32 %v5293, %v612
    %v5337 = vmul.f32 %v5299, %v612
    %v5338 = vmul.f32 %v5305, %v612
    %v5339 = vmul.f32 %v5311, %v612
    %v5340 = vmul.f32 %v5317, %v612
    %v5341 = vmul.f32 %v5323, %v612
    %v5342 = vmul.f32 %v5329, %v612
    %v5343 = vmul.f32 %v5335, %v612
    %v5344 = vadd.f32 %v5280, %v5336
    %v5345 = vadd.f32 %v5281, %v5337
    %v5346 = vadd.f32 %v5282, %v5338
    %v5347 = vadd.f32 %v5283, %v5339
    %v5348 = vadd.f32 %v5284, %v5340
    %v5349 = vadd.f32 %v5285, %v5341
    %v5350 = vadd.f32 %v5286, %v5342
    %v5351 = vadd.f32 %v5287, %v5343
    %v5352 = vlaneseq
    %v5353 = vshrl.u32 %v5352, 7
    %v5354 = vadd.s32 %v5353, 8
    %5355 = vset.pattern.permute.xlu0 %v5354
    %5356 = vperm.xlu0 %5355, %v5216
    %v5357 = vpop.permute.xlu0 %5356
    %v5358 = vlaneseq
    %v5359 = vshrl.u32 %v5358, 7
    %v5360 = vadd.s32 %v5359, 8
    %5361 = vset.pattern.permute.xlu0 %v5360
    %5362 = vperm.xlu0 %5361, %v5223
    %v5363 = vpop.permute.xlu0 %5362
    %v5364 = vlaneseq
    %v5365 = vshrl.u32 %v5364, 7
    %v5366 = vadd.s32 %v5365, 8
    %5367 = vset.pattern.permute.xlu0 %v5366
    %5368 = vperm.xlu0 %5367, %v5230
    %v5369 = vpop.permute.xlu0 %5368
    %v5370 = vlaneseq
    %v5371 = vshrl.u32 %v5370, 7
    %v5372 = vadd.s32 %v5371, 8
    %5373 = vset.pattern.permute.xlu0 %v5372
    %5374 = vperm.xlu0 %5373, %v5237
    %v5375 = vpop.permute.xlu0 %5374
    %v5376 = vlaneseq
    %v5377 = vshrl.u32 %v5376, 7
    %v5378 = vadd.s32 %v5377, 8
    %5379 = vset.pattern.permute.xlu0 %v5378
    %5380 = vperm.xlu0 %5379, %v5244
    %v5381 = vpop.permute.xlu0 %5380
    %v5382 = vlaneseq
    %v5383 = vshrl.u32 %v5382, 7
    %v5384 = vadd.s32 %v5383, 8
    %5385 = vset.pattern.permute.xlu0 %v5384
    %5386 = vperm.xlu0 %5385, %v5251
    %v5387 = vpop.permute.xlu0 %5386
    %v5388 = vlaneseq
    %v5389 = vshrl.u32 %v5388, 7
    %v5390 = vadd.s32 %v5389, 8
    %5391 = vset.pattern.permute.xlu0 %v5390
    %5392 = vperm.xlu0 %5391, %v5258
    %v5393 = vpop.permute.xlu0 %5392
    %v5394 = vlaneseq
    %v5395 = vshrl.u32 %v5394, 7
    %v5396 = vadd.s32 %v5395, 8
    %5397 = vset.pattern.permute.xlu0 %v5396
    %5398 = vperm.xlu0 %5397, %v5265
    %v5399 = vpop.permute.xlu0 %5398
    %v5400 = vmul.f32 %v5357, %v631
    %v5401 = vmul.f32 %v5363, %v631
    %v5402 = vmul.f32 %v5369, %v631
    %v5403 = vmul.f32 %v5375, %v631
    %v5404 = vmul.f32 %v5381, %v631
    %v5405 = vmul.f32 %v5387, %v631
    %v5406 = vmul.f32 %v5393, %v631
    %v5407 = vmul.f32 %v5399, %v631
    %v5408 = vadd.f32 %v5344, %v5400
    %v5409 = vadd.f32 %v5345, %v5401
    %v5410 = vadd.f32 %v5346, %v5402
    %v5411 = vadd.f32 %v5347, %v5403
    %v5412 = vadd.f32 %v5348, %v5404
    %v5413 = vadd.f32 %v5349, %v5405
    %v5414 = vadd.f32 %v5350, %v5406
    %v5415 = vadd.f32 %v5351, %v5407
    %v5416 = vlaneseq
    %v5417 = vshrl.u32 %v5416, 7
    %v5418 = vadd.s32 %v5417, 16
    %5419 = vset.pattern.permute.xlu0 %v5418
    %5420 = vperm.xlu0 %5419, %v5144
    %v5421 = vpop.permute.xlu0 %5420
    %v5422 = vlaneseq
    %v5423 = vshrl.u32 %v5422, 7
    %v5424 = vadd.s32 %v5423, 16
    %5425 = vset.pattern.permute.xlu0 %v5424
    %5426 = vperm.xlu0 %5425, %v5151
    %v5427 = vpop.permute.xlu0 %5426
    %v5428 = vlaneseq
    %v5429 = vshrl.u32 %v5428, 7
    %v5430 = vadd.s32 %v5429, 16
    %5431 = vset.pattern.permute.xlu0 %v5430
    %5432 = vperm.xlu0 %5431, %v5158
    %v5433 = vpop.permute.xlu0 %5432
    %v5434 = vlaneseq
    %v5435 = vshrl.u32 %v5434, 7
    %v5436 = vadd.s32 %v5435, 16
    %5437 = vset.pattern.permute.xlu0 %v5436
    %5438 = vperm.xlu0 %5437, %v5165
    %v5439 = vpop.permute.xlu0 %5438
    %v5440 = vlaneseq
    %v5441 = vshrl.u32 %v5440, 7
    %v5442 = vadd.s32 %v5441, 16
    %5443 = vset.pattern.permute.xlu0 %v5442
    %5444 = vperm.xlu0 %5443, %v5172
    %v5445 = vpop.permute.xlu0 %5444
    %v5446 = vlaneseq
    %v5447 = vshrl.u32 %v5446, 7
    %v5448 = vadd.s32 %v5447, 16
    %5449 = vset.pattern.permute.xlu0 %v5448
    %5450 = vperm.xlu0 %5449, %v5179
    %v5451 = vpop.permute.xlu0 %5450
    %v5452 = vlaneseq
    %v5453 = vshrl.u32 %v5452, 7
    %v5454 = vadd.s32 %v5453, 16
    %5455 = vset.pattern.permute.xlu0 %v5454
    %5456 = vperm.xlu0 %5455, %v5186
    %v5457 = vpop.permute.xlu0 %5456
    %v5458 = vlaneseq
    %v5459 = vshrl.u32 %v5458, 7
    %v5460 = vadd.s32 %v5459, 16
    %5461 = vset.pattern.permute.xlu0 %v5460
    %5462 = vperm.xlu0 %5461, %v5193
    %v5463 = vpop.permute.xlu0 %5462
    %v5464 = vmul.f32 %v5421, %v698
    %v5465 = vmul.f32 %v5427, %v698
    %v5466 = vmul.f32 %v5433, %v698
    %v5467 = vmul.f32 %v5439, %v698
    %v5468 = vmul.f32 %v5445, %v698
    %v5469 = vmul.f32 %v5451, %v698
    %v5470 = vmul.f32 %v5457, %v698
    %v5471 = vmul.f32 %v5463, %v698
    %v5472 = vadd.f32 %v5408, %v5464
    %v5473 = vadd.f32 %v5409, %v5465
    %v5474 = vadd.f32 %v5410, %v5466
    %v5475 = vadd.f32 %v5411, %v5467
    %v5476 = vadd.f32 %v5412, %v5468
    %v5477 = vadd.f32 %v5413, %v5469
    %v5478 = vadd.f32 %v5414, %v5470
    %v5479 = vadd.f32 %v5415, %v5471
    %v5480 = vlaneseq
    %v5481 = vshrl.u32 %v5480, 7
    %v5482 = vadd.s32 %v5481, 16
    %5483 = vset.pattern.permute.xlu0 %v5482
    %5484 = vperm.xlu0 %5483, %v5216
    %v5485 = vpop.permute.xlu0 %5484
    %v5486 = vlaneseq
    %v5487 = vshrl.u32 %v5486, 7
    %v5488 = vadd.s32 %v5487, 16
    %5489 = vset.pattern.permute.xlu0 %v5488
    %5490 = vperm.xlu0 %5489, %v5223
    %v5491 = vpop.permute.xlu0 %5490
    %v5492 = vlaneseq
    %v5493 = vshrl.u32 %v5492, 7
    %v5494 = vadd.s32 %v5493, 16
    %5495 = vset.pattern.permute.xlu0 %v5494
    %5496 = vperm.xlu0 %5495, %v5230
    %v5497 = vpop.permute.xlu0 %5496
    %v5498 = vlaneseq
    %v5499 = vshrl.u32 %v5498, 7
    %v5500 = vadd.s32 %v5499, 16
    %5501 = vset.pattern.permute.xlu0 %v5500
    %5502 = vperm.xlu0 %5501, %v5237
    %v5503 = vpop.permute.xlu0 %5502
    %v5504 = vlaneseq
    %v5505 = vshrl.u32 %v5504, 7
    %v5506 = vadd.s32 %v5505, 16
    %5507 = vset.pattern.permute.xlu0 %v5506
    %5508 = vperm.xlu0 %5507, %v5244
    %v5509 = vpop.permute.xlu0 %5508
    %v5510 = vlaneseq
    %v5511 = vshrl.u32 %v5510, 7
    %v5512 = vadd.s32 %v5511, 16
    %5513 = vset.pattern.permute.xlu0 %v5512
    %5514 = vperm.xlu0 %5513, %v5251
    %v5515 = vpop.permute.xlu0 %5514
    %v5516 = vlaneseq
    %v5517 = vshrl.u32 %v5516, 7
    %v5518 = vadd.s32 %v5517, 16
    %5519 = vset.pattern.permute.xlu0 %v5518
    %5520 = vperm.xlu0 %5519, %v5258
    %v5521 = vpop.permute.xlu0 %5520
    %v5522 = vlaneseq
    %v5523 = vshrl.u32 %v5522, 7
    %v5524 = vadd.s32 %v5523, 16
    %5525 = vset.pattern.permute.xlu0 %v5524
    %5526 = vperm.xlu0 %5525, %v5265
    %v5527 = vpop.permute.xlu0 %5526
    %v5528 = vmul.f32 %v5485, %v717
    %v5529 = vmul.f32 %v5491, %v717
    %v5530 = vmul.f32 %v5497, %v717
    %v5531 = vmul.f32 %v5503, %v717
    %v5532 = vmul.f32 %v5509, %v717
    %v5533 = vmul.f32 %v5515, %v717
    %v5534 = vmul.f32 %v5521, %v717
    %v5535 = vmul.f32 %v5527, %v717
    %v5536 = vadd.f32 %v5472, %v5528
    %v5537 = vadd.f32 %v5473, %v5529
    %v5538 = vadd.f32 %v5474, %v5530
    %v5539 = vadd.f32 %v5475, %v5531
    %v5540 = vadd.f32 %v5476, %v5532
    %v5541 = vadd.f32 %v5477, %v5533
    %v5542 = vadd.f32 %v5478, %v5534
    %v5543 = vadd.f32 %v5479, %v5535
    %v5544 = vtanh.pop %v5536
    %v5545 = vtanh.pop %v5537
    %v5546 = vtanh.pop %v5538
    %v5547 = vtanh.pop %v5539
    %v5548 = vtanh.pop %v5540
    %v5549 = vtanh.pop %v5541
    %v5550 = vtanh.pop %v5542
    %v5551 = vtanh.pop %v5543
    %v5552 = vmul.f32 %v5544, %v744
    %v5553 = vmul.f32 %v5545, %v744
    %v5554 = vmul.f32 %v5546, %v744
    %v5555 = vmul.f32 %v5547, %v744
    %v5556 = vmul.f32 %v5548, %v744
    %v5557 = vmul.f32 %v5549, %v744
    %v5558 = vmul.f32 %v5550, %v744
    %v5559 = vmul.f32 %v5551, %v744
    %v5560 = vsel %vm754, %v5552, 0.0
    %5561 = vadd.xlane.f32.xlu0 %v5560
    %v5562 = vpop.xlane.xlu0 %5561
    %v5563 = vsel %vm754, %v5553, 0.0
    %5564 = vadd.xlane.f32.xlu0 %v5563
    %v5565 = vpop.xlane.xlu0 %5564
    %v5566 = vsel %vm754, %v5554, 0.0
    %5567 = vadd.xlane.f32.xlu0 %v5566
    %v5568 = vpop.xlane.xlu0 %5567
    %v5569 = vsel %vm754, %v5555, 0.0
    %5570 = vadd.xlane.f32.xlu0 %v5569
    %v5571 = vpop.xlane.xlu0 %5570
    %v5572 = vsel %vm754, %v5556, 0.0
    %5573 = vadd.xlane.f32.xlu0 %v5572
    %v5574 = vpop.xlane.xlu0 %5573
    %v5575 = vsel %vm754, %v5557, 0.0
    %5576 = vadd.xlane.f32.xlu0 %v5575
    %v5577 = vpop.xlane.xlu0 %5576
    %v5578 = vsel %vm754, %v5558, 0.0
    %5579 = vadd.xlane.f32.xlu0 %v5578
    %v5580 = vpop.xlane.xlu0 %5579
    %v5581 = vsel %vm754, %v5559, 0.0
    %5582 = vadd.xlane.f32.xlu0 %v5581
    %v5583 = vpop.xlane.xlu0 %5582
    %v5592 = vperm.slane %v5562, %v788
    %v5593 = vperm.slane %v5565, %v788
    %v5594 = vperm.slane %v5568, %v788
    %v5595 = vperm.slane %v5571, %v788
    %v5596 = vperm.slane %v5574, %v788
    %v5597 = vperm.slane %v5577, %v788
    %v5598 = vperm.slane %v5580, %v788
    %v5599 = vperm.slane %v5583, %v788
    %v5600 = vsel %vm797, %v5593, %v5592
    %v5601 = vsel %vm799, %v5594, %v5600
    %v5602 = vsel %vm801, %v5595, %v5601
    %v5603 = vsel %vm803, %v5596, %v5602
    %v5604 = vsel %vm805, %v5597, %v5603
    %v5605 = vsel %vm807, %v5598, %v5604
    %v5606 = vsel %vm809, %v5599, %v5605
    %v5608 = vsel %vm327, %v5606, -inf
    %5609 = vmax.xlane.f32.xlu0 %v5608
    %v5610 = vpop.xlane.xlu0 %5609
    %v5612 = vperm.slane %v5610, 0
    %v5613 = vperm.slane %v5610, 1
    %v5614 = vperm.slane %v5610, 2
    %v5615 = vperm.slane %v5610, 3
    %v5616 = vperm.slane %v5610, 4
    %v5617 = vperm.slane %v5610, 5
    %v5618 = vperm.slane %v5610, 6
    %v5619 = vperm.slane %v5610, 7
    %v5628 = vsub.f32 %v5562, %v5612
    %v5629 = vsub.f32 %v5565, %v5613
    %v5630 = vsub.f32 %v5568, %v5614
    %v5631 = vsub.f32 %v5571, %v5615
    %v5632 = vsub.f32 %v5574, %v5616
    %v5633 = vsub.f32 %v5577, %v5617
    %v5634 = vsub.f32 %v5580, %v5618
    %v5635 = vsub.f32 %v5583, %v5619
    %v5636 = vmul.f32 %v5628, 1.442695
    %v5637 = vpow.pop %v5636
    %v5638 = vmul.f32 %v5629, 1.442695
    %v5639 = vpow.pop %v5638
    %v5640 = vmul.f32 %v5630, 1.442695
    %v5641 = vpow.pop %v5640
    %v5642 = vmul.f32 %v5631, 1.442695
    %v5643 = vpow.pop %v5642
    %v5644 = vmul.f32 %v5632, 1.442695
    %v5645 = vpow.pop %v5644
    %v5646 = vmul.f32 %v5633, 1.442695
    %v5647 = vpow.pop %v5646
    %v5648 = vmul.f32 %v5634, 1.442695
    %v5649 = vpow.pop %v5648
    %v5650 = vmul.f32 %v5635, 1.442695
    %v5651 = vpow.pop %v5650
    %5660 = vset.pattern.permute.xlu0 0
    %5661 = vperm.xlu0 %5660, %v5637
    %v5662 = vpop.permute.xlu0 %5661
    %5663 = vset.pattern.permute.xlu0 0
    %5664 = vperm.xlu0 %5663, %v5639
    %v5665 = vpop.permute.xlu0 %5664
    %5666 = vset.pattern.permute.xlu0 0
    %5667 = vperm.xlu0 %5666, %v5641
    %v5668 = vpop.permute.xlu0 %5667
    %5669 = vset.pattern.permute.xlu0 0
    %5670 = vperm.xlu0 %5669, %v5643
    %v5671 = vpop.permute.xlu0 %5670
    %5672 = vset.pattern.permute.xlu0 0
    %5673 = vperm.xlu0 %5672, %v5645
    %v5674 = vpop.permute.xlu0 %5673
    %5675 = vset.pattern.permute.xlu0 0
    %5676 = vperm.xlu0 %5675, %v5647
    %v5677 = vpop.permute.xlu0 %5676
    %5678 = vset.pattern.permute.xlu0 0
    %5679 = vperm.xlu0 %5678, %v5649
    %v5680 = vpop.permute.xlu0 %5679
    %5681 = vset.pattern.permute.xlu0 0
    %5682 = vperm.xlu0 %5681, %v5651
    %v5683 = vpop.permute.xlu0 %5682
    %v5684 = vperm.slane %v5662, %v788
    %v5685 = vperm.slane %v5665, %v788
    %v5686 = vperm.slane %v5668, %v788
    %v5687 = vperm.slane %v5671, %v788
    %v5688 = vperm.slane %v5674, %v788
    %v5689 = vperm.slane %v5677, %v788
    %v5690 = vperm.slane %v5680, %v788
    %v5691 = vperm.slane %v5683, %v788
    %v5692 = vsel %vm797, %v5685, %v5684
    %v5693 = vsel %vm799, %v5686, %v5692
    %v5694 = vsel %vm801, %v5687, %v5693
    %v5695 = vsel %vm803, %v5688, %v5694
    %v5696 = vsel %vm805, %v5689, %v5695
    %v5697 = vsel %vm807, %v5690, %v5696
    %v5698 = vsel %vm809, %v5691, %v5697
    %v5700 = vsel %vm327, %v5698, 0.0
    %5701 = vadd.xlane.f32.xlu0 %v5700
    %v5702 = vpop.xlane.xlu0 %5701
    %v5703 = vrcp.pop %v5702
    %v5705 = vperm.slane %v5703, 0
    %v5706 = vperm.slane %v5703, 1
    %v5707 = vperm.slane %v5703, 2
    %v5708 = vperm.slane %v5703, 3
    %v5709 = vperm.slane %v5703, 4
    %v5710 = vperm.slane %v5703, 5
    %v5711 = vperm.slane %v5703, 6
    %v5712 = vperm.slane %v5703, 7
    %v5721 = vmul.f32 %v5637, %v5705
    %v5722 = vmul.f32 %v5639, %v5706
    %v5723 = vmul.f32 %v5641, %v5707
    %v5724 = vmul.f32 %v5643, %v5708
    %v5725 = vmul.f32 %v5645, %v5709
    %v5726 = vmul.f32 %v5647, %v5710
    %v5727 = vmul.f32 %v5649, %v5711
    %v5728 = vmul.f32 %v5651, %v5712
    %v5729 = vpack.c.bf16 %v5721, %v5721
    %v5730 = vpack.c.bf16 %v5722, %v5722
    %v5731 = vpack.c.bf16 %v5723, %v5723
    %v5732 = vpack.c.bf16 %v5724, %v5724
    %v5733 = vpack.c.bf16 %v5725, %v5725
    %v5734 = vpack.c.bf16 %v5726, %v5726
    %v5735 = vpack.c.bf16 %v5727, %v5727
    %v5736 = vpack.c.bf16 %v5728, %v5728
    %v5738 = vunpack.c.l.b16 %v5729
    %v5739 = vpack.c.b16 %v5738, %v5738
    %v5740 = vunpack.c.l.b16 %v5739
    %5741 = vset.pattern.permute.xlu0 0
    %5742 = vperm.xlu0 %5741, %v5740
    %v5743 = vpop.permute.xlu0 %5742
    %v5744 = vperm.slane %v5743, %v788
    %v5745 = vpack.c.b16 %v5744, %v5744
    %v5747 = vsel %vm327, %v5745, 0
    %5749 = vmatpush.bf16.msra.mxu0 0
    %5750 = vmatpush.bf16.msra.mxu0 0
    %5751 = vmatpush.bf16.msra.mxu0 0
    %5752 = vmatpush.bf16.msra.mxu0 0
    %5753 = vmatpush.bf16.msra.mxu0 0
    %5754 = vmatpush.bf16.msra.mxu0 0
    %5755 = vmatpush.bf16.msra.mxu0 0
    %5756 = vmatpush.bf16.msra.mxu0 %v954
    %5757 = vmatmul.bf16.gmra.mxu0 %v5747
    %v5758 = vpop.f32.mrf.mxu0
    %v5759 = vadd.f32 0.0, %v5758
    %v5760 = vpop.f32.mrf.mxu0
    %5761 = vdwg.mxu0
    %v5763 = vunpack.c.l.b16 %v5730
    %v5764 = vpack.c.b16 %v5763, %v5763
    %v5765 = vunpack.c.l.b16 %v5764
    %5766 = vset.pattern.permute.xlu0 0
    %5767 = vperm.xlu0 %5766, %v5765
    %v5768 = vpop.permute.xlu0 %5767
    %v5769 = vperm.slane %v5768, %v788
    %v5770 = vpack.c.b16 %v5769, %v5769
    %v5772 = vsel %vm327, %v5770, 0
    %5774 = vmatpush.bf16.msra.mxu0 0
    %5775 = vmatpush.bf16.msra.mxu0 0
    %5776 = vmatpush.bf16.msra.mxu0 0
    %5777 = vmatpush.bf16.msra.mxu0 0
    %5778 = vmatpush.bf16.msra.mxu0 0
    %5779 = vmatpush.bf16.msra.mxu0 0
    %5780 = vmatpush.bf16.msra.mxu0 0
    %5781 = vmatpush.bf16.msra.mxu0 %v982
    %5782 = vmatmul.bf16.gmra.mxu0 %v5772
    %v5783 = vpop.f32.mrf.mxu0
    %v5784 = vadd.f32 0.0, %v5783
    %v5785 = vpop.f32.mrf.mxu0
    %5786 = vdwg.mxu0
    %v5788 = vunpack.c.l.b16 %v5731
    %v5789 = vpack.c.b16 %v5788, %v5788
    %v5790 = vunpack.c.l.b16 %v5789
    %5791 = vset.pattern.permute.xlu0 0
    %5792 = vperm.xlu0 %5791, %v5790
    %v5793 = vpop.permute.xlu0 %5792
    %v5794 = vperm.slane %v5793, %v788
    %v5795 = vpack.c.b16 %v5794, %v5794
    %v5797 = vsel %vm327, %v5795, 0
    %5799 = vmatpush.bf16.msra.mxu0 0
    %5800 = vmatpush.bf16.msra.mxu0 0
    %5801 = vmatpush.bf16.msra.mxu0 0
    %5802 = vmatpush.bf16.msra.mxu0 0
    %5803 = vmatpush.bf16.msra.mxu0 0
    %5804 = vmatpush.bf16.msra.mxu0 0
    %5805 = vmatpush.bf16.msra.mxu0 0
    %5806 = vmatpush.bf16.msra.mxu0 %v1010
    %5807 = vmatmul.bf16.gmra.mxu0 %v5797
    %v5808 = vpop.f32.mrf.mxu0
    %v5809 = vadd.f32 0.0, %v5808
    %v5810 = vpop.f32.mrf.mxu0
    %5811 = vdwg.mxu0
    %v5813 = vunpack.c.l.b16 %v5732
    %v5814 = vpack.c.b16 %v5813, %v5813
    %v5815 = vunpack.c.l.b16 %v5814
    %5816 = vset.pattern.permute.xlu0 0
    %5817 = vperm.xlu0 %5816, %v5815
    %v5818 = vpop.permute.xlu0 %5817
    %v5819 = vperm.slane %v5818, %v788
    %v5820 = vpack.c.b16 %v5819, %v5819
    %v5822 = vsel %vm327, %v5820, 0
    %5824 = vmatpush.bf16.msra.mxu0 0
    %5825 = vmatpush.bf16.msra.mxu0 0
    %5826 = vmatpush.bf16.msra.mxu0 0
    %5827 = vmatpush.bf16.msra.mxu0 0
    %5828 = vmatpush.bf16.msra.mxu0 0
    %5829 = vmatpush.bf16.msra.mxu0 0
    %5830 = vmatpush.bf16.msra.mxu0 0
    %5831 = vmatpush.bf16.msra.mxu0 %v1038
    %5832 = vmatmul.bf16.gmra.mxu0 %v5822
    %v5833 = vpop.f32.mrf.mxu0
    %v5834 = vadd.f32 0.0, %v5833
    %v5835 = vpop.f32.mrf.mxu0
    %5836 = vdwg.mxu0
    %v5838 = vunpack.c.l.b16 %v5733
    %v5839 = vpack.c.b16 %v5838, %v5838
    %v5840 = vunpack.c.l.b16 %v5839
    %5841 = vset.pattern.permute.xlu0 0
    %5842 = vperm.xlu0 %5841, %v5840
    %v5843 = vpop.permute.xlu0 %5842
    %v5844 = vperm.slane %v5843, %v788
    %v5845 = vpack.c.b16 %v5844, %v5844
    %v5847 = vsel %vm327, %v5845, 0
    %5849 = vmatpush.bf16.msra.mxu0 0
    %5850 = vmatpush.bf16.msra.mxu0 0
    %5851 = vmatpush.bf16.msra.mxu0 0
    %5852 = vmatpush.bf16.msra.mxu0 0
    %5853 = vmatpush.bf16.msra.mxu0 0
    %5854 = vmatpush.bf16.msra.mxu0 0
    %5855 = vmatpush.bf16.msra.mxu0 0
    %5856 = vmatpush.bf16.msra.mxu0 %v1066
    %5857 = vmatmul.bf16.gmra.mxu0 %v5847
    %v5858 = vpop.f32.mrf.mxu0
    %v5859 = vadd.f32 0.0, %v5858
    %v5860 = vpop.f32.mrf.mxu0
    %5861 = vdwg.mxu0
    %v5863 = vunpack.c.l.b16 %v5734
    %v5864 = vpack.c.b16 %v5863, %v5863
    %v5865 = vunpack.c.l.b16 %v5864
    %5866 = vset.pattern.permute.xlu0 0
    %5867 = vperm.xlu0 %5866, %v5865
    %v5868 = vpop.permute.xlu0 %5867
    %v5869 = vperm.slane %v5868, %v788
    %v5870 = vpack.c.b16 %v5869, %v5869
    %v5872 = vsel %vm327, %v5870, 0
    %5874 = vmatpush.bf16.msra.mxu0 0
    %5875 = vmatpush.bf16.msra.mxu0 0
    %5876 = vmatpush.bf16.msra.mxu0 0
    %5877 = vmatpush.bf16.msra.mxu0 0
    %5878 = vmatpush.bf16.msra.mxu0 0
    %5879 = vmatpush.bf16.msra.mxu0 0
    %5880 = vmatpush.bf16.msra.mxu0 0
    %5881 = vmatpush.bf16.msra.mxu0 %v1094
    %5882 = vmatmul.bf16.gmra.mxu0 %v5872
    %v5883 = vpop.f32.mrf.mxu0
    %v5884 = vadd.f32 0.0, %v5883
    %v5885 = vpop.f32.mrf.mxu0
    %5886 = vdwg.mxu0
    %v5888 = vunpack.c.l.b16 %v5735
    %v5889 = vpack.c.b16 %v5888, %v5888
    %v5890 = vunpack.c.l.b16 %v5889
    %5891 = vset.pattern.permute.xlu0 0
    %5892 = vperm.xlu0 %5891, %v5890
    %v5893 = vpop.permute.xlu0 %5892
    %v5894 = vperm.slane %v5893, %v788
    %v5895 = vpack.c.b16 %v5894, %v5894
    %v5897 = vsel %vm327, %v5895, 0
    %5899 = vmatpush.bf16.msra.mxu0 0
    %5900 = vmatpush.bf16.msra.mxu0 0
    %5901 = vmatpush.bf16.msra.mxu0 0
    %5902 = vmatpush.bf16.msra.mxu0 0
    %5903 = vmatpush.bf16.msra.mxu0 0
    %5904 = vmatpush.bf16.msra.mxu0 0
    %5905 = vmatpush.bf16.msra.mxu0 0
    %5906 = vmatpush.bf16.msra.mxu0 %v1122
    %5907 = vmatmul.bf16.gmra.mxu0 %v5897
    %v5908 = vpop.f32.mrf.mxu0
    %v5909 = vadd.f32 0.0, %v5908
    %v5910 = vpop.f32.mrf.mxu0
    %5911 = vdwg.mxu0
    %v5913 = vunpack.c.l.b16 %v5736
    %v5914 = vpack.c.b16 %v5913, %v5913
    %v5915 = vunpack.c.l.b16 %v5914
    %5916 = vset.pattern.permute.xlu0 0
    %5917 = vperm.xlu0 %5916, %v5915
    %v5918 = vpop.permute.xlu0 %5917
    %v5919 = vperm.slane %v5918, %v788
    %v5920 = vpack.c.b16 %v5919, %v5919
    %v5922 = vsel %vm327, %v5920, 0
    %5924 = vmatpush.bf16.msra.mxu0 0
    %5925 = vmatpush.bf16.msra.mxu0 0
    %5926 = vmatpush.bf16.msra.mxu0 0
    %5927 = vmatpush.bf16.msra.mxu0 0
    %5928 = vmatpush.bf16.msra.mxu0 0
    %5929 = vmatpush.bf16.msra.mxu0 0
    %5930 = vmatpush.bf16.msra.mxu0 0
    %5931 = vmatpush.bf16.msra.mxu0 %v1150
    %5932 = vmatmul.bf16.gmra.mxu0 %v5922
    %v5933 = vpop.f32.mrf.mxu0
    %v5934 = vadd.f32 0.0, %v5933
    %v5935 = vpop.f32.mrf.mxu0
    %5936 = vdwg.mxu0
    %v5937 = vadd.f32 %v4747, %v5721
    %v5938 = vadd.f32 %v4748, %v5722
    %v5939 = vadd.f32 %v4749, %v5723
    %v5940 = vadd.f32 %v4750, %v5724
    %v5941 = vadd.f32 %v4751, %v5725
    %v5942 = vadd.f32 %v4752, %v5726
    %v5943 = vadd.f32 %v4753, %v5727
    %v5944 = vadd.f32 %v4754, %v5728
    %v5945 = vpack.c.bf16 %v5759, %v5759
    %v5946 = vpack.c.bf16 %v5784, %v5784
    %v5947 = vpack.c.bf16 %v5809, %v5809
    %v5948 = vpack.c.bf16 %v5834, %v5834
    %v5949 = vpack.c.bf16 %v5859, %v5859
    %v5950 = vpack.c.bf16 %v5884, %v5884
    %v5951 = vpack.c.bf16 %v5909, %v5909
    %v5952 = vpack.c.bf16 %v5934, %v5934
    %v5961 = vunpack.c.l.b16 %v5945
    %v5962 = vunpack.c.l.b16 %v5946
    %v5963 = vunpack.c.l.b16 %v5947
    %v5964 = vunpack.c.l.b16 %v5948
    %v5965 = vunpack.c.l.b16 %v5949
    %v5966 = vunpack.c.l.b16 %v5950
    %v5967 = vunpack.c.l.b16 %v5951
    %v5968 = vunpack.c.l.b16 %v5952
    %v5969 = vrot.slane %v5962, 7
    %v5970 = vsel %vm797, %v5969, %v5961
    %v5971 = vrot.slane %v5963, 6
    %v5972 = vsel %vm799, %v5971, %v5970
    %v5973 = vrot.slane %v5964, 5
    %v5974 = vsel %vm801, %v5973, %v5972
    %v5975 = vrot.slane %v5965, 4
    %v5976 = vsel %vm803, %v5975, %v5974
    %v5977 = vrot.slane %v5966, 3
    %v5978 = vsel %vm805, %v5977, %v5976
    %v5979 = vrot.slane %v5967, 2
    %v5980 = vsel %vm807, %v5979, %v5978
    %v5981 = vrot.slane %v5968, 1
    %v5982 = vsel %vm809, %v5981, %v5980
    %v5983 = vpack.c.b16 %v5982, %v5982
    %v5985 = vsel %vm260, %v5983, 0
    %5987 = vmatpush.bf16.msra.mxu0 0
    %5988 = vmatpush.bf16.msra.mxu0 0
    %5989 = vmatpush.bf16.msra.mxu0 0
    %5990 = vmatpush.bf16.msra.mxu0 0
    %5991 = vmatpush.bf16.msra.mxu0 0
    %5992 = vmatpush.bf16.msra.mxu0 0
    %5993 = vmatpush.bf16.msra.mxu0 %v1221
    %5994 = vmatpush.bf16.msra.mxu0 %v1220
    %5995 = vmatmul.bf16.gmra.mxu0 %v5985
    %v5996 = vpop.f32.mrf.mxu0
    %v5997 = vadd.f32 %v4885, %v5996
    %v5998 = vpop.f32.mrf.mxu0
    %5999 = vdwg.mxu0
    %v6000 = vadd.f32 %v5997, %v225
    %v6001 = vxor.u32 %v6000, 2147483648
    %v6002 = vmul.f32 %v6001, 1.442695
    %v6003 = vpow.pop %v6002
    %v6004 = vadd.f32 %v6003, 1.0
    %v6005 = vrcp.pop %v6004
    %v6006 = vmul.f32 %v6004, %v6005
    %v6007 = vsub.f32 1.0, %v6006
    %v6008 = vmul.f32 %v6005, %v6007
    %v6009 = vadd.f32 %v6005, %v6008
    %vm6010 = vweird.f32 %v6004
    %vm6011 = vweird.f32 %v6005
    %vm6012 = vmor %vm6010, %vm6011
    %v6013 = vsel %vm6012, %v6005, %v6009
    %v6014 = vand.u32 2147483647, %v6004
    %vm6015 = vcmp.eq.f32.partialorder %v6014, 8.507059e+37
    %v6016 = vand.u32 %v6004, 2147483648
    %v6017 = vor.u32 1.1754944e-38, %v6016
    %v6018 = vsel %vm6015, %v6017, %v6013
    %v6019 = vmul.f32 1.0, %v6018
    %v6020 = vtanh.pop %v6000
    %v6021 = vmul.f32 %v6019, %v4841
    %6023 = vrot.lane.b32.xlu0 %v6020, 64
    %v6024 = vpop.permute.xlu0 %6023
    %v6026 = vmul.f32 %v6019, %v6024
    %6028 = vrot.lane.b32.xlu0 %v6026, 32
    %v6029 = vpop.permute.xlu0 %6028
    %v6031 = vadd.f32 %v6021, %v6029
    %v6032 = vtanh.pop %v6031
    %6034 = vrot.lane.b32.xlu0 %v6032, 64
    %v6035 = vpop.permute.xlu0 %6034
    %v6037 = vmul.f32 %v6019, %v6035
    %6039 = vrot.lane.b32.xlu0 %v6037, 32
    %v6040 = vpop.permute.xlu0 %6039
    %6042 = vst.msk [vmem:[#allocation2 + $0x20] sm:$0xff] %vm260, %v6040
    %s6043 = scalar_lea.vmem [#allocation3], 20
    %v6044 = vld [vmem:[%s6043] sm:$0xf]
    %6045 = vmatpush.bf16.msra.mxu0 0
    %6046 = vmatpush.bf16.msra.mxu0 0
    %6047 = vmatpush.bf16.msra.mxu0 0
    %6048 = vmatpush.bf16.msra.mxu0 0
    %6049 = vmatpush.bf16.msra.mxu0 0
    %6050 = vmatpush.bf16.msra.mxu0 0
    %6051 = vmatpush.bf16.msra.mxu0 %v257
    %6052 = vmatpush.bf16.msra.mxu0 %v256
    %6053 = vmatmul.bf16.gmra.mxu0 %v4961
    %v6054 = vpop.f32.mrf.mxu0
    %v6055 = vadd.f32 0.0, %v6054
    %v6056 = vpop.f32.mrf.mxu0
    %6057 = vdwg.mxu0
    %v6058 = vpack.c.bf16 %v6037, %v6037
    %6060 = vrot.lane.b32.xlu0 %v6058, 32
    %v6061 = vpop.permute.xlu0 %6060
    %v6063 = vsel %vm260, %v6061, 0
    %6065 = vmatpush.bf16.msra.mxu0 0
    %6066 = vmatpush.bf16.msra.mxu0 0
    %6067 = vmatpush.bf16.msra.mxu0 0
    %6068 = vmatpush.bf16.msra.mxu0 0
    %6069 = vmatpush.bf16.msra.mxu0 0
    %6070 = vmatpush.bf16.msra.mxu0 0
    %6071 = vmatpush.bf16.msra.mxu0 %v286
    %6072 = vmatpush.bf16.msra.mxu0 %v285
    %6073 = vmatmul.bf16.gmra.mxu0 %v6063
    %v6074 = vpop.f32.mrf.mxu0
    %v6075 = vadd.f32 0.0, %v6074
    %v6076 = vpop.f32.mrf.mxu0
    %6077 = vdwg.mxu0
    %6078 = vmatpush.bf16.msra.mxu0 0
    %6079 = vmatpush.bf16.msra.mxu0 0
    %6080 = vmatpush.bf16.msra.mxu0 0
    %6081 = vmatpush.bf16.msra.mxu0 0
    %6082 = vmatpush.bf16.msra.mxu0 0
    %6083 = vmatpush.bf16.msra.mxu0 0
    %6084 = vmatpush.bf16.msra.mxu0 %v311
    %6085 = vmatpush.bf16.msra.mxu0 %v310
    %6086 = vmatmul.bf16.gmra.mxu0 %v5985
    %v6087 = vpop.f32.mrf.mxu0
    %v6088 = vadd.f32 0.0, %v6087
    %v6089 = vpop.f32.mrf.mxu0
    %6090 = vdwg.mxu0
    %v6092 = vsel %vm327, %v6044, 0
    %6094 = vmatpush.bf16.msra.mxu0 0
    %6095 = vmatpush.bf16.msra.mxu0 0
    %6096 = vmatpush.bf16.msra.mxu0 0
    %6097 = vmatpush.bf16.msra.mxu0 0
    %6098 = vmatpush.bf16.msra.mxu0 0
    %6099 = vmatpush.bf16.msra.mxu0 0
    %6100 = vmatpush.bf16.msra.mxu0 0
    %6101 = vmatpush.bf16.msra.mxu0 %v333
    %6102 = vmatmul.bf16.gmra.mxu0 %v6092
    %v6103 = vpop.f32.mrf.mxu0
    %v6104 = vadd.f32 %v6088, %v6103
    %v6105 = vpop.f32.mrf.mxu0
    %6106 = vdwg.mxu0
    %v6107 = vadd.f32 %v6104, %v6055
    %v6108 = vadd.f32 %v6107, %v221
    %v6109 = vxor.u32 %v6108, 2147483648
    %v6110 = vmul.f32 %v6109, 1.442695
    %v6111 = vpow.pop %v6110
    %v6112 = vadd.f32 %v6111, 1.0
    %v6113 = vrcp.pop %v6112
    %v6114 = vmul.f32 %v6112, %v6113
    %v6115 = vsub.f32 1.0, %v6114
    %v6116 = vmul.f32 %v6113, %v6115
    %v6117 = vadd.f32 %v6113, %v6116
    %vm6118 = vweird.f32 %v6112
    %vm6119 = vweird.f32 %v6113
    %vm6120 = vmor %vm6118, %vm6119
    %v6121 = vsel %vm6120, %v6113, %v6117
    %v6122 = vand.u32 2147483647, %v6112
    %vm6123 = vcmp.eq.f32.partialorder %v6122, 8.507059e+37
    %v6124 = vand.u32 %v6112, 2147483648
    %v6125 = vor.u32 1.1754944e-38, %v6124
    %v6126 = vsel %vm6123, %v6125, %v6121
    %v6127 = vmul.f32 1.0, %v6126
    %v6128 = vtanh.pop %v6108
    %v6129 = vmul.f32 %v6127, %v4949
    %6131 = vrot.lane.b32.xlu0 %v6128, 64
    %v6132 = vpop.permute.xlu0 %6131
    %v6134 = vmul.f32 %v6127, %v6132
    %6136 = vrot.lane.b32.xlu0 %v6134, 32
    %v6137 = vpop.permute.xlu0 %6136
    %v6139 = vadd.f32 %v6129, %v6137
    %v6140 = vtanh.pop %v6139
    %6142 = vrot.lane.b32.xlu0 %v6140, 64
    %v6143 = vpop.permute.xlu0 %6142
    %v6145 = vmul.f32 %v6127, %v6143
    %v6146 = vpack.c.bf16 %v6145, %v6145
    %6148 = vrot.lane.b32.xlu0 %v6146, 32
    %v6149 = vpop.permute.xlu0 %6148
    %v6151 = vsel %vm260, %v6149, 0
    %6153 = vmatpush.bf16.msra.mxu0 0
    %6154 = vmatpush.bf16.msra.mxu0 0
    %6155 = vmatpush.bf16.msra.mxu0 0
    %6156 = vmatpush.bf16.msra.mxu0 0
    %6157 = vmatpush.bf16.msra.mxu0 0
    %6158 = vmatpush.bf16.msra.mxu0 0
    %6159 = vmatpush.bf16.msra.mxu0 %v400
    %6160 = vmatpush.bf16.msra.mxu0 %v399
    %6161 = vmatmul.bf16.gmra.mxu0 %v6151
    %v6162 = vpop.f32.mrf.mxu0
    %v6163 = vadd.f32 0.0, %v6162
    %v6164 = vpop.f32.mrf.mxu0
    %6165 = vdwg.mxu0
    %6166 = vset.pattern.permute.xlu0 0
    %6167 = vperm.xlu0 %6166, %v5738
    %v6168 = vpop.permute.xlu0 %6167
    %6169 = vset.pattern.permute.xlu0 0
    %6170 = vperm.xlu0 %6169, %v5763
    %v6171 = vpop.permute.xlu0 %6170
    %6172 = vset.pattern.permute.xlu0 0
    %6173 = vperm.xlu0 %6172, %v5788
    %v6174 = vpop.permute.xlu0 %6173
    %6175 = vset.pattern.permute.xlu0 0
    %6176 = vperm.xlu0 %6175, %v5813
    %v6177 = vpop.permute.xlu0 %6176
    %6178 = vset.pattern.permute.xlu0 0
    %6179 = vperm.xlu0 %6178, %v5838
    %v6180 = vpop.permute.xlu0 %6179
    %6181 = vset.pattern.permute.xlu0 0
    %6182 = vperm.xlu0 %6181, %v5863
    %v6183 = vpop.permute.xlu0 %6182
    %6184 = vset.pattern.permute.xlu0 0
    %6185 = vperm.xlu0 %6184, %v5888
    %v6186 = vpop.permute.xlu0 %6185
    %6187 = vset.pattern.permute.xlu0 0
    %6188 = vperm.xlu0 %6187, %v5913
    %v6189 = vpop.permute.xlu0 %6188
    %v6190 = vperm.slane %v6168, %v788
    %v6191 = vperm.slane %v6171, %v788
    %v6192 = vperm.slane %v6174, %v788
    %v6193 = vperm.slane %v6177, %v788
    %v6194 = vperm.slane %v6180, %v788
    %v6195 = vperm.slane %v6183, %v788
    %v6196 = vperm.slane %v6186, %v788
    %v6197 = vperm.slane %v6189, %v788
    %v6198 = vsel %vm797, %v6191, %v6190
    %v6199 = vsel %vm799, %v6192, %v6198
    %v6200 = vsel %vm801, %v6193, %v6199
    %v6201 = vsel %vm803, %v6194, %v6200
    %v6202 = vsel %vm805, %v6195, %v6201
    %v6203 = vsel %vm807, %v6196, %v6202
    %v6204 = vsel %vm809, %v6197, %v6203
    %v6205 = vpack.c.b16 %v6204, %v6204
    %v6207 = vsel %vm327, %v6205, 0
    %6209 = vmatpush.bf16.msra.mxu0 0
    %6210 = vmatpush.bf16.msra.mxu0 0
    %6211 = vmatpush.bf16.msra.mxu0 0
    %6212 = vmatpush.bf16.msra.mxu0 0
    %6213 = vmatpush.bf16.msra.mxu0 0
    %6214 = vmatpush.bf16.msra.mxu0 0
    %6215 = vmatpush.bf16.msra.mxu0 0
    %6216 = vmatpush.bf16.msra.mxu0 %v422
    %6217 = vmatmul.bf16.gmra.mxu0 %v6207
    %v6218 = vpop.f32.mrf.mxu0
    %v6219 = vadd.f32 0.0, %v6218
    %v6220 = vpop.f32.mrf.mxu0
    %6221 = vdwg.mxu0
    %v6222 = vpack.c.bf16 %v5937, %v5937
    %v6223 = vpack.c.bf16 %v5938, %v5938
    %v6224 = vpack.c.bf16 %v5939, %v5939
    %v6225 = vpack.c.bf16 %v5940, %v5940
    %v6226 = vpack.c.bf16 %v5941, %v5941
    %v6227 = vpack.c.bf16 %v5942, %v5942
    %v6228 = vpack.c.bf16 %v5943, %v5943
    %v6229 = vpack.c.bf16 %v5944, %v5944
    %v6238 = vunpack.c.l.b16 %v6222
    %v6239 = vunpack.c.l.b16 %v6223
    %v6240 = vunpack.c.l.b16 %v6224
    %v6241 = vunpack.c.l.b16 %v6225
    %v6242 = vunpack.c.l.b16 %v6226
    %v6243 = vunpack.c.l.b16 %v6227
    %v6244 = vunpack.c.l.b16 %v6228
    %v6245 = vunpack.c.l.b16 %v6229
    %6246 = vset.pattern.permute.xlu0 0
    %6247 = vperm.xlu0 %6246, %v6238
    %v6248 = vpop.permute.xlu0 %6247
    %6249 = vset.pattern.permute.xlu0 0
    %6250 = vperm.xlu0 %6249, %v6239
    %v6251 = vpop.permute.xlu0 %6250
    %6252 = vset.pattern.permute.xlu0 0
    %6253 = vperm.xlu0 %6252, %v6240
    %v6254 = vpop.permute.xlu0 %6253
    %6255 = vset.pattern.permute.xlu0 0
    %6256 = vperm.xlu0 %6255, %v6241
    %v6257 = vpop.permute.xlu0 %6256
    %6258 = vset.pattern.permute.xlu0 0
    %6259 = vperm.xlu0 %6258, %v6242
    %v6260 = vpop.permute.xlu0 %6259
    %6261 = vset.pattern.permute.xlu0 0
    %6262 = vperm.xlu0 %6261, %v6243
    %v6263 = vpop.permute.xlu0 %6262
    %6264 = vset.pattern.permute.xlu0 0
    %6265 = vperm.xlu0 %6264, %v6244
    %v6266 = vpop.permute.xlu0 %6265
    %6267 = vset.pattern.permute.xlu0 0
    %6268 = vperm.xlu0 %6267, %v6245
    %v6269 = vpop.permute.xlu0 %6268
    %v6270 = vperm.slane %v6248, %v788
    %v6271 = vperm.slane %v6251, %v788
    %v6272 = vperm.slane %v6254, %v788
    %v6273 = vperm.slane %v6257, %v788
    %v6274 = vperm.slane %v6260, %v788
    %v6275 = vperm.slane %v6263, %v788
    %v6276 = vperm.slane %v6266, %v788
    %v6277 = vperm.slane %v6269, %v788
    %v6278 = vsel %vm797, %v6271, %v6270
    %v6279 = vsel %vm799, %v6272, %v6278
    %v6280 = vsel %vm801, %v6273, %v6279
    %v6281 = vsel %vm803, %v6274, %v6280
    %v6282 = vsel %vm805, %v6275, %v6281
    %v6283 = vsel %vm807, %v6276, %v6282
    %v6284 = vsel %vm809, %v6277, %v6283
    %v6285 = vpack.c.b16 %v6284, %v6284
    %v6287 = vsel %vm327, %v6285, 0
    %6289 = vmatpush.bf16.msra.mxu0 0
    %6290 = vmatpush.bf16.msra.mxu0 0
    %6291 = vmatpush.bf16.msra.mxu0 0
    %6292 = vmatpush.bf16.msra.mxu0 0
    %6293 = vmatpush.bf16.msra.mxu0 0
    %6294 = vmatpush.bf16.msra.mxu0 0
    %6295 = vmatpush.bf16.msra.mxu0 0
    %6296 = vmatpush.bf16.msra.mxu0 %v422
    %6297 = vmatmul.bf16.gmra.mxu0 %v6287
    %v6298 = vpop.f32.mrf.mxu0
    %v6299 = vadd.f32 0.0, %v6298
    %v6300 = vpop.f32.mrf.mxu0
    %6301 = vdwg.mxu0
    %v6303 = vrot.slane %v6163, 1
    %v6304 = vrot.slane %v6163, 2
    %v6305 = vrot.slane %v6163, 3
    %v6306 = vrot.slane %v6163, 4
    %v6307 = vrot.slane %v6163, 5
    %v6308 = vrot.slane %v6163, 6
    %v6309 = vrot.slane %v6163, 7
    %v6310 = vperm.slane %v6163, 0
    %v6311 = vperm.slane %v6303, 0
    %v6312 = vperm.slane %v6304, 0
    %v6313 = vperm.slane %v6305, 0
    %v6314 = vperm.slane %v6306, 0
    %v6315 = vperm.slane %v6307, 0
    %v6316 = vperm.slane %v6308, 0
    %v6317 = vperm.slane %v6309, 0
    %v6326 = vadd.f32 %v198, %v6310
    %v6327 = vadd.f32 %v199, %v6311
    %v6328 = vadd.f32 %v200, %v6312
    %v6329 = vadd.f32 %v201, %v6313
    %v6330 = vadd.f32 %v202, %v6314
    %v6331 = vadd.f32 %v203, %v6315
    %v6332 = vadd.f32 %v204, %v6316
    %v6333 = vadd.f32 %v205, %v6317
    %v6334 = vperm.slane %v6219, 0
    %v6335 = vlaneseq
    %v6336 = vshrl.u32 %v6335, 7
    %6338 = vset.pattern.permute.xlu0 %v6336
    %6339 = vperm.xlu0 %6338, %v6334
    %v6340 = vpop.permute.xlu0 %6339
    %v6341 = vperm.slane %v6219, 1
    %v6342 = vlaneseq
    %v6343 = vshrl.u32 %v6342, 7
    %6345 = vset.pattern.permute.xlu0 %v6343
    %6346 = vperm.xlu0 %6345, %v6341
    %v6347 = vpop.permute.xlu0 %6346
    %v6348 = vperm.slane %v6219, 2
    %v6349 = vlaneseq
    %v6350 = vshrl.u32 %v6349, 7
    %6352 = vset.pattern.permute.xlu0 %v6350
    %6353 = vperm.xlu0 %6352, %v6348
    %v6354 = vpop.permute.xlu0 %6353
    %v6355 = vperm.slane %v6219, 3
    %v6356 = vlaneseq
    %v6357 = vshrl.u32 %v6356, 7
    %6359 = vset.pattern.permute.xlu0 %v6357
    %6360 = vperm.xlu0 %6359, %v6355
    %v6361 = vpop.permute.xlu0 %6360
    %v6362 = vperm.slane %v6219, 4
    %v6363 = vlaneseq
    %v6364 = vshrl.u32 %v6363, 7
    %6366 = vset.pattern.permute.xlu0 %v6364
    %6367 = vperm.xlu0 %6366, %v6362
    %v6368 = vpop.permute.xlu0 %6367
    %v6369 = vperm.slane %v6219, 5
    %v6370 = vlaneseq
    %v6371 = vshrl.u32 %v6370, 7
    %6373 = vset.pattern.permute.xlu0 %v6371
    %6374 = vperm.xlu0 %6373, %v6369
    %v6375 = vpop.permute.xlu0 %6374
    %v6376 = vperm.slane %v6219, 6
    %v6377 = vlaneseq
    %v6378 = vshrl.u32 %v6377, 7
    %6380 = vset.pattern.permute.xlu0 %v6378
    %6381 = vperm.xlu0 %6380, %v6376
    %v6382 = vpop.permute.xlu0 %6381
    %v6383 = vperm.slane %v6219, 7
    %v6384 = vlaneseq
    %v6385 = vshrl.u32 %v6384, 7
    %6387 = vset.pattern.permute.xlu0 %v6385
    %6388 = vperm.xlu0 %6387, %v6383
    %v6389 = vpop.permute.xlu0 %6388
    %v6390 = vmul.f32 %v6340, %v526
    %v6391 = vmul.f32 %v6347, %v526
    %v6392 = vmul.f32 %v6354, %v526
    %v6393 = vmul.f32 %v6361, %v526
    %v6394 = vmul.f32 %v6368, %v526
    %v6395 = vmul.f32 %v6375, %v526
    %v6396 = vmul.f32 %v6382, %v526
    %v6397 = vmul.f32 %v6389, %v526
    %v6398 = vadd.f32 %v6326, %v6390
    %v6399 = vadd.f32 %v6327, %v6391
    %v6400 = vadd.f32 %v6328, %v6392
    %v6401 = vadd.f32 %v6329, %v6393
    %v6402 = vadd.f32 %v6330, %v6394
    %v6403 = vadd.f32 %v6331, %v6395
    %v6404 = vadd.f32 %v6332, %v6396
    %v6405 = vadd.f32 %v6333, %v6397
    %v6406 = vperm.slane %v6299, 0
    %v6407 = vlaneseq
    %v6408 = vshrl.u32 %v6407, 7
    %6410 = vset.pattern.permute.xlu0 %v6408
    %6411 = vperm.xlu0 %6410, %v6406
    %v6412 = vpop.permute.xlu0 %6411
    %v6413 = vperm.slane %v6299, 1
    %v6414 = vlaneseq
    %v6415 = vshrl.u32 %v6414, 7
    %6417 = vset.pattern.permute.xlu0 %v6415
    %6418 = vperm.xlu0 %6417, %v6413
    %v6419 = vpop.permute.xlu0 %6418
    %v6420 = vperm.slane %v6299, 2
    %v6421 = vlaneseq
    %v6422 = vshrl.u32 %v6421, 7
    %6424 = vset.pattern.permute.xlu0 %v6422
    %6425 = vperm.xlu0 %6424, %v6420
    %v6426 = vpop.permute.xlu0 %6425
    %v6427 = vperm.slane %v6299, 3
    %v6428 = vlaneseq
    %v6429 = vshrl.u32 %v6428, 7
    %6431 = vset.pattern.permute.xlu0 %v6429
    %6432 = vperm.xlu0 %6431, %v6427
    %v6433 = vpop.permute.xlu0 %6432
    %v6434 = vperm.slane %v6299, 4
    %v6435 = vlaneseq
    %v6436 = vshrl.u32 %v6435, 7
    %6438 = vset.pattern.permute.xlu0 %v6436
    %6439 = vperm.xlu0 %6438, %v6434
    %v6440 = vpop.permute.xlu0 %6439
    %v6441 = vperm.slane %v6299, 5
    %v6442 = vlaneseq
    %v6443 = vshrl.u32 %v6442, 7
    %6445 = vset.pattern.permute.xlu0 %v6443
    %6446 = vperm.xlu0 %6445, %v6441
    %v6447 = vpop.permute.xlu0 %6446
    %v6448 = vperm.slane %v6299, 6
    %v6449 = vlaneseq
    %v6450 = vshrl.u32 %v6449, 7
    %6452 = vset.pattern.permute.xlu0 %v6450
    %6453 = vperm.xlu0 %6452, %v6448
    %v6454 = vpop.permute.xlu0 %6453
    %v6455 = vperm.slane %v6299, 7
    %v6456 = vlaneseq
    %v6457 = vshrl.u32 %v6456, 7
    %6459 = vset.pattern.permute.xlu0 %v6457
    %6460 = vperm.xlu0 %6459, %v6455
    %v6461 = vpop.permute.xlu0 %6460
    %v6462 = vmul.f32 %v6412, %v545
    %v6463 = vmul.f32 %v6419, %v545
    %v6464 = vmul.f32 %v6426, %v545
    %v6465 = vmul.f32 %v6433, %v545
    %v6466 = vmul.f32 %v6440, %v545
    %v6467 = vmul.f32 %v6447, %v545
    %v6468 = vmul.f32 %v6454, %v545
    %v6469 = vmul.f32 %v6461, %v545
    %v6470 = vadd.f32 %v6398, %v6462
    %v6471 = vadd.f32 %v6399, %v6463
    %v6472 = vadd.f32 %v6400, %v6464
    %v6473 = vadd.f32 %v6401, %v6465
    %v6474 = vadd.f32 %v6402, %v6466
    %v6475 = vadd.f32 %v6403, %v6467
    %v6476 = vadd.f32 %v6404, %v6468
    %v6477 = vadd.f32 %v6405, %v6469
    %v6478 = vlaneseq
    %v6479 = vshrl.u32 %v6478, 7
    %v6480 = vadd.s32 %v6479, 8
    %6481 = vset.pattern.permute.xlu0 %v6480
    %6482 = vperm.xlu0 %6481, %v6334
    %v6483 = vpop.permute.xlu0 %6482
    %v6484 = vlaneseq
    %v6485 = vshrl.u32 %v6484, 7
    %v6486 = vadd.s32 %v6485, 8
    %6487 = vset.pattern.permute.xlu0 %v6486
    %6488 = vperm.xlu0 %6487, %v6341
    %v6489 = vpop.permute.xlu0 %6488
    %v6490 = vlaneseq
    %v6491 = vshrl.u32 %v6490, 7
    %v6492 = vadd.s32 %v6491, 8
    %6493 = vset.pattern.permute.xlu0 %v6492
    %6494 = vperm.xlu0 %6493, %v6348
    %v6495 = vpop.permute.xlu0 %6494
    %v6496 = vlaneseq
    %v6497 = vshrl.u32 %v6496, 7
    %v6498 = vadd.s32 %v6497, 8
    %6499 = vset.pattern.permute.xlu0 %v6498
    %6500 = vperm.xlu0 %6499, %v6355
    %v6501 = vpop.permute.xlu0 %6500
    %v6502 = vlaneseq
    %v6503 = vshrl.u32 %v6502, 7
    %v6504 = vadd.s32 %v6503, 8
    %6505 = vset.pattern.permute.xlu0 %v6504
    %6506 = vperm.xlu0 %6505, %v6362
    %v6507 = vpop.permute.xlu0 %6506
    %v6508 = vlaneseq
    %v6509 = vshrl.u32 %v6508, 7
    %v6510 = vadd.s32 %v6509, 8
    %6511 = vset.pattern.permute.xlu0 %v6510
    %6512 = vperm.xlu0 %6511, %v6369
    %v6513 = vpop.permute.xlu0 %6512
    %v6514 = vlaneseq
    %v6515 = vshrl.u32 %v6514, 7
    %v6516 = vadd.s32 %v6515, 8
    %6517 = vset.pattern.permute.xlu0 %v6516
    %6518 = vperm.xlu0 %6517, %v6376
    %v6519 = vpop.permute.xlu0 %6518
    %v6520 = vlaneseq
    %v6521 = vshrl.u32 %v6520, 7
    %v6522 = vadd.s32 %v6521, 8
    %6523 = vset.pattern.permute.xlu0 %v6522
    %6524 = vperm.xlu0 %6523, %v6383
    %v6525 = vpop.permute.xlu0 %6524
    %v6526 = vmul.f32 %v6483, %v612
    %v6527 = vmul.f32 %v6489, %v612
    %v6528 = vmul.f32 %v6495, %v612
    %v6529 = vmul.f32 %v6501, %v612
    %v6530 = vmul.f32 %v6507, %v612
    %v6531 = vmul.f32 %v6513, %v612
    %v6532 = vmul.f32 %v6519, %v612
    %v6533 = vmul.f32 %v6525, %v612
    %v6534 = vadd.f32 %v6470, %v6526
    %v6535 = vadd.f32 %v6471, %v6527
    %v6536 = vadd.f32 %v6472, %v6528
    %v6537 = vadd.f32 %v6473, %v6529
    %v6538 = vadd.f32 %v6474, %v6530
    %v6539 = vadd.f32 %v6475, %v6531
    %v6540 = vadd.f32 %v6476, %v6532
    %v6541 = vadd.f32 %v6477, %v6533
    %v6542 = vlaneseq
    %v6543 = vshrl.u32 %v6542, 7
    %v6544 = vadd.s32 %v6543, 8
    %6545 = vset.pattern.permute.xlu0 %v6544
    %6546 = vperm.xlu0 %6545, %v6406
    %v6547 = vpop.permute.xlu0 %6546
    %v6548 = vlaneseq
    %v6549 = vshrl.u32 %v6548, 7
    %v6550 = vadd.s32 %v6549, 8
    %6551 = vset.pattern.permute.xlu0 %v6550
    %6552 = vperm.xlu0 %6551, %v6413
    %v6553 = vpop.permute.xlu0 %6552
    %v6554 = vlaneseq
    %v6555 = vshrl.u32 %v6554, 7
    %v6556 = vadd.s32 %v6555, 8
    %6557 = vset.pattern.permute.xlu0 %v6556
    %6558 = vperm.xlu0 %6557, %v6420
    %v6559 = vpop.permute.xlu0 %6558
    %v6560 = vlaneseq
    %v6561 = vshrl.u32 %v6560, 7
    %v6562 = vadd.s32 %v6561, 8
    %6563 = vset.pattern.permute.xlu0 %v6562
    %6564 = vperm.xlu0 %6563, %v6427
    %v6565 = vpop.permute.xlu0 %6564
    %v6566 = vlaneseq
    %v6567 = vshrl.u32 %v6566, 7
    %v6568 = vadd.s32 %v6567, 8
    %6569 = vset.pattern.permute.xlu0 %v6568
    %6570 = vperm.xlu0 %6569, %v6434
    %v6571 = vpop.permute.xlu0 %6570
    %v6572 = vlaneseq
    %v6573 = vshrl.u32 %v6572, 7
    %v6574 = vadd.s32 %v6573, 8
    %6575 = vset.pattern.permute.xlu0 %v6574
    %6576 = vperm.xlu0 %6575, %v6441
    %v6577 = vpop.permute.xlu0 %6576
    %v6578 = vlaneseq
    %v6579 = vshrl.u32 %v6578, 7
    %v6580 = vadd.s32 %v6579, 8
    %6581 = vset.pattern.permute.xlu0 %v6580
    %6582 = vperm.xlu0 %6581, %v6448
    %v6583 = vpop.permute.xlu0 %6582
    %v6584 = vlaneseq
    %v6585 = vshrl.u32 %v6584, 7
    %v6586 = vadd.s32 %v6585, 8
    %6587 = vset.pattern.permute.xlu0 %v6586
    %6588 = vperm.xlu0 %6587, %v6455
    %v6589 = vpop.permute.xlu0 %6588
    %v6590 = vmul.f32 %v6547, %v631
    %v6591 = vmul.f32 %v6553, %v631
    %v6592 = vmul.f32 %v6559, %v631
    %v6593 = vmul.f32 %v6565, %v631
    %v6594 = vmul.f32 %v6571, %v631
    %v6595 = vmul.f32 %v6577, %v631
    %v6596 = vmul.f32 %v6583, %v631
    %v6597 = vmul.f32 %v6589, %v631
    %v6598 = vadd.f32 %v6534, %v6590
    %v6599 = vadd.f32 %v6535, %v6591
    %v6600 = vadd.f32 %v6536, %v6592
    %v6601 = vadd.f32 %v6537, %v6593
    %v6602 = vadd.f32 %v6538, %v6594
    %v6603 = vadd.f32 %v6539, %v6595
    %v6604 = vadd.f32 %v6540, %v6596
    %v6605 = vadd.f32 %v6541, %v6597
    %v6606 = vlaneseq
    %v6607 = vshrl.u32 %v6606, 7
    %v6608 = vadd.s32 %v6607, 16
    %6609 = vset.pattern.permute.xlu0 %v6608
    %6610 = vperm.xlu0 %6609, %v6334
    %v6611 = vpop.permute.xlu0 %6610
    %v6612 = vlaneseq
    %v6613 = vshrl.u32 %v6612, 7
    %v6614 = vadd.s32 %v6613, 16
    %6615 = vset.pattern.permute.xlu0 %v6614
    %6616 = vperm.xlu0 %6615, %v6341
    %v6617 = vpop.permute.xlu0 %6616
    %v6618 = vlaneseq
    %v6619 = vshrl.u32 %v6618, 7
    %v6620 = vadd.s32 %v6619, 16
    %6621 = vset.pattern.permute.xlu0 %v6620
    %6622 = vperm.xlu0 %6621, %v6348
    %v6623 = vpop.permute.xlu0 %6622
    %v6624 = vlaneseq
    %v6625 = vshrl.u32 %v6624, 7
    %v6626 = vadd.s32 %v6625, 16
    %6627 = vset.pattern.permute.xlu0 %v6626
    %6628 = vperm.xlu0 %6627, %v6355
    %v6629 = vpop.permute.xlu0 %6628
    %v6630 = vlaneseq
    %v6631 = vshrl.u32 %v6630, 7
    %v6632 = vadd.s32 %v6631, 16
    %6633 = vset.pattern.permute.xlu0 %v6632
    %6634 = vperm.xlu0 %6633, %v6362
    %v6635 = vpop.permute.xlu0 %6634
    %v6636 = vlaneseq
    %v6637 = vshrl.u32 %v6636, 7
    %v6638 = vadd.s32 %v6637, 16
    %6639 = vset.pattern.permute.xlu0 %v6638
    %6640 = vperm.xlu0 %6639, %v6369
    %v6641 = vpop.permute.xlu0 %6640
    %v6642 = vlaneseq
    %v6643 = vshrl.u32 %v6642, 7
    %v6644 = vadd.s32 %v6643, 16
    %6645 = vset.pattern.permute.xlu0 %v6644
    %6646 = vperm.xlu0 %6645, %v6376
    %v6647 = vpop.permute.xlu0 %6646
    %v6648 = vlaneseq
    %v6649 = vshrl.u32 %v6648, 7
    %v6650 = vadd.s32 %v6649, 16
    %6651 = vset.pattern.permute.xlu0 %v6650
    %6652 = vperm.xlu0 %6651, %v6383
    %v6653 = vpop.permute.xlu0 %6652
    %v6654 = vmul.f32 %v6611, %v698
    %v6655 = vmul.f32 %v6617, %v698
    %v6656 = vmul.f32 %v6623, %v698
    %v6657 = vmul.f32 %v6629, %v698
    %v6658 = vmul.f32 %v6635, %v698
    %v6659 = vmul.f32 %v6641, %v698
    %v6660 = vmul.f32 %v6647, %v698
    %v6661 = vmul.f32 %v6653, %v698
    %v6662 = vadd.f32 %v6598, %v6654
    %v6663 = vadd.f32 %v6599, %v6655
    %v6664 = vadd.f32 %v6600, %v6656
    %v6665 = vadd.f32 %v6601, %v6657
    %v6666 = vadd.f32 %v6602, %v6658
    %v6667 = vadd.f32 %v6603, %v6659
    %v6668 = vadd.f32 %v6604, %v6660
    %v6669 = vadd.f32 %v6605, %v6661
    %v6670 = vlaneseq
    %v6671 = vshrl.u32 %v6670, 7
    %v6672 = vadd.s32 %v6671, 16
    %6673 = vset.pattern.permute.xlu0 %v6672
    %6674 = vperm.xlu0 %6673, %v6406
    %v6675 = vpop.permute.xlu0 %6674
    %v6676 = vlaneseq
    %v6677 = vshrl.u32 %v6676, 7
    %v6678 = vadd.s32 %v6677, 16
    %6679 = vset.pattern.permute.xlu0 %v6678
    %6680 = vperm.xlu0 %6679, %v6413
    %v6681 = vpop.permute.xlu0 %6680
    %v6682 = vlaneseq
    %v6683 = vshrl.u32 %v6682, 7
    %v6684 = vadd.s32 %v6683, 16
    %6685 = vset.pattern.permute.xlu0 %v6684
    %6686 = vperm.xlu0 %6685, %v6420
    %v6687 = vpop.permute.xlu0 %6686
    %v6688 = vlaneseq
    %v6689 = vshrl.u32 %v6688, 7
    %v6690 = vadd.s32 %v6689, 16
    %6691 = vset.pattern.permute.xlu0 %v6690
    %6692 = vperm.xlu0 %6691, %v6427
    %v6693 = vpop.permute.xlu0 %6692
    %v6694 = vlaneseq
    %v6695 = vshrl.u32 %v6694, 7
    %v6696 = vadd.s32 %v6695, 16
    %6697 = vset.pattern.permute.xlu0 %v6696
    %6698 = vperm.xlu0 %6697, %v6434
    %v6699 = vpop.permute.xlu0 %6698
    %v6700 = vlaneseq
    %v6701 = vshrl.u32 %v6700, 7
    %v6702 = vadd.s32 %v6701, 16
    %6703 = vset.pattern.permute.xlu0 %v6702
    %6704 = vperm.xlu0 %6703, %v6441
    %v6705 = vpop.permute.xlu0 %6704
    %v6706 = vlaneseq
    %v6707 = vshrl.u32 %v6706, 7
    %v6708 = vadd.s32 %v6707, 16
    %6709 = vset.pattern.permute.xlu0 %v6708
    %6710 = vperm.xlu0 %6709, %v6448
    %v6711 = vpop.permute.xlu0 %6710
    %v6712 = vlaneseq
    %v6713 = vshrl.u32 %v6712, 7
    %v6714 = vadd.s32 %v6713, 16
    %6715 = vset.pattern.permute.xlu0 %v6714
    %6716 = vperm.xlu0 %6715, %v6455
    %v6717 = vpop.permute.xlu0 %6716
    %v6718 = vmul.f32 %v6675, %v717
    %v6719 = vmul.f32 %v6681, %v717
    %v6720 = vmul.f32 %v6687, %v717
    %v6721 = vmul.f32 %v6693, %v717
    %v6722 = vmul.f32 %v6699, %v717
    %v6723 = vmul.f32 %v6705, %v717
    %v6724 = vmul.f32 %v6711, %v717
    %v6725 = vmul.f32 %v6717, %v717
    %v6726 = vadd.f32 %v6662, %v6718
    %v6727 = vadd.f32 %v6663, %v6719
    %v6728 = vadd.f32 %v6664, %v6720
    %v6729 = vadd.f32 %v6665, %v6721
    %v6730 = vadd.f32 %v6666, %v6722
    %v6731 = vadd.f32 %v6667, %v6723
    %v6732 = vadd.f32 %v6668, %v6724
    %v6733 = vadd.f32 %v6669, %v6725
    %v6734 = vtanh.pop %v6726
    %v6735 = vtanh.pop %v6727
    %v6736 = vtanh.pop %v6728
    %v6737 = vtanh.pop %v6729
    %v6738 = vtanh.pop %v6730
    %v6739 = vtanh.pop %v6731
    %v6740 = vtanh.pop %v6732
    %v6741 = vtanh.pop %v6733
    %v6742 = vmul.f32 %v6734, %v744
    %v6743 = vmul.f32 %v6735, %v744
    %v6744 = vmul.f32 %v6736, %v744
    %v6745 = vmul.f32 %v6737, %v744
    %v6746 = vmul.f32 %v6738, %v744
    %v6747 = vmul.f32 %v6739, %v744
    %v6748 = vmul.f32 %v6740, %v744
    %v6749 = vmul.f32 %v6741, %v744
    %v6750 = vsel %vm754, %v6742, 0.0
    %6751 = vadd.xlane.f32.xlu0 %v6750
    %v6752 = vpop.xlane.xlu0 %6751
    %v6753 = vsel %vm754, %v6743, 0.0
    %6754 = vadd.xlane.f32.xlu0 %v6753
    %v6755 = vpop.xlane.xlu0 %6754
    %v6756 = vsel %vm754, %v6744, 0.0
    %6757 = vadd.xlane.f32.xlu0 %v6756
    %v6758 = vpop.xlane.xlu0 %6757
    %v6759 = vsel %vm754, %v6745, 0.0
    %6760 = vadd.xlane.f32.xlu0 %v6759
    %v6761 = vpop.xlane.xlu0 %6760
    %v6762 = vsel %vm754, %v6746, 0.0
    %6763 = vadd.xlane.f32.xlu0 %v6762
    %v6764 = vpop.xlane.xlu0 %6763
    %v6765 = vsel %vm754, %v6747, 0.0
    %6766 = vadd.xlane.f32.xlu0 %v6765
    %v6767 = vpop.xlane.xlu0 %6766
    %v6768 = vsel %vm754, %v6748, 0.0
    %6769 = vadd.xlane.f32.xlu0 %v6768
    %v6770 = vpop.xlane.xlu0 %6769
    %v6771 = vsel %vm754, %v6749, 0.0
    %6772 = vadd.xlane.f32.xlu0 %v6771
    %v6773 = vpop.xlane.xlu0 %6772
    %v6782 = vperm.slane %v6752, %v788
    %v6783 = vperm.slane %v6755, %v788
    %v6784 = vperm.slane %v6758, %v788
    %v6785 = vperm.slane %v6761, %v788
    %v6786 = vperm.slane %v6764, %v788
    %v6787 = vperm.slane %v6767, %v788
    %v6788 = vperm.slane %v6770, %v788
    %v6789 = vperm.slane %v6773, %v788
    %v6790 = vsel %vm797, %v6783, %v6782
    %v6791 = vsel %vm799, %v6784, %v6790
    %v6792 = vsel %vm801, %v6785, %v6791
    %v6793 = vsel %vm803, %v6786, %v6792
    %v6794 = vsel %vm805, %v6787, %v6793
    %v6795 = vsel %vm807, %v6788, %v6794
    %v6796 = vsel %vm809, %v6789, %v6795
    %v6798 = vsel %vm327, %v6796, -inf
    %6799 = vmax.xlane.f32.xlu0 %v6798
    %v6800 = vpop.xlane.xlu0 %6799
    %v6802 = vperm.slane %v6800, 0
    %v6803 = vperm.slane %v6800, 1
    %v6804 = vperm.slane %v6800, 2
    %v6805 = vperm.slane %v6800, 3
    %v6806 = vperm.slane %v6800, 4
    %v6807 = vperm.slane %v6800, 5
    %v6808 = vperm.slane %v6800, 6
    %v6809 = vperm.slane %v6800, 7
    %v6818 = vsub.f32 %v6752, %v6802
    %v6819 = vsub.f32 %v6755, %v6803
    %v6820 = vsub.f32 %v6758, %v6804
    %v6821 = vsub.f32 %v6761, %v6805
    %v6822 = vsub.f32 %v6764, %v6806
    %v6823 = vsub.f32 %v6767, %v6807
    %v6824 = vsub.f32 %v6770, %v6808
    %v6825 = vsub.f32 %v6773, %v6809
    %v6826 = vmul.f32 %v6818, 1.442695
    %v6827 = vpow.pop %v6826
    %v6828 = vmul.f32 %v6819, 1.442695
    %v6829 = vpow.pop %v6828
    %v6830 = vmul.f32 %v6820, 1.442695
    %v6831 = vpow.pop %v6830
    %v6832 = vmul.f32 %v6821, 1.442695
    %v6833 = vpow.pop %v6832
    %v6834 = vmul.f32 %v6822, 1.442695
    %v6835 = vpow.pop %v6834
    %v6836 = vmul.f32 %v6823, 1.442695
    %v6837 = vpow.pop %v6836
    %v6838 = vmul.f32 %v6824, 1.442695
    %v6839 = vpow.pop %v6838
    %v6840 = vmul.f32 %v6825, 1.442695
    %v6841 = vpow.pop %v6840
    %6850 = vset.pattern.permute.xlu0 0
    %6851 = vperm.xlu0 %6850, %v6827
    %v6852 = vpop.permute.xlu0 %6851
    %6853 = vset.pattern.permute.xlu0 0
    %6854 = vperm.xlu0 %6853, %v6829
    %v6855 = vpop.permute.xlu0 %6854
    %6856 = vset.pattern.permute.xlu0 0
    %6857 = vperm.xlu0 %6856, %v6831
    %v6858 = vpop.permute.xlu0 %6857
    %6859 = vset.pattern.permute.xlu0 0
    %6860 = vperm.xlu0 %6859, %v6833
    %v6861 = vpop.permute.xlu0 %6860
    %6862 = vset.pattern.permute.xlu0 0
    %6863 = vperm.xlu0 %6862, %v6835
    %v6864 = vpop.permute.xlu0 %6863
    %6865 = vset.pattern.permute.xlu0 0
    %6866 = vperm.xlu0 %6865, %v6837
    %v6867 = vpop.permute.xlu0 %6866
    %6868 = vset.pattern.permute.xlu0 0
    %6869 = vperm.xlu0 %6868, %v6839
    %v6870 = vpop.permute.xlu0 %6869
    %6871 = vset.pattern.permute.xlu0 0
    %6872 = vperm.xlu0 %6871, %v6841
    %v6873 = vpop.permute.xlu0 %6872
    %v6874 = vperm.slane %v6852, %v788
    %v6875 = vperm.slane %v6855, %v788
    %v6876 = vperm.slane %v6858, %v788
    %v6877 = vperm.slane %v6861, %v788
    %v6878 = vperm.slane %v6864, %v788
    %v6879 = vperm.slane %v6867, %v788
    %v6880 = vperm.slane %v6870, %v788
    %v6881 = vperm.slane %v6873, %v788
    %v6882 = vsel %vm797, %v6875, %v6874
    %v6883 = vsel %vm799, %v6876, %v6882
    %v6884 = vsel %vm801, %v6877, %v6883
    %v6885 = vsel %vm803, %v6878, %v6884
    %v6886 = vsel %vm805, %v6879, %v6885
    %v6887 = vsel %vm807, %v6880, %v6886
    %v6888 = vsel %vm809, %v6881, %v6887
    %v6890 = vsel %vm327, %v6888, 0.0
    %6891 = vadd.xlane.f32.xlu0 %v6890
    %v6892 = vpop.xlane.xlu0 %6891
    %v6893 = vrcp.pop %v6892
    %v6895 = vperm.slane %v6893, 0
    %v6896 = vperm.slane %v6893, 1
    %v6897 = vperm.slane %v6893, 2
    %v6898 = vperm.slane %v6893, 3
    %v6899 = vperm.slane %v6893, 4
    %v6900 = vperm.slane %v6893, 5
    %v6901 = vperm.slane %v6893, 6
    %v6902 = vperm.slane %v6893, 7
    %v6911 = vmul.f32 %v6827, %v6895
    %v6912 = vmul.f32 %v6829, %v6896
    %v6913 = vmul.f32 %v6831, %v6897
    %v6914 = vmul.f32 %v6833, %v6898
    %v6915 = vmul.f32 %v6835, %v6899
    %v6916 = vmul.f32 %v6837, %v6900
    %v6917 = vmul.f32 %v6839, %v6901
    %v6918 = vmul.f32 %v6841, %v6902
    %v6919 = vpack.c.bf16 %v6911, %v6911
    %v6920 = vpack.c.bf16 %v6912, %v6912
    %v6921 = vpack.c.bf16 %v6913, %v6913
    %v6922 = vpack.c.bf16 %v6914, %v6914
    %v6923 = vpack.c.bf16 %v6915, %v6915
    %v6924 = vpack.c.bf16 %v6916, %v6916
    %v6925 = vpack.c.bf16 %v6917, %v6917
    %v6926 = vpack.c.bf16 %v6918, %v6918
    %v6928 = vunpack.c.l.b16 %v6919
    %v6929 = vpack.c.b16 %v6928, %v6928
    %v6930 = vunpack.c.l.b16 %v6929
    %6931 = vset.pattern.permute.xlu0 0
    %6932 = vperm.xlu0 %6931, %v6930
    %v6933 = vpop.permute.xlu0 %6932
    %v6934 = vperm.slane %v6933, %v788
    %v6935 = vpack.c.b16 %v6934, %v6934
    %v6937 = vsel %vm327, %v6935, 0
    %6939 = vmatpush.bf16.msra.mxu0 0
    %6940 = vmatpush.bf16.msra.mxu0 0
    %6941 = vmatpush.bf16.msra.mxu0 0
    %6942 = vmatpush.bf16.msra.mxu0 0
    %6943 = vmatpush.bf16.msra.mxu0 0
    %6944 = vmatpush.bf16.msra.mxu0 0
    %6945 = vmatpush.bf16.msra.mxu0 0
    %6946 = vmatpush.bf16.msra.mxu0 %v954
    %6947 = vmatmul.bf16.gmra.mxu0 %v6937
    %v6948 = vpop.f32.mrf.mxu0
    %v6949 = vadd.f32 0.0, %v6948
    %v6950 = vpop.f32.mrf.mxu0
    %6951 = vdwg.mxu0
    %v6953 = vunpack.c.l.b16 %v6920
    %v6954 = vpack.c.b16 %v6953, %v6953
    %v6955 = vunpack.c.l.b16 %v6954
    %6956 = vset.pattern.permute.xlu0 0
    %6957 = vperm.xlu0 %6956, %v6955
    %v6958 = vpop.permute.xlu0 %6957
    %v6959 = vperm.slane %v6958, %v788
    %v6960 = vpack.c.b16 %v6959, %v6959
    %v6962 = vsel %vm327, %v6960, 0
    %6964 = vmatpush.bf16.msra.mxu0 0
    %6965 = vmatpush.bf16.msra.mxu0 0
    %6966 = vmatpush.bf16.msra.mxu0 0
    %6967 = vmatpush.bf16.msra.mxu0 0
    %6968 = vmatpush.bf16.msra.mxu0 0
    %6969 = vmatpush.bf16.msra.mxu0 0
    %6970 = vmatpush.bf16.msra.mxu0 0
    %6971 = vmatpush.bf16.msra.mxu0 %v982
    %6972 = vmatmul.bf16.gmra.mxu0 %v6962
    %v6973 = vpop.f32.mrf.mxu0
    %v6974 = vadd.f32 0.0, %v6973
    %v6975 = vpop.f32.mrf.mxu0
    %6976 = vdwg.mxu0
    %v6978 = vunpack.c.l.b16 %v6921
    %v6979 = vpack.c.b16 %v6978, %v6978
    %v6980 = vunpack.c.l.b16 %v6979
    %6981 = vset.pattern.permute.xlu0 0
    %6982 = vperm.xlu0 %6981, %v6980
    %v6983 = vpop.permute.xlu0 %6982
    %v6984 = vperm.slane %v6983, %v788
    %v6985 = vpack.c.b16 %v6984, %v6984
    %v6987 = vsel %vm327, %v6985, 0
    %6989 = vmatpush.bf16.msra.mxu0 0
    %6990 = vmatpush.bf16.msra.mxu0 0
    %6991 = vmatpush.bf16.msra.mxu0 0
    %6992 = vmatpush.bf16.msra.mxu0 0
    %6993 = vmatpush.bf16.msra.mxu0 0
    %6994 = vmatpush.bf16.msra.mxu0 0
    %6995 = vmatpush.bf16.msra.mxu0 0
    %6996 = vmatpush.bf16.msra.mxu0 %v1010
    %6997 = vmatmul.bf16.gmra.mxu0 %v6987
    %v6998 = vpop.f32.mrf.mxu0
    %v6999 = vadd.f32 0.0, %v6998
    %v7000 = vpop.f32.mrf.mxu0
    %7001 = vdwg.mxu0
    %v7003 = vunpack.c.l.b16 %v6922
    %v7004 = vpack.c.b16 %v7003, %v7003
    %v7005 = vunpack.c.l.b16 %v7004
    %7006 = vset.pattern.permute.xlu0 0
    %7007 = vperm.xlu0 %7006, %v7005
    %v7008 = vpop.permute.xlu0 %7007
    %v7009 = vperm.slane %v7008, %v788
    %v7010 = vpack.c.b16 %v7009, %v7009
    %v7012 = vsel %vm327, %v7010, 0
    %7014 = vmatpush.bf16.msra.mxu0 0
    %7015 = vmatpush.bf16.msra.mxu0 0
    %7016 = vmatpush.bf16.msra.mxu0 0
    %7017 = vmatpush.bf16.msra.mxu0 0
    %7018 = vmatpush.bf16.msra.mxu0 0
    %7019 = vmatpush.bf16.msra.mxu0 0
    %7020 = vmatpush.bf16.msra.mxu0 0
    %7021 = vmatpush.bf16.msra.mxu0 %v1038
    %7022 = vmatmul.bf16.gmra.mxu0 %v7012
    %v7023 = vpop.f32.mrf.mxu0
    %v7024 = vadd.f32 0.0, %v7023
    %v7025 = vpop.f32.mrf.mxu0
    %7026 = vdwg.mxu0
    %v7028 = vunpack.c.l.b16 %v6923
    %v7029 = vpack.c.b16 %v7028, %v7028
    %v7030 = vunpack.c.l.b16 %v7029
    %7031 = vset.pattern.permute.xlu0 0
    %7032 = vperm.xlu0 %7031, %v7030
    %v7033 = vpop.permute.xlu0 %7032
    %v7034 = vperm.slane %v7033, %v788
    %v7035 = vpack.c.b16 %v7034, %v7034
    %v7037 = vsel %vm327, %v7035, 0
    %7039 = vmatpush.bf16.msra.mxu0 0
    %7040 = vmatpush.bf16.msra.mxu0 0
    %7041 = vmatpush.bf16.msra.mxu0 0
    %7042 = vmatpush.bf16.msra.mxu0 0
    %7043 = vmatpush.bf16.msra.mxu0 0
    %7044 = vmatpush.bf16.msra.mxu0 0
    %7045 = vmatpush.bf16.msra.mxu0 0
    %7046 = vmatpush.bf16.msra.mxu0 %v1066
    %7047 = vmatmul.bf16.gmra.mxu0 %v7037
    %v7048 = vpop.f32.mrf.mxu0
    %v7049 = vadd.f32 0.0, %v7048
    %v7050 = vpop.f32.mrf.mxu0
    %7051 = vdwg.mxu0
    %v7053 = vunpack.c.l.b16 %v6924
    %v7054 = vpack.c.b16 %v7053, %v7053
    %v7055 = vunpack.c.l.b16 %v7054
    %7056 = vset.pattern.permute.xlu0 0
    %7057 = vperm.xlu0 %7056, %v7055
    %v7058 = vpop.permute.xlu0 %7057
    %v7059 = vperm.slane %v7058, %v788
    %v7060 = vpack.c.b16 %v7059, %v7059
    %v7062 = vsel %vm327, %v7060, 0
    %7064 = vmatpush.bf16.msra.mxu0 0
    %7065 = vmatpush.bf16.msra.mxu0 0
    %7066 = vmatpush.bf16.msra.mxu0 0
    %7067 = vmatpush.bf16.msra.mxu0 0
    %7068 = vmatpush.bf16.msra.mxu0 0
    %7069 = vmatpush.bf16.msra.mxu0 0
    %7070 = vmatpush.bf16.msra.mxu0 0
    %7071 = vmatpush.bf16.msra.mxu0 %v1094
    %7072 = vmatmul.bf16.gmra.mxu0 %v7062
    %v7073 = vpop.f32.mrf.mxu0
    %v7074 = vadd.f32 0.0, %v7073
    %v7075 = vpop.f32.mrf.mxu0
    %7076 = vdwg.mxu0
    %v7078 = vunpack.c.l.b16 %v6925
    %v7079 = vpack.c.b16 %v7078, %v7078
    %v7080 = vunpack.c.l.b16 %v7079
    %7081 = vset.pattern.permute.xlu0 0
    %7082 = vperm.xlu0 %7081, %v7080
    %v7083 = vpop.permute.xlu0 %7082
    %v7084 = vperm.slane %v7083, %v788
    %v7085 = vpack.c.b16 %v7084, %v7084
    %v7087 = vsel %vm327, %v7085, 0
    %7089 = vmatpush.bf16.msra.mxu0 0
    %7090 = vmatpush.bf16.msra.mxu0 0
    %7091 = vmatpush.bf16.msra.mxu0 0
    %7092 = vmatpush.bf16.msra.mxu0 0
    %7093 = vmatpush.bf16.msra.mxu0 0
    %7094 = vmatpush.bf16.msra.mxu0 0
    %7095 = vmatpush.bf16.msra.mxu0 0
    %7096 = vmatpush.bf16.msra.mxu0 %v1122
    %7097 = vmatmul.bf16.gmra.mxu0 %v7087
    %v7098 = vpop.f32.mrf.mxu0
    %v7099 = vadd.f32 0.0, %v7098
    %v7100 = vpop.f32.mrf.mxu0
    %7101 = vdwg.mxu0
    %v7103 = vunpack.c.l.b16 %v6926
    %v7104 = vpack.c.b16 %v7103, %v7103
    %v7105 = vunpack.c.l.b16 %v7104
    %7106 = vset.pattern.permute.xlu0 0
    %7107 = vperm.xlu0 %7106, %v7105
    %v7108 = vpop.permute.xlu0 %7107
    %v7109 = vperm.slane %v7108, %v788
    %v7110 = vpack.c.b16 %v7109, %v7109
    %v7112 = vsel %vm327, %v7110, 0
    %7114 = vmatpush.bf16.msra.mxu0 0
    %7115 = vmatpush.bf16.msra.mxu0 0
    %7116 = vmatpush.bf16.msra.mxu0 0
    %7117 = vmatpush.bf16.msra.mxu0 0
    %7118 = vmatpush.bf16.msra.mxu0 0
    %7119 = vmatpush.bf16.msra.mxu0 0
    %7120 = vmatpush.bf16.msra.mxu0 0
    %7121 = vmatpush.bf16.msra.mxu0 %v1150
    %7122 = vmatmul.bf16.gmra.mxu0 %v7112
    %v7123 = vpop.f32.mrf.mxu0
    %v7124 = vadd.f32 0.0, %v7123
    %v7125 = vpop.f32.mrf.mxu0
    %7126 = vdwg.mxu0
    %v7127 = vpack.c.bf16 %v6949, %v6949
    %v7128 = vpack.c.bf16 %v6974, %v6974
    %v7129 = vpack.c.bf16 %v6999, %v6999
    %v7130 = vpack.c.bf16 %v7024, %v7024
    %v7131 = vpack.c.bf16 %v7049, %v7049
    %v7132 = vpack.c.bf16 %v7074, %v7074
    %v7133 = vpack.c.bf16 %v7099, %v7099
    %v7134 = vpack.c.bf16 %v7124, %v7124
    %v7143 = vunpack.c.l.b16 %v7127
    %v7144 = vunpack.c.l.b16 %v7128
    %v7145 = vunpack.c.l.b16 %v7129
    %v7146 = vunpack.c.l.b16 %v7130
    %v7147 = vunpack.c.l.b16 %v7131
    %v7148 = vunpack.c.l.b16 %v7132
    %v7149 = vunpack.c.l.b16 %v7133
    %v7150 = vunpack.c.l.b16 %v7134
    %v7151 = vrot.slane %v7144, 7
    %v7152 = vsel %vm797, %v7151, %v7143
    %v7153 = vrot.slane %v7145, 6
    %v7154 = vsel %vm799, %v7153, %v7152
    %v7155 = vrot.slane %v7146, 5
    %v7156 = vsel %vm801, %v7155, %v7154
    %v7157 = vrot.slane %v7147, 4
    %v7158 = vsel %vm803, %v7157, %v7156
    %v7159 = vrot.slane %v7148, 3
    %v7160 = vsel %vm805, %v7159, %v7158
    %v7161 = vrot.slane %v7149, 2
    %v7162 = vsel %vm807, %v7161, %v7160
    %v7163 = vrot.slane %v7150, 1
    %v7164 = vsel %vm809, %v7163, %v7162
    %v7165 = vpack.c.b16 %v7164, %v7164
    %v7167 = vsel %vm260, %v7165, 0
    %7169 = vmatpush.bf16.msra.mxu0 0
    %7170 = vmatpush.bf16.msra.mxu0 0
    %7171 = vmatpush.bf16.msra.mxu0 0
    %7172 = vmatpush.bf16.msra.mxu0 0
    %7173 = vmatpush.bf16.msra.mxu0 0
    %7174 = vmatpush.bf16.msra.mxu0 0
    %7175 = vmatpush.bf16.msra.mxu0 %v1221
    %7176 = vmatpush.bf16.msra.mxu0 %v1220
    %7177 = vmatmul.bf16.gmra.mxu0 %v7167
    %v7178 = vpop.f32.mrf.mxu0
    %v7179 = vadd.f32 %v6075, %v7178
    %v7180 = vpop.f32.mrf.mxu0
    %7181 = vdwg.mxu0
    %v7182 = vadd.f32 %v7179, %v225
    %v7183 = vxor.u32 %v7182, 2147483648
    %v7184 = vmul.f32 %v7183, 1.442695
    %v7185 = vpow.pop %v7184
    %v7186 = vadd.f32 %v7185, 1.0
    %v7187 = vrcp.pop %v7186
    %v7188 = vmul.f32 %v7186, %v7187
    %v7189 = vsub.f32 1.0, %v7188
    %v7190 = vmul.f32 %v7187, %v7189
    %v7191 = vadd.f32 %v7187, %v7190
    %vm7192 = vweird.f32 %v7186
    %vm7193 = vweird.f32 %v7187
    %vm7194 = vmor %vm7192, %vm7193
    %v7195 = vsel %vm7194, %v7187, %v7191
    %v7196 = vand.u32 2147483647, %v7186
    %vm7197 = vcmp.eq.f32.partialorder %v7196, 8.507059e+37
    %v7198 = vand.u32 %v7186, 2147483648
    %v7199 = vor.u32 1.1754944e-38, %v7198
    %v7200 = vsel %vm7197, %v7199, %v7195
    %v7201 = vmul.f32 1.0, %v7200
    %v7202 = vtanh.pop %v7182
    %v7203 = vmul.f32 %v7201, %v6031
    %7205 = vrot.lane.b32.xlu0 %v7202, 64
    %v7206 = vpop.permute.xlu0 %7205
    %v7208 = vmul.f32 %v7201, %v7206
    %7210 = vrot.lane.b32.xlu0 %v7208, 32
    %v7211 = vpop.permute.xlu0 %7210
    %v7213 = vadd.f32 %v7203, %v7211
    %v7214 = vtanh.pop %v7213
    %7216 = vrot.lane.b32.xlu0 %v7214, 64
    %v7217 = vpop.permute.xlu0 %7216
    %v7219 = vmul.f32 %v7201, %v7217
    %7221 = vrot.lane.b32.xlu0 %v7219, 32
    %v7222 = vpop.permute.xlu0 %7221
    %7224 = vst.msk [vmem:[#allocation2 + $0x28] sm:$0xff] %vm260, %v7222
    %v7225 = vld [vmem:[#allocation2] sm:$0xff]
    %v7226 = vld [vmem:[#allocation2 + $0x8] sm:$0xff]
    %v7227 = vld [vmem:[#allocation2 + $0x10] sm:$0xff]
    %v7228 = vld [vmem:[#allocation2 + $0x18] sm:$0xff]
    %v7229 = vld [vmem:[#allocation2 + $0x20] sm:$0xff]
    %v7230 = vld [vmem:[#allocation2 + $0x28] sm:$0xff]
    %v7231 = vpack.c.bf16 %v7226, %v7225
    %v7232 = vpack.c.bf16 %v7228, %v7227
    %v7233 = vpack.c.bf16 %v7230, %v7229
    %v7238 = vunpack.c.l.b16 %v243
    %v7239 = vunpack.c.l.b16 %v244
    %v7240 = vunpack.c.l.b16 %v245
    %v7241 = vunpack.c.l.b16 %v246
    %v7242 = vpack.c.b16 %v7239, %v7238
    %v7243 = vpack.c.b16 %v7241, %v7240
    %v7247 = vsel %vm260, %v7231, 0
    %v7250 = vsel %vm260, %v7232, 0
    %v7253 = vsel %vm260, %v7233, 0
    %7255 = vmatpush.bf16.msra.mxu0 0
    %7256 = vmatpush.bf16.msra.mxu0 0
    %7257 = vmatpush.bf16.msra.mxu0 0
    %7258 = vmatpush.bf16.msra.mxu0 0
    %7259 = vmatpush.bf16.msra.mxu0 0
    %7260 = vmatpush.bf16.msra.mxu0 0
    %7261 = vmatpush.bf16.msra.mxu0 %v7243
    %7262 = vmatpush.bf16.msra.mxu0 %v7242
    %7263 = vmatmul.bf16.gmra.mxu0 %v7247
    %v7264 = vpop.f32.mrf.mxu0
    %v7265 = vadd.f32 0.0, %v7264
    %v7266 = vpop.f32.mrf.mxu0
    %v7267 = vadd.f32 0.0, %v7266
    %7268 = vmatmul.bf16.gmra.mxu0 %v7250
    %v7269 = vpop.f32.mrf.mxu0
    %v7270 = vadd.f32 0.0, %v7269
    %v7271 = vpop.f32.mrf.mxu0
    %v7272 = vadd.f32 0.0, %v7271
    %7273 = vmatmul.bf16.gmra.mxu0 %v7253
    %v7274 = vpop.f32.mrf.mxu0
    %v7275 = vadd.f32 0.0, %v7274
    %v7276 = vpop.f32.mrf.mxu0
    %v7277 = vadd.f32 0.0, %v7276
    %7278 = vdwg.mxu0
    %7279 = vst.msk [vmem:[%s16] sm:$0xff] %vm754, %v7265
    %7280 = vst.msk [vmem:[%s16 + $0x8] sm:$0xff] %vm754, %v7267
    %7281 = vst.msk [vmem:[%s16 + $0x10] sm:$0xff] %vm754, %v7270
    %7282 = vst.msk [vmem:[%s16 + $0x18] sm:$0xff] %vm754, %v7272
    %7283 = vst.msk [vmem:[%s16 + $0x20] sm:$0xff] %vm754, %v7275
    %7284 = vst.msk [vmem:[%s16 + $0x28] sm:$0xff] %vm754, %v7277
    // Predicated region
    $region102: #{tpu_custom_call.1} parent=1 // pred_check
      _
    $region103: #{tpu_custom_call.1} parent=1 // pred_check_branch
      %7286 = sbr.rel (0) target = $region105
    $region104: #{tpu_custom_call.1} parent=1 // pred_region
      _
    $region105: #{tpu_custom_call.1} parent=1 // pred_fallthru
      _
    // Predicated region
    $region106: #{tpu_custom_call.1} parent=1 // pred_check
      _
    $region107: #{tpu_custom_call.1} parent=1 // pred_check_branch
      %7288 = sbr.rel (0) target = $region109
    $region108: #{tpu_custom_call.1} parent=1 // pred_region
      _
    $region109: #{tpu_custom_call.1} parent=1 // pred_fallthru
      _
    %7289 = vsyncpa [#allocation4], 1
    %7290 = vsyncpa [#allocation6], 1
    %7291 = vsyncpa [#allocation9], 1
    %7292 = vsyncpa [#allocation12], 1
    %7293 = vsyncpa [#allocation15], 1

</llo_original>
